<compile_context>
chip_gen: v7x
topology: tpu7x:2x2x1
jax: 0.10.0
libtpu: 0.0.40
codegen_flags: <defaults>
</compile_context>

<pallas_src>
import functools

import jax
import jax.numpy as jnp
from jax import lax
from jax.experimental import pallas as pl
from jax.experimental.pallas import tpu as pltpu

# 48 MiB scoped VMEM: well above the ~4-10 MiB these tiles need, below v7x's 64 MiB physical.
# (On v6e you can raise this and pass tm=tn=1024 for another ~2x cut in conv(A) re-reads.)
_VMEM_LIMIT = 48 * 1024 * 1024


def _tile(n, pref):
    """Largest multiple-of-128 tile <= pref that divides n (or n itself if small)."""
    if n <= pref:
        return n
    t = (pref // 128) * 128
    while t >= 128:
        if n % t == 0:
            return t
        t -= 128
    return n


# --------------------------- GTConv: edge-type mix (precompute) ---------------------------

def _mix_kernel(f_ref, a_ref, o_ref):
    """conv(A)[c] = sum_e filter[c, e] * A[e] on the current (tr, tc) tile, written bf16."""
    E = a_ref.shape[0]
    C2 = o_ref.shape[0]
    for c in range(C2):
        acc = a_ref[0].astype(jnp.float32) * f_ref[c, 0]
        for e in range(1, E):
            acc = acc + a_ref[e].astype(jnp.float32) * f_ref[c, e]
        o_ref[c] = acc.astype(o_ref.dtype)


def gtconv_mix(filters, A, *, tr=512, tc=512):
    """filters (C', E) f32 in SMEM, A (E, N, N) f32 -> conv(A) (C', N, N) bf16.
    A is read exactly once; all channels for a tile are produced in the same grid step."""
    C2, E = filters.shape
    N = A.shape[1]
    tr, tc = _tile(N, tr), _tile(N, tc)
    return pl.pallas_call(
        _mix_kernel,
        out_shape=jax.ShapeDtypeStruct((C2, N, N), jnp.bfloat16),
        grid=(N // tr, N // tc),
        in_specs=[
            pl.BlockSpec(memory_space=pltpu.MemorySpace.SMEM),             # softmaxed filters
            pl.BlockSpec((E, tr, tc), lambda r, c: (0, r, c)),             # A tile (all edge types)
        ],
        out_specs=pl.BlockSpec((C2, tr, tc), lambda r, c: (0, r, c)),
        compiler_params=pltpu.CompilerParams(
            dimension_semantics=("parallel", "parallel"),
            vmem_limit_bytes=_VMEM_LIMIT),
        cost_estimate=pl.CostEstimate(
            flops=int(2 * C2 * E * N * N), transcendentals=0,
            bytes_accessed=int(E * N * N * 4 + C2 * N * N * 2)),
    )(filters, A)


# --------------------------- GT layer (spspmm + norm) kernels ---------------------------

def _layer_prologue(acc_ref, dinv_ref):
    m = pl.program_id(2)
    k = pl.program_id(3)

    @pl.when(k == 0)
    def _():
        acc_ref[...] = jnp.zeros_like(acc_ref)

    @pl.when(jnp.logical_and(m == 0, k == 0))
    def _():
        dinv_ref[...] = jnp.zeros_like(dinv_ref)


def _layer_epilogue(acc_ref, h_ref, dinv_ref, *, tm, tn):
    n = pl.program_id(1)
    m = pl.program_id(2)
    k = pl.program_id(3)
    nm = pl.num_programs(2)
    nk = pl.num_programs(3)

    @pl.when(k == nk - 1)
    def _():
        row0 = m * tm
        col0 = n * tn

        # remove_self_loops: only tiles that actually touch the diagonal pay for the mask
        @pl.when(jnp.logical_and(row0 < col0 + tn, col0 < row0 + tm))
        def _():
            row = row0 + lax.broadcasted_iota(jnp.int32, acc_ref.shape, 0)
            col = col0 + lax.broadcasted_iota(jnp.int32, acc_ref.shape, 1)
            acc_ref[...] = jnp.where(row == col, 0.0, acc_ref[...])

        h = acc_ref[...]                                                   # f32 (tm, tn)
        h_ref[0] = h.astype(h_ref.dtype)                                   # un-normalized H (bf16)
        # scatter_add over col == column sums; accumulated across the M tiles
        dinv_ref[...] += jnp.sum(h, axis=0, keepdims=True).reshape(dinv_ref.shape)

        @pl.when(m == nm - 1)                                              # all row tiles seen
        def _():
            d = dinv_ref[...]
            dinv_ref[...] = jnp.where(d == 0.0, 0.0,
                                      pl.reciprocal(d, approx=True))       # deg^-1, inf -> 0


def _first_layer_kernel(la_ref, ra_ref, h_ref, dinv_ref, acc_ref, *, tm, tn):
    _layer_prologue(acc_ref, dinv_ref)
    acc_ref[...] += jnp.dot(la_ref[0], ra_ref[0], preferred_element_type=jnp.float32)
    _layer_epilogue(acc_ref, h_ref, dinv_ref, tm=tm, tn=tn)


def _next_layer_kernel(hp_ref, dp_ref, ra_ref, h_ref, dinv_ref, acc_ref, *, tm, tn):
    _layer_prologue(acc_ref, dinv_ref)
    # previous layer's normalization folded into the LHS read: H_prev * deg_inv_prev[col]
    lhs = (hp_ref[0] * dp_ref[0]).astype(jnp.bfloat16)                     # (tm, tk)
    acc_ref[...] += jnp.dot(lhs, ra_ref[0], preferred_element_type=jnp.float32)
    _layer_epilogue(acc_ref, h_ref, dinv_ref, tm=tm, tn=tn)


def _layer_compiler_params():
    return pltpu.CompilerParams(
        dimension_semantics=("parallel", "parallel", "arbitrary", "arbitrary"),
        vmem_limit_bytes=_VMEM_LIMIT)


def _layer_cost(C, N, tm, tn):
    return pl.CostEstimate(
        flops=int(2 * C * N * N * N),
        transcendentals=0,
        bytes_accessed=int(C * N * N * 2 * (N // tn + N // tm + 1) + C * N * 8))


def gt_layer_first(conv_stacked, num_channels, *, tm=512, tn=512, tk=512):
    """First GT layer: H[c] = conv1(A)[c] @ conv2(A)[c], self-loops removed, plus deg^-1.
    `conv_stacked` is (2C, N, N) bf16 = [conv1(A); conv2(A)]."""
    C = num_channels
    N = conv_stacked.shape[1]
    tm, tn, tk = _tile(N, tm), _tile(N, tn), _tile(N, tk)
    grid = (C, N // tn, N // tm, N // tk)
    return pl.pallas_call(
        functools.partial(_first_layer_kernel, tm=tm, tn=tn),
        out_shape=(jax.ShapeDtypeStruct((C, N, N), jnp.bfloat16),
                   jax.ShapeDtypeStruct((C, 1, N), jnp.float32)),
        grid=grid,
        in_specs=[
            pl.BlockSpec((1, tm, tk), lambda c, n, m, k: (c, m, k)),       # conv1(A)[c]
            pl.BlockSpec((1, tk, tn), lambda c, n, m, k: (c + C, k, n)),   # conv2(A)[c]
        ],
        out_specs=(
            pl.BlockSpec((1, tm, tn), lambda c, n, m, k: (c, m, n)),       # H (no self-loops)
            pl.BlockSpec((1, 1, tn), lambda c, n, m, k: (c, 0, n)),        # deg_inv per column
        ),
        scratch_shapes=[pltpu.VMEM((tm, tn), jnp.float32)],
        compiler_params=_layer_compiler_params(),
        cost_estimate=_layer_cost(C, N, tm, tn),
    )(conv_stacked, conv_stacked)


def gt_layer_next(h_prev, dinv_prev, conv1A, *, tm=512, tn=512, tk=512):
    """Subsequent GT layer: H[c] = (H_prev[c] * deg_inv_prev[c][col]) @ conv1(A)[c]."""
    C, N, _ = h_prev.shape
    tm, tn, tk = _tile(N, tm), _tile(N, tn), _tile(N, tk)
    grid = (C, N // tn, N // tm, N // tk)
    return pl.pallas_call(
        functools.partial(_next_layer_kernel, tm=tm, tn=tn),
        out_shape=(jax.ShapeDtypeStruct((C, N, N), jnp.bfloat16),
                   jax.ShapeDtypeStruct((C, 1, N), jnp.float32)),
        grid=grid,
        in_specs=[
            pl.BlockSpec((1, tm, tk), lambda c, n, m, k: (c, m, k)),       # H_prev (bf16)
            pl.BlockSpec((1, 1, tk), lambda c, n, m, k: (c, 0, k)),        # deg_inv_prev
            pl.BlockSpec((1, tk, tn), lambda c, n, m, k: (c, k, n)),       # conv1(A) this layer
        ],
        out_specs=(
            pl.BlockSpec((1, tm, tn), lambda c, n, m, k: (c, m, n)),
            pl.BlockSpec((1, 1, tn), lambda c, n, m, k: (c, 0, n)),
        ),
        scratch_shapes=[pltpu.VMEM((tm, tn), jnp.float32)],
        compiler_params=_layer_compiler_params(),
        cost_estimate=_layer_cost(C, N, tm, tn),
    )(h_prev, dinv_prev, conv1A)


# ----------------------- fused GCN aggregation + linear1 -----------------------

def _gcn_lin1_kernel(xwt_ref, h_ref, dinv_ref, gb_ref, w1t_ref, b1_ref, o_ref,
                     gcn_acc, x1_acc):
    c = pl.program_id(1)
    s = pl.program_id(2)
    nc = pl.num_programs(1)
    ns = pl.num_programs(2)

    @pl.when(jnp.logical_and(c == 0, s == 0))
    def _():
        x1_acc[...] = jnp.zeros_like(x1_acc)

    @pl.when(s == 0)
    def _():
        gcn_acc[...] = jnp.zeros_like(gcn_acc)

    # canonical bf16 MXU matmul: acc[f, t] += sum_s XW^T[f, s] * H[c, s, t]
    gcn_acc[...] += jnp.dot(xwt_ref[...], h_ref[0], preferred_element_type=jnp.float32)

    @pl.when(s == ns - 1)
    def _():
        # deferred GCN normalization (deg_inv over the target axis), + bias, relu
        g = jnp.maximum(gcn_acc[...] * dinv_ref[0] + gb_ref[...], 0.0)     # (w_out, tm)
        # linear1 fused: per-channel (transposed) weight slice, summed over channels
        x1_acc[...] += jnp.dot(w1t_ref[0], g, preferred_element_type=jnp.float32)

        @pl.when(c == nc - 1)
        def _():
            o_ref[...] = jnp.maximum(x1_acc[...] + b1_ref[...], 0.0)       # relu(linear1(.))


def gcn_lin1(h, dinv, xw_t, gcn_b, w1t, b1, *, tm=1024, ts=512):
    """Per-channel GCN aggregation with folded normalization + bias + relu, channel concat
    and linear1 (+bias, relu), all in one pass over H.  Output is transposed (w_out, N),
    lane-dense along the node axis."""
    C, N, _ = h.shape
    w_out = xw_t.shape[0]
    tm, ts = _tile(N, tm), _tile(N, ts)
    grid = (N // tm, C, N // ts)
    return pl.pallas_call(
        _gcn_lin1_kernel,
        out_shape=jax.ShapeDtypeStruct((w_out, N), jnp.float32),
        grid=grid,
        in_specs=[
            pl.BlockSpec((w_out, ts), lambda m, c, s: (0, s)),             # (X @ gcn_w)^T, bf16
            pl.BlockSpec((1, ts, tm), lambda m, c, s: (c, s, m)),          # H[c, source, target]
            pl.BlockSpec((1, 1, tm), lambda m, c, s: (c, 0, m)),           # deg_inv[c, target]
            pl.BlockSpec((w_out, 1), lambda m, c, s: (0, 0)),              # gcn bias (column)
            pl.BlockSpec((1, w_out, w_out), lambda m, c, s: (c, 0, 0)),    # lin1 weight^T per chan
            pl.BlockSpec((w_out, 1), lambda m, c, s: (0, 0)),              # lin1 bias (column)
        ],
        out_specs=pl.BlockSpec((w_out, tm), lambda m, c, s: (0, m)),
        scratch_shapes=[pltpu.VMEM((w_out, tm), jnp.float32),
                        pltpu.VMEM((w_out, tm), jnp.float32)],
        compiler_params=pltpu.CompilerParams(
            dimension_semantics=("parallel", "arbitrary", "arbitrary"),
            vmem_limit_bytes=_VMEM_LIMIT),
        cost_estimate=pl.CostEstimate(
            flops=int(2 * C * N * N * w_out), transcendentals=0,
            bytes_accessed=int(C * N * N * 2 * (N // tm) + N * w_out * (2 + 4))),
    )(xw_t, h, dinv, gcn_b.reshape(-1, 1), w1t, b1.reshape(-1, 1))


# ------------------------------- node-feature transform -------------------------------

def _matmul_kernel(x_ref, w_ref, o_ref):
    o_ref[...] = jnp.dot(x_ref[...], w_ref[...],
                         preferred_element_type=jnp.float32).astype(o_ref.dtype)


def node_linear(x, w, *, tm=512, out_dtype=jnp.bfloat16):
    """y = x @ w, emitted in bf16 so the GCN matmul gets matched MXU operands."""
    M, K = x.shape
    Nout = w.shape[1]
    tm = _tile(M, tm)
    return pl.pallas_call(
        _matmul_kernel,
        out_shape=jax.ShapeDtypeStruct((M, Nout), out_dtype),
        grid=(M // tm,),
        in_specs=[pl.BlockSpec((tm, K), lambda i: (i, 0)),
                  pl.BlockSpec((K, Nout), lambda i: (0, 0))],
        out_specs=pl.BlockSpec((tm, Nout), lambda i: (i, 0)),
        compiler_params=pltpu.CompilerParams(
            dimension_semantics=("parallel",),
            vmem_limit_bytes=_VMEM_LIMIT),
    )(x, w)


# ------------------------------- GTN forward -------------------------------

def gtn_forward(params, A_dense, X, target_x, target, *,
                tm=512, tn=512, tk=512, gcn_tm=1024, gcn_ts=512, mix_t=512):
    N = A_dense.shape[1]
    # TODO(synk): add a padding path for graphs whose node count is not a multiple of 128.
    assert N % 128 == 0, "num_nodes must be a multiple of 128"
    C = params["layers"][0]["conv1_w"].shape[0]

    Ws = []
    H = dinv = None
    for i, lp in enumerate(params["layers"]):
        f1 = jax.nn.softmax(lp["conv1_w"], axis=1)                         # (C, E)
        if i == 0:
            f2 = jax.nn.softmax(lp["conv2_w"], axis=1)
            # one streaming pass over A produces both conv1(A) and conv2(A), bf16 in HBM
            conv = gtconv_mix(jnp.concatenate([f1, f2], axis=0), A_dense, tr=mix_t, tc=mix_t)
            H, dinv = gt_layer_first(conv, C, tm=tm, tn=tn, tk=tk)
            Ws.append([f1, f2])
        else:
            conv = gtconv_mix(f1, A_dense, tr=mix_t, tc=mix_t)
            H, dinv = gt_layer_next(H, dinv, conv, tm=tm, tn=tn, tk=tk)
            Ws.append([f1])

    # GCN shared node-feature transform; emitted bf16 and fed transposed so the big
    # aggregation matmul in gcn_lin1 is canonical (w_out, ts) @ (ts, tm).
    xw_t = node_linear(X, params["gcn_w"]).T                               # (w_out, N) bf16
    x1_t = gcn_lin1(H, dinv, xw_t, params["gcn_b"], params["lin1_w_ct"],
                    params["lin1_b"], tm=gcn_tm, ts=gcn_ts)                # (w_out, N) f32

    # final classifier + CrossEntropyLoss on the tiny logits — plain JAX glue
    y = x1_t.T[target_x] @ params["lin2_w"] + params["lin2_b"]
    logp = jax.nn.log_softmax(y, axis=-1)
    loss = -jnp.mean(jnp.take_along_axis(logp, target[:, None], axis=1))
    return loss, y, Ws


# ----------------------------- setup / demo -----------------------------

def init_params(key, num_edge, num_channels, w_in, w_out, num_class, num_layers):
    keys = jax.random.split(key, 2 * num_layers + 4)
    layers = []
    for i in range(num_layers):
        lp = {"conv1_w": 0.01 * jax.random.normal(keys[2 * i], (num_channels, num_edge),
                                                  jnp.float32)}
        if i == 0:
            lp["conv2_w"] = 0.01 * jax.random.normal(keys[2 * i + 1],
                                                     (num_channels, num_edge), jnp.float32)
        layers.append(lp)
    s_gcn = (6.0 / (w_in + w_out)) ** 0.5
    s_l1 = 1.0 / (w_out * num_channels) ** 0.5
    s_l2 = 1.0 / w_out ** 0.5
    return {
        "layers": layers,
        "gcn_w": jax.random.uniform(keys[-4], (w_in, w_out), jnp.float32, -s_gcn, s_gcn),
        "gcn_b": jnp.zeros((w_out,), jnp.float32),
        # linear1 stored per channel and pre-transposed (out_features, in_features):
        #   X1^T = relu( sum_c  W1ct[c] @ relu(GCN_c)^T  + b1 )
        "lin1_w_ct": jax.random.uniform(keys[-3], (num_channels, w_out, w_out),
                                        jnp.float32, -s_l1, s_l1),
        "lin1_b": jnp.zeros((w_out,), jnp.float32),
        # linear2 stored pre-transposed (w_out, num_class)
        "lin2_w": jax.random.uniform(keys[-2], (w_out, num_class), jnp.float32, -s_l2, s_l2),
        "lin2_b": jnp.zeros((num_class,), jnp.float32),
    }


if __name__ == "__main__":
    # small, module-consistent shapes (N chosen so the 128-tiled grids have >1 tile per axis)
    num_edge, num_channels = 3, 2
    num_nodes, w_in, w_out, num_class, num_layers = 256, 64, 16, 4, 2
    num_targets = 16

    key = jax.random.PRNGKey(0)
    k_a, k_x, k_t, k_p = jax.random.split(key, 4)

    # dense nonnegative adjacency per edge type (sparse-ish)
    mask = jax.random.bernoulli(k_a, 0.05, (num_edge, num_nodes, num_nodes))
    vals = jax.random.uniform(jax.random.fold_in(k_a, 1),
                              (num_edge, num_nodes, num_nodes), jnp.float32)
    A_dense = (mask * vals).astype(jnp.float32)

    X = jax.random.normal(k_x, (num_nodes, w_in), jnp.float32)
    target_x = jnp.arange(num_targets, dtype=jnp.int32)
    target = jax.random.randint(k_t, (num_targets,), 0, num_class, jnp.int32)

    params = init_params(k_p, num_edge, num_channels, w_in, w_out, num_class, num_layers)

    # 128 tiles in the demo so every accumulator / multi-tile / diagonal-gating code path is
    # exercised; production defaults (512 matmul tiles, 1024 GCN target tile) are v7x-safe.
    fwd = jax.jit(functools.partial(gtn_forward, tm=128, tn=128, tk=128,
                                    gcn_tm=128, gcn_ts=128, mix_t=128))
    loss, y, Ws = fwd(params, A_dense, X, target_x, target)
    jax.block_until_ready((loss, y))
    assert y.shape == (num_targets, num_class)
    assert bool(jnp.isfinite(loss))
    print("KERNEL_OK")
</pallas_src>

<mosaic_0001>
module attributes {stable_mosaic.version = 11 : i64} {
  func.func @_mix_kernel(%arg0: i32, %arg1: i32, %arg2: memref<2x3xf32, #tpu.memory_space<smem>>, %arg3: memref<3x128x128xf32, #tpu.memory_space<vmem>>, %arg4: memref<2x128x128xbf16, #tpu.memory_space<vmem>>) attributes {dimension_semantics = [#tpu.dimension_semantics<parallel>, #tpu.dimension_semantics<parallel>], iteration_bounds = array<i64: 2, 2>, scalar_prefetch = 0 : i64, scratch_operands = 0 : i64, tpu.core_type = #tpu.core_type<tc>, window_params = [{transform_indices = @transform_0, window_bounds = array<i64: 2, 3>}, {transform_indices = @transform_1, window_bounds = array<i64: 3, 128, 128>}, {transform_indices = @transform_2, window_bounds = array<i64: 2, 128, 128>}]} {
    %c0 = arith.constant 0 : index
    %c0_0 = arith.constant 0 : index
    %c0_1 = arith.constant 0 : index
    %0 = vector.load %arg3[%c0, %c0_0, %c0_1] : memref<3x128x128xf32, #tpu.memory_space<vmem>>, vector<1x128x128xf32>
    %1 = vector.shape_cast %0 : vector<1x128x128xf32> to vector<128x128xf32>
    %c0_2 = arith.constant 0 : index
    %c0_3 = arith.constant 0 : index
    %2 = memref.load %arg2[%c0_2, %c0_3] : memref<2x3xf32, #tpu.memory_space<smem>>
    %3 = vector.broadcast %2 : f32 to vector<128x128xf32>
    %4 = arith.mulf %1, %3 : vector<128x128xf32>
    %c1 = arith.constant 1 : index
    %c0_4 = arith.constant 0 : index
    %c0_5 = arith.constant 0 : index
    %5 = vector.load %arg3[%c1, %c0_4, %c0_5] : memref<3x128x128xf32, #tpu.memory_space<vmem>>, vector<1x128x128xf32>
    %6 = vector.shape_cast %5 : vector<1x128x128xf32> to vector<128x128xf32>
    %c0_6 = arith.constant 0 : index
    %c1_7 = arith.constant 1 : index
    %7 = memref.load %arg2[%c0_6, %c1_7] : memref<2x3xf32, #tpu.memory_space<smem>>
    %8 = vector.broadcast %7 : f32 to vector<128x128xf32>
    %9 = arith.mulf %6, %8 : vector<128x128xf32>
    %10 = arith.addf %4, %9 : vector<128x128xf32>
    %c2 = arith.constant 2 : index
    %c0_8 = arith.constant 0 : index
    %c0_9 = arith.constant 0 : index
    %11 = vector.load %arg3[%c2, %c0_8, %c0_9] : memref<3x128x128xf32, #tpu.memory_space<vmem>>, vector<1x128x128xf32>
    %12 = vector.shape_cast %11 : vector<1x128x128xf32> to vector<128x128xf32>
    %c0_10 = arith.constant 0 : index
    %c2_11 = arith.constant 2 : index
    %13 = memref.load %arg2[%c0_10, %c2_11] : memref<2x3xf32, #tpu.memory_space<smem>>
    %14 = vector.broadcast %13 : f32 to vector<128x128xf32>
    %15 = arith.mulf %12, %14 : vector<128x128xf32>
    %16 = arith.addf %10, %15 : vector<128x128xf32>
    %17 = arith.truncf %16 : vector<128x128xf32> to vector<128x128xbf16>
    %c0_12 = arith.constant 0 : index
    %c0_13 = arith.constant 0 : index
    %c0_14 = arith.constant 0 : index
    %18 = vector.load %arg4[%c0_12, %c0_13, %c0_14] : memref<2x128x128xbf16, #tpu.memory_space<vmem>>, vector<1x128x128xbf16>
    %19 = vector.shape_cast %18 : vector<1x128x128xbf16> to vector<128x128xbf16>
    %20 = vector.shape_cast %17 : vector<128x128xbf16> to vector<1x128x128xbf16>
    tpu.vector_store %arg4[%c0_12, %c0_13, %c0_14], %20 {strides = array<i32>} : memref<2x128x128xbf16, #tpu.memory_space<vmem>>, vector<1x128x128xbf16>,
    %c0_15 = arith.constant 0 : index
    %c0_16 = arith.constant 0 : index
    %c0_17 = arith.constant 0 : index
    %21 = vector.load %arg3[%c0_15, %c0_16, %c0_17] : memref<3x128x128xf32, #tpu.memory_space<vmem>>, vector<1x128x128xf32>
    %22 = vector.shape_cast %21 : vector<1x128x128xf32> to vector<128x128xf32>
    %c1_18 = arith.constant 1 : index
    %c0_19 = arith.constant 0 : index
    %23 = memref.load %arg2[%c1_18, %c0_19] : memref<2x3xf32, #tpu.memory_space<smem>>
    %24 = vector.broadcast %23 : f32 to vector<128x128xf32>
    %25 = arith.mulf %22, %24 : vector<128x128xf32>
    %c1_20 = arith.constant 1 : index
    %c0_21 = arith.constant 0 : index
    %c0_22 = arith.constant 0 : index
    %26 = vector.load %arg3[%c1_20, %c0_21, %c0_22] : memref<3x128x128xf32, #tpu.memory_space<vmem>>, vector<1x128x128xf32>
    %27 = vector.shape_cast %26 : vector<1x128x128xf32> to vector<128x128xf32>
    %c1_23 = arith.constant 1 : index
    %c1_24 = arith.constant 1 : index
    %28 = memref.load %arg2[%c1_23, %c1_24] : memref<2x3xf32, #tpu.memory_space<smem>>
    %29 = vector.broadcast %28 : f32 to vector<128x128xf32>
    %30 = arith.mulf %27, %29 : vector<128x128xf32>
    %31 = arith.addf %25, %30 : vector<128x128xf32>
    %c2_25 = arith.constant 2 : index
    %c0_26 = arith.constant 0 : index
    %c0_27 = arith.constant 0 : index
    %32 = vector.load %arg3[%c2_25, %c0_26, %c0_27] : memref<3x128x128xf32, #tpu.memory_space<vmem>>, vector<1x128x128xf32>
    %33 = vector.shape_cast %32 : vector<1x128x128xf32> to vector<128x128xf32>
    %c1_28 = arith.constant 1 : index
    %c2_29 = arith.constant 2 : index
    %34 = memref.load %arg2[%c1_28, %c2_29] : memref<2x3xf32, #tpu.memory_space<smem>>
    %35 = vector.broadcast %34 : f32 to vector<128x128xf32>
    %36 = arith.mulf %33, %35 : vector<128x128xf32>
    %37 = arith.addf %31, %36 : vector<128x128xf32>
    %38 = arith.truncf %37 : vector<128x128xf32> to vector<128x128xbf16>
    %c1_30 = arith.constant 1 : index
    %c0_31 = arith.constant 0 : index
    %c0_32 = arith.constant 0 : index
    %39 = vector.load %arg4[%c1_30, %c0_31, %c0_32] : memref<2x128x128xbf16, #tpu.memory_space<vmem>>, vector<1x128x128xbf16>
    %40 = vector.shape_cast %39 : vector<1x128x128xbf16> to vector<128x128xbf16>
    %41 = vector.shape_cast %38 : vector<128x128xbf16> to vector<1x128x128xbf16>
    tpu.vector_store %arg4[%c1_30, %c0_31, %c0_32], %41 {strides = array<i32>} : memref<2x128x128xbf16, #tpu.memory_space<vmem>>, vector<1x128x128xbf16>,
    return
  }
  func.func @transform_0(%arg0: i32, %arg1: i32) -> (i32, i32) {
    %c0_i32 = arith.constant 0 : i32
    %c0_i32_0 = arith.constant 0 : i32
    %c0_i32_1 = arith.constant 0 : i32
    return %c0_i32, %c0_i32_0 : i32, i32
  }
  func.func @transform_1(%arg0: i32, %arg1: i32) -> (i32, i32, i32) {
    %c0_i32 = arith.constant 0 : i32
    %c0_i32_0 = arith.constant 0 : i32
    return %c0_i32, %arg0, %arg1 : i32, i32, i32
  }
  func.func @transform_2(%arg0: i32, %arg1: i32) -> (i32, i32, i32) {
    %c0_i32 = arith.constant 0 : i32
    %c0_i32_0 = arith.constant 0 : i32
    return %c0_i32, %arg0, %arg1 : i32, i32, i32
  }
}

module attributes {stable_mosaic.version = 11 : i64} {
  func.func @_first_layer_kernel(%arg0: i32, %arg1: i32, %arg2: i32, %arg3: i32, %arg4: memref<1x128x128xbf16, #tpu.memory_space<vmem>>, %arg5: memref<1x128x128xbf16, #tpu.memory_space<vmem>>, %arg6: memref<1x128x128xbf16, #tpu.memory_space<vmem>>, %arg7: memref<1x1x128xf32, #tpu.memory_space<vmem>>, %arg8: memref<128x128xf32, #tpu.memory_space<vmem>>) attributes {dimension_semantics = [#tpu.dimension_semantics<parallel>, #tpu.dimension_semantics<parallel>, #tpu.dimension_semantics<arbitrary>, #tpu.dimension_semantics<arbitrary>], iteration_bounds = array<i64: 2, 2, 2, 2>, scalar_prefetch = 0 : i64, scratch_operands = 1 : i64, tpu.core_type = #tpu.core_type<tc>, window_params = [{transform_indices = @transform_0, window_bounds = array<i64: 1, 128, 128>}, {transform_indices = @transform_1, window_bounds = array<i64: 1, 128, 128>}, {transform_indices = @transform_2, window_bounds = array<i64: 1, 128, 128>}, {transform_indices = @transform_3, window_bounds = array<i64: 1, 1, 128>}]} {
    %c0_i32 = arith.constant 0 : i32
    %0 = arith.cmpi eq, %arg3, %c0_i32 : i32
    %1 = arith.extui %0 : i1 to i32
    %c0_i32_0 = arith.constant 0 : i32
    %2 = arith.cmpi ne, %1, %c0_i32_0 : i32
    scf.if %2 {
      %cst_14 = arith.constant 0.000000e+00 : f32
      %19 = vector.broadcast %cst_14 : f32 to vector<128x128xf32>
      %c0_15 = arith.constant 0 : index
      %c0_16 = arith.constant 0 : index
      %20 = vector.load %arg8[%c0_15, %c0_16] : memref<128x128xf32, #tpu.memory_space<vmem>>, vector<128x128xf32>
      tpu.vector_store %arg8[%c0_15, %c0_16], %19 {strides = array<i32>} : memref<128x128xf32, #tpu.memory_space<vmem>>, vector<128x128xf32>,
    } else {
    }
    %c0_i32_1 = arith.constant 0 : i32
    %3 = arith.cmpi eq, %arg2, %c0_i32_1 : i32
    %c0_i32_2 = arith.constant 0 : i32
    %4 = arith.cmpi eq, %arg3, %c0_i32_2 : i32
    %5 = arith.andi %3, %4 : i1
    %6 = arith.extui %5 : i1 to i32
    %c0_i32_3 = arith.constant 0 : i32
    %7 = arith.cmpi ne, %6, %c0_i32_3 : i32
    scf.if %7 {
      %cst_14 = arith.constant 0.000000e+00 : f32
      %19 = vector.broadcast %cst_14 : f32 to vector<1x1x128xf32>
      %c0_15 = arith.constant 0 : index
      %c0_16 = arith.constant 0 : index
      %c0_17 = arith.constant 0 : index
      %20 = vector.load %arg7[%c0_15, %c0_16, %c0_17] : memref<1x1x128xf32, #tpu.memory_space<vmem>>, vector<1x1x128xf32>
      tpu.vector_store %arg7[%c0_15, %c0_16, %c0_17], %19 {strides = array<i32>} : memref<1x1x128xf32, #tpu.memory_space<vmem>>, vector<1x1x128xf32>,
    } else {
    }
    %c0 = arith.constant 0 : index
    %c0_4 = arith.constant 0 : index
    %8 = vector.load %arg8[%c0, %c0_4] : memref<128x128xf32, #tpu.memory_space<vmem>>, vector<128x128xf32>
    %c0_5 = arith.constant 0 : index
    %c0_6 = arith.constant 0 : index
    %c0_7 = arith.constant 0 : index
    %9 = vector.load %arg4[%c0_5, %c0_6, %c0_7] : memref<1x128x128xbf16, #tpu.memory_space<vmem>>, vector<1x128x128xbf16>
    %10 = vector.shape_cast %9 : vector<1x128x128xbf16> to vector<128x128xbf16>
    %c0_8 = arith.constant 0 : index
    %c0_9 = arith.constant 0 : index
    %c0_10 = arith.constant 0 : index
    %11 = vector.load %arg5[%c0_8, %c0_9, %c0_10] : memref<1x128x128xbf16, #tpu.memory_space<vmem>>, vector<1x128x128xbf16>
    %12 = vector.shape_cast %11 : vector<1x128x128xbf16> to vector<128x128xbf16>
    %cst = arith.constant dense<0.000000e+00> : vector<128x128xf32>
    %13 = tpu.matmul %10, %12, %cst {dimension_numbers = #tpu.dot_dimension_numbers<[1], [0], [0], [1], [0, 0, 1, 1], [], []>} : vector<128x128xbf16>, vector<128x128xbf16>, vector<128x128xf32> -> vector<128x128xf32>
    %14 = arith.addf %8, %13 : vector<128x128xf32>
    %c0_11 = arith.constant 0 : index
    %c0_12 = arith.constant 0 : index
    %15 = vector.load %arg8[%c0_11, %c0_12] : memref<128x128xf32, #tpu.memory_space<vmem>>, vector<128x128xf32>
    tpu.vector_store %arg8[%c0_11, %c0_12], %14 {strides = array<i32>} : memref<128x128xf32, #tpu.memory_space<vmem>>, vector<128x128xf32>,
    %c1_i32 = arith.constant 1 : i32
    %16 = arith.cmpi eq, %arg3, %c1_i32 : i32
    %17 = arith.extui %16 : i1 to i32
    %c0_i32_13 = arith.constant 0 : i32
    %18 = arith.cmpi ne, %17, %c0_i32_13 : i32
    scf.if %18 {
      %c128_i32 = arith.constant 128 : i32
      %19 = arith.muli %arg2, %c128_i32 : i32
      %c128_i32_14 = arith.constant 128 : i32
      %20 = arith.muli %arg1, %c128_i32_14 : i32
      %c128_i32_15 = arith.constant 128 : i32
      %21 = arith.addi %20, %c128_i32_15 : i32
      %22 = arith.cmpi slt, %19, %21 : i32
      %c128_i32_16 = arith.constant 128 : i32
      %23 = arith.addi %19, %c128_i32_16 : i32
      %24 = arith.cmpi slt, %20, %23 : i32
      %25 = arith.andi %22, %24 : i1
      %26 = arith.extui %25 : i1 to i32
      %c0_i32_17 = arith.constant 0 : i32
      %27 = arith.cmpi ne, %26, %c0_i32_17 : i32
      scf.if %27 {
        %42 = tpu.iota {dimensions = array<i32: 0>} : vector<128x128xi32>
        %43 = vector.broadcast %19 : i32 to vector<128x128xi32>
        %44 = arith.addi %43, %42 : vector<128x128xi32>
        %45 = tpu.iota {dimensions = array<i32: 1>} : vector<128x128xi32>
        %46 = vector.broadcast %20 : i32 to vector<128x128xi32>
        %47 = arith.addi %46, %45 : vector<128x128xi32>
        %48 = arith.cmpi eq, %44, %47 : vector<128x128xi32>
        %c0_32 = arith.constant 0 : index
        %c0_33 = arith.constant 0 : index
        %49 = vector.load %arg8[%c0_32, %c0_33] : memref<128x128xf32, #tpu.memory_space<vmem>>, vector<128x128xf32>
        %cst_34 = arith.constant 0.000000e+00 : f32
        %50 = vector.broadcast %cst_34 : f32 to vector<128x128xf32>
        %51 = arith.select %48, %50, %49 : vector<128x128xi1>, vector<128x128xf32>
        %c0_35 = arith.constant 0 : index
        %c0_36 = arith.constant 0 : index
        %52 = vector.load %arg8[%c0_35, %c0_36] : memref<128x128xf32, #tpu.memory_space<vmem>>, vector<128x128xf32>
        tpu.vector_store %arg8[%c0_35, %c0_36], %51 {strides = array<i32>} : memref<128x128xf32, #tpu.memory_space<vmem>>, vector<128x128xf32>,
      } else {
      }
      %c0_18 = arith.constant 0 : index
      %c0_19 = arith.constant 0 : index
      %28 = vector.load %arg8[%c0_18, %c0_19] : memref<128x128xf32, #tpu.memory_space<vmem>>, vector<128x128xf32>
      %29 = arith.truncf %28 : vector<128x128xf32> to vector<128x128xbf16>
      %c0_20 = arith.constant 0 : index
      %c0_21 = arith.constant 0 : index
      %c0_22 = arith.constant 0 : index
      %30 = vector.load %arg6[%c0_20, %c0_21, %c0_22] : memref<1x128x128xbf16, #tpu.memory_space<vmem>>, vector<1x128x128xbf16>
      %31 = vector.shape_cast %30 : vector<1x128x128xbf16> to vector<128x128xbf16>
      %32 = vector.shape_cast %29 : vector<128x128xbf16> to vector<1x128x128xbf16>
      tpu.vector_store %arg6[%c0_20, %c0_21, %c0_22], %32 {strides = array<i32>} : memref<1x128x128xbf16, #tpu.memory_space<vmem>>, vector<1x128x128xbf16>,
      %c0_23 = arith.constant 0 : index
      %c0_24 = arith.constant 0 : index
      %c0_25 = arith.constant 0 : index
      %33 = vector.load %arg7[%c0_23, %c0_24, %c0_25] : memref<1x1x128xf32, #tpu.memory_space<vmem>>, vector<1x1x128xf32>
      %cst_26 = arith.constant dense<0.000000e+00> : vector<128xf32>
      %34 = vector.multi_reduction <add>, %28, %cst_26 [0] : vector<128x128xf32> to vector<128xf32>
      %35 = vector.shape_cast %34 : vector<128xf32> to vector<1x128xf32>
      %36 = vector.shape_cast %35 : vector<1x128xf32> to vector<1x1x128xf32>
      %37 = arith.addf %33, %36 : vector<1x1x128xf32>
      %c0_27 = arith.constant 0 : index
      %c0_28 = arith.constant 0 : index
      %c0_29 = arith.constant 0 : index
      %38 = vector.load %arg7[%c0_27, %c0_28, %c0_29] : memref<1x1x128xf32, #tpu.memory_space<vmem>>, vector<1x1x128xf32>
      tpu.vector_store %arg7[%c0_27, %c0_28, %c0_29], %37 {strides = array<i32>} : memref<1x1x128xf32, #tpu.memory_space<vmem>>, vector<1x1x128xf32>,
      %c1_i32_30 = arith.constant 1 : i32
      %39 = arith.cmpi eq, %arg2, %c1_i32_30 : i32
      %40 = arith.extui %39 : i1 to i32
      %c0_i32_31 = arith.constant 0 : i32
      %41 = arith.cmpi ne, %40, %c0_i32_31 : i32
      scf.if %41 {
        %c0_32 = arith.constant 0 : index
        %c0_33 = arith.constant 0 : index
        %c0_34 = arith.constant 0 : index
        %42 = vector.load %arg7[%c0_32, %c0_33, %c0_34] : memref<1x1x128xf32, #tpu.memory_space<vmem>>, vector<1x1x128xf32>
        %cst_35 = arith.constant 0.000000e+00 : f32
        %43 = vector.broadcast %cst_35 : f32 to vector<1x1x128xf32>
        %44 = arith.cmpf oeq, %42, %43 : vector<1x1x128xf32>
        %45 = tpu.reciprocal %42 {approx = true} : vector<1x1x128xf32> -> vector<1x1x128xf32>
        %cst_36 = arith.constant 0.000000e+00 : f32
        %46 = vector.broadcast %cst_36 : f32 to vector<1x1x128xf32>
        %47 = arith.select %44, %46, %45 : vector<1x1x128xi1>, vector<1x1x128xf32>
        %c0_37 = arith.constant 0 : index
        %c0_38 = arith.constant 0 : index
        %c0_39 = arith.constant 0 : index
        %48 = vector.load %arg7[%c0_37, %c0_38, %c0_39] : memref<1x1x128xf32, #tpu.memory_space<vmem>>, vector<1x1x128xf32>
        tpu.vector_store %arg7[%c0_37, %c0_38, %c0_39], %47 {strides = array<i32>} : memref<1x1x128xf32, #tpu.memory_space<vmem>>, vector<1x1x128xf32>,
      } else {
      }
    } else {
    }
    return
  }
  func.func @transform_0(%arg0: i32, %arg1: i32, %arg2: i32, %arg3: i32) -> (i32, i32, i32) {
    %c0_i32 = arith.constant 0 : i32
    return %arg0, %arg2, %arg3 : i32, i32, i32
  }
  func.func @transform_1(%arg0: i32, %arg1: i32, %arg2: i32, %arg3: i32) -> (i32, i32, i32) {
    %c2_i32 = arith.constant 2 : i32
    %0 = arith.addi %arg0, %c2_i32 : i32
    %c0_i32 = arith.constant 0 : i32
    return %0, %arg3, %arg1 : i32, i32, i32
  }
  func.func @transform_2(%arg0: i32, %arg1: i32, %arg2: i32, %arg3: i32) -> (i32, i32, i32) {
    %c0_i32 = arith.constant 0 : i32
    return %arg0, %arg2, %arg1 : i32, i32, i32
  }
  func.func @transform_3(%arg0: i32, %arg1: i32, %arg2: i32, %arg3: i32) -> (i32, i32, i32) {
    %c0_i32 = arith.constant 0 : i32
    %c0_i32_0 = arith.constant 0 : i32
    return %arg0, %c0_i32, %arg1 : i32, i32, i32
  }
}

module attributes {stable_mosaic.version = 11 : i64} {
  func.func @_mix_kernel(%arg0: i32, %arg1: i32, %arg2: memref<4x3xf32, #tpu.memory_space<smem>>, %arg3: memref<3x128x128xf32, #tpu.memory_space<vmem>>, %arg4: memref<4x128x128xbf16, #tpu.memory_space<vmem>>) attributes {dimension_semantics = [#tpu.dimension_semantics<parallel>, #tpu.dimension_semantics<parallel>], iteration_bounds = array<i64: 2, 2>, scalar_prefetch = 0 : i64, scratch_operands = 0 : i64, tpu.core_type = #tpu.core_type<tc>, window_params = [{transform_indices = @transform_0, window_bounds = array<i64: 4, 3>}, {transform_indices = @transform_1, window_bounds = array<i64: 3, 128, 128>}, {transform_indices = @transform_2, window_bounds = array<i64: 4, 128, 128>}]} {
    %c0 = arith.constant 0 : index
    %c0_0 = arith.constant 0 : index
    %c0_1 = arith.constant 0 : index
    %0 = vector.load %arg3[%c0, %c0_0, %c0_1] : memref<3x128x128xf32, #tpu.memory_space<vmem>>, vector<1x128x128xf32>
    %1 = vector.shape_cast %0 : vector<1x128x128xf32> to vector<128x128xf32>
    %c0_2 = arith.constant 0 : index
    %c0_3 = arith.constant 0 : index
    %2 = memref.load %arg2[%c0_2, %c0_3] : memref<4x3xf32, #tpu.memory_space<smem>>
    %3 = vector.broadcast %2 : f32 to vector<128x128xf32>
    %4 = arith.mulf %1, %3 : vector<128x128xf32>
    %c1 = arith.constant 1 : index
    %c0_4 = arith.constant 0 : index
    %c0_5 = arith.constant 0 : index
    %5 = vector.load %arg3[%c1, %c0_4, %c0_5] : memref<3x128x128xf32, #tpu.memory_space<vmem>>, vector<1x128x128xf32>
    %6 = vector.shape_cast %5 : vector<1x128x128xf32> to vector<128x128xf32>
    %c0_6 = arith.constant 0 : index
    %c1_7 = arith.constant 1 : index
    %7 = memref.load %arg2[%c0_6, %c1_7] : memref<4x3xf32, #tpu.memory_space<smem>>
    %8 = vector.broadcast %7 : f32 to vector<128x128xf32>
    %9 = arith.mulf %6, %8 : vector<128x128xf32>
    %10 = arith.addf %4, %9 : vector<128x128xf32>
    %c2 = arith.constant 2 : index
    %c0_8 = arith.constant 0 : index
    %c0_9 = arith.constant 0 : index
    %11 = vector.load %arg3[%c2, %c0_8, %c0_9] : memref<3x128x128xf32, #tpu.memory_space<vmem>>, vector<1x128x128xf32>
    %12 = vector.shape_cast %11 : vector<1x128x128xf32> to vector<128x128xf32>
    %c0_10 = arith.constant 0 : index
    %c2_11 = arith.constant 2 : index
    %13 = memref.load %arg2[%c0_10, %c2_11] : memref<4x3xf32, #tpu.memory_space<smem>>
    %14 = vector.broadcast %13 : f32 to vector<128x128xf32>
    %15 = arith.mulf %12, %14 : vector<128x128xf32>
    %16 = arith.addf %10, %15 : vector<128x128xf32>
    %17 = arith.truncf %16 : vector<128x128xf32> to vector<128x128xbf16>
    %c0_12 = arith.constant 0 : index
    %c0_13 = arith.constant 0 : index
    %c0_14 = arith.constant 0 : index
    %18 = vector.load %arg4[%c0_12, %c0_13, %c0_14] : memref<4x128x128xbf16, #tpu.memory_space<vmem>>, vector<1x128x128xbf16>
    %19 = vector.shape_cast %18 : vector<1x128x128xbf16> to vector<128x128xbf16>
    %20 = vector.shape_cast %17 : vector<128x128xbf16> to vector<1x128x128xbf16>
    tpu.vector_store %arg4[%c0_12, %c0_13, %c0_14], %20 {strides = array<i32>} : memref<4x128x128xbf16, #tpu.memory_space<vmem>>, vector<1x128x128xbf16>,
    %c0_15 = arith.constant 0 : index
    %c0_16 = arith.constant 0 : index
    %c0_17 = arith.constant 0 : index
    %21 = vector.load %arg3[%c0_15, %c0_16, %c0_17] : memref<3x128x128xf32, #tpu.memory_space<vmem>>, vector<1x128x128xf32>
    %22 = vector.shape_cast %21 : vector<1x128x128xf32> to vector<128x128xf32>
    %c1_18 = arith.constant 1 : index
    %c0_19 = arith.constant 0 : index
    %23 = memref.load %arg2[%c1_18, %c0_19] : memref<4x3xf32, #tpu.memory_space<smem>>
    %24 = vector.broadcast %23 : f32 to vector<128x128xf32>
    %25 = arith.mulf %22, %24 : vector<128x128xf32>
    %c1_20 = arith.constant 1 : index
    %c0_21 = arith.constant 0 : index
    %c0_22 = arith.constant 0 : index
    %26 = vector.load %arg3[%c1_20, %c0_21, %c0_22] : memref<3x128x128xf32, #tpu.memory_space<vmem>>, vector<1x128x128xf32>
    %27 = vector.shape_cast %26 : vector<1x128x128xf32> to vector<128x128xf32>
    %c1_23 = arith.constant 1 : index
    %c1_24 = arith.constant 1 : index
    %28 = memref.load %arg2[%c1_23, %c1_24] : memref<4x3xf32, #tpu.memory_space<smem>>
    %29 = vector.broadcast %28 : f32 to vector<128x128xf32>
    %30 = arith.mulf %27, %29 : vector<128x128xf32>
    %31 = arith.addf %25, %30 : vector<128x128xf32>
    %c2_25 = arith.constant 2 : index
    %c0_26 = arith.constant 0 : index
    %c0_27 = arith.constant 0 : index
    %32 = vector.load %arg3[%c2_25, %c0_26, %c0_27] : memref<3x128x128xf32, #tpu.memory_space<vmem>>, vector<1x128x128xf32>
    %33 = vector.shape_cast %32 : vector<1x128x128xf32> to vector<128x128xf32>
    %c1_28 = arith.constant 1 : index
    %c2_29 = arith.constant 2 : index
    %34 = memref.load %arg2[%c1_28, %c2_29] : memref<4x3xf32, #tpu.memory_space<smem>>
    %35 = vector.broadcast %34 : f32 to vector<128x128xf32>
    %36 = arith.mulf %33, %35 : vector<128x128xf32>
    %37 = arith.addf %31, %36 : vector<128x128xf32>
    %38 = arith.truncf %37 : vector<128x128xf32> to vector<128x128xbf16>
    %c1_30 = arith.constant 1 : index
    %c0_31 = arith.constant 0 : index
    %c0_32 = arith.constant 0 : index
    %39 = vector.load %arg4[%c1_30, %c0_31, %c0_32] : memref<4x128x128xbf16, #tpu.memory_space<vmem>>, vector<1x128x128xbf16>
    %40 = vector.shape_cast %39 : vector<1x128x128xbf16> to vector<128x128xbf16>
    %41 = vector.shape_cast %38 : vector<128x128xbf16> to vector<1x128x128xbf16>
    tpu.vector_store %arg4[%c1_30, %c0_31, %c0_32], %41 {strides = array<i32>} : memref<4x128x128xbf16, #tpu.memory_space<vmem>>, vector<1x128x128xbf16>,
    %c0_33 = arith.constant 0 : index
    %c0_34 = arith.constant 0 : index
    %c0_35 = arith.constant 0 : index
    %42 = vector.load %arg3[%c0_33, %c0_34, %c0_35] : memref<3x128x128xf32, #tpu.memory_space<vmem>>, vector<1x128x128xf32>
    %43 = vector.shape_cast %42 : vector<1x128x128xf32> to vector<128x128xf32>
    %c2_36 = arith.constant 2 : index
    %c0_37 = arith.constant 0 : index
    %44 = memref.load %arg2[%c2_36, %c0_37] : memref<4x3xf32, #tpu.memory_space<smem>>
    %45 = vector.broadcast %44 : f32 to vector<128x128xf32>
    %46 = arith.mulf %43, %45 : vector<128x128xf32>
    %c1_38 = arith.constant 1 : index
    %c0_39 = arith.constant 0 : index
    %c0_40 = arith.constant 0 : index
    %47 = vector.load %arg3[%c1_38, %c0_39, %c0_40] : memref<3x128x128xf32, #tpu.memory_space<vmem>>, vector<1x128x128xf32>
    %48 = vector.shape_cast %47 : vector<1x128x128xf32> to vector<128x128xf32>
    %c2_41 = arith.constant 2 : index
    %c1_42 = arith.constant 1 : index
    %49 = memref.load %arg2[%c2_41, %c1_42] : memref<4x3xf32, #tpu.memory_space<smem>>
    %50 = vector.broadcast %49 : f32 to vector<128x128xf32>
    %51 = arith.mulf %48, %50 : vector<128x128xf32>
    %52 = arith.addf %46, %51 : vector<128x128xf32>
    %c2_43 = arith.constant 2 : index
    %c0_44 = arith.constant 0 : index
    %c0_45 = arith.constant 0 : index
    %53 = vector.load %arg3[%c2_43, %c0_44, %c0_45] : memref<3x128x128xf32, #tpu.memory_space<vmem>>, vector<1x128x128xf32>
    %54 = vector.shape_cast %53 : vector<1x128x128xf32> to vector<128x128xf32>
    %c2_46 = arith.constant 2 : index
    %c2_47 = arith.constant 2 : index
    %55 = memref.load %arg2[%c2_46, %c2_47] : memref<4x3xf32, #tpu.memory_space<smem>>
    %56 = vector.broadcast %55 : f32 to vector<128x128xf32>
    %57 = arith.mulf %54, %56 : vector<128x128xf32>
    %58 = arith.addf %52, %57 : vector<128x128xf32>
    %59 = arith.truncf %58 : vector<128x128xf32> to vector<128x128xbf16>
    %c2_48 = arith.constant 2 : index
    %c0_49 = arith.constant 0 : index
    %c0_50 = arith.constant 0 : index
    %60 = vector.load %arg4[%c2_48, %c0_49, %c0_50] : memref<4x128x128xbf16, #tpu.memory_space<vmem>>, vector<1x128x128xbf16>
    %61 = vector.shape_cast %60 : vector<1x128x128xbf16> to vector<128x128xbf16>
    %62 = vector.shape_cast %59 : vector<128x128xbf16> to vector<1x128x128xbf16>
    tpu.vector_store %arg4[%c2_48, %c0_49, %c0_50], %62 {strides = array<i32>} : memref<4x128x128xbf16, #tpu.memory_space<vmem>>, vector<1x128x128xbf16>,
    %c0_51 = arith.constant 0 : index
    %c0_52 = arith.constant 0 : index
    %c0_53 = arith.constant 0 : index
    %63 = vector.load %arg3[%c0_51, %c0_52, %c0_53] : memref<3x128x128xf32, #tpu.memory_space<vmem>>, vector<1x128x128xf32>
    %64 = vector.shape_cast %63 : vector<1x128x128xf32> to vector<128x128xf32>
    %c3 = arith.constant 3 : index
    %c0_54 = arith.constant 0 : index
    %65 = memref.load %arg2[%c3, %c0_54] : memref<4x3xf32, #tpu.memory_space<smem>>
    %66 = vector.broadcast %65 : f32 to vector<128x128xf32>
    %67 = arith.mulf %64, %66 : vector<128x128xf32>
    %c1_55 = arith.constant 1 : index
    %c0_56 = arith.constant 0 : index
    %c0_57 = arith.constant 0 : index
    %68 = vector.load %arg3[%c1_55, %c0_56, %c0_57] : memref<3x128x128xf32, #tpu.memory_space<vmem>>, vector<1x128x128xf32>
    %69 = vector.shape_cast %68 : vector<1x128x128xf32> to vector<128x128xf32>
    %c3_58 = arith.constant 3 : index
    %c1_59 = arith.constant 1 : index
    %70 = memref.load %arg2[%c3_58, %c1_59] : memref<4x3xf32, #tpu.memory_space<smem>>
    %71 = vector.broadcast %70 : f32 to vector<128x128xf32>
    %72 = arith.mulf %69, %71 : vector<128x128xf32>
    %73 = arith.addf %67, %72 : vector<128x128xf32>
    %c2_60 = arith.constant 2 : index
    %c0_61 = arith.constant 0 : index
    %c0_62 = arith.constant 0 : index
    %74 = vector.load %arg3[%c2_60, %c0_61, %c0_62] : memref<3x128x128xf32, #tpu.memory_space<vmem>>, vector<1x128x128xf32>
    %75 = vector.shape_cast %74 : vector<1x128x128xf32> to vector<128x128xf32>
    %c3_63 = arith.constant 3 : index
    %c2_64 = arith.constant 2 : index
    %76 = memref.load %arg2[%c3_63, %c2_64] : memref<4x3xf32, #tpu.memory_space<smem>>
    %77 = vector.broadcast %76 : f32 to vector<128x128xf32>
    %78 = arith.mulf %75, %77 : vector<128x128xf32>
    %79 = arith.addf %73, %78 : vector<128x128xf32>
    %80 = arith.truncf %79 : vector<128x128xf32> to vector<128x128xbf16>
    %c3_65 = arith.constant 3 : index
    %c0_66 = arith.constant 0 : index
    %c0_67 = arith.constant 0 : index
    %81 = vector.load %arg4[%c3_65, %c0_66, %c0_67] : memref<4x128x128xbf16, #tpu.memory_space<vmem>>, vector<1x128x128xbf16>
    %82 = vector.shape_cast %81 : vector<1x128x128xbf16> to vector<128x128xbf16>
    %83 = vector.shape_cast %80 : vector<128x128xbf16> to vector<1x128x128xbf16>
    tpu.vector_store %arg4[%c3_65, %c0_66, %c0_67], %83 {strides = array<i32>} : memref<4x128x128xbf16, #tpu.memory_space<vmem>>, vector<1x128x128xbf16>,
    return
  }
  func.func @transform_0(%arg0: i32, %arg1: i32) -> (i32, i32) {
    %c0_i32 = arith.constant 0 : i32
    %c0_i32_0 = arith.constant 0 : i32
    %c0_i32_1 = arith.constant 0 : i32
    return %c0_i32, %c0_i32_0 : i32, i32
  }
  func.func @transform_1(%arg0: i32, %arg1: i32) -> (i32, i32, i32) {
    %c0_i32 = arith.constant 0 : i32
    %c0_i32_0 = arith.constant 0 : i32
    return %c0_i32, %arg0, %arg1 : i32, i32, i32
  }
  func.func @transform_2(%arg0: i32, %arg1: i32) -> (i32, i32, i32) {
    %c0_i32 = arith.constant 0 : i32
    %c0_i32_0 = arith.constant 0 : i32
    return %c0_i32, %arg0, %arg1 : i32, i32, i32
  }
}

module attributes {stable_mosaic.version = 11 : i64} {
  func.func @_next_layer_kernel(%arg0: i32, %arg1: i32, %arg2: i32, %arg3: i32, %arg4: memref<1x128x128xbf16, #tpu.memory_space<vmem>>, %arg5: memref<1x1x128xf32, #tpu.memory_space<vmem>>, %arg6: memref<1x128x128xbf16, #tpu.memory_space<vmem>>, %arg7: memref<1x128x128xbf16, #tpu.memory_space<vmem>>, %arg8: memref<1x1x128xf32, #tpu.memory_space<vmem>>, %arg9: memref<128x128xf32, #tpu.memory_space<vmem>>) attributes {dimension_semantics = [#tpu.dimension_semantics<parallel>, #tpu.dimension_semantics<parallel>, #tpu.dimension_semantics<arbitrary>, #tpu.dimension_semantics<arbitrary>], iteration_bounds = array<i64: 2, 2, 2, 2>, scalar_prefetch = 0 : i64, scratch_operands = 1 : i64, tpu.core_type = #tpu.core_type<tc>, window_params = [{transform_indices = @transform_0, window_bounds = array<i64: 1, 128, 128>}, {transform_indices = @transform_1, window_bounds = array<i64: 1, 1, 128>}, {transform_indices = @transform_2, window_bounds = array<i64: 1, 128, 128>}, {transform_indices = @transform_3, window_bounds = array<i64: 1, 128, 128>}, {transform_indices = @transform_4, window_bounds = array<i64: 1, 1, 128>}]} {
    %c0_i32 = arith.constant 0 : i32
    %0 = arith.cmpi eq, %arg3, %c0_i32 : i32
    %1 = arith.extui %0 : i1 to i32
    %c0_i32_0 = arith.constant 0 : i32
    %2 = arith.cmpi ne, %1, %c0_i32_0 : i32
    scf.if %2 {
      %cst_17 = arith.constant 0.000000e+00 : f32
      %25 = vector.broadcast %cst_17 : f32 to vector<128x128xf32>
      %c0_18 = arith.constant 0 : index
      %c0_19 = arith.constant 0 : index
      %26 = vector.load %arg9[%c0_18, %c0_19] : memref<128x128xf32, #tpu.memory_space<vmem>>, vector<128x128xf32>
      tpu.vector_store %arg9[%c0_18, %c0_19], %25 {strides = array<i32>} : memref<128x128xf32, #tpu.memory_space<vmem>>, vector<128x128xf32>,
    } else {
    }
    %c0_i32_1 = arith.constant 0 : i32
    %3 = arith.cmpi eq, %arg2, %c0_i32_1 : i32
    %c0_i32_2 = arith.constant 0 : i32
    %4 = arith.cmpi eq, %arg3, %c0_i32_2 : i32
    %5 = arith.andi %3, %4 : i1
    %6 = arith.extui %5 : i1 to i32
    %c0_i32_3 = arith.constant 0 : i32
    %7 = arith.cmpi ne, %6, %c0_i32_3 : i32
    scf.if %7 {
      %cst_17 = arith.constant 0.000000e+00 : f32
      %25 = vector.broadcast %cst_17 : f32 to vector<1x1x128xf32>
      %c0_18 = arith.constant 0 : index
      %c0_19 = arith.constant 0 : index
      %c0_20 = arith.constant 0 : index
      %26 = vector.load %arg8[%c0_18, %c0_19, %c0_20] : memref<1x1x128xf32, #tpu.memory_space<vmem>>, vector<1x1x128xf32>
      tpu.vector_store %arg8[%c0_18, %c0_19, %c0_20], %25 {strides = array<i32>} : memref<1x1x128xf32, #tpu.memory_space<vmem>>, vector<1x1x128xf32>,
    } else {
    }
    %c0 = arith.constant 0 : index
    %c0_4 = arith.constant 0 : index
    %c0_5 = arith.constant 0 : index
    %8 = vector.load %arg4[%c0, %c0_4, %c0_5] : memref<1x128x128xbf16, #tpu.memory_space<vmem>>, vector<1x128x128xbf16>
    %9 = vector.shape_cast %8 : vector<1x128x128xbf16> to vector<128x128xbf16>
    %c0_6 = arith.constant 0 : index
    %c0_7 = arith.constant 0 : index
    %c0_8 = arith.constant 0 : index
    %10 = vector.load %arg5[%c0_6, %c0_7, %c0_8] : memref<1x1x128xf32, #tpu.memory_space<vmem>>, vector<1x1x128xf32>
    %11 = vector.shape_cast %10 : vector<1x1x128xf32> to vector<1x128xf32>
    %12 = arith.extf %9 : vector<128x128xbf16> to vector<128x128xf32>
    %13 = vector.broadcast %11 : vector<1x128xf32> to vector<128x128xf32>
    %14 = arith.mulf %12, %13 : vector<128x128xf32>
    %15 = arith.truncf %14 : vector<128x128xf32> to vector<128x128xbf16>
    %c0_9 = arith.constant 0 : index
    %c0_10 = arith.constant 0 : index
    %16 = vector.load %arg9[%c0_9, %c0_10] : memref<128x128xf32, #tpu.memory_space<vmem>>, vector<128x128xf32>
    %c0_11 = arith.constant 0 : index
    %c0_12 = arith.constant 0 : index
    %c0_13 = arith.constant 0 : index
    %17 = vector.load %arg6[%c0_11, %c0_12, %c0_13] : memref<1x128x128xbf16, #tpu.memory_space<vmem>>, vector<1x128x128xbf16>
    %18 = vector.shape_cast %17 : vector<1x128x128xbf16> to vector<128x128xbf16>
    %cst = arith.constant dense<0.000000e+00> : vector<128x128xf32>
    %19 = tpu.matmul %15, %18, %cst {dimension_numbers = #tpu.dot_dimension_numbers<[1], [0], [0], [1], [0, 0, 1, 1], [], []>} : vector<128x128xbf16>, vector<128x128xbf16>, vector<128x128xf32> -> vector<128x128xf32>
    %20 = arith.addf %16, %19 : vector<128x128xf32>
    %c0_14 = arith.constant 0 : index
    %c0_15 = arith.constant 0 : index
    %21 = vector.load %arg9[%c0_14, %c0_15] : memref<128x128xf32, #tpu.memory_space<vmem>>, vector<128x128xf32>
    tpu.vector_store %arg9[%c0_14, %c0_15], %20 {strides = array<i32>} : memref<128x128xf32, #tpu.memory_space<vmem>>, vector<128x128xf32>,
    %c1_i32 = arith.constant 1 : i32
    %22 = arith.cmpi eq, %arg3, %c1_i32 : i32
    %23 = arith.extui %22 : i1 to i32
    %c0_i32_16 = arith.constant 0 : i32
    %24 = arith.cmpi ne, %23, %c0_i32_16 : i32
    scf.if %24 {
      %c128_i32 = arith.constant 128 : i32
      %25 = arith.muli %arg2, %c128_i32 : i32
      %c128_i32_17 = arith.constant 128 : i32
      %26 = arith.muli %arg1, %c128_i32_17 : i32
      %c128_i32_18 = arith.constant 128 : i32
      %27 = arith.addi %26, %c128_i32_18 : i32
      %28 = arith.cmpi slt, %25, %27 : i32
      %c128_i32_19 = arith.constant 128 : i32
      %29 = arith.addi %25, %c128_i32_19 : i32
      %30 = arith.cmpi slt, %26, %29 : i32
      %31 = arith.andi %28, %30 : i1
      %32 = arith.extui %31 : i1 to i32
      %c0_i32_20 = arith.constant 0 : i32
      %33 = arith.cmpi ne, %32, %c0_i32_20 : i32
      scf.if %33 {
        %48 = tpu.iota {dimensions = array<i32: 0>} : vector<128x128xi32>
        %49 = vector.broadcast %25 : i32 to vector<128x128xi32>
        %50 = arith.addi %49, %48 : vector<128x128xi32>
        %51 = tpu.iota {dimensions = array<i32: 1>} : vector<128x128xi32>
        %52 = vector.broadcast %26 : i32 to vector<128x128xi32>
        %53 = arith.addi %52, %51 : vector<128x128xi32>
        %54 = arith.cmpi eq, %50, %53 : vector<128x128xi32>
        %c0_35 = arith.constant 0 : index
        %c0_36 = arith.constant 0 : index
        %55 = vector.load %arg9[%c0_35, %c0_36] : memref<128x128xf32, #tpu.memory_space<vmem>>, vector<128x128xf32>
        %cst_37 = arith.constant 0.000000e+00 : f32
        %56 = vector.broadcast %cst_37 : f32 to vector<128x128xf32>
        %57 = arith.select %54, %56, %55 : vector<128x128xi1>, vector<128x128xf32>
        %c0_38 = arith.constant 0 : index
        %c0_39 = arith.constant 0 : index
        %58 = vector.load %arg9[%c0_38, %c0_39] : memref<128x128xf32, #tpu.memory_space<vmem>>, vector<128x128xf32>
        tpu.vector_store %arg9[%c0_38, %c0_39], %57 {strides = array<i32>} : memref<128x128xf32, #tpu.memory_space<vmem>>, vector<128x128xf32>,
      } else {
      }
      %c0_21 = arith.constant 0 : index
      %c0_22 = arith.constant 0 : index
      %34 = vector.load %arg9[%c0_21, %c0_22] : memref<128x128xf32, #tpu.memory_space<vmem>>, vector<128x128xf32>
      %35 = arith.truncf %34 : vector<128x128xf32> to vector<128x128xbf16>
      %c0_23 = arith.constant 0 : index
      %c0_24 = arith.constant 0 : index
      %c0_25 = arith.constant 0 : index
      %36 = vector.load %arg7[%c0_23, %c0_24, %c0_25] : memref<1x128x128xbf16, #tpu.memory_space<vmem>>, vector<1x128x128xbf16>
      %37 = vector.shape_cast %36 : vector<1x128x128xbf16> to vector<128x128xbf16>
      %38 = vector.shape_cast %35 : vector<128x128xbf16> to vector<1x128x128xbf16>
      tpu.vector_store %arg7[%c0_23, %c0_24, %c0_25], %38 {strides = array<i32>} : memref<1x128x128xbf16, #tpu.memory_space<vmem>>, vector<1x128x128xbf16>,
      %c0_26 = arith.constant 0 : index
      %c0_27 = arith.constant 0 : index
      %c0_28 = arith.constant 0 : index
      %39 = vector.load %arg8[%c0_26, %c0_27, %c0_28] : memref<1x1x128xf32, #tpu.memory_space<vmem>>, vector<1x1x128xf32>
      %cst_29 = arith.constant dense<0.000000e+00> : vector<128xf32>
      %40 = vector.multi_reduction <add>, %34, %cst_29 [0] : vector<128x128xf32> to vector<128xf32>
      %41 = vector.shape_cast %40 : vector<128xf32> to vector<1x128xf32>
      %42 = vector.shape_cast %41 : vector<1x128xf32> to vector<1x1x128xf32>
      %43 = arith.addf %39, %42 : vector<1x1x128xf32>
      %c0_30 = arith.constant 0 : index
      %c0_31 = arith.constant 0 : index
      %c0_32 = arith.constant 0 : index
      %44 = vector.load %arg8[%c0_30, %c0_31, %c0_32] : memref<1x1x128xf32, #tpu.memory_space<vmem>>, vector<1x1x128xf32>
      tpu.vector_store %arg8[%c0_30, %c0_31, %c0_32], %43 {strides = array<i32>} : memref<1x1x128xf32, #tpu.memory_space<vmem>>, vector<1x1x128xf32>,
      %c1_i32_33 = arith.constant 1 : i32
      %45 = arith.cmpi eq, %arg2, %c1_i32_33 : i32
      %46 = arith.extui %45 : i1 to i32
      %c0_i32_34 = arith.constant 0 : i32
      %47 = arith.cmpi ne, %46, %c0_i32_34 : i32
      scf.if %47 {
        %c0_35 = arith.constant 0 : index
        %c0_36 = arith.constant 0 : index
        %c0_37 = arith.constant 0 : index
        %48 = vector.load %arg8[%c0_35, %c0_36, %c0_37] : memref<1x1x128xf32, #tpu.memory_space<vmem>>, vector<1x1x128xf32>
        %cst_38 = arith.constant 0.000000e+00 : f32
        %49 = vector.broadcast %cst_38 : f32 to vector<1x1x128xf32>
        %50 = arith.cmpf oeq, %48, %49 : vector<1x1x128xf32>
        %51 = tpu.reciprocal %48 {approx = true} : vector<1x1x128xf32> -> vector<1x1x128xf32>
        %cst_39 = arith.constant 0.000000e+00 : f32
        %52 = vector.broadcast %cst_39 : f32 to vector<1x1x128xf32>
        %53 = arith.select %50, %52, %51 : vector<1x1x128xi1>, vector<1x1x128xf32>
        %c0_40 = arith.constant 0 : index
        %c0_41 = arith.constant 0 : index
        %c0_42 = arith.constant 0 : index
        %54 = vector.load %arg8[%c0_40, %c0_41, %c0_42] : memref<1x1x128xf32, #tpu.memory_space<vmem>>, vector<1x1x128xf32>
        tpu.vector_store %arg8[%c0_40, %c0_41, %c0_42], %53 {strides = array<i32>} : memref<1x1x128xf32, #tpu.memory_space<vmem>>, vector<1x1x128xf32>,
      } else {
      }
    } else {
    }
    return
  }
  func.func @transform_0(%arg0: i32, %arg1: i32, %arg2: i32, %arg3: i32) -> (i32, i32, i32) {
    %c0_i32 = arith.constant 0 : i32
    return %arg0, %arg2, %arg3 : i32, i32, i32
  }
  func.func @transform_1(%arg0: i32, %arg1: i32, %arg2: i32, %arg3: i32) -> (i32, i32, i32) {
    %c0_i32 = arith.constant 0 : i32
    %c0_i32_0 = arith.constant 0 : i32
    return %arg0, %c0_i32, %arg3 : i32, i32, i32
  }
  func.func @transform_2(%arg0: i32, %arg1: i32, %arg2: i32, %arg3: i32) -> (i32, i32, i32) {
    %c0_i32 = arith.constant 0 : i32
    return %arg0, %arg3, %arg1 : i32, i32, i32
  }
  func.func @transform_3(%arg0: i32, %arg1: i32, %arg2: i32, %arg3: i32) -> (i32, i32, i32) {
    %c0_i32 = arith.constant 0 : i32
    return %arg0, %arg2, %arg1 : i32, i32, i32
  }
  func.func @transform_4(%arg0: i32, %arg1: i32, %arg2: i32, %arg3: i32) -> (i32, i32, i32) {
    %c0_i32 = arith.constant 0 : i32
    %c0_i32_0 = arith.constant 0 : i32
    return %arg0, %c0_i32, %arg1 : i32, i32, i32
  }
}

module attributes {stable_mosaic.version = 11 : i64} {
  func.func @_matmul_kernel(%arg0: i32, %arg1: memref<256x64xf32, #tpu.memory_space<vmem>>, %arg2: memref<64x16xf32, #tpu.memory_space<vmem>>, %arg3: memref<256x16xbf16, #tpu.memory_space<vmem>>) attributes {dimension_semantics = [#tpu.dimension_semantics<parallel>], iteration_bounds = array<i64: 1>, scalar_prefetch = 0 : i64, scratch_operands = 0 : i64, tpu.core_type = #tpu.core_type<tc>, window_params = [{transform_indices = @transform_0, window_bounds = array<i64: 256, 64>}, {pipeline_mode = #tpu.pipeline_mode<synchronous>, transform_indices = @transform_1, window_bounds = array<i64: 64, 16>}, {transform_indices = @transform_2, window_bounds = array<i64: 256, 16>}]} {
    %c0 = arith.constant 0 : index
    %c0_0 = arith.constant 0 : index
    %0 = vector.load %arg1[%c0, %c0_0] : memref<256x64xf32, #tpu.memory_space<vmem>>, vector<256x64xf32>
    %c0_1 = arith.constant 0 : index
    %c0_2 = arith.constant 0 : index
    %1 = vector.load %arg2[%c0_1, %c0_2] : memref<64x16xf32, #tpu.memory_space<vmem>>, vector<64x16xf32>
    %cst = arith.constant dense<0.000000e+00> : vector<256x16xf32>
    %2 = tpu.matmul %0, %1, %cst {dimension_numbers = #tpu.dot_dimension_numbers<[1], [0], [0], [1], [0, 0, 1, 1], [], []>} : vector<256x64xf32>, vector<64x16xf32>, vector<256x16xf32> -> vector<256x16xf32>
    %3 = arith.truncf %2 : vector<256x16xf32> to vector<256x16xbf16>
    %c0_3 = arith.constant 0 : index
    %c0_4 = arith.constant 0 : index
    %4 = vector.load %arg3[%c0_3, %c0_4] : memref<256x16xbf16, #tpu.memory_space<vmem>>, vector<256x16xbf16>
    tpu.vector_store %arg3[%c0_3, %c0_4], %3 {strides = array<i32>} : memref<256x16xbf16, #tpu.memory_space<vmem>>, vector<256x16xbf16>,
    return
  }
  func.func @transform_0(%arg0: i32) -> (i32, i32) {
    %c0_i32 = arith.constant 0 : i32
    %c0_i32_0 = arith.constant 0 : i32
    return %arg0, %c0_i32 : i32, i32
  }
  func.func @transform_1(%arg0: i32) -> (i32, i32) {
    %c0_i32 = arith.constant 0 : i32
    %c0_i32_0 = arith.constant 0 : i32
    %c0_i32_1 = arith.constant 0 : i32
    return %c0_i32, %c0_i32_0 : i32, i32
  }
  func.func @transform_2(%arg0: i32) -> (i32, i32) {
    %c0_i32 = arith.constant 0 : i32
    %c0_i32_0 = arith.constant 0 : i32
    return %arg0, %c0_i32 : i32, i32
  }
}

module attributes {stable_mosaic.version = 11 : i64} {
  func.func @_gcn_lin1_kernel(%arg0: i32, %arg1: i32, %arg2: i32, %arg3: memref<16x128xbf16, #tpu.memory_space<vmem>>, %arg4: memref<1x128x128xbf16, #tpu.memory_space<vmem>>, %arg5: memref<1x1x128xf32, #tpu.memory_space<vmem>>, %arg6: memref<16x1xf32, #tpu.memory_space<vmem>>, %arg7: memref<1x16x16xf32, #tpu.memory_space<vmem>>, %arg8: memref<16x1xf32, #tpu.memory_space<vmem>>, %arg9: memref<16x128xf32, #tpu.memory_space<vmem>>, %arg10: memref<16x128xf32, #tpu.memory_space<vmem>>, %arg11: memref<16x128xf32, #tpu.memory_space<vmem>>) attributes {dimension_semantics = [#tpu.dimension_semantics<parallel>, #tpu.dimension_semantics<arbitrary>, #tpu.dimension_semantics<arbitrary>], iteration_bounds = array<i64: 2, 2, 2>, scalar_prefetch = 0 : i64, scratch_operands = 2 : i64, tpu.core_type = #tpu.core_type<tc>, window_params = [{transform_indices = @transform_0, window_bounds = array<i64: 16, 128>}, {transform_indices = @transform_1, window_bounds = array<i64: 1, 128, 128>}, {transform_indices = @transform_2, window_bounds = array<i64: 1, 1, 128>}, {pipeline_mode = #tpu.pipeline_mode<synchronous>, transform_indices = @transform_3, window_bounds = array<i64: 16, 1>}, {transform_indices = @transform_4, window_bounds = array<i64: 1, 16, 16>}, {pipeline_mode = #tpu.pipeline_mode<synchronous>, transform_indices = @transform_5, window_bounds = array<i64: 16, 1>}, {transform_indices = @transform_6, window_bounds = array<i64: 16, 128>}]} {
    %c0_i32 = arith.constant 0 : i32
    %0 = arith.cmpi eq, %arg1, %c0_i32 : i32
    %c0_i32_0 = arith.constant 0 : i32
    %1 = arith.cmpi eq, %arg2, %c0_i32_0 : i32
    %2 = arith.andi %0, %1 : i1
    %3 = arith.extui %2 : i1 to i32
    %c0_i32_1 = arith.constant 0 : i32
    %4 = arith.cmpi ne, %3, %c0_i32_1 : i32
    scf.if %4 {
      %cst_13 = arith.constant 0.000000e+00 : f32
      %18 = vector.broadcast %cst_13 : f32 to vector<16x128xf32>
      %c0_14 = arith.constant 0 : index
      %c0_15 = arith.constant 0 : index
      %19 = vector.load %arg11[%c0_14, %c0_15] : memref<16x128xf32, #tpu.memory_space<vmem>>, vector<16x128xf32>
      tpu.vector_store %arg11[%c0_14, %c0_15], %18 {strides = array<i32>} : memref<16x128xf32, #tpu.memory_space<vmem>>, vector<16x128xf32>,
    } else {
    }
    %c0_i32_2 = arith.constant 0 : i32
    %5 = arith.cmpi eq, %arg2, %c0_i32_2 : i32
    %6 = arith.extui %5 : i1 to i32
    %c0_i32_3 = arith.constant 0 : i32
    %7 = arith.cmpi ne, %6, %c0_i32_3 : i32
    scf.if %7 {
      %cst_13 = arith.constant 0.000000e+00 : f32
      %18 = vector.broadcast %cst_13 : f32 to vector<16x128xf32>
      %c0_14 = arith.constant 0 : index
      %c0_15 = arith.constant 0 : index
      %19 = vector.load %arg10[%c0_14, %c0_15] : memref<16x128xf32, #tpu.memory_space<vmem>>, vector<16x128xf32>
      tpu.vector_store %arg10[%c0_14, %c0_15], %18 {strides = array<i32>} : memref<16x128xf32, #tpu.memory_space<vmem>>, vector<16x128xf32>,
    } else {
    }
    %c0 = arith.constant 0 : index
    %c0_4 = arith.constant 0 : index
    %8 = vector.load %arg10[%c0, %c0_4] : memref<16x128xf32, #tpu.memory_space<vmem>>, vector<16x128xf32>
    %c0_5 = arith.constant 0 : index
    %c0_6 = arith.constant 0 : index
    %9 = vector.load %arg3[%c0_5, %c0_6] : memref<16x128xbf16, #tpu.memory_space<vmem>>, vector<16x128xbf16>
    %c0_7 = arith.constant 0 : index
    %c0_8 = arith.constant 0 : index
    %c0_9 = arith.constant 0 : index
    %10 = vector.load %arg4[%c0_7, %c0_8, %c0_9] : memref<1x128x128xbf16, #tpu.memory_space<vmem>>, vector<1x128x128xbf16>
    %11 = vector.shape_cast %10 : vector<1x128x128xbf16> to vector<128x128xbf16>
    %cst = arith.constant dense<0.000000e+00> : vector<16x128xf32>
    %12 = tpu.matmul %9, %11, %cst {dimension_numbers = #tpu.dot_dimension_numbers<[1], [0], [0], [1], [0, 0, 1, 1], [], []>} : vector<16x128xbf16>, vector<128x128xbf16>, vector<16x128xf32> -> vector<16x128xf32>
    %13 = arith.addf %8, %12 : vector<16x128xf32>
    %c0_10 = arith.constant 0 : index
    %c0_11 = arith.constant 0 : index
    %14 = vector.load %arg10[%c0_10, %c0_11] : memref<16x128xf32, #tpu.memory_space<vmem>>, vector<16x128xf32>
    tpu.vector_store %arg10[%c0_10, %c0_11], %13 {strides = array<i32>} : memref<16x128xf32, #tpu.memory_space<vmem>>, vector<16x128xf32>,
    %c1_i32 = arith.constant 1 : i32
    %15 = arith.cmpi eq, %arg2, %c1_i32 : i32
    %16 = arith.extui %15 : i1 to i32
    %c0_i32_12 = arith.constant 0 : i32
    %17 = arith.cmpi ne, %16, %c0_i32_12 : i32
    scf.if %17 {
      %c0_13 = arith.constant 0 : index
      %c0_14 = arith.constant 0 : index
      %18 = vector.load %arg10[%c0_13, %c0_14] : memref<16x128xf32, #tpu.memory_space<vmem>>, vector<16x128xf32>
      %c0_15 = arith.constant 0 : index
      %c0_16 = arith.constant 0 : index
      %c0_17 = arith.constant 0 : index
      %19 = vector.load %arg5[%c0_15, %c0_16, %c0_17] : memref<1x1x128xf32, #tpu.memory_space<vmem>>, vector<1x1x128xf32>
      %20 = vector.shape_cast %19 : vector<1x1x128xf32> to vector<1x128xf32>
      %21 = vector.broadcast %20 : vector<1x128xf32> to vector<16x128xf32>
      %22 = arith.mulf %18, %21 : vector<16x128xf32>
      %c0_18 = arith.constant 0 : index
      %c0_19 = arith.constant 0 : index
      %23 = vector.load %arg6[%c0_18, %c0_19] : memref<16x1xf32, #tpu.memory_space<vmem>>, vector<16x1xf32>
      %24 = vector.broadcast %23 : vector<16x1xf32> to vector<16x128xf32>
      %25 = arith.addf %22, %24 : vector<16x128xf32>
      %cst_20 = arith.constant 0.000000e+00 : f32
      %26 = vector.broadcast %cst_20 : f32 to vector<16x128xf32>
      %27 = arith.maximumf %25, %26 : vector<16x128xf32>
      %c0_21 = arith.constant 0 : index
      %c0_22 = arith.constant 0 : index
      %28 = vector.load %arg11[%c0_21, %c0_22] : memref<16x128xf32, #tpu.memory_space<vmem>>, vector<16x128xf32>
      %c0_23 = arith.constant 0 : index
      %c0_24 = arith.constant 0 : index
      %c0_25 = arith.constant 0 : index
      %29 = vector.load %arg7[%c0_23, %c0_24, %c0_25] : memref<1x16x16xf32, #tpu.memory_space<vmem>>, vector<1x16x16xf32>
      %30 = vector.shape_cast %29 : vector<1x16x16xf32> to vector<16x16xf32>
      %cst_26 = arith.constant dense<0.000000e+00> : vector<16x128xf32>
      %31 = tpu.matmul %30, %27, %cst_26 {dimension_numbers = #tpu.dot_dimension_numbers<[1], [0], [0], [1], [0, 0, 1, 1], [], []>} : vector<16x16xf32>, vector<16x128xf32>, vector<16x128xf32> -> vector<16x128xf32>
      %32 = arith.addf %28, %31 : vector<16x128xf32>
      %c0_27 = arith.constant 0 : index
      %c0_28 = arith.constant 0 : index
      %33 = vector.load %arg11[%c0_27, %c0_28] : memref<16x128xf32, #tpu.memory_space<vmem>>, vector<16x128xf32>
      tpu.vector_store %arg11[%c0_27, %c0_28], %32 {strides = array<i32>} : memref<16x128xf32, #tpu.memory_space<vmem>>, vector<16x128xf32>,
      %c1_i32_29 = arith.constant 1 : i32
      %34 = arith.cmpi eq, %arg1, %c1_i32_29 : i32
      %35 = arith.extui %34 : i1 to i32
      %c0_i32_30 = arith.constant 0 : i32
      %36 = arith.cmpi ne, %35, %c0_i32_30 : i32
      scf.if %36 {
        %c0_31 = arith.constant 0 : index
        %c0_32 = arith.constant 0 : index
        %37 = vector.load %arg11[%c0_31, %c0_32] : memref<16x128xf32, #tpu.memory_space<vmem>>, vector<16x128xf32>
        %c0_33 = arith.constant 0 : index
        %c0_34 = arith.constant 0 : index
        %38 = vector.load %arg8[%c0_33, %c0_34] : memref<16x1xf32, #tpu.memory_space<vmem>>, vector<16x1xf32>
        %39 = vector.broadcast %38 : vector<16x1xf32> to vector<16x128xf32>
        %40 = arith.addf %37, %39 : vector<16x128xf32>
        %cst_35 = arith.constant 0.000000e+00 : f32
        %41 = vector.broadcast %cst_35 : f32 to vector<16x128xf32>
        %42 = arith.maximumf %40, %41 : vector<16x128xf32>
        %c0_36 = arith.constant 0 : index
        %c0_37 = arith.constant 0 : index
        %43 = vector.load %arg9[%c0_36, %c0_37] : memref<16x128xf32, #tpu.memory_space<vmem>>, vector<16x128xf32>
        tpu.vector_store %arg9[%c0_36, %c0_37], %42 {strides = array<i32>} : memref<16x128xf32, #tpu.memory_space<vmem>>, vector<16x128xf32>,
      } else {
      }
    } else {
    }
    return
  }
  func.func @transform_0(%arg0: i32, %arg1: i32, %arg2: i32) -> (i32, i32) {
    %c0_i32 = arith.constant 0 : i32
    %c0_i32_0 = arith.constant 0 : i32
    return %c0_i32, %arg2 : i32, i32
  }
  func.func @transform_1(%arg0: i32, %arg1: i32, %arg2: i32) -> (i32, i32, i32) {
    %c0_i32 = arith.constant 0 : i32
    return %arg1, %arg2, %arg0 : i32, i32, i32
  }
  func.func @transform_2(%arg0: i32, %arg1: i32, %arg2: i32) -> (i32, i32, i32) {
    %c0_i32 = arith.constant 0 : i32
    %c0_i32_0 = arith.constant 0 : i32
    return %arg1, %c0_i32, %arg0 : i32, i32, i32
  }
  func.func @transform_3(%arg0: i32, %arg1: i32, %arg2: i32) -> (i32, i32) {
    %c0_i32 = arith.constant 0 : i32
    %c0_i32_0 = arith.constant 0 : i32
    %c0_i32_1 = arith.constant 0 : i32
    return %c0_i32, %c0_i32_0 : i32, i32
  }
  func.func @transform_4(%arg0: i32, %arg1: i32, %arg2: i32) -> (i32, i32, i32) {
    %c0_i32 = arith.constant 0 : i32
    %c0_i32_0 = arith.constant 0 : i32
    %c0_i32_1 = arith.constant 0 : i32
    return %arg1, %c0_i32, %c0_i32_0 : i32, i32, i32
  }
  func.func @transform_5(%arg0: i32, %arg1: i32, %arg2: i32) -> (i32, i32) {
    %c0_i32 = arith.constant 0 : i32
    %c0_i32_0 = arith.constant 0 : i32
    %c0_i32_1 = arith.constant 0 : i32
    return %c0_i32, %c0_i32_0 : i32, i32
  }
  func.func @transform_6(%arg0: i32, %arg1: i32, %arg2: i32) -> (i32, i32) {
    %c0_i32 = arith.constant 0 : i32
    %c0_i32_0 = arith.constant 0 : i32
    return %c0_i32, %arg0 : i32, i32
  }
}

</mosaic_0001>

<llo_original>
// kernel: gtn_forward.9
$region0: #{gtn_forward.9}
  #allocation0 [shape = 'u32[]', space=smem, size = 0x4, offset = 0x4, fixed_abs, tag = 'smem constant byte address 0x4 - core index']
  #allocation1 [shape = 'u32[144,128]{1,0:T(1,128)}', space=vmem, size = 0x12000, scoped, tag = 'internal scratch']
  #allocation2 [shape = 'f32[128,128]{1,0:T(8,128)}', space=vmem, size = 0x10000, scoped, tag = 'scratch operand']
  %s0 = inlined_call_operand.vmem [shape: bf16[2,256,256], index: 0, kind: input, shape index: {}]
  %s1 = inlined_call_operand.vmem [shape: f32[2,1,256], index: 1, kind: input, shape index: {}]
  %s2 = inlined_call_operand.vmem [shape: bf16[2,256,256], index: 2, kind: input, shape index: {}]
  %s3 = inlined_call_operand.vmem [shape: bf16[2,256,256], index: 3, kind: output, shape index: {0}]
  %s4 = inlined_call_operand.vmem [shape: f32[2,1,256], index: 4, kind: output, shape index: {1}]
  %5 = xla_tuple %s3, %s4
  %s6 = sld [smem:[#allocation0]]
  $region192: #{gtn_forward.9} parent=0
    _
  %s8 = ssub.s32 1, %s6
  %s9 = scalar_select 0, %s8, %s6
  $region1: #{gtn_forward.9} parent=0
    #allocation3 [shape = 'u8[65536]{0}', space=vmem, size = 0x10000, scoped, tag = 'input window, operand 0']
    #allocation4 [shape = 'u8[65536]{0}', space=vmem, size = 0x10000, scoped, tag = 'input window, operand 2']
    #allocation5 [shape = 'u8[65536]{0}', space=vmem, size = 0x10000, scoped, tag = 'output window, operand 0']
    loop: start=0, step=1, limit=18
    $region2: #{gtn_forward.9} parent=1 // loop_pre_header
      _
    $region3: #{gtn_forward.9} parent=1 // loop_header
      %s11 = sphi 0, %s15
      %p12 = scmp.ge.s32.totalorder %s11, 18
      %s18 = sphi 0, %s44
      %s19 = sphi 0, %s40
      %s20 = sphi 0, %s36
      %s21 = sphi 0, %s32
      %s22 = sphi 0, %s18
      %s23 = sphi 0, %s19
      %s24 = sphi 0, %s20
      %s25 = sphi 0, %s21
      %s26 = sphi 0, %s22
      %s27 = sphi 0, %s23
      %s28 = sphi 0, %s24
      %s29 = sphi 0, %s25
      %s51 = sphi 0, %s53
      %s54 = sphi 0, %s51
      %s55 = sphi 0, %s54
      %s71 = sphi 0, %s55
      %s79 = sphi 0, %s81
      %s82 = sphi 0, %s79
      %s83 = sphi 0, %s82
      %s99 = sphi 0, %s83
      %s109 = sphi 0, %s111
      %s112 = sphi 0, %s109
      %s113 = sphi 0, %s112
      %s129 = sphi 0, %s113
      %s139 = sphi 0, %s141
      %s142 = sphi 0, %s139
      %s143 = sphi 0, %s142
      %s159 = sphi 0, %s143
      %s167 = sphi 0, %s169
      %s170 = sphi 0, %s167
      %s171 = sphi 0, %s170
      %s187 = sphi 0, %s171
    $region4: #{gtn_forward.9} parent=1 // loop_header_branch
      %14 = sbr.rel (%p12) target = $region8
    $region5: #{gtn_forward.9} parent=1 // loop_body
      %s16 = ssub.s32 %s11, 1
      %s17 = ssub.s32 %s11, 2
      %s30 = sadd.s32 1, %s21
      %p31 = scmp.ge.s32.totalorder %s30, 2
      %s32 = scalar_select %p31, 0, %s30
      %s33 = sadd.s32 1, %s20
      %s34 = scalar_select %p31, %s33, %s20
      %p35 = scmp.ge.s32.totalorder %s34, 2
      %s36 = scalar_select %p35, 0, %s34
      %s37 = sadd.s32 1, %s19
      %s38 = scalar_select %p35, %s37, %s19
      %p39 = scmp.ge.s32.totalorder %s38, 2
      %s40 = scalar_select %p39, 0, %s38
      %s41 = sadd.s32 1, %s18
      %s42 = scalar_select %p39, %s41, %s18
      %p43 = scmp.ge.s32.totalorder %s42, 2
      %s44 = scalar_select %p43, 0, %s42
      %s45 = ssub.s32 %s18, %s44
      %s46 = ssub.s32 %s20, %s36
      %s47 = sor.u32 %s45, %s46
      %s48 = ssub.s32 %s21, %s32
      %s49 = sor.u32 %s47, %s48
      %p50 = scmp.eq.s32.totalorder %s49, 0
      %s52 = sadd.s32 %s51, 1
      %s53 = scalar_select %p50, %s51, %s52
      %p56 = pneg %p50
      %p57 = scmp.eq.s32.totalorder %s11, 15
      %p58 = por %p56, %p57
      %p59 = scmp.ne.s32.totalorder %s51, %s54
      %p60 = scmp.eq.s32.totalorder %s11, 0
      %p61 = por %p59, %p60
      %p62 = scmp.ne.s32.totalorder %s51, %s54
      %p63 = scmp.eq.s32.totalorder %s16, 15
      %p64 = por %p62, %p63
      %p65 = scmp.ne.s32.totalorder %s54, %s55
      %p66 = scmp.eq.s32.totalorder %s16, 0
      %p67 = por %p65, %p66
      %p68 = scmp.ne.s32.totalorder %s54, %s55
      %p69 = scmp.eq.s32.totalorder %s17, 15
      %p70 = por %p68, %p69
      %p72 = scmp.ne.s32.totalorder %s55, %s71
      %p73 = scmp.eq.s32.totalorder %s17, 0
      %p74 = por %p72, %p73
      %s75 = ssub.s32 %s18, %s44
      %s76 = ssub.s32 %s21, %s32
      %s77 = sor.u32 %s75, %s76
      %p78 = scmp.eq.s32.totalorder %s77, 0
      %s80 = sadd.s32 %s79, 1
      %s81 = scalar_select %p78, %s79, %s80
      %p84 = pneg %p78
      %p85 = scmp.eq.s32.totalorder %s11, 15
      %p86 = por %p84, %p85
      %p87 = scmp.ne.s32.totalorder %s79, %s82
      %p88 = scmp.eq.s32.totalorder %s11, 0
      %p89 = por %p87, %p88
      %p90 = scmp.ne.s32.totalorder %s79, %s82
      %p91 = scmp.eq.s32.totalorder %s16, 15
      %p92 = por %p90, %p91
      %p93 = scmp.ne.s32.totalorder %s82, %s83
      %p94 = scmp.eq.s32.totalorder %s16, 0
      %p95 = por %p93, %p94
      %p96 = scmp.ne.s32.totalorder %s82, %s83
      %p97 = scmp.eq.s32.totalorder %s17, 15
      %p98 = por %p96, %p97
      %p100 = scmp.ne.s32.totalorder %s83, %s99
      %p101 = scmp.eq.s32.totalorder %s17, 0
      %p102 = por %p100, %p101
      %s103 = ssub.s32 %s18, %s44
      %s104 = ssub.s32 %s21, %s32
      %s105 = sor.u32 %s103, %s104
      %s106 = ssub.s32 %s19, %s40
      %s107 = sor.u32 %s105, %s106
      %p108 = scmp.eq.s32.totalorder %s107, 0
      %s110 = sadd.s32 %s109, 1
      %s111 = scalar_select %p108, %s109, %s110
      %p114 = pneg %p108
      %p115 = scmp.eq.s32.totalorder %s11, 15
      %p116 = por %p114, %p115
      %p117 = scmp.ne.s32.totalorder %s109, %s112
      %p118 = scmp.eq.s32.totalorder %s11, 0
      %p119 = por %p117, %p118
      %p120 = scmp.ne.s32.totalorder %s109, %s112
      %p121 = scmp.eq.s32.totalorder %s16, 15
      %p122 = por %p120, %p121
      %p123 = scmp.ne.s32.totalorder %s112, %s113
      %p124 = scmp.eq.s32.totalorder %s16, 0
      %p125 = por %p123, %p124
      %p126 = scmp.ne.s32.totalorder %s112, %s113
      %p127 = scmp.eq.s32.totalorder %s17, 15
      %p128 = por %p126, %p127
      %p130 = scmp.ne.s32.totalorder %s113, %s129
      %p131 = scmp.eq.s32.totalorder %s17, 0
      %p132 = por %p130, %p131
      %s133 = ssub.s32 %s18, %s44
      %s134 = ssub.s32 %s20, %s36
      %s135 = sor.u32 %s133, %s134
      %s136 = ssub.s32 %s19, %s40
      %s137 = sor.u32 %s135, %s136
      %p138 = scmp.eq.s32.totalorder %s137, 0
      %s140 = sadd.s32 %s139, 1
      %s141 = scalar_select %p138, %s139, %s140
      %p144 = pneg %p138
      %p145 = scmp.eq.s32.totalorder %s11, 15
      %p146 = por %p144, %p145
      %p147 = scmp.ne.s32.totalorder %s139, %s142
      %p148 = scmp.eq.s32.totalorder %s11, 0
      %p149 = por %p147, %p148
      %p150 = scmp.ne.s32.totalorder %s139, %s142
      %p151 = scmp.eq.s32.totalorder %s16, 15
      %p152 = por %p150, %p151
      %p153 = scmp.ne.s32.totalorder %s142, %s143
      %p154 = scmp.eq.s32.totalorder %s16, 0
      %p155 = por %p153, %p154
      %p156 = scmp.ne.s32.totalorder %s142, %s143
      %p157 = scmp.eq.s32.totalorder %s17, 15
      %p158 = por %p156, %p157
      %p160 = scmp.ne.s32.totalorder %s143, %s159
      %p161 = scmp.eq.s32.totalorder %s17, 0
      %p162 = por %p160, %p161
      %s163 = ssub.s32 %s18, %s44
      %s164 = ssub.s32 %s19, %s40
      %s165 = sor.u32 %s163, %s164
      %p166 = scmp.eq.s32.totalorder %s165, 0
      %s168 = sadd.s32 %s167, 1
      %s169 = scalar_select %p166, %s167, %s168
      %p172 = pneg %p166
      %p173 = scmp.eq.s32.totalorder %s11, 15
      %p174 = por %p172, %p173
      %p175 = scmp.ne.s32.totalorder %s167, %s170
      %p176 = scmp.eq.s32.totalorder %s11, 0
      %p177 = por %p175, %p176
      %p178 = scmp.ne.s32.totalorder %s167, %s170
      %p179 = scmp.eq.s32.totalorder %s16, 15
      %p180 = por %p178, %p179
      %p181 = scmp.ne.s32.totalorder %s170, %s171
      %p182 = scmp.eq.s32.totalorder %s16, 0
      %p183 = por %p181, %p182
      %p184 = scmp.ne.s32.totalorder %s170, %s171
      %p185 = scmp.eq.s32.totalorder %s17, 15
      %p186 = por %p184, %p185
      %p188 = scmp.ne.s32.totalorder %s171, %s187
      %p189 = scmp.eq.s32.totalorder %s17, 0
      %p190 = por %p188, %p189
      %p191 = scmp.le.s32.totalorder 1, %s11
      %p192 = scmp.lt.s32.totalorder %s11, 17
      %p193 = pnand %p191, %p192
      %p194 = pneg %p193
      // Predicated region
      $region9: #{gtn_forward.9} parent=5 // pred_check
        _
      $region10: #{gtn_forward.9} parent=5 // pred_check_branch
        %196 = sbr.rel (%p193) target = $region12
      $region11: #{gtn_forward.9} parent=5 // pred_region
        %s197 = ssub.s32 %s11, 1
      $region12: #{gtn_forward.9} parent=5 // pred_fallthru
        _
      %p198 = scmp.lt.s32.totalorder %s11, 16
      // Predicated region
      $region13: #{gtn_forward.9} parent=5 // pred_check
        %p199 = pneg %p198
      $region14: #{gtn_forward.9} parent=5 // pred_check_branch
        %201 = sbr.rel (%p199) target = $region16
      $region15: #{gtn_forward.9} parent=5 // pred_region
        // Predicated region
        $region17: #{gtn_forward.9} parent=15 // pred_check
          %p202 = pneg %p61
        $region18: #{gtn_forward.9} parent=15 // pred_check_branch
          %204 = sbr.rel (%p202) target = $region20
        $region19: #{gtn_forward.9} parent=15 // pred_region
          %s205 = sand.u32 %s51, 1
          %s206 = sand.u32 %s51, 1
          %s207 = smul.addr %s206, 64
          %s208 = scalar_lea.vmem [#allocation3], %s207
          %s209 = smul.u32 16, %s20
          %s210 = smul.addr %s209, 2
          %s211 = sadd.s32 %s21, %s210
          %s212 = smul.addr %s18, 64
          %s213 = sadd.s32 %s211, %s212
          %s214 = smul.addr %s213, 4
          %s215 = scalar_lea.vmem %s0, %s214
          // Predicated region
          $region21: #{gtn_forward.9} parent=19 // pred_check
            _
          $region22: #{gtn_forward.9} parent=19 // pred_check_branch
            %217 = sbr.rel (0) target = $region24
          $region23: #{gtn_forward.9} parent=19 // pred_region
            // Predicated region
            $region25: #{gtn_forward.9} parent=23 // pred_check
              _
            $region26: #{gtn_forward.9} parent=23 // pred_check_branch
              %219 = sbr.rel target = $region28
            $region27: #{gtn_forward.9} parent=23 // pred_region
              // Predicated region
              $region40: #{gtn_forward.9} parent=27 // pred_check
                _
              $region41: #{gtn_forward.9} parent=27 // pred_check_branch
                %264 = sbr.rel (0) target = $region43
              $region42: #{gtn_forward.9} parent=27 // pred_region
                loop: start=0, step=1, limit=1
                $region44: #{gtn_forward.9} parent=42 // loop_pre_header
                  _
                $region45: #{gtn_forward.9} parent=42 // loop_header
                  %s266 = sphi 0, %s270
                  %p267 = scmp.ge.s32.totalorder %s266, 1
                  %s271 = sphi %s215, %s215
                  %s272 = sphi %s208, %s208
                $region46: #{gtn_forward.9} parent=42 // loop_header_branch
                  %269 = sbr.rel (%p267) target = $region50
                $region47: #{gtn_forward.9} parent=42 // loop_body
                  _
                $region48: #{gtn_forward.9} parent=42 // loop_footer
                  %s270 = sadd.s32 1, %s266
                $region49: #{gtn_forward.9} parent=42 // loop_footer_branch
                  %265 = sbr.rel target = $region45
                $region50: #{gtn_forward.9} parent=42 // loop_exit
                  _
                loop: start=0, step=1, limit=1
                $region51: #{gtn_forward.9} parent=42 // loop_pre_header
                  _
                $region52: #{gtn_forward.9} parent=42 // loop_header
                  %s275 = sphi 0, %s279
                  %p276 = scmp.ge.s32.totalorder %s275, 1
                  %s280 = sphi %s215, %s215
                  %s281 = sphi %s208, %s208
                $region53: #{gtn_forward.9} parent=42 // loop_header_branch
                  %278 = sbr.rel (%p276) target = $region57
                $region54: #{gtn_forward.9} parent=42 // loop_body
                  %v282 = vld [vmem:[%s280] sm:$0xf]
                  %283 = vst [vmem:[%s281] sm:$0xf] %v282
                  %v284 = vld [vmem:[%s280 + $0x8] sm:$0xf]
                  %285 = vst [vmem:[%s281 + $0x4] sm:$0xf] %v284
                  %v286 = vld [vmem:[%s280 + $0x10] sm:$0xf]
                  %287 = vst [vmem:[%s281 + $0x8] sm:$0xf] %v286
                  %v288 = vld [vmem:[%s280 + $0x18] sm:$0xf]
                  %289 = vst [vmem:[%s281 + $0xc] sm:$0xf] %v288
                  %v290 = vld [vmem:[%s280 + $0x20] sm:$0xf]
                  %291 = vst [vmem:[%s281 + $0x10] sm:$0xf] %v290
                  %v292 = vld [vmem:[%s280 + $0x28] sm:$0xf]
                  %293 = vst [vmem:[%s281 + $0x14] sm:$0xf] %v292
                  %v294 = vld [vmem:[%s280 + $0x30] sm:$0xf]
                  %295 = vst [vmem:[%s281 + $0x18] sm:$0xf] %v294
                  %v296 = vld [vmem:[%s280 + $0x38] sm:$0xf]
                  %297 = vst [vmem:[%s281 + $0x1c] sm:$0xf] %v296
                  %v298 = vld [vmem:[%s280 + $0x40] sm:$0xf]
                  %299 = vst [vmem:[%s281 + $0x20] sm:$0xf] %v298
                  %v300 = vld [vmem:[%s280 + $0x48] sm:$0xf]
                  %301 = vst [vmem:[%s281 + $0x24] sm:$0xf] %v300
                  %v302 = vld [vmem:[%s280 + $0x50] sm:$0xf]
                  %303 = vst [vmem:[%s281 + $0x28] sm:$0xf] %v302
                  %v304 = vld [vmem:[%s280 + $0x58] sm:$0xf]
                  %305 = vst [vmem:[%s281 + $0x2c] sm:$0xf] %v304
                  %v306 = vld [vmem:[%s280 + $0x60] sm:$0xf]
                  %307 = vst [vmem:[%s281 + $0x30] sm:$0xf] %v306
                  %v308 = vld [vmem:[%s280 + $0x68] sm:$0xf]
                  %309 = vst [vmem:[%s281 + $0x34] sm:$0xf] %v308
                  %v310 = vld [vmem:[%s280 + $0x70] sm:$0xf]
                  %311 = vst [vmem:[%s281 + $0x38] sm:$0xf] %v310
                  %v312 = vld [vmem:[%s280 + $0x78] sm:$0xf]
                  %313 = vst [vmem:[%s281 + $0x3c] sm:$0xf] %v312
                $region55: #{gtn_forward.9} parent=42 // loop_footer
                  %s279 = sadd.s32 1, %s275
                $region56: #{gtn_forward.9} parent=42 // loop_footer_branch
                  %274 = sbr.rel target = $region52
                $region57: #{gtn_forward.9} parent=42 // loop_exit
                  _
              $region43: #{gtn_forward.9} parent=27 // pred_fallthru
                _
            $region28: #{gtn_forward.9} parent=23 // pred_fallthru
              _
            // Predicated region
            $region29: #{gtn_forward.9} parent=23 // pred_check
              _
            $region30: #{gtn_forward.9} parent=23 // pred_check_branch
              %221 = sbr.rel (0) target = $region32
            $region31: #{gtn_forward.9} parent=23 // pred_region
              loop: start=0, step=1, limit=1
              $region33: #{gtn_forward.9} parent=31 // loop_pre_header
                _
              $region34: #{gtn_forward.9} parent=31 // loop_header
                %s224 = sphi 0, %s228
                %p225 = scmp.ge.s32.totalorder %s224, 1
                %s229 = sphi %s215, %s215
                %s230 = sphi %s208, %s208
              $region35: #{gtn_forward.9} parent=31 // loop_header_branch
                %227 = sbr.rel (%p225) target = $region39
              $region36: #{gtn_forward.9} parent=31 // loop_body
                %v231 = vld [vmem:[%s229] sm:$0xf]
                %232 = vst [vmem:[%s230] sm:$0xf] %v231
                %v233 = vld [vmem:[%s229 + $0x8] sm:$0xf]
                %234 = vst [vmem:[%s230 + $0x4] sm:$0xf] %v233
                %v235 = vld [vmem:[%s229 + $0x10] sm:$0xf]
                %236 = vst [vmem:[%s230 + $0x8] sm:$0xf] %v235
                %v237 = vld [vmem:[%s229 + $0x18] sm:$0xf]
                %238 = vst [vmem:[%s230 + $0xc] sm:$0xf] %v237
                %v239 = vld [vmem:[%s229 + $0x20] sm:$0xf]
                %240 = vst [vmem:[%s230 + $0x10] sm:$0xf] %v239
                %v241 = vld [vmem:[%s229 + $0x28] sm:$0xf]
                %242 = vst [vmem:[%s230 + $0x14] sm:$0xf] %v241
                %v243 = vld [vmem:[%s229 + $0x30] sm:$0xf]
                %244 = vst [vmem:[%s230 + $0x18] sm:$0xf] %v243
                %v245 = vld [vmem:[%s229 + $0x38] sm:$0xf]
                %246 = vst [vmem:[%s230 + $0x1c] sm:$0xf] %v245
                %v247 = vld [vmem:[%s229 + $0x40] sm:$0xf]
                %248 = vst [vmem:[%s230 + $0x20] sm:$0xf] %v247
                %v249 = vld [vmem:[%s229 + $0x48] sm:$0xf]
                %250 = vst [vmem:[%s230 + $0x24] sm:$0xf] %v249
                %v251 = vld [vmem:[%s229 + $0x50] sm:$0xf]
                %252 = vst [vmem:[%s230 + $0x28] sm:$0xf] %v251
                %v253 = vld [vmem:[%s229 + $0x58] sm:$0xf]
                %254 = vst [vmem:[%s230 + $0x2c] sm:$0xf] %v253
                %v255 = vld [vmem:[%s229 + $0x60] sm:$0xf]
                %256 = vst [vmem:[%s230 + $0x30] sm:$0xf] %v255
                %v257 = vld [vmem:[%s229 + $0x68] sm:$0xf]
                %258 = vst [vmem:[%s230 + $0x34] sm:$0xf] %v257
                %v259 = vld [vmem:[%s229 + $0x70] sm:$0xf]
                %260 = vst [vmem:[%s230 + $0x38] sm:$0xf] %v259
                %v261 = vld [vmem:[%s229 + $0x78] sm:$0xf]
                %262 = vst [vmem:[%s230 + $0x3c] sm:$0xf] %v261
              $region37: #{gtn_forward.9} parent=31 // loop_footer
                %s228 = sadd.s32 1, %s224
              $region38: #{gtn_forward.9} parent=31 // loop_footer_branch
                %223 = sbr.rel target = $region34
              $region39: #{gtn_forward.9} parent=31 // loop_exit
                _
            $region32: #{gtn_forward.9} parent=23 // pred_fallthru
              _
          $region24: #{gtn_forward.9} parent=19 // pred_fallthru
            _
          %314 = vnop
        $region20: #{gtn_forward.9} parent=15 // pred_fallthru
          _
        // Predicated region
        $region58: #{gtn_forward.9} parent=15 // pred_check
          %p315 = pneg %p89
        $region59: #{gtn_forward.9} parent=15 // pred_check_branch
          %317 = sbr.rel (%p315) target = $region61
        $region60: #{gtn_forward.9} parent=15 // pred_region
          %p318 = scmp.lt.s32.totalorder %s18, 1
          %s319 = scalar_select %p318, %s18, 1
          %p320 = scmp.lt.s32.totalorder %s21, 1
          %s321 = scalar_select %p320, %s21, 1
          %s322 = smul.addr %s319, 2
          %s323 = sadd.s32 %s321, %s322
          %s324 = scalar_lea.vmem %s1, %s323
        $region61: #{gtn_forward.9} parent=15 // pred_fallthru
          _
        // Predicated region
        $region62: #{gtn_forward.9} parent=15 // pred_check
          %p325 = pneg %p119
        $region63: #{gtn_forward.9} parent=15 // pred_check_branch
          %327 = sbr.rel (%p325) target = $region65
        $region64: #{gtn_forward.9} parent=15 // pred_region
          %s328 = sand.u32 %s109, 1
          %s329 = sand.u32 %s109, 1
          %s330 = smul.addr %s329, 64
          %s331 = scalar_lea.vmem [#allocation4], %s330
          %s332 = smul.u32 16, %s21
          %s333 = smul.addr %s332, 2
          %s334 = sadd.s32 %s19, %s333
          %s335 = smul.addr %s18, 64
          %s336 = sadd.s32 %s334, %s335
          %s337 = smul.addr %s336, 4
          %s338 = scalar_lea.vmem %s2, %s337
          // Predicated region
          $region66: #{gtn_forward.9} parent=64 // pred_check
            _
          $region67: #{gtn_forward.9} parent=64 // pred_check_branch
            %340 = sbr.rel (0) target = $region69
          $region68: #{gtn_forward.9} parent=64 // pred_region
            // Predicated region
            $region70: #{gtn_forward.9} parent=68 // pred_check
              _
            $region71: #{gtn_forward.9} parent=68 // pred_check_branch
              %342 = sbr.rel target = $region73
            $region72: #{gtn_forward.9} parent=68 // pred_region
              // Predicated region
              $region85: #{gtn_forward.9} parent=72 // pred_check
                _
              $region86: #{gtn_forward.9} parent=72 // pred_check_branch
                %387 = sbr.rel (0) target = $region88
              $region87: #{gtn_forward.9} parent=72 // pred_region
                loop: start=0, step=1, limit=1
                $region89: #{gtn_forward.9} parent=87 // loop_pre_header
                  _
                $region90: #{gtn_forward.9} parent=87 // loop_header
                  %s389 = sphi 0, %s393
                  %p390 = scmp.ge.s32.totalorder %s389, 1
                  %s394 = sphi %s338, %s338
                  %s395 = sphi %s331, %s331
                $region91: #{gtn_forward.9} parent=87 // loop_header_branch
                  %392 = sbr.rel (%p390) target = $region95
                $region92: #{gtn_forward.9} parent=87 // loop_body
                  _
                $region93: #{gtn_forward.9} parent=87 // loop_footer
                  %s393 = sadd.s32 1, %s389
                $region94: #{gtn_forward.9} parent=87 // loop_footer_branch
                  %388 = sbr.rel target = $region90
                $region95: #{gtn_forward.9} parent=87 // loop_exit
                  _
                loop: start=0, step=1, limit=1
                $region96: #{gtn_forward.9} parent=87 // loop_pre_header
                  _
                $region97: #{gtn_forward.9} parent=87 // loop_header
                  %s398 = sphi 0, %s402
                  %p399 = scmp.ge.s32.totalorder %s398, 1
                  %s403 = sphi %s338, %s338
                  %s404 = sphi %s331, %s331
                $region98: #{gtn_forward.9} parent=87 // loop_header_branch
                  %401 = sbr.rel (%p399) target = $region102
                $region99: #{gtn_forward.9} parent=87 // loop_body
                  %v405 = vld [vmem:[%s403] sm:$0xf]
                  %406 = vst [vmem:[%s404] sm:$0xf] %v405
                  %v407 = vld [vmem:[%s403 + $0x8] sm:$0xf]
                  %408 = vst [vmem:[%s404 + $0x4] sm:$0xf] %v407
                  %v409 = vld [vmem:[%s403 + $0x10] sm:$0xf]
                  %410 = vst [vmem:[%s404 + $0x8] sm:$0xf] %v409
                  %v411 = vld [vmem:[%s403 + $0x18] sm:$0xf]
                  %412 = vst [vmem:[%s404 + $0xc] sm:$0xf] %v411
                  %v413 = vld [vmem:[%s403 + $0x20] sm:$0xf]
                  %414 = vst [vmem:[%s404 + $0x10] sm:$0xf] %v413
                  %v415 = vld [vmem:[%s403 + $0x28] sm:$0xf]
                  %416 = vst [vmem:[%s404 + $0x14] sm:$0xf] %v415
                  %v417 = vld [vmem:[%s403 + $0x30] sm:$0xf]
                  %418 = vst [vmem:[%s404 + $0x18] sm:$0xf] %v417
                  %v419 = vld [vmem:[%s403 + $0x38] sm:$0xf]
                  %420 = vst [vmem:[%s404 + $0x1c] sm:$0xf] %v419
                  %v421 = vld [vmem:[%s403 + $0x40] sm:$0xf]
                  %422 = vst [vmem:[%s404 + $0x20] sm:$0xf] %v421
                  %v423 = vld [vmem:[%s403 + $0x48] sm:$0xf]
                  %424 = vst [vmem:[%s404 + $0x24] sm:$0xf] %v423
                  %v425 = vld [vmem:[%s403 + $0x50] sm:$0xf]
                  %426 = vst [vmem:[%s404 + $0x28] sm:$0xf] %v425
                  %v427 = vld [vmem:[%s403 + $0x58] sm:$0xf]
                  %428 = vst [vmem:[%s404 + $0x2c] sm:$0xf] %v427
                  %v429 = vld [vmem:[%s403 + $0x60] sm:$0xf]
                  %430 = vst [vmem:[%s404 + $0x30] sm:$0xf] %v429
                  %v431 = vld [vmem:[%s403 + $0x68] sm:$0xf]
                  %432 = vst [vmem:[%s404 + $0x34] sm:$0xf] %v431
                  %v433 = vld [vmem:[%s403 + $0x70] sm:$0xf]
                  %434 = vst [vmem:[%s404 + $0x38] sm:$0xf] %v433
                  %v435 = vld [vmem:[%s403 + $0x78] sm:$0xf]
                  %436 = vst [vmem:[%s404 + $0x3c] sm:$0xf] %v435
                $region100: #{gtn_forward.9} parent=87 // loop_footer
                  %s402 = sadd.s32 1, %s398
                $region101: #{gtn_forward.9} parent=87 // loop_footer_branch
                  %397 = sbr.rel target = $region97
                $region102: #{gtn_forward.9} parent=87 // loop_exit
                  _
              $region88: #{gtn_forward.9} parent=72 // pred_fallthru
                _
            $region73: #{gtn_forward.9} parent=68 // pred_fallthru
              _
            // Predicated region
            $region74: #{gtn_forward.9} parent=68 // pred_check
              _
            $region75: #{gtn_forward.9} parent=68 // pred_check_branch
              %344 = sbr.rel (0) target = $region77
            $region76: #{gtn_forward.9} parent=68 // pred_region
              loop: start=0, step=1, limit=1
              $region78: #{gtn_forward.9} parent=76 // loop_pre_header
                _
              $region79: #{gtn_forward.9} parent=76 // loop_header
                %s347 = sphi 0, %s351
                %p348 = scmp.ge.s32.totalorder %s347, 1
                %s352 = sphi %s338, %s338
                %s353 = sphi %s331, %s331
              $region80: #{gtn_forward.9} parent=76 // loop_header_branch
                %350 = sbr.rel (%p348) target = $region84
              $region81: #{gtn_forward.9} parent=76 // loop_body
                %v354 = vld [vmem:[%s352] sm:$0xf]
                %355 = vst [vmem:[%s353] sm:$0xf] %v354
                %v356 = vld [vmem:[%s352 + $0x8] sm:$0xf]
                %357 = vst [vmem:[%s353 + $0x4] sm:$0xf] %v356
                %v358 = vld [vmem:[%s352 + $0x10] sm:$0xf]
                %359 = vst [vmem:[%s353 + $0x8] sm:$0xf] %v358
                %v360 = vld [vmem:[%s352 + $0x18] sm:$0xf]
                %361 = vst [vmem:[%s353 + $0xc] sm:$0xf] %v360
                %v362 = vld [vmem:[%s352 + $0x20] sm:$0xf]
                %363 = vst [vmem:[%s353 + $0x10] sm:$0xf] %v362
                %v364 = vld [vmem:[%s352 + $0x28] sm:$0xf]
                %365 = vst [vmem:[%s353 + $0x14] sm:$0xf] %v364
                %v366 = vld [vmem:[%s352 + $0x30] sm:$0xf]
                %367 = vst [vmem:[%s353 + $0x18] sm:$0xf] %v366
                %v368 = vld [vmem:[%s352 + $0x38] sm:$0xf]
                %369 = vst [vmem:[%s353 + $0x1c] sm:$0xf] %v368
                %v370 = vld [vmem:[%s352 + $0x40] sm:$0xf]
                %371 = vst [vmem:[%s353 + $0x20] sm:$0xf] %v370
                %v372 = vld [vmem:[%s352 + $0x48] sm:$0xf]
                %373 = vst [vmem:[%s353 + $0x24] sm:$0xf] %v372
                %v374 = vld [vmem:[%s352 + $0x50] sm:$0xf]
                %375 = vst [vmem:[%s353 + $0x28] sm:$0xf] %v374
                %v376 = vld [vmem:[%s352 + $0x58] sm:$0xf]
                %377 = vst [vmem:[%s353 + $0x2c] sm:$0xf] %v376
                %v378 = vld [vmem:[%s352 + $0x60] sm:$0xf]
                %379 = vst [vmem:[%s353 + $0x30] sm:$0xf] %v378
                %v380 = vld [vmem:[%s352 + $0x68] sm:$0xf]
                %381 = vst [vmem:[%s353 + $0x34] sm:$0xf] %v380
                %v382 = vld [vmem:[%s352 + $0x70] sm:$0xf]
                %383 = vst [vmem:[%s353 + $0x38] sm:$0xf] %v382
                %v384 = vld [vmem:[%s352 + $0x78] sm:$0xf]
                %385 = vst [vmem:[%s353 + $0x3c] sm:$0xf] %v384
              $region82: #{gtn_forward.9} parent=76 // loop_footer
                %s351 = sadd.s32 1, %s347
              $region83: #{gtn_forward.9} parent=76 // loop_footer_branch
                %346 = sbr.rel target = $region79
              $region84: #{gtn_forward.9} parent=76 // loop_exit
                _
            $region77: #{gtn_forward.9} parent=68 // pred_fallthru
              _
          $region69: #{gtn_forward.9} parent=64 // pred_fallthru
            _
          %437 = vnop
        $region65: #{gtn_forward.9} parent=15 // pred_fallthru
          _
      $region16: #{gtn_forward.9} parent=5 // pred_fallthru
        _
      %p438 = scmp.le.s32.totalorder 1, %s11
      %p439 = scmp.lt.s32.totalorder %s11, 17
      %p440 = pnand %p438, %p439
      %p441 = pneg %p440
      // Predicated region
      $region103: #{gtn_forward.9} parent=5 // pred_check
        _
      $region104: #{gtn_forward.9} parent=5 // pred_check_branch
        %443 = sbr.rel (%p440) target = $region106
      $region105: #{gtn_forward.9} parent=5 // pred_region
        %s444 = ssub.s32 %s11, 1
        %s445 = sand.u32 %s54, 1
        %s446 = sand.u32 %s54, 1
        %s447 = smul.addr %s446, 64
        %s448 = scalar_lea.vmem [#allocation3], %s447
        // Predicated region
        $region107: #{gtn_forward.9} parent=105 // pred_check
          %p449 = pneg %p67
        $region108: #{gtn_forward.9} parent=105 // pred_check_branch
          %451 = sbr.rel (%p449) target = $region110
        $region109: #{gtn_forward.9} parent=105 // pred_region
          _
        $region110: #{gtn_forward.9} parent=105 // pred_fallthru
          _
        %s452 = sand.u32 %s112, 1
        %s453 = sand.u32 %s112, 1
        %s454 = smul.addr %s453, 64
        %s455 = scalar_lea.vmem [#allocation4], %s454
        // Predicated region
        $region111: #{gtn_forward.9} parent=105 // pred_check
          %p456 = pneg %p125
        $region112: #{gtn_forward.9} parent=105 // pred_check_branch
          %458 = sbr.rel (%p456) target = $region114
        $region113: #{gtn_forward.9} parent=105 // pred_region
          _
        $region114: #{gtn_forward.9} parent=105 // pred_fallthru
          _
        %s459 = sand.u32 %s54, 1
        %s460 = sand.u32 %s54, 1
        %s461 = smul.addr %s460, 64
        %s462 = scalar_lea.vmem [#allocation3], %s461
        %p463 = pneg %p67
        %p464 = pneg %p64
        %p465 = scmp.lt.s32.totalorder %s22, 1
        %s466 = scalar_select %p465, %s22, 1
        %p467 = scmp.lt.s32.totalorder %s25, 1
        %s468 = scalar_select %p467, %s25, 1
        %s469 = smul.addr %s466, 2
        %s470 = sadd.s32 %s468, %s469
        %s471 = scalar_lea.vmem %s1, %s470
        %p472 = pneg %p95
        %p473 = pneg %p92
        %s474 = sand.u32 %s112, 1
        %s475 = sand.u32 %s112, 1
        %s476 = smul.addr %s475, 64
        %s477 = scalar_lea.vmem [#allocation4], %s476
        %p478 = pneg %p125
        %p479 = pneg %p122
        %p480 = pneg %p155
        %p481 = pneg %p152
        %s482 = sand.u32 %s142, 1
        %s483 = sand.u32 %s142, 1
        %s484 = smul.addr %s483, 64
        %s485 = scalar_lea.vmem [#allocation5], %s484
        %p486 = pneg %p183
        %p487 = pneg %p180
        %p488 = scmp.lt.s32.totalorder %s22, 1
        %s489 = scalar_select %p488, %s22, 1
        %p490 = scmp.lt.s32.totalorder %s23, 1
        %s491 = scalar_select %p490, %s23, 1
        %s492 = smul.addr %s489, 2
        %s493 = sadd.s32 %s491, %s492
        %s494 = scalar_lea.vmem %s4, %s493
        %s495 = smul.u32 16, %s24
        %p496 = scmp.lt.s32.totalorder %s22, 1
        %s497 = scalar_select %p496, %s22, 1
        %p498 = scmp.lt.s32.totalorder %s25, 1
        %s499 = scalar_select %p498, %s25, 1
        %s500 = smul.addr %s497, 2
        %s501 = sadd.s32 %s499, %s500
        %s502 = scalar_lea.vmem %s1, %s501
        %s503 = smul.u32 16, %s25
        %s504 = smul.u32 16, %s24
        %p505 = scmp.lt.s32.totalorder %s22, 1
        %s506 = scalar_select %p505, %s22, 1
        %p507 = scmp.lt.s32.totalorder %s23, 1
        %s508 = scalar_select %p507, %s23, 1
        %s509 = smul.addr %s506, 2
        %s510 = sadd.s32 %s508, %s509
        %s511 = scalar_lea.vmem %s4, %s510
        %p513 = scmp.eq.s32.totalorder %s25, 0
        // Predicated region
        $region115: #{gtn_forward.9} parent=105 // pred_check
          %p514 = pneg %p513
        $region116: #{gtn_forward.9} parent=105 // pred_check_branch
          %516 = sbr.rel (%p514) target = $region118
        $region117: #{gtn_forward.9} parent=105 // pred_region
          %517 = vst [vmem:[#allocation2] sm:$0xff] 0.0
          %518 = vst [vmem:[#allocation2 + $0x8] sm:$0xff] 0.0
          %519 = vst [vmem:[#allocation2 + $0x10] sm:$0xff] 0.0
          %520 = vst [vmem:[#allocation2 + $0x18] sm:$0xff] 0.0
          %521 = vst [vmem:[#allocation2 + $0x20] sm:$0xff] 0.0
          %522 = vst [vmem:[#allocation2 + $0x28] sm:$0xff] 0.0
          %523 = vst [vmem:[#allocation2 + $0x30] sm:$0xff] 0.0
          %524 = vst [vmem:[#allocation2 + $0x38] sm:$0xff] 0.0
          %525 = vst [vmem:[#allocation2 + $0x40] sm:$0xff] 0.0
          %526 = vst [vmem:[#allocation2 + $0x48] sm:$0xff] 0.0
          %527 = vst [vmem:[#allocation2 + $0x50] sm:$0xff] 0.0
          %528 = vst [vmem:[#allocation2 + $0x58] sm:$0xff] 0.0
          %529 = vst [vmem:[#allocation2 + $0x60] sm:$0xff] 0.0
          %530 = vst [vmem:[#allocation2 + $0x68] sm:$0xff] 0.0
          %531 = vst [vmem:[#allocation2 + $0x70] sm:$0xff] 0.0
          %532 = vst [vmem:[#allocation2 + $0x78] sm:$0xff] 0.0
        $region118: #{gtn_forward.9} parent=105 // pred_fallthru
          _
        %p533 = scmp.eq.s32.totalorder %s24, 0
        %p534 = pnand %p533, %p513
        %p535 = pneg %p534
        // Predicated region
        $region119: #{gtn_forward.9} parent=105 // pred_check
          _
        $region120: #{gtn_forward.9} parent=105 // pred_check_branch
          %537 = sbr.rel (%p534) target = $region122
        $region121: #{gtn_forward.9} parent=105 // pred_region
          %538 = vst [vmem:[%s511] sm:$0x1] 0.0
        $region122: #{gtn_forward.9} parent=105 // pred_fallthru
          _
        %v539 = vld [vmem:[%s448] sm:$0xf]
        %v540 = vld [vmem:[%s448 + $0x4] sm:$0xf]
        %v541 = vld [vmem:[%s448 + $0x8] sm:$0xf]
        %v542 = vld [vmem:[%s448 + $0xc] sm:$0xf]
        %v543 = vld [vmem:[%s448 + $0x10] sm:$0xf]
        %v544 = vld [vmem:[%s448 + $0x14] sm:$0xf]
        %v545 = vld [vmem:[%s448 + $0x18] sm:$0xf]
        %v546 = vld [vmem:[%s448 + $0x1c] sm:$0xf]
        %v547 = vld [vmem:[%s448 + $0x20] sm:$0xf]
        %v548 = vld [vmem:[%s448 + $0x24] sm:$0xf]
        %v549 = vld [vmem:[%s448 + $0x28] sm:$0xf]
        %v550 = vld [vmem:[%s448 + $0x2c] sm:$0xf]
        %v551 = vld [vmem:[%s448 + $0x30] sm:$0xf]
        %v552 = vld [vmem:[%s448 + $0x34] sm:$0xf]
        %v553 = vld [vmem:[%s448 + $0x38] sm:$0xf]
        %v554 = vld [vmem:[%s448 + $0x3c] sm:$0xf]
        %v555 = vld [vmem:[%s502] sm:$0x1]
        %v556 = vunpack.c.l.bf16 %v539
        %v557 = vunpack.c.l.bf16 %v540
        %v558 = vunpack.c.l.bf16 %v541
        %v559 = vunpack.c.l.bf16 %v542
        %v560 = vunpack.c.l.bf16 %v543
        %v561 = vunpack.c.l.bf16 %v544
        %v562 = vunpack.c.l.bf16 %v545
        %v563 = vunpack.c.l.bf16 %v546
        %v564 = vunpack.c.l.bf16 %v547
        %v565 = vunpack.c.l.bf16 %v548
        %v566 = vunpack.c.l.bf16 %v549
        %v567 = vunpack.c.l.bf16 %v550
        %v568 = vunpack.c.l.bf16 %v551
        %v569 = vunpack.c.l.bf16 %v552
        %v570 = vunpack.c.l.bf16 %v553
        %v571 = vunpack.c.l.bf16 %v554
        %v573 = vlaneseq
        %v574 = vshrl.u32 %v573, 7
        %v575 = vsub.s32 0, %v574
        %v576 = vrot.slane %v555, %v575
        %v578 = vmul.f32 %v556, %v576
        %v579 = vmul.f32 %v557, %v576
        %v580 = vmul.f32 %v558, %v576
        %v581 = vmul.f32 %v559, %v576
        %v582 = vmul.f32 %v560, %v576
        %v583 = vmul.f32 %v561, %v576
        %v584 = vmul.f32 %v562, %v576
        %v585 = vmul.f32 %v563, %v576
        %v586 = vmul.f32 %v564, %v576
        %v587 = vmul.f32 %v565, %v576
        %v588 = vmul.f32 %v566, %v576
        %v589 = vmul.f32 %v567, %v576
        %v590 = vmul.f32 %v568, %v576
        %v591 = vmul.f32 %v569, %v576
        %v592 = vmul.f32 %v570, %v576
        %v593 = vmul.f32 %v571, %v576
        %v594 = vpack.c.bf16 %v579, %v578
        %v595 = vpack.c.bf16 %v581, %v580
        %v596 = vpack.c.bf16 %v583, %v582
        %v597 = vpack.c.bf16 %v585, %v584
        %v598 = vpack.c.bf16 %v587, %v586
        %v599 = vpack.c.bf16 %v589, %v588
        %v600 = vpack.c.bf16 %v591, %v590
        %v601 = vpack.c.bf16 %v593, %v592
        %v602 = vld [vmem:[#allocation2] sm:$0xff]
        %v603 = vld [vmem:[#allocation2 + $0x8] sm:$0xff]
        %v604 = vld [vmem:[#allocation2 + $0x10] sm:$0xff]
        %v605 = vld [vmem:[#allocation2 + $0x18] sm:$0xff]
        %v606 = vld [vmem:[#allocation2 + $0x20] sm:$0xff]
        %v607 = vld [vmem:[#allocation2 + $0x28] sm:$0xff]
        %v608 = vld [vmem:[#allocation2 + $0x30] sm:$0xff]
        %v609 = vld [vmem:[#allocation2 + $0x38] sm:$0xff]
        %v610 = vld [vmem:[#allocation2 + $0x40] sm:$0xff]
        %v611 = vld [vmem:[#allocation2 + $0x48] sm:$0xff]
        %v612 = vld [vmem:[#allocation2 + $0x50] sm:$0xff]
        %v613 = vld [vmem:[#allocation2 + $0x58] sm:$0xff]
        %v614 = vld [vmem:[#allocation2 + $0x60] sm:$0xff]
        %v615 = vld [vmem:[#allocation2 + $0x68] sm:$0xff]
        %v616 = vld [vmem:[#allocation2 + $0x70] sm:$0xff]
        %v617 = vld [vmem:[#allocation2 + $0x78] sm:$0xff]
        %v618 = vld [vmem:[%s455] sm:$0xf]
        %v619 = vld [vmem:[%s455 + $0x4] sm:$0xf]
        %v620 = vld [vmem:[%s455 + $0x8] sm:$0xf]
        %v621 = vld [vmem:[%s455 + $0xc] sm:$0xf]
        %v622 = vld [vmem:[%s455 + $0x10] sm:$0xf]
        %v623 = vld [vmem:[%s455 + $0x14] sm:$0xf]
        %v624 = vld [vmem:[%s455 + $0x18] sm:$0xf]
        %v625 = vld [vmem:[%s455 + $0x1c] sm:$0xf]
        %v626 = vld [vmem:[%s455 + $0x20] sm:$0xf]
        %v627 = vld [vmem:[%s455 + $0x24] sm:$0xf]
        %v628 = vld [vmem:[%s455 + $0x28] sm:$0xf]
        %v629 = vld [vmem:[%s455 + $0x2c] sm:$0xf]
        %v630 = vld [vmem:[%s455 + $0x30] sm:$0xf]
        %v631 = vld [vmem:[%s455 + $0x34] sm:$0xf]
        %v632 = vld [vmem:[%s455 + $0x38] sm:$0xf]
        %v633 = vld [vmem:[%s455 + $0x3c] sm:$0xf]
        %v650 = vunpack.c.l.b16 %v618
        %v651 = vunpack.c.l.b16 %v619
        %v652 = vunpack.c.l.b16 %v620
        %v653 = vunpack.c.l.b16 %v621
        %v654 = vunpack.c.l.b16 %v622
        %v655 = vunpack.c.l.b16 %v623
        %v656 = vunpack.c.l.b16 %v624
        %v657 = vunpack.c.l.b16 %v625
        %v658 = vunpack.c.l.b16 %v626
        %v659 = vunpack.c.l.b16 %v627
        %v660 = vunpack.c.l.b16 %v628
        %v661 = vunpack.c.l.b16 %v629
        %v662 = vunpack.c.l.b16 %v630
        %v663 = vunpack.c.l.b16 %v631
        %v664 = vunpack.c.l.b16 %v632
        %v665 = vunpack.c.l.b16 %v633
        %v666 = vpack.c.b16 %v651, %v650
        %v667 = vpack.c.b16 %v653, %v652
        %v668 = vpack.c.b16 %v655, %v654
        %v669 = vpack.c.b16 %v657, %v656
        %v670 = vpack.c.b16 %v659, %v658
        %v671 = vpack.c.b16 %v661, %v660
        %v672 = vpack.c.b16 %v663, %v662
        %v673 = vpack.c.b16 %v665, %v664
        %682 = vmatprep.subr.bf16.mxu0 0
        %683 = vmatpush1.bf16.msra.mxu0 %v666
        %684 = vmatprep.subr.bf16.mxu0 0
        %685 = vmatpush1.bf16.msra.mxu0 %v667
        %686 = vmatprep.subr.bf16.mxu0 0
        %687 = vmatpush1.bf16.msra.mxu0 %v668
        %688 = vmatprep.subr.bf16.mxu0 0
        %689 = vmatpush1.bf16.msra.mxu0 %v669
        %690 = vmatprep.subr.bf16.mxu0 0
        %691 = vmatpush1.bf16.msra.mxu0 %v670
        %692 = vmatprep.subr.bf16.mxu0 0
        %693 = vmatpush1.bf16.msra.mxu0 %v671
        %694 = vmatprep.subr.bf16.mxu0 0
        %695 = vmatpush1.bf16.msra.mxu0 %v672
        %696 = vmatprep.subr.bf16.mxu0 0
        %697 = vmatpush1.bf16.msra.mxu0 %v673
        %698 = vmatprep.subr.bf16.mxu0 0
        %699 = vmatpush1.bf16.msra.mxu0 0
        %700 = vmatprep.subr.bf16.mxu0 0
        %701 = vmatpush1.bf16.msra.mxu0 0
        %702 = vmatprep.subr.bf16.mxu0 0
        %703 = vmatpush1.bf16.msra.mxu0 0
        %704 = vmatprep.subr.bf16.mxu0 0
        %705 = vmatpush1.bf16.msra.mxu0 0
        %706 = vmatprep.subr.bf16.mxu0 0
        %707 = vmatpush1.bf16.msra.mxu0 0
        %708 = vmatprep.subr.bf16.mxu0 0
        %709 = vmatpush1.bf16.msra.mxu0 0
        %710 = vmatprep.subr.bf16.mxu0 0
        %711 = vmatpush1.bf16.msra.mxu0 0
        %712 = vmatprep.subr.bf16.mxu0 0
        %713 = vmatpush1.bf16.msra.mxu0 0
        %714 = vmatprep.mubr.bf16.mxu0 0
        %715 = vmatmul.mubr.bf16.gmra.mrb[0].mxu0 %v594
        %v716 = vpop.f32.mrb[0].mxu0
        %v717 = vadd.f32 0.0, %v716
        %v718 = vpop.f32.mrb[0].mxu0
        %v719 = vpop.f32.mrb[0].mxu0
        %v720 = vadd.f32 0.0, %v719
        %v721 = vpop.f32.mrb[0].mxu0
        %722 = vmatprep.mubr.bf16.mxu0 0
        %723 = vmatmul.mubr.bf16.gmra.mrb[0].mxu0 %v595
        %v724 = vpop.f32.mrb[0].mxu0
        %v725 = vadd.f32 0.0, %v724
        %v726 = vpop.f32.mrb[0].mxu0
        %v727 = vpop.f32.mrb[0].mxu0
        %v728 = vadd.f32 0.0, %v727
        %v729 = vpop.f32.mrb[0].mxu0
        %730 = vmatprep.mubr.bf16.mxu0 0
        %731 = vmatmul.mubr.bf16.gmra.mrb[0].mxu0 %v596
        %v732 = vpop.f32.mrb[0].mxu0
        %v733 = vadd.f32 0.0, %v732
        %v734 = vpop.f32.mrb[0].mxu0
        %v735 = vpop.f32.mrb[0].mxu0
        %v736 = vadd.f32 0.0, %v735
        %v737 = vpop.f32.mrb[0].mxu0
        %738 = vmatprep.mubr.bf16.mxu0 0
        %739 = vmatmul.mubr.bf16.gmra.mrb[0].mxu0 %v597
        %v740 = vpop.f32.mrb[0].mxu0
        %v741 = vadd.f32 0.0, %v740
        %v742 = vpop.f32.mrb[0].mxu0
        %v743 = vpop.f32.mrb[0].mxu0
        %v744 = vadd.f32 0.0, %v743
        %v745 = vpop.f32.mrb[0].mxu0
        %746 = vmatprep.mubr.bf16.mxu0 0
        %747 = vmatmul.mubr.bf16.gmra.mrb[0].mxu0 %v598
        %v748 = vpop.f32.mrb[0].mxu0
        %v749 = vadd.f32 0.0, %v748
        %v750 = vpop.f32.mrb[0].mxu0
        %v751 = vpop.f32.mrb[0].mxu0
        %v752 = vadd.f32 0.0, %v751
        %v753 = vpop.f32.mrb[0].mxu0
        %754 = vmatprep.mubr.bf16.mxu0 0
        %755 = vmatmul.mubr.bf16.gmra.mrb[0].mxu0 %v599
        %v756 = vpop.f32.mrb[0].mxu0
        %v757 = vadd.f32 0.0, %v756
        %v758 = vpop.f32.mrb[0].mxu0
        %v759 = vpop.f32.mrb[0].mxu0
        %v760 = vadd.f32 0.0, %v759
        %v761 = vpop.f32.mrb[0].mxu0
        %762 = vmatprep.mubr.bf16.mxu0 0
        %763 = vmatmul.mubr.bf16.gmra.mrb[0].mxu0 %v600
        %v764 = vpop.f32.mrb[0].mxu0
        %v765 = vadd.f32 0.0, %v764
        %v766 = vpop.f32.mrb[0].mxu0
        %v767 = vpop.f32.mrb[0].mxu0
        %v768 = vadd.f32 0.0, %v767
        %v769 = vpop.f32.mrb[0].mxu0
        %770 = vmatprep.mubr.bf16.mxu0 0
        %771 = vmatmul.mubr.bf16.gmra.mrb[0].mxu0 %v601
        %v772 = vpop.f32.mrb[0].mxu0
        %v773 = vadd.f32 0.0, %v772
        %v774 = vpop.f32.mrb[0].mxu0
        %v775 = vpop.f32.mrb[0].mxu0
        %v776 = vadd.f32 0.0, %v775
        %v777 = vpop.f32.mrb[0].mxu0
        %778 = vdwg.mxu0
        %v779 = vadd.f32 %v602, %v717
        %v780 = vadd.f32 %v603, %v720
        %v781 = vadd.f32 %v604, %v725
        %v782 = vadd.f32 %v605, %v728
        %v783 = vadd.f32 %v606, %v733
        %v784 = vadd.f32 %v607, %v736
        %v785 = vadd.f32 %v608, %v741
        %v786 = vadd.f32 %v609, %v744
        %v787 = vadd.f32 %v610, %v749
        %v788 = vadd.f32 %v611, %v752
        %v789 = vadd.f32 %v612, %v757
        %v790 = vadd.f32 %v613, %v760
        %v791 = vadd.f32 %v614, %v765
        %v792 = vadd.f32 %v615, %v768
        %v793 = vadd.f32 %v616, %v773
        %v794 = vadd.f32 %v617, %v776
        %795 = vst [vmem:[#allocation2] sm:$0xff] %v779
        %796 = vst [vmem:[#allocation2 + $0x8] sm:$0xff] %v780
        %797 = vst [vmem:[#allocation2 + $0x10] sm:$0xff] %v781
        %798 = vst [vmem:[#allocation2 + $0x18] sm:$0xff] %v782
        %799 = vst [vmem:[#allocation2 + $0x20] sm:$0xff] %v783
        %800 = vst [vmem:[#allocation2 + $0x28] sm:$0xff] %v784
        %801 = vst [vmem:[#allocation2 + $0x30] sm:$0xff] %v785
        %802 = vst [vmem:[#allocation2 + $0x38] sm:$0xff] %v786
        %803 = vst [vmem:[#allocation2 + $0x40] sm:$0xff] %v787
        %804 = vst [vmem:[#allocation2 + $0x48] sm:$0xff] %v788
        %805 = vst [vmem:[#allocation2 + $0x50] sm:$0xff] %v789
        %806 = vst [vmem:[#allocation2 + $0x58] sm:$0xff] %v790
        %807 = vst [vmem:[#allocation2 + $0x60] sm:$0xff] %v791
        %808 = vst [vmem:[#allocation2 + $0x68] sm:$0xff] %v792
        %809 = vst [vmem:[#allocation2 + $0x70] sm:$0xff] %v793
        %810 = vst [vmem:[#allocation2 + $0x78] sm:$0xff] %v794
        %p811 = scmp.eq.s32.totalorder %s25, 1
        // Predicated region
        $region123: #{gtn_forward.9} parent=105 // pred_check
          %p812 = pneg %p811
        $region124: #{gtn_forward.9} parent=105 // pred_check_branch
          %814 = sbr.rel (%p812) target = $region126
        $region125: #{gtn_forward.9} parent=105 // pred_region
          %s815 = smul.u32 %s24, 128
          %s816 = smul.u32 %s23, 128
          %s817 = sadd.s32 %s816, 128
          %p818 = scmp.lt.s32.totalorder %s815, %s817
          %s819 = sadd.s32 %s815, 128
          %p820 = scmp.lt.s32.totalorder %s816, %s819
          %p821 = pnand %p818, %p820
          %p822 = pneg %p821
          // Predicated region
          $region127: #{gtn_forward.9} parent=125 // pred_check
            _
          $region128: #{gtn_forward.9} parent=125 // pred_check_branch
            %824 = sbr.rel (%p821) target = $region130
          $region129: #{gtn_forward.9} parent=125 // pred_region
            %v825 = vlaneseq
            %v826 = vshrl.u32 %v825, 7
            %v827 = vadd.s32 %v826, 8
            %v828 = vadd.s32 %v826, 16
            %v829 = vadd.s32 %v826, 24
            %v830 = vadd.s32 %v826, 32
            %v831 = vadd.s32 %v826, 40
            %v832 = vadd.s32 %v826, 48
            %v833 = vadd.s32 %v826, 56
            %v834 = vadd.s32 %v826, 64
            %v835 = vadd.s32 %v826, 72
            %v836 = vadd.s32 %v826, 80
            %v837 = vadd.s32 %v826, 88
            %v838 = vadd.s32 %v826, 96
            %v839 = vadd.s32 %v826, 104
            %v840 = vadd.s32 %v826, 112
            %v841 = vadd.s32 %v826, 120
            %v842 = vstv %s815
            %v843 = vadd.s32 %v842, %v826
            %v844 = vadd.s32 %v842, %v827
            %v845 = vadd.s32 %v842, %v828
            %v846 = vadd.s32 %v842, %v829
            %v847 = vadd.s32 %v842, %v830
            %v848 = vadd.s32 %v842, %v831
            %v849 = vadd.s32 %v842, %v832
            %v850 = vadd.s32 %v842, %v833
            %v851 = vadd.s32 %v842, %v834
            %v852 = vadd.s32 %v842, %v835
            %v853 = vadd.s32 %v842, %v836
            %v854 = vadd.s32 %v842, %v837
            %v855 = vadd.s32 %v842, %v838
            %v856 = vadd.s32 %v842, %v839
            %v857 = vadd.s32 %v842, %v840
            %v858 = vadd.s32 %v842, %v841
            %v859 = vlaneseq
            %v860 = vand.u32 %v859, 127
            %v861 = vstv %s816
            %v862 = vadd.s32 %v861, %v860
            %vm863 = vcmp.eq.s32.totalorder %v843, %v862
            %vm864 = vcmp.eq.s32.totalorder %v844, %v862
            %vm865 = vcmp.eq.s32.totalorder %v845, %v862
            %vm866 = vcmp.eq.s32.totalorder %v846, %v862
            %vm867 = vcmp.eq.s32.totalorder %v847, %v862
            %vm868 = vcmp.eq.s32.totalorder %v848, %v862
            %vm869 = vcmp.eq.s32.totalorder %v849, %v862
            %vm870 = vcmp.eq.s32.totalorder %v850, %v862
            %vm871 = vcmp.eq.s32.totalorder %v851, %v862
            %vm872 = vcmp.eq.s32.totalorder %v852, %v862
            %vm873 = vcmp.eq.s32.totalorder %v853, %v862
            %vm874 = vcmp.eq.s32.totalorder %v854, %v862
            %vm875 = vcmp.eq.s32.totalorder %v855, %v862
            %vm876 = vcmp.eq.s32.totalorder %v856, %v862
            %vm877 = vcmp.eq.s32.totalorder %v857, %v862
            %vm878 = vcmp.eq.s32.totalorder %v858, %v862
            %v879 = vld [vmem:[#allocation2] sm:$0xff]
            %v880 = vld [vmem:[#allocation2 + $0x8] sm:$0xff]
            %v881 = vld [vmem:[#allocation2 + $0x10] sm:$0xff]
            %v882 = vld [vmem:[#allocation2 + $0x18] sm:$0xff]
            %v883 = vld [vmem:[#allocation2 + $0x20] sm:$0xff]
            %v884 = vld [vmem:[#allocation2 + $0x28] sm:$0xff]
            %v885 = vld [vmem:[#allocation2 + $0x30] sm:$0xff]
            %v886 = vld [vmem:[#allocation2 + $0x38] sm:$0xff]
            %v887 = vld [vmem:[#allocation2 + $0x40] sm:$0xff]
            %v888 = vld [vmem:[#allocation2 + $0x48] sm:$0xff]
            %v889 = vld [vmem:[#allocation2 + $0x50] sm:$0xff]
            %v890 = vld [vmem:[#allocation2 + $0x58] sm:$0xff]
            %v891 = vld [vmem:[#allocation2 + $0x60] sm:$0xff]
            %v892 = vld [vmem:[#allocation2 + $0x68] sm:$0xff]
            %v893 = vld [vmem:[#allocation2 + $0x70] sm:$0xff]
            %v894 = vld [vmem:[#allocation2 + $0x78] sm:$0xff]
            %v895 = vsel %vm863, 0.0, %v879
            %v896 = vsel %vm864, 0.0, %v880
            %v897 = vsel %vm865, 0.0, %v881
            %v898 = vsel %vm866, 0.0, %v882
            %v899 = vsel %vm867, 0.0, %v883
            %v900 = vsel %vm868, 0.0, %v884
            %v901 = vsel %vm869, 0.0, %v885
            %v902 = vsel %vm870, 0.0, %v886
            %v903 = vsel %vm871, 0.0, %v887
            %v904 = vsel %vm872, 0.0, %v888
            %v905 = vsel %vm873, 0.0, %v889
            %v906 = vsel %vm874, 0.0, %v890
            %v907 = vsel %vm875, 0.0, %v891
            %v908 = vsel %vm876, 0.0, %v892
            %v909 = vsel %vm877, 0.0, %v893
            %v910 = vsel %vm878, 0.0, %v894
            %911 = vst [vmem:[#allocation2] sm:$0xff] %v895
            %912 = vst [vmem:[#allocation2 + $0x8] sm:$0xff] %v896
            %913 = vst [vmem:[#allocation2 + $0x10] sm:$0xff] %v897
            %914 = vst [vmem:[#allocation2 + $0x18] sm:$0xff] %v898
            %915 = vst [vmem:[#allocation2 + $0x20] sm:$0xff] %v899
            %916 = vst [vmem:[#allocation2 + $0x28] sm:$0xff] %v900
            %917 = vst [vmem:[#allocation2 + $0x30] sm:$0xff] %v901
            %918 = vst [vmem:[#allocation2 + $0x38] sm:$0xff] %v902
            %919 = vst [vmem:[#allocation2 + $0x40] sm:$0xff] %v903
            %920 = vst [vmem:[#allocation2 + $0x48] sm:$0xff] %v904
            %921 = vst [vmem:[#allocation2 + $0x50] sm:$0xff] %v905
            %922 = vst [vmem:[#allocation2 + $0x58] sm:$0xff] %v906
            %923 = vst [vmem:[#allocation2 + $0x60] sm:$0xff] %v907
            %924 = vst [vmem:[#allocation2 + $0x68] sm:$0xff] %v908
            %925 = vst [vmem:[#allocation2 + $0x70] sm:$0xff] %v909
            %926 = vst [vmem:[#allocation2 + $0x78] sm:$0xff] %v910
          $region130: #{gtn_forward.9} parent=125 // pred_fallthru
            _
          %v927 = vld [vmem:[#allocation2] sm:$0xff]
          %v928 = vld [vmem:[#allocation2 + $0x8] sm:$0xff]
          %v929 = vld [vmem:[#allocation2 + $0x10] sm:$0xff]
          %v930 = vld [vmem:[#allocation2 + $0x18] sm:$0xff]
          %v931 = vld [vmem:[#allocation2 + $0x20] sm:$0xff]
          %v932 = vld [vmem:[#allocation2 + $0x28] sm:$0xff]
          %v933 = vld [vmem:[#allocation2 + $0x30] sm:$0xff]
          %v934 = vld [vmem:[#allocation2 + $0x38] sm:$0xff]
          %v935 = vld [vmem:[#allocation2 + $0x40] sm:$0xff]
          %v936 = vld [vmem:[#allocation2 + $0x48] sm:$0xff]
          %v937 = vld [vmem:[#allocation2 + $0x50] sm:$0xff]
          %v938 = vld [vmem:[#allocation2 + $0x58] sm:$0xff]
          %v939 = vld [vmem:[#allocation2 + $0x60] sm:$0xff]
          %v940 = vld [vmem:[#allocation2 + $0x68] sm:$0xff]
          %v941 = vld [vmem:[#allocation2 + $0x70] sm:$0xff]
          %v942 = vld [vmem:[#allocation2 + $0x78] sm:$0xff]
          %v943 = vpack.c.bf16 %v928, %v927
          %v944 = vpack.c.bf16 %v930, %v929
          %v945 = vpack.c.bf16 %v932, %v931
          %v946 = vpack.c.bf16 %v934, %v933
          %v947 = vpack.c.bf16 %v936, %v935
          %v948 = vpack.c.bf16 %v938, %v937
          %v949 = vpack.c.bf16 %v940, %v939
          %v950 = vpack.c.bf16 %v942, %v941
          %v959 = vunpack.c.l.b16 %v943
          %v960 = vunpack.c.h.b16 %v943
          %v961 = vunpack.c.l.b16 %v944
          %v962 = vunpack.c.h.b16 %v944
          %v963 = vunpack.c.l.b16 %v945
          %v964 = vunpack.c.h.b16 %v945
          %v965 = vunpack.c.l.b16 %v946
          %v966 = vunpack.c.h.b16 %v946
          %v967 = vunpack.c.l.b16 %v947
          %v968 = vunpack.c.h.b16 %v947
          %v969 = vunpack.c.l.b16 %v948
          %v970 = vunpack.c.h.b16 %v948
          %v971 = vunpack.c.l.b16 %v949
          %v972 = vunpack.c.h.b16 %v949
          %v973 = vunpack.c.l.b16 %v950
          %v974 = vunpack.c.h.b16 %v950
          %v975 = vpack.c.b16 %v959, %v959
          %v976 = vpack.c.b16 %v960, %v960
          %v977 = vpack.c.b16 %v961, %v961
          %v978 = vpack.c.b16 %v962, %v962
          %v979 = vpack.c.b16 %v963, %v963
          %v980 = vpack.c.b16 %v964, %v964
          %v981 = vpack.c.b16 %v965, %v965
          %v982 = vpack.c.b16 %v966, %v966
          %v983 = vpack.c.b16 %v967, %v967
          %v984 = vpack.c.b16 %v968, %v968
          %v985 = vpack.c.b16 %v969, %v969
          %v986 = vpack.c.b16 %v970, %v970
          %v987 = vpack.c.b16 %v971, %v971
          %v988 = vpack.c.b16 %v972, %v972
          %v989 = vpack.c.b16 %v973, %v973
          %v990 = vpack.c.b16 %v974, %v974
          %1007 = vst [vmem:[%s485] sm:$0xf] %v975
          %1008 = vst [vmem:[%s485 + $0x4] sm:$0xf] %v976
          %1009 = vst [vmem:[%s485 + $0x8] sm:$0xf] %v977
          %1010 = vst [vmem:[%s485 + $0xc] sm:$0xf] %v978
          %1011 = vst [vmem:[%s485 + $0x10] sm:$0xf] %v979
          %1012 = vst [vmem:[%s485 + $0x14] sm:$0xf] %v980
          %1013 = vst [vmem:[%s485 + $0x18] sm:$0xf] %v981
          %1014 = vst [vmem:[%s485 + $0x1c] sm:$0xf] %v982
          %1015 = vst [vmem:[%s485 + $0x20] sm:$0xf] %v983
          %1016 = vst [vmem:[%s485 + $0x24] sm:$0xf] %v984
          %1017 = vst [vmem:[%s485 + $0x28] sm:$0xf] %v985
          %1018 = vst [vmem:[%s485 + $0x2c] sm:$0xf] %v986
          %1019 = vst [vmem:[%s485 + $0x30] sm:$0xf] %v987
          %1020 = vst [vmem:[%s485 + $0x34] sm:$0xf] %v988
          %1021 = vst [vmem:[%s485 + $0x38] sm:$0xf] %v989
          %1022 = vst [vmem:[%s485 + $0x3c] sm:$0xf] %v990
          %v1023 = vld [vmem:[%s511] sm:$0x1]
          %v1024 = vadd.f32 %v927, %v928
          %v1025 = vadd.f32 %v1024, %v929
          %v1026 = vadd.f32 %v1025, %v930
          %v1027 = vadd.f32 %v1026, %v931
          %v1028 = vadd.f32 %v1027, %v932
          %v1029 = vadd.f32 %v1028, %v933
          %v1030 = vadd.f32 %v1029, %v934
          %v1031 = vadd.f32 %v1030, %v935
          %v1032 = vadd.f32 %v1031, %v936
          %v1033 = vadd.f32 %v1032, %v937
          %v1034 = vadd.f32 %v1033, %v938
          %v1035 = vadd.f32 %v1034, %v939
          %v1036 = vadd.f32 %v1035, %v940
          %v1037 = vadd.f32 %v1036, %v941
          %v1038 = vadd.f32 %v1037, %v942
          %v1039 = vrot.slane %v1038, 4
          %v1040 = vadd.f32 %v1038, %v1039
          %v1041 = vrot.slane %v1040, 2
          %v1042 = vadd.f32 %v1040, %v1041
          %v1043 = vrot.slane %v1042, 1
          %v1044 = vadd.f32 %v1042, %v1043
          %v1045 = vadd.f32 %v1023, %v1044
          %1046 = vst [vmem:[%s511] sm:$0x1] %v1045
          %p1047 = scmp.eq.s32.totalorder %s24, 1
          // Predicated region
          $region131: #{gtn_forward.9} parent=125 // pred_check
            %p1048 = pneg %p1047
          $region132: #{gtn_forward.9} parent=125 // pred_check_branch
            %1050 = sbr.rel (%p1048) target = $region134
          $region133: #{gtn_forward.9} parent=125 // pred_region
            %v1051 = vld [vmem:[%s511] sm:$0x1]
            %vm1052 = vcmp.eq.f32.partialorder %v1051, 0.0
            %v1053 = vrcp.pop %v1051
            %v1054 = vsel %vm1052, 0.0, %v1053
            %1055 = vst [vmem:[%s511] sm:$0x1] %v1054
          $region134: #{gtn_forward.9} parent=125 // pred_fallthru
            _
        $region126: #{gtn_forward.9} parent=105 // pred_fallthru
          _
        %s1056 = sand.u32 %s142, 1
        %s1057 = sand.u32 %s142, 1
        %s1058 = smul.addr %s1057, 64
        %s1059 = scalar_lea.vmem [#allocation5], %s1058
        %p1060 = scmp.lt.s32.totalorder %s22, 1
        %s1061 = scalar_select %p1060, %s22, 1
        %p1062 = scmp.lt.s32.totalorder %s23, 1
        %s1063 = scalar_select %p1062, %s23, 1
        %s1064 = smul.addr %s1061, 2
        %s1065 = sadd.s32 %s1063, %s1064
        %s1066 = scalar_lea.vmem %s4, %s1065
        // Predicated region
        $region135: #{gtn_forward.9} parent=105 // pred_check
          %p1067 = pneg %p152
        $region136: #{gtn_forward.9} parent=105 // pred_check_branch
          %1069 = sbr.rel (%p1067) target = $region138
        $region137: #{gtn_forward.9} parent=105 // pred_region
          %s1070 = smul.u32 16, %s24
          %s1071 = smul.addr %s1070, 2
          %s1072 = sadd.s32 %s23, %s1071
          %s1073 = smul.addr %s22, 64
          %s1074 = sadd.s32 %s1072, %s1073
          %s1075 = smul.addr %s1074, 4
          %s1076 = scalar_lea.vmem %s3, %s1075
          // Predicated region
          $region139: #{gtn_forward.9} parent=137 // pred_check
            _
          $region140: #{gtn_forward.9} parent=137 // pred_check_branch
            %1078 = sbr.rel (0) target = $region142
          $region141: #{gtn_forward.9} parent=137 // pred_region
            // Predicated region
            $region143: #{gtn_forward.9} parent=141 // pred_check
              _
            $region144: #{gtn_forward.9} parent=141 // pred_check_branch
              %1080 = sbr.rel target = $region146
            $region145: #{gtn_forward.9} parent=141 // pred_region
              // Predicated region
              $region158: #{gtn_forward.9} parent=145 // pred_check
                _
              $region159: #{gtn_forward.9} parent=145 // pred_check_branch
                %1125 = sbr.rel (0) target = $region161
              $region160: #{gtn_forward.9} parent=145 // pred_region
                loop: start=0, step=1, limit=1
                $region162: #{gtn_forward.9} parent=160 // loop_pre_header
                  _
                $region163: #{gtn_forward.9} parent=160 // loop_header
                  %s1127 = sphi 0, %s1131
                  %p1128 = scmp.ge.s32.totalorder %s1127, 1
                  %s1132 = sphi %s1059, %s1059
                  %s1133 = sphi %s1076, %s1076
                $region164: #{gtn_forward.9} parent=160 // loop_header_branch
                  %1130 = sbr.rel (%p1128) target = $region168
                $region165: #{gtn_forward.9} parent=160 // loop_body
                  _
                $region166: #{gtn_forward.9} parent=160 // loop_footer
                  %s1131 = sadd.s32 1, %s1127
                $region167: #{gtn_forward.9} parent=160 // loop_footer_branch
                  %1126 = sbr.rel target = $region163
                $region168: #{gtn_forward.9} parent=160 // loop_exit
                  _
                loop: start=0, step=1, limit=1
                $region169: #{gtn_forward.9} parent=160 // loop_pre_header
                  _
                $region170: #{gtn_forward.9} parent=160 // loop_header
                  %s1136 = sphi 0, %s1140
                  %p1137 = scmp.ge.s32.totalorder %s1136, 1
                  %s1141 = sphi %s1059, %s1059
                  %s1142 = sphi %s1076, %s1076
                $region171: #{gtn_forward.9} parent=160 // loop_header_branch
                  %1139 = sbr.rel (%p1137) target = $region175
                $region172: #{gtn_forward.9} parent=160 // loop_body
                  %v1143 = vld [vmem:[%s1141] sm:$0xf]
                  %1144 = vst [vmem:[%s1142] sm:$0xf] %v1143
                  %v1145 = vld [vmem:[%s1141 + $0x4] sm:$0xf]
                  %1146 = vst [vmem:[%s1142 + $0x8] sm:$0xf] %v1145
                  %v1147 = vld [vmem:[%s1141 + $0x8] sm:$0xf]
                  %1148 = vst [vmem:[%s1142 + $0x10] sm:$0xf] %v1147
                  %v1149 = vld [vmem:[%s1141 + $0xc] sm:$0xf]
                  %1150 = vst [vmem:[%s1142 + $0x18] sm:$0xf] %v1149
                  %v1151 = vld [vmem:[%s1141 + $0x10] sm:$0xf]
                  %1152 = vst [vmem:[%s1142 + $0x20] sm:$0xf] %v1151
                  %v1153 = vld [vmem:[%s1141 + $0x14] sm:$0xf]
                  %1154 = vst [vmem:[%s1142 + $0x28] sm:$0xf] %v1153
                  %v1155 = vld [vmem:[%s1141 + $0x18] sm:$0xf]
                  %1156 = vst [vmem:[%s1142 + $0x30] sm:$0xf] %v1155
                  %v1157 = vld [vmem:[%s1141 + $0x1c] sm:$0xf]
                  %1158 = vst [vmem:[%s1142 + $0x38] sm:$0xf] %v1157
                  %v1159 = vld [vmem:[%s1141 + $0x20] sm:$0xf]
                  %1160 = vst [vmem:[%s1142 + $0x40] sm:$0xf] %v1159
                  %v1161 = vld [vmem:[%s1141 + $0x24] sm:$0xf]
                  %1162 = vst [vmem:[%s1142 + $0x48] sm:$0xf] %v1161
                  %v1163 = vld [vmem:[%s1141 + $0x28] sm:$0xf]
                  %1164 = vst [vmem:[%s1142 + $0x50] sm:$0xf] %v1163
                  %v1165 = vld [vmem:[%s1141 + $0x2c] sm:$0xf]
                  %1166 = vst [vmem:[%s1142 + $0x58] sm:$0xf] %v1165
                  %v1167 = vld [vmem:[%s1141 + $0x30] sm:$0xf]
                  %1168 = vst [vmem:[%s1142 + $0x60] sm:$0xf] %v1167
                  %v1169 = vld [vmem:[%s1141 + $0x34] sm:$0xf]
                  %1170 = vst [vmem:[%s1142 + $0x68] sm:$0xf] %v1169
                  %v1171 = vld [vmem:[%s1141 + $0x38] sm:$0xf]
                  %1172 = vst [vmem:[%s1142 + $0x70] sm:$0xf] %v1171
                  %v1173 = vld [vmem:[%s1141 + $0x3c] sm:$0xf]
                  %1174 = vst [vmem:[%s1142 + $0x78] sm:$0xf] %v1173
                $region173: #{gtn_forward.9} parent=160 // loop_footer
                  %s1140 = sadd.s32 1, %s1136
                $region174: #{gtn_forward.9} parent=160 // loop_footer_branch
                  %1135 = sbr.rel target = $region170
                $region175: #{gtn_forward.9} parent=160 // loop_exit
                  _
              $region161: #{gtn_forward.9} parent=145 // pred_fallthru
                _
            $region146: #{gtn_forward.9} parent=141 // pred_fallthru
              _
            // Predicated region
            $region147: #{gtn_forward.9} parent=141 // pred_check
              _
            $region148: #{gtn_forward.9} parent=141 // pred_check_branch
              %1082 = sbr.rel (0) target = $region150
            $region149: #{gtn_forward.9} parent=141 // pred_region
              loop: start=0, step=1, limit=1
              $region151: #{gtn_forward.9} parent=149 // loop_pre_header
                _
              $region152: #{gtn_forward.9} parent=149 // loop_header
                %s1085 = sphi 0, %s1089
                %p1086 = scmp.ge.s32.totalorder %s1085, 1
                %s1090 = sphi %s1059, %s1059
                %s1091 = sphi %s1076, %s1076
              $region153: #{gtn_forward.9} parent=149 // loop_header_branch
                %1088 = sbr.rel (%p1086) target = $region157
              $region154: #{gtn_forward.9} parent=149 // loop_body
                %v1092 = vld [vmem:[%s1090] sm:$0xf]
                %1093 = vst [vmem:[%s1091] sm:$0xf] %v1092
                %v1094 = vld [vmem:[%s1090 + $0x4] sm:$0xf]
                %1095 = vst [vmem:[%s1091 + $0x8] sm:$0xf] %v1094
                %v1096 = vld [vmem:[%s1090 + $0x8] sm:$0xf]
                %1097 = vst [vmem:[%s1091 + $0x10] sm:$0xf] %v1096
                %v1098 = vld [vmem:[%s1090 + $0xc] sm:$0xf]
                %1099 = vst [vmem:[%s1091 + $0x18] sm:$0xf] %v1098
                %v1100 = vld [vmem:[%s1090 + $0x10] sm:$0xf]
                %1101 = vst [vmem:[%s1091 + $0x20] sm:$0xf] %v1100
                %v1102 = vld [vmem:[%s1090 + $0x14] sm:$0xf]
                %1103 = vst [vmem:[%s1091 + $0x28] sm:$0xf] %v1102
                %v1104 = vld [vmem:[%s1090 + $0x18] sm:$0xf]
                %1105 = vst [vmem:[%s1091 + $0x30] sm:$0xf] %v1104
                %v1106 = vld [vmem:[%s1090 + $0x1c] sm:$0xf]
                %1107 = vst [vmem:[%s1091 + $0x38] sm:$0xf] %v1106
                %v1108 = vld [vmem:[%s1090 + $0x20] sm:$0xf]
                %1109 = vst [vmem:[%s1091 + $0x40] sm:$0xf] %v1108
                %v1110 = vld [vmem:[%s1090 + $0x24] sm:$0xf]
                %1111 = vst [vmem:[%s1091 + $0x48] sm:$0xf] %v1110
                %v1112 = vld [vmem:[%s1090 + $0x28] sm:$0xf]
                %1113 = vst [vmem:[%s1091 + $0x50] sm:$0xf] %v1112
                %v1114 = vld [vmem:[%s1090 + $0x2c] sm:$0xf]
                %1115 = vst [vmem:[%s1091 + $0x58] sm:$0xf] %v1114
                %v1116 = vld [vmem:[%s1090 + $0x30] sm:$0xf]
                %1117 = vst [vmem:[%s1091 + $0x60] sm:$0xf] %v1116
                %v1118 = vld [vmem:[%s1090 + $0x34] sm:$0xf]
                %1119 = vst [vmem:[%s1091 + $0x68] sm:$0xf] %v1118
                %v1120 = vld [vmem:[%s1090 + $0x38] sm:$0xf]
                %1121 = vst [vmem:[%s1091 + $0x70] sm:$0xf] %v1120
                %v1122 = vld [vmem:[%s1090 + $0x3c] sm:$0xf]
                %1123 = vst [vmem:[%s1091 + $0x78] sm:$0xf] %v1122
              $region155: #{gtn_forward.9} parent=149 // loop_footer
                %s1089 = sadd.s32 1, %s1085
              $region156: #{gtn_forward.9} parent=149 // loop_footer_branch
                %1084 = sbr.rel target = $region152
              $region157: #{gtn_forward.9} parent=149 // loop_exit
                _
            $region150: #{gtn_forward.9} parent=141 // pred_fallthru
              _
          $region142: #{gtn_forward.9} parent=137 // pred_fallthru
            _
          %1175 = vnop
        $region138: #{gtn_forward.9} parent=105 // pred_fallthru
          _
        // Predicated region
        $region176: #{gtn_forward.9} parent=105 // pred_check
          %p1176 = pneg %p180
        $region177: #{gtn_forward.9} parent=105 // pred_check_branch
          %1178 = sbr.rel (%p1176) target = $region179
        $region178: #{gtn_forward.9} parent=105 // pred_region
          _
        $region179: #{gtn_forward.9} parent=105 // pred_fallthru
          _
      $region106: #{gtn_forward.9} parent=5 // pred_fallthru
        _
      %p1179 = scmp.le.s32.totalorder 2, %s11
      // Predicated region
      $region180: #{gtn_forward.9} parent=5 // pred_check
        %p1180 = pneg %p1179
      $region181: #{gtn_forward.9} parent=5 // pred_check_branch
        %1182 = sbr.rel (%p1180) target = $region183
      $region182: #{gtn_forward.9} parent=5 // pred_region
        %s1183 = ssub.s32 %s11, 2
        // Predicated region
        $region184: #{gtn_forward.9} parent=182 // pred_check
          %p1184 = pneg %p158
        $region185: #{gtn_forward.9} parent=182 // pred_check_branch
          %1186 = sbr.rel (%p1184) target = $region187
        $region186: #{gtn_forward.9} parent=182 // pred_region
          %s1187 = sand.u32 %s143, 1
          %s1188 = sand.u32 %s143, 1
          %s1189 = smul.addr %s1188, 64
          %s1190 = scalar_lea.vmem [#allocation5], %s1189
        $region187: #{gtn_forward.9} parent=182 // pred_fallthru
          _
        // Predicated region
        $region188: #{gtn_forward.9} parent=182 // pred_check
          %p1191 = pneg %p186
        $region189: #{gtn_forward.9} parent=182 // pred_check_branch
          %1193 = sbr.rel (%p1191) target = $region191
        $region190: #{gtn_forward.9} parent=182 // pred_region
          %p1194 = scmp.lt.s32.totalorder %s26, 1
          %s1195 = scalar_select %p1194, %s26, 1
          %p1196 = scmp.lt.s32.totalorder %s27, 1
          %s1197 = scalar_select %p1196, %s27, 1
          %s1198 = smul.addr %s1195, 2
          %s1199 = sadd.s32 %s1197, %s1198
          %s1200 = scalar_lea.vmem %s4, %s1199
        $region191: #{gtn_forward.9} parent=182 // pred_fallthru
          _
      $region183: #{gtn_forward.9} parent=5 // pred_fallthru
        _
    $region6: #{gtn_forward.9} parent=1 // loop_footer
      %s15 = sadd.s32 1, %s11
    $region7: #{gtn_forward.9} parent=1 // loop_footer_branch
      %10 = sbr.rel target = $region3
    $region8: #{gtn_forward.9} parent=1 // loop_exit
      _

// kernel: gtn_forward.7
$region0: #{gtn_forward.7}
  #allocation0 [shape = 'u32[]', space=smem, size = 0x4, offset = 0x4, fixed_abs, tag = 'smem constant byte address 0x4 - core index']
  #allocation1 [shape = 'u32[144,128]{1,0:T(1,128)}', space=vmem, size = 0x12000, scoped, tag = 'internal scratch']
  #allocation2 [shape = 'f32[128,128]{1,0:T(8,128)}', space=vmem, size = 0x10000, scoped, tag = 'scratch operand']
  %s0 = inlined_call_operand.vmem [shape: bf16[4,256,256], index: 0, kind: input, shape index: {}, may-alias: {0,1}]
  %s1 = inlined_call_operand.vmem [shape: bf16[4,256,256], index: 1, kind: input, shape index: {}, may-alias: {0,1}]
  %s2 = inlined_call_operand.vmem [shape: bf16[2,256,256], index: 2, kind: output, shape index: {0}]
  %s3 = inlined_call_operand.vmem [shape: f32[2,1,256], index: 3, kind: output, shape index: {1}]
  %4 = xla_tuple %s2, %s3
  %s5 = sld [smem:[#allocation0]]
  $region188: #{gtn_forward.7} parent=0
    _
  %s7 = ssub.s32 1, %s5
  %s8 = scalar_select 0, %s7, %s5
  $region1: #{gtn_forward.7} parent=0
    #allocation3 [shape = 'u8[65536]{0}', space=vmem, size = 0x10000, scoped, tag = 'input window, operand 0']
    #allocation4 [shape = 'u8[65536]{0}', space=vmem, size = 0x10000, scoped, tag = 'input window, operand 1']
    #allocation5 [shape = 'u8[65536]{0}', space=vmem, size = 0x10000, scoped, tag = 'output window, operand 0']
    loop: start=0, step=1, limit=18
    $region2: #{gtn_forward.7} parent=1 // loop_pre_header
      _
    $region3: #{gtn_forward.7} parent=1 // loop_header
      %s10 = sphi 0, %s14
      %p11 = scmp.ge.s32.totalorder %s10, 18
      %s17 = sphi 0, %s43
      %s18 = sphi 0, %s39
      %s19 = sphi 0, %s35
      %s20 = sphi 0, %s31
      %s21 = sphi 0, %s17
      %s22 = sphi 0, %s18
      %s23 = sphi 0, %s19
      %s24 = sphi 0, %s20
      %s25 = sphi 0, %s21
      %s26 = sphi 0, %s22
      %s27 = sphi 0, %s23
      %s28 = sphi 0, %s24
      %s50 = sphi 0, %s52
      %s53 = sphi 0, %s50
      %s54 = sphi 0, %s53
      %s70 = sphi 0, %s54
      %s82 = sphi 0, %s84
      %s85 = sphi 0, %s82
      %s86 = sphi 0, %s85
      %s102 = sphi 0, %s86
      %s112 = sphi 0, %s114
      %s115 = sphi 0, %s112
      %s116 = sphi 0, %s115
      %s132 = sphi 0, %s116
      %s140 = sphi 0, %s142
      %s143 = sphi 0, %s140
      %s144 = sphi 0, %s143
      %s160 = sphi 0, %s144
    $region4: #{gtn_forward.7} parent=1 // loop_header_branch
      %13 = sbr.rel (%p11) target = $region8
    $region5: #{gtn_forward.7} parent=1 // loop_body
      %s15 = ssub.s32 %s10, 1
      %s16 = ssub.s32 %s10, 2
      %s29 = sadd.s32 1, %s20
      %p30 = scmp.ge.s32.totalorder %s29, 2
      %s31 = scalar_select %p30, 0, %s29
      %s32 = sadd.s32 1, %s19
      %s33 = scalar_select %p30, %s32, %s19
      %p34 = scmp.ge.s32.totalorder %s33, 2
      %s35 = scalar_select %p34, 0, %s33
      %s36 = sadd.s32 1, %s18
      %s37 = scalar_select %p34, %s36, %s18
      %p38 = scmp.ge.s32.totalorder %s37, 2
      %s39 = scalar_select %p38, 0, %s37
      %s40 = sadd.s32 1, %s17
      %s41 = scalar_select %p38, %s40, %s17
      %p42 = scmp.ge.s32.totalorder %s41, 2
      %s43 = scalar_select %p42, 0, %s41
      %s44 = ssub.s32 %s17, %s43
      %s45 = ssub.s32 %s19, %s35
      %s46 = sor.u32 %s44, %s45
      %s47 = ssub.s32 %s20, %s31
      %s48 = sor.u32 %s46, %s47
      %p49 = scmp.eq.s32.totalorder %s48, 0
      %s51 = sadd.s32 %s50, 1
      %s52 = scalar_select %p49, %s50, %s51
      %p55 = pneg %p49
      %p56 = scmp.eq.s32.totalorder %s10, 15
      %p57 = por %p55, %p56
      %p58 = scmp.ne.s32.totalorder %s50, %s53
      %p59 = scmp.eq.s32.totalorder %s10, 0
      %p60 = por %p58, %p59
      %p61 = scmp.ne.s32.totalorder %s50, %s53
      %p62 = scmp.eq.s32.totalorder %s15, 15
      %p63 = por %p61, %p62
      %p64 = scmp.ne.s32.totalorder %s53, %s54
      %p65 = scmp.eq.s32.totalorder %s15, 0
      %p66 = por %p64, %p65
      %p67 = scmp.ne.s32.totalorder %s53, %s54
      %p68 = scmp.eq.s32.totalorder %s16, 15
      %p69 = por %p67, %p68
      %p71 = scmp.ne.s32.totalorder %s54, %s70
      %p72 = scmp.eq.s32.totalorder %s16, 0
      %p73 = por %p71, %p72
      %s74 = sadd.s32 %s17, 2
      %s75 = sadd.s32 %s43, 2
      %s76 = ssub.s32 %s74, %s75
      %s77 = ssub.s32 %s20, %s31
      %s78 = sor.u32 %s76, %s77
      %s79 = ssub.s32 %s18, %s39
      %s80 = sor.u32 %s78, %s79
      %p81 = scmp.eq.s32.totalorder %s80, 0
      %s83 = sadd.s32 %s82, 1
      %s84 = scalar_select %p81, %s82, %s83
      %p87 = pneg %p81
      %p88 = scmp.eq.s32.totalorder %s10, 15
      %p89 = por %p87, %p88
      %p90 = scmp.ne.s32.totalorder %s82, %s85
      %p91 = scmp.eq.s32.totalorder %s10, 0
      %p92 = por %p90, %p91
      %p93 = scmp.ne.s32.totalorder %s82, %s85
      %p94 = scmp.eq.s32.totalorder %s15, 15
      %p95 = por %p93, %p94
      %p96 = scmp.ne.s32.totalorder %s85, %s86
      %p97 = scmp.eq.s32.totalorder %s15, 0
      %p98 = por %p96, %p97
      %p99 = scmp.ne.s32.totalorder %s85, %s86
      %p100 = scmp.eq.s32.totalorder %s16, 15
      %p101 = por %p99, %p100
      %p103 = scmp.ne.s32.totalorder %s86, %s102
      %p104 = scmp.eq.s32.totalorder %s16, 0
      %p105 = por %p103, %p104
      %s106 = ssub.s32 %s17, %s43
      %s107 = ssub.s32 %s19, %s35
      %s108 = sor.u32 %s106, %s107
      %s109 = ssub.s32 %s18, %s39
      %s110 = sor.u32 %s108, %s109
      %p111 = scmp.eq.s32.totalorder %s110, 0
      %s113 = sadd.s32 %s112, 1
      %s114 = scalar_select %p111, %s112, %s113
      %p117 = pneg %p111
      %p118 = scmp.eq.s32.totalorder %s10, 15
      %p119 = por %p117, %p118
      %p120 = scmp.ne.s32.totalorder %s112, %s115
      %p121 = scmp.eq.s32.totalorder %s10, 0
      %p122 = por %p120, %p121
      %p123 = scmp.ne.s32.totalorder %s112, %s115
      %p124 = scmp.eq.s32.totalorder %s15, 15
      %p125 = por %p123, %p124
      %p126 = scmp.ne.s32.totalorder %s115, %s116
      %p127 = scmp.eq.s32.totalorder %s15, 0
      %p128 = por %p126, %p127
      %p129 = scmp.ne.s32.totalorder %s115, %s116
      %p130 = scmp.eq.s32.totalorder %s16, 15
      %p131 = por %p129, %p130
      %p133 = scmp.ne.s32.totalorder %s116, %s132
      %p134 = scmp.eq.s32.totalorder %s16, 0
      %p135 = por %p133, %p134
      %s136 = ssub.s32 %s17, %s43
      %s137 = ssub.s32 %s18, %s39
      %s138 = sor.u32 %s136, %s137
      %p139 = scmp.eq.s32.totalorder %s138, 0
      %s141 = sadd.s32 %s140, 1
      %s142 = scalar_select %p139, %s140, %s141
      %p145 = pneg %p139
      %p146 = scmp.eq.s32.totalorder %s10, 15
      %p147 = por %p145, %p146
      %p148 = scmp.ne.s32.totalorder %s140, %s143
      %p149 = scmp.eq.s32.totalorder %s10, 0
      %p150 = por %p148, %p149
      %p151 = scmp.ne.s32.totalorder %s140, %s143
      %p152 = scmp.eq.s32.totalorder %s15, 15
      %p153 = por %p151, %p152
      %p154 = scmp.ne.s32.totalorder %s143, %s144
      %p155 = scmp.eq.s32.totalorder %s15, 0
      %p156 = por %p154, %p155
      %p157 = scmp.ne.s32.totalorder %s143, %s144
      %p158 = scmp.eq.s32.totalorder %s16, 15
      %p159 = por %p157, %p158
      %p161 = scmp.ne.s32.totalorder %s144, %s160
      %p162 = scmp.eq.s32.totalorder %s16, 0
      %p163 = por %p161, %p162
      %p164 = scmp.le.s32.totalorder 1, %s10
      %p165 = scmp.lt.s32.totalorder %s10, 17
      %p166 = pnand %p164, %p165
      %p167 = pneg %p166
      // Predicated region
      $region9: #{gtn_forward.7} parent=5 // pred_check
        _
      $region10: #{gtn_forward.7} parent=5 // pred_check_branch
        %169 = sbr.rel (%p166) target = $region12
      $region11: #{gtn_forward.7} parent=5 // pred_region
        %s170 = ssub.s32 %s10, 1
      $region12: #{gtn_forward.7} parent=5 // pred_fallthru
        _
      %p171 = scmp.lt.s32.totalorder %s10, 16
      // Predicated region
      $region13: #{gtn_forward.7} parent=5 // pred_check
        %p172 = pneg %p171
      $region14: #{gtn_forward.7} parent=5 // pred_check_branch
        %174 = sbr.rel (%p172) target = $region16
      $region15: #{gtn_forward.7} parent=5 // pred_region
        // Predicated region
        $region17: #{gtn_forward.7} parent=15 // pred_check
          %p175 = pneg %p60
        $region18: #{gtn_forward.7} parent=15 // pred_check_branch
          %177 = sbr.rel (%p175) target = $region20
        $region19: #{gtn_forward.7} parent=15 // pred_region
          %s178 = sand.u32 %s50, 1
          %s179 = sand.u32 %s50, 1
          %s180 = smul.addr %s179, 64
          %s181 = scalar_lea.vmem [#allocation3], %s180
          %s182 = smul.u32 16, %s19
          %s183 = smul.addr %s182, 2
          %s184 = sadd.s32 %s20, %s183
          %s185 = smul.addr %s17, 64
          %s186 = sadd.s32 %s184, %s185
          %s187 = smul.addr %s186, 4
          %s188 = scalar_lea.vmem %s0, %s187
          // Predicated region
          $region21: #{gtn_forward.7} parent=19 // pred_check
            _
          $region22: #{gtn_forward.7} parent=19 // pred_check_branch
            %190 = sbr.rel (0) target = $region24
          $region23: #{gtn_forward.7} parent=19 // pred_region
            // Predicated region
            $region25: #{gtn_forward.7} parent=23 // pred_check
              _
            $region26: #{gtn_forward.7} parent=23 // pred_check_branch
              %192 = sbr.rel target = $region28
            $region27: #{gtn_forward.7} parent=23 // pred_region
              // Predicated region
              $region40: #{gtn_forward.7} parent=27 // pred_check
                _
              $region41: #{gtn_forward.7} parent=27 // pred_check_branch
                %237 = sbr.rel (0) target = $region43
              $region42: #{gtn_forward.7} parent=27 // pred_region
                loop: start=0, step=1, limit=1
                $region44: #{gtn_forward.7} parent=42 // loop_pre_header
                  _
                $region45: #{gtn_forward.7} parent=42 // loop_header
                  %s239 = sphi 0, %s243
                  %p240 = scmp.ge.s32.totalorder %s239, 1
                  %s244 = sphi %s188, %s188
                  %s245 = sphi %s181, %s181
                $region46: #{gtn_forward.7} parent=42 // loop_header_branch
                  %242 = sbr.rel (%p240) target = $region50
                $region47: #{gtn_forward.7} parent=42 // loop_body
                  _
                $region48: #{gtn_forward.7} parent=42 // loop_footer
                  %s243 = sadd.s32 1, %s239
                $region49: #{gtn_forward.7} parent=42 // loop_footer_branch
                  %238 = sbr.rel target = $region45
                $region50: #{gtn_forward.7} parent=42 // loop_exit
                  _
                loop: start=0, step=1, limit=1
                $region51: #{gtn_forward.7} parent=42 // loop_pre_header
                  _
                $region52: #{gtn_forward.7} parent=42 // loop_header
                  %s248 = sphi 0, %s252
                  %p249 = scmp.ge.s32.totalorder %s248, 1
                  %s253 = sphi %s188, %s188
                  %s254 = sphi %s181, %s181
                $region53: #{gtn_forward.7} parent=42 // loop_header_branch
                  %251 = sbr.rel (%p249) target = $region57
                $region54: #{gtn_forward.7} parent=42 // loop_body
                  %v255 = vld [vmem:[%s253] sm:$0xf]
                  %256 = vst [vmem:[%s254] sm:$0xf] %v255
                  %v257 = vld [vmem:[%s253 + $0x8] sm:$0xf]
                  %258 = vst [vmem:[%s254 + $0x4] sm:$0xf] %v257
                  %v259 = vld [vmem:[%s253 + $0x10] sm:$0xf]
                  %260 = vst [vmem:[%s254 + $0x8] sm:$0xf] %v259
                  %v261 = vld [vmem:[%s253 + $0x18] sm:$0xf]
                  %262 = vst [vmem:[%s254 + $0xc] sm:$0xf] %v261
                  %v263 = vld [vmem:[%s253 + $0x20] sm:$0xf]
                  %264 = vst [vmem:[%s254 + $0x10] sm:$0xf] %v263
                  %v265 = vld [vmem:[%s253 + $0x28] sm:$0xf]
                  %266 = vst [vmem:[%s254 + $0x14] sm:$0xf] %v265
                  %v267 = vld [vmem:[%s253 + $0x30] sm:$0xf]
                  %268 = vst [vmem:[%s254 + $0x18] sm:$0xf] %v267
                  %v269 = vld [vmem:[%s253 + $0x38] sm:$0xf]
                  %270 = vst [vmem:[%s254 + $0x1c] sm:$0xf] %v269
                  %v271 = vld [vmem:[%s253 + $0x40] sm:$0xf]
                  %272 = vst [vmem:[%s254 + $0x20] sm:$0xf] %v271
                  %v273 = vld [vmem:[%s253 + $0x48] sm:$0xf]
                  %274 = vst [vmem:[%s254 + $0x24] sm:$0xf] %v273
                  %v275 = vld [vmem:[%s253 + $0x50] sm:$0xf]
                  %276 = vst [vmem:[%s254 + $0x28] sm:$0xf] %v275
                  %v277 = vld [vmem:[%s253 + $0x58] sm:$0xf]
                  %278 = vst [vmem:[%s254 + $0x2c] sm:$0xf] %v277
                  %v279 = vld [vmem:[%s253 + $0x60] sm:$0xf]
                  %280 = vst [vmem:[%s254 + $0x30] sm:$0xf] %v279
                  %v281 = vld [vmem:[%s253 + $0x68] sm:$0xf]
                  %282 = vst [vmem:[%s254 + $0x34] sm:$0xf] %v281
                  %v283 = vld [vmem:[%s253 + $0x70] sm:$0xf]
                  %284 = vst [vmem:[%s254 + $0x38] sm:$0xf] %v283
                  %v285 = vld [vmem:[%s253 + $0x78] sm:$0xf]
                  %286 = vst [vmem:[%s254 + $0x3c] sm:$0xf] %v285
                $region55: #{gtn_forward.7} parent=42 // loop_footer
                  %s252 = sadd.s32 1, %s248
                $region56: #{gtn_forward.7} parent=42 // loop_footer_branch
                  %247 = sbr.rel target = $region52
                $region57: #{gtn_forward.7} parent=42 // loop_exit
                  _
              $region43: #{gtn_forward.7} parent=27 // pred_fallthru
                _
            $region28: #{gtn_forward.7} parent=23 // pred_fallthru
              _
            // Predicated region
            $region29: #{gtn_forward.7} parent=23 // pred_check
              _
            $region30: #{gtn_forward.7} parent=23 // pred_check_branch
              %194 = sbr.rel (0) target = $region32
            $region31: #{gtn_forward.7} parent=23 // pred_region
              loop: start=0, step=1, limit=1
              $region33: #{gtn_forward.7} parent=31 // loop_pre_header
                _
              $region34: #{gtn_forward.7} parent=31 // loop_header
                %s197 = sphi 0, %s201
                %p198 = scmp.ge.s32.totalorder %s197, 1
                %s202 = sphi %s188, %s188
                %s203 = sphi %s181, %s181
              $region35: #{gtn_forward.7} parent=31 // loop_header_branch
                %200 = sbr.rel (%p198) target = $region39
              $region36: #{gtn_forward.7} parent=31 // loop_body
                %v204 = vld [vmem:[%s202] sm:$0xf]
                %205 = vst [vmem:[%s203] sm:$0xf] %v204
                %v206 = vld [vmem:[%s202 + $0x8] sm:$0xf]
                %207 = vst [vmem:[%s203 + $0x4] sm:$0xf] %v206
                %v208 = vld [vmem:[%s202 + $0x10] sm:$0xf]
                %209 = vst [vmem:[%s203 + $0x8] sm:$0xf] %v208
                %v210 = vld [vmem:[%s202 + $0x18] sm:$0xf]
                %211 = vst [vmem:[%s203 + $0xc] sm:$0xf] %v210
                %v212 = vld [vmem:[%s202 + $0x20] sm:$0xf]
                %213 = vst [vmem:[%s203 + $0x10] sm:$0xf] %v212
                %v214 = vld [vmem:[%s202 + $0x28] sm:$0xf]
                %215 = vst [vmem:[%s203 + $0x14] sm:$0xf] %v214
                %v216 = vld [vmem:[%s202 + $0x30] sm:$0xf]
                %217 = vst [vmem:[%s203 + $0x18] sm:$0xf] %v216
                %v218 = vld [vmem:[%s202 + $0x38] sm:$0xf]
                %219 = vst [vmem:[%s203 + $0x1c] sm:$0xf] %v218
                %v220 = vld [vmem:[%s202 + $0x40] sm:$0xf]
                %221 = vst [vmem:[%s203 + $0x20] sm:$0xf] %v220
                %v222 = vld [vmem:[%s202 + $0x48] sm:$0xf]
                %223 = vst [vmem:[%s203 + $0x24] sm:$0xf] %v222
                %v224 = vld [vmem:[%s202 + $0x50] sm:$0xf]
                %225 = vst [vmem:[%s203 + $0x28] sm:$0xf] %v224
                %v226 = vld [vmem:[%s202 + $0x58] sm:$0xf]
                %227 = vst [vmem:[%s203 + $0x2c] sm:$0xf] %v226
                %v228 = vld [vmem:[%s202 + $0x60] sm:$0xf]
                %229 = vst [vmem:[%s203 + $0x30] sm:$0xf] %v228
                %v230 = vld [vmem:[%s202 + $0x68] sm:$0xf]
                %231 = vst [vmem:[%s203 + $0x34] sm:$0xf] %v230
                %v232 = vld [vmem:[%s202 + $0x70] sm:$0xf]
                %233 = vst [vmem:[%s203 + $0x38] sm:$0xf] %v232
                %v234 = vld [vmem:[%s202 + $0x78] sm:$0xf]
                %235 = vst [vmem:[%s203 + $0x3c] sm:$0xf] %v234
              $region37: #{gtn_forward.7} parent=31 // loop_footer
                %s201 = sadd.s32 1, %s197
              $region38: #{gtn_forward.7} parent=31 // loop_footer_branch
                %196 = sbr.rel target = $region34
              $region39: #{gtn_forward.7} parent=31 // loop_exit
                _
            $region32: #{gtn_forward.7} parent=23 // pred_fallthru
              _
          $region24: #{gtn_forward.7} parent=19 // pred_fallthru
            _
          %287 = vnop
        $region20: #{gtn_forward.7} parent=15 // pred_fallthru
          _
        // Predicated region
        $region58: #{gtn_forward.7} parent=15 // pred_check
          %p288 = pneg %p92
        $region59: #{gtn_forward.7} parent=15 // pred_check_branch
          %290 = sbr.rel (%p288) target = $region61
        $region60: #{gtn_forward.7} parent=15 // pred_region
          %s291 = sand.u32 %s82, 1
          %s292 = sand.u32 %s82, 1
          %s293 = smul.addr %s292, 64
          %s294 = scalar_lea.vmem [#allocation4], %s293
          %s295 = sadd.s32 %s17, 2
          %s296 = smul.u32 16, %s20
          %s297 = smul.addr %s296, 2
          %s298 = sadd.s32 %s18, %s297
          %s299 = smul.addr %s295, 64
          %s300 = sadd.s32 %s298, %s299
          %s301 = smul.addr %s300, 4
          %s302 = scalar_lea.vmem %s1, %s301
          // Predicated region
          $region62: #{gtn_forward.7} parent=60 // pred_check
            _
          $region63: #{gtn_forward.7} parent=60 // pred_check_branch
            %304 = sbr.rel (0) target = $region65
          $region64: #{gtn_forward.7} parent=60 // pred_region
            // Predicated region
            $region66: #{gtn_forward.7} parent=64 // pred_check
              _
            $region67: #{gtn_forward.7} parent=64 // pred_check_branch
              %306 = sbr.rel target = $region69
            $region68: #{gtn_forward.7} parent=64 // pred_region
              // Predicated region
              $region81: #{gtn_forward.7} parent=68 // pred_check
                _
              $region82: #{gtn_forward.7} parent=68 // pred_check_branch
                %351 = sbr.rel (0) target = $region84
              $region83: #{gtn_forward.7} parent=68 // pred_region
                loop: start=0, step=1, limit=1
                $region85: #{gtn_forward.7} parent=83 // loop_pre_header
                  _
                $region86: #{gtn_forward.7} parent=83 // loop_header
                  %s353 = sphi 0, %s357
                  %p354 = scmp.ge.s32.totalorder %s353, 1
                  %s358 = sphi %s302, %s302
                  %s359 = sphi %s294, %s294
                $region87: #{gtn_forward.7} parent=83 // loop_header_branch
                  %356 = sbr.rel (%p354) target = $region91
                $region88: #{gtn_forward.7} parent=83 // loop_body
                  _
                $region89: #{gtn_forward.7} parent=83 // loop_footer
                  %s357 = sadd.s32 1, %s353
                $region90: #{gtn_forward.7} parent=83 // loop_footer_branch
                  %352 = sbr.rel target = $region86
                $region91: #{gtn_forward.7} parent=83 // loop_exit
                  _
                loop: start=0, step=1, limit=1
                $region92: #{gtn_forward.7} parent=83 // loop_pre_header
                  _
                $region93: #{gtn_forward.7} parent=83 // loop_header
                  %s362 = sphi 0, %s366
                  %p363 = scmp.ge.s32.totalorder %s362, 1
                  %s367 = sphi %s302, %s302
                  %s368 = sphi %s294, %s294
                $region94: #{gtn_forward.7} parent=83 // loop_header_branch
                  %365 = sbr.rel (%p363) target = $region98
                $region95: #{gtn_forward.7} parent=83 // loop_body
                  %v369 = vld [vmem:[%s367] sm:$0xf]
                  %370 = vst [vmem:[%s368] sm:$0xf] %v369
                  %v371 = vld [vmem:[%s367 + $0x8] sm:$0xf]
                  %372 = vst [vmem:[%s368 + $0x4] sm:$0xf] %v371
                  %v373 = vld [vmem:[%s367 + $0x10] sm:$0xf]
                  %374 = vst [vmem:[%s368 + $0x8] sm:$0xf] %v373
                  %v375 = vld [vmem:[%s367 + $0x18] sm:$0xf]
                  %376 = vst [vmem:[%s368 + $0xc] sm:$0xf] %v375
                  %v377 = vld [vmem:[%s367 + $0x20] sm:$0xf]
                  %378 = vst [vmem:[%s368 + $0x10] sm:$0xf] %v377
                  %v379 = vld [vmem:[%s367 + $0x28] sm:$0xf]
                  %380 = vst [vmem:[%s368 + $0x14] sm:$0xf] %v379
                  %v381 = vld [vmem:[%s367 + $0x30] sm:$0xf]
                  %382 = vst [vmem:[%s368 + $0x18] sm:$0xf] %v381
                  %v383 = vld [vmem:[%s367 + $0x38] sm:$0xf]
                  %384 = vst [vmem:[%s368 + $0x1c] sm:$0xf] %v383
                  %v385 = vld [vmem:[%s367 + $0x40] sm:$0xf]
                  %386 = vst [vmem:[%s368 + $0x20] sm:$0xf] %v385
                  %v387 = vld [vmem:[%s367 + $0x48] sm:$0xf]
                  %388 = vst [vmem:[%s368 + $0x24] sm:$0xf] %v387
                  %v389 = vld [vmem:[%s367 + $0x50] sm:$0xf]
                  %390 = vst [vmem:[%s368 + $0x28] sm:$0xf] %v389
                  %v391 = vld [vmem:[%s367 + $0x58] sm:$0xf]
                  %392 = vst [vmem:[%s368 + $0x2c] sm:$0xf] %v391
                  %v393 = vld [vmem:[%s367 + $0x60] sm:$0xf]
                  %394 = vst [vmem:[%s368 + $0x30] sm:$0xf] %v393
                  %v395 = vld [vmem:[%s367 + $0x68] sm:$0xf]
                  %396 = vst [vmem:[%s368 + $0x34] sm:$0xf] %v395
                  %v397 = vld [vmem:[%s367 + $0x70] sm:$0xf]
                  %398 = vst [vmem:[%s368 + $0x38] sm:$0xf] %v397
                  %v399 = vld [vmem:[%s367 + $0x78] sm:$0xf]
                  %400 = vst [vmem:[%s368 + $0x3c] sm:$0xf] %v399
                $region96: #{gtn_forward.7} parent=83 // loop_footer
                  %s366 = sadd.s32 1, %s362
                $region97: #{gtn_forward.7} parent=83 // loop_footer_branch
                  %361 = sbr.rel target = $region93
                $region98: #{gtn_forward.7} parent=83 // loop_exit
                  _
              $region84: #{gtn_forward.7} parent=68 // pred_fallthru
                _
            $region69: #{gtn_forward.7} parent=64 // pred_fallthru
              _
            // Predicated region
            $region70: #{gtn_forward.7} parent=64 // pred_check
              _
            $region71: #{gtn_forward.7} parent=64 // pred_check_branch
              %308 = sbr.rel (0) target = $region73
            $region72: #{gtn_forward.7} parent=64 // pred_region
              loop: start=0, step=1, limit=1
              $region74: #{gtn_forward.7} parent=72 // loop_pre_header
                _
              $region75: #{gtn_forward.7} parent=72 // loop_header
                %s311 = sphi 0, %s315
                %p312 = scmp.ge.s32.totalorder %s311, 1
                %s316 = sphi %s302, %s302
                %s317 = sphi %s294, %s294
              $region76: #{gtn_forward.7} parent=72 // loop_header_branch
                %314 = sbr.rel (%p312) target = $region80
              $region77: #{gtn_forward.7} parent=72 // loop_body
                %v318 = vld [vmem:[%s316] sm:$0xf]
                %319 = vst [vmem:[%s317] sm:$0xf] %v318
                %v320 = vld [vmem:[%s316 + $0x8] sm:$0xf]
                %321 = vst [vmem:[%s317 + $0x4] sm:$0xf] %v320
                %v322 = vld [vmem:[%s316 + $0x10] sm:$0xf]
                %323 = vst [vmem:[%s317 + $0x8] sm:$0xf] %v322
                %v324 = vld [vmem:[%s316 + $0x18] sm:$0xf]
                %325 = vst [vmem:[%s317 + $0xc] sm:$0xf] %v324
                %v326 = vld [vmem:[%s316 + $0x20] sm:$0xf]
                %327 = vst [vmem:[%s317 + $0x10] sm:$0xf] %v326
                %v328 = vld [vmem:[%s316 + $0x28] sm:$0xf]
                %329 = vst [vmem:[%s317 + $0x14] sm:$0xf] %v328
                %v330 = vld [vmem:[%s316 + $0x30] sm:$0xf]
                %331 = vst [vmem:[%s317 + $0x18] sm:$0xf] %v330
                %v332 = vld [vmem:[%s316 + $0x38] sm:$0xf]
                %333 = vst [vmem:[%s317 + $0x1c] sm:$0xf] %v332
                %v334 = vld [vmem:[%s316 + $0x40] sm:$0xf]
                %335 = vst [vmem:[%s317 + $0x20] sm:$0xf] %v334
                %v336 = vld [vmem:[%s316 + $0x48] sm:$0xf]
                %337 = vst [vmem:[%s317 + $0x24] sm:$0xf] %v336
                %v338 = vld [vmem:[%s316 + $0x50] sm:$0xf]
                %339 = vst [vmem:[%s317 + $0x28] sm:$0xf] %v338
                %v340 = vld [vmem:[%s316 + $0x58] sm:$0xf]
                %341 = vst [vmem:[%s317 + $0x2c] sm:$0xf] %v340
                %v342 = vld [vmem:[%s316 + $0x60] sm:$0xf]
                %343 = vst [vmem:[%s317 + $0x30] sm:$0xf] %v342
                %v344 = vld [vmem:[%s316 + $0x68] sm:$0xf]
                %345 = vst [vmem:[%s317 + $0x34] sm:$0xf] %v344
                %v346 = vld [vmem:[%s316 + $0x70] sm:$0xf]
                %347 = vst [vmem:[%s317 + $0x38] sm:$0xf] %v346
                %v348 = vld [vmem:[%s316 + $0x78] sm:$0xf]
                %349 = vst [vmem:[%s317 + $0x3c] sm:$0xf] %v348
              $region78: #{gtn_forward.7} parent=72 // loop_footer
                %s315 = sadd.s32 1, %s311
              $region79: #{gtn_forward.7} parent=72 // loop_footer_branch
                %310 = sbr.rel target = $region75
              $region80: #{gtn_forward.7} parent=72 // loop_exit
                _
            $region73: #{gtn_forward.7} parent=64 // pred_fallthru
              _
          $region65: #{gtn_forward.7} parent=60 // pred_fallthru
            _
          %401 = vnop
        $region61: #{gtn_forward.7} parent=15 // pred_fallthru
          _
      $region16: #{gtn_forward.7} parent=5 // pred_fallthru
        _
      %p402 = scmp.le.s32.totalorder 1, %s10
      %p403 = scmp.lt.s32.totalorder %s10, 17
      %p404 = pnand %p402, %p403
      %p405 = pneg %p404
      // Predicated region
      $region99: #{gtn_forward.7} parent=5 // pred_check
        _
      $region100: #{gtn_forward.7} parent=5 // pred_check_branch
        %407 = sbr.rel (%p404) target = $region102
      $region101: #{gtn_forward.7} parent=5 // pred_region
        %s408 = ssub.s32 %s10, 1
        %s409 = sand.u32 %s53, 1
        %s410 = sand.u32 %s53, 1
        %s411 = smul.addr %s410, 64
        %s412 = scalar_lea.vmem [#allocation3], %s411
        // Predicated region
        $region103: #{gtn_forward.7} parent=101 // pred_check
          %p413 = pneg %p66
        $region104: #{gtn_forward.7} parent=101 // pred_check_branch
          %415 = sbr.rel (%p413) target = $region106
        $region105: #{gtn_forward.7} parent=101 // pred_region
          _
        $region106: #{gtn_forward.7} parent=101 // pred_fallthru
          _
        %s416 = sand.u32 %s85, 1
        %s417 = sand.u32 %s85, 1
        %s418 = smul.addr %s417, 64
        %s419 = scalar_lea.vmem [#allocation4], %s418
        // Predicated region
        $region107: #{gtn_forward.7} parent=101 // pred_check
          %p420 = pneg %p98
        $region108: #{gtn_forward.7} parent=101 // pred_check_branch
          %422 = sbr.rel (%p420) target = $region110
        $region109: #{gtn_forward.7} parent=101 // pred_region
          _
        $region110: #{gtn_forward.7} parent=101 // pred_fallthru
          _
        %s423 = sand.u32 %s53, 1
        %s424 = sand.u32 %s53, 1
        %s425 = smul.addr %s424, 64
        %s426 = scalar_lea.vmem [#allocation3], %s425
        %p427 = pneg %p66
        %p428 = pneg %p63
        %s429 = sand.u32 %s85, 1
        %s430 = sand.u32 %s85, 1
        %s431 = smul.addr %s430, 64
        %s432 = scalar_lea.vmem [#allocation4], %s431
        %p433 = pneg %p98
        %p434 = pneg %p95
        %p435 = pneg %p128
        %p436 = pneg %p125
        %s437 = sand.u32 %s115, 1
        %s438 = sand.u32 %s115, 1
        %s439 = smul.addr %s438, 64
        %s440 = scalar_lea.vmem [#allocation5], %s439
        %p441 = pneg %p156
        %p442 = pneg %p153
        %p443 = scmp.lt.s32.totalorder %s21, 1
        %s444 = scalar_select %p443, %s21, 1
        %p445 = scmp.lt.s32.totalorder %s22, 1
        %s446 = scalar_select %p445, %s22, 1
        %s447 = smul.addr %s444, 2
        %s448 = sadd.s32 %s446, %s447
        %s449 = scalar_lea.vmem %s3, %s448
        %s450 = smul.u32 16, %s23
        %s451 = sadd.s32 %s21, 2
        %s452 = smul.u32 16, %s24
        %s453 = smul.u32 16, %s23
        %p454 = scmp.lt.s32.totalorder %s21, 1
        %s455 = scalar_select %p454, %s21, 1
        %p456 = scmp.lt.s32.totalorder %s22, 1
        %s457 = scalar_select %p456, %s22, 1
        %s458 = smul.addr %s455, 2
        %s459 = sadd.s32 %s457, %s458
        %s460 = scalar_lea.vmem %s3, %s459
        %p462 = scmp.eq.s32.totalorder %s24, 0
        // Predicated region
        $region111: #{gtn_forward.7} parent=101 // pred_check
          %p463 = pneg %p462
        $region112: #{gtn_forward.7} parent=101 // pred_check_branch
          %465 = sbr.rel (%p463) target = $region114
        $region113: #{gtn_forward.7} parent=101 // pred_region
          %466 = vst [vmem:[#allocation2] sm:$0xff] 0.0
          %467 = vst [vmem:[#allocation2 + $0x8] sm:$0xff] 0.0
          %468 = vst [vmem:[#allocation2 + $0x10] sm:$0xff] 0.0
          %469 = vst [vmem:[#allocation2 + $0x18] sm:$0xff] 0.0
          %470 = vst [vmem:[#allocation2 + $0x20] sm:$0xff] 0.0
          %471 = vst [vmem:[#allocation2 + $0x28] sm:$0xff] 0.0
          %472 = vst [vmem:[#allocation2 + $0x30] sm:$0xff] 0.0
          %473 = vst [vmem:[#allocation2 + $0x38] sm:$0xff] 0.0
          %474 = vst [vmem:[#allocation2 + $0x40] sm:$0xff] 0.0
          %475 = vst [vmem:[#allocation2 + $0x48] sm:$0xff] 0.0
          %476 = vst [vmem:[#allocation2 + $0x50] sm:$0xff] 0.0
          %477 = vst [vmem:[#allocation2 + $0x58] sm:$0xff] 0.0
          %478 = vst [vmem:[#allocation2 + $0x60] sm:$0xff] 0.0
          %479 = vst [vmem:[#allocation2 + $0x68] sm:$0xff] 0.0
          %480 = vst [vmem:[#allocation2 + $0x70] sm:$0xff] 0.0
          %481 = vst [vmem:[#allocation2 + $0x78] sm:$0xff] 0.0
        $region114: #{gtn_forward.7} parent=101 // pred_fallthru
          _
        %p482 = scmp.eq.s32.totalorder %s23, 0
        %p483 = pnand %p482, %p462
        %p484 = pneg %p483
        // Predicated region
        $region115: #{gtn_forward.7} parent=101 // pred_check
          _
        $region116: #{gtn_forward.7} parent=101 // pred_check_branch
          %486 = sbr.rel (%p483) target = $region118
        $region117: #{gtn_forward.7} parent=101 // pred_region
          %487 = vst [vmem:[%s460] sm:$0x1] 0.0
        $region118: #{gtn_forward.7} parent=101 // pred_fallthru
          _
        %v488 = vld [vmem:[#allocation2] sm:$0xff]
        %v489 = vld [vmem:[#allocation2 + $0x8] sm:$0xff]
        %v490 = vld [vmem:[#allocation2 + $0x10] sm:$0xff]
        %v491 = vld [vmem:[#allocation2 + $0x18] sm:$0xff]
        %v492 = vld [vmem:[#allocation2 + $0x20] sm:$0xff]
        %v493 = vld [vmem:[#allocation2 + $0x28] sm:$0xff]
        %v494 = vld [vmem:[#allocation2 + $0x30] sm:$0xff]
        %v495 = vld [vmem:[#allocation2 + $0x38] sm:$0xff]
        %v496 = vld [vmem:[#allocation2 + $0x40] sm:$0xff]
        %v497 = vld [vmem:[#allocation2 + $0x48] sm:$0xff]
        %v498 = vld [vmem:[#allocation2 + $0x50] sm:$0xff]
        %v499 = vld [vmem:[#allocation2 + $0x58] sm:$0xff]
        %v500 = vld [vmem:[#allocation2 + $0x60] sm:$0xff]
        %v501 = vld [vmem:[#allocation2 + $0x68] sm:$0xff]
        %v502 = vld [vmem:[#allocation2 + $0x70] sm:$0xff]
        %v503 = vld [vmem:[#allocation2 + $0x78] sm:$0xff]
        %v504 = vld [vmem:[%s412] sm:$0xf]
        %v505 = vld [vmem:[%s412 + $0x4] sm:$0xf]
        %v506 = vld [vmem:[%s412 + $0x8] sm:$0xf]
        %v507 = vld [vmem:[%s412 + $0xc] sm:$0xf]
        %v508 = vld [vmem:[%s412 + $0x10] sm:$0xf]
        %v509 = vld [vmem:[%s412 + $0x14] sm:$0xf]
        %v510 = vld [vmem:[%s412 + $0x18] sm:$0xf]
        %v511 = vld [vmem:[%s412 + $0x1c] sm:$0xf]
        %v512 = vld [vmem:[%s412 + $0x20] sm:$0xf]
        %v513 = vld [vmem:[%s412 + $0x24] sm:$0xf]
        %v514 = vld [vmem:[%s412 + $0x28] sm:$0xf]
        %v515 = vld [vmem:[%s412 + $0x2c] sm:$0xf]
        %v516 = vld [vmem:[%s412 + $0x30] sm:$0xf]
        %v517 = vld [vmem:[%s412 + $0x34] sm:$0xf]
        %v518 = vld [vmem:[%s412 + $0x38] sm:$0xf]
        %v519 = vld [vmem:[%s412 + $0x3c] sm:$0xf]
        %v520 = vld [vmem:[%s419] sm:$0xf]
        %v521 = vld [vmem:[%s419 + $0x4] sm:$0xf]
        %v522 = vld [vmem:[%s419 + $0x8] sm:$0xf]
        %v523 = vld [vmem:[%s419 + $0xc] sm:$0xf]
        %v524 = vld [vmem:[%s419 + $0x10] sm:$0xf]
        %v525 = vld [vmem:[%s419 + $0x14] sm:$0xf]
        %v526 = vld [vmem:[%s419 + $0x18] sm:$0xf]
        %v527 = vld [vmem:[%s419 + $0x1c] sm:$0xf]
        %v528 = vld [vmem:[%s419 + $0x20] sm:$0xf]
        %v529 = vld [vmem:[%s419 + $0x24] sm:$0xf]
        %v530 = vld [vmem:[%s419 + $0x28] sm:$0xf]
        %v531 = vld [vmem:[%s419 + $0x2c] sm:$0xf]
        %v532 = vld [vmem:[%s419 + $0x30] sm:$0xf]
        %v533 = vld [vmem:[%s419 + $0x34] sm:$0xf]
        %v534 = vld [vmem:[%s419 + $0x38] sm:$0xf]
        %v535 = vld [vmem:[%s419 + $0x3c] sm:$0xf]
        %v552 = vunpack.c.l.b16 %v504
        %v553 = vunpack.c.l.b16 %v505
        %v554 = vunpack.c.l.b16 %v506
        %v555 = vunpack.c.l.b16 %v507
        %v556 = vunpack.c.l.b16 %v508
        %v557 = vunpack.c.l.b16 %v509
        %v558 = vunpack.c.l.b16 %v510
        %v559 = vunpack.c.l.b16 %v511
        %v560 = vunpack.c.l.b16 %v512
        %v561 = vunpack.c.l.b16 %v513
        %v562 = vunpack.c.l.b16 %v514
        %v563 = vunpack.c.l.b16 %v515
        %v564 = vunpack.c.l.b16 %v516
        %v565 = vunpack.c.l.b16 %v517
        %v566 = vunpack.c.l.b16 %v518
        %v567 = vunpack.c.l.b16 %v519
        %v568 = vpack.c.b16 %v553, %v552
        %v569 = vpack.c.b16 %v555, %v554
        %v570 = vpack.c.b16 %v557, %v556
        %v571 = vpack.c.b16 %v559, %v558
        %v572 = vpack.c.b16 %v561, %v560
        %v573 = vpack.c.b16 %v563, %v562
        %v574 = vpack.c.b16 %v565, %v564
        %v575 = vpack.c.b16 %v567, %v566
        %v600 = vunpack.c.l.b16 %v520
        %v601 = vunpack.c.l.b16 %v521
        %v602 = vunpack.c.l.b16 %v522
        %v603 = vunpack.c.l.b16 %v523
        %v604 = vunpack.c.l.b16 %v524
        %v605 = vunpack.c.l.b16 %v525
        %v606 = vunpack.c.l.b16 %v526
        %v607 = vunpack.c.l.b16 %v527
        %v608 = vunpack.c.l.b16 %v528
        %v609 = vunpack.c.l.b16 %v529
        %v610 = vunpack.c.l.b16 %v530
        %v611 = vunpack.c.l.b16 %v531
        %v612 = vunpack.c.l.b16 %v532
        %v613 = vunpack.c.l.b16 %v533
        %v614 = vunpack.c.l.b16 %v534
        %v615 = vunpack.c.l.b16 %v535
        %v616 = vpack.c.b16 %v601, %v600
        %v617 = vpack.c.b16 %v603, %v602
        %v618 = vpack.c.b16 %v605, %v604
        %v619 = vpack.c.b16 %v607, %v606
        %v620 = vpack.c.b16 %v609, %v608
        %v621 = vpack.c.b16 %v611, %v610
        %v622 = vpack.c.b16 %v613, %v612
        %v623 = vpack.c.b16 %v615, %v614
        %632 = vmatprep.subr.bf16.mxu0 0
        %633 = vmatpush1.bf16.msra.mxu0 %v616
        %634 = vmatprep.subr.bf16.mxu0 0
        %635 = vmatpush1.bf16.msra.mxu0 %v617
        %636 = vmatprep.subr.bf16.mxu0 0
        %637 = vmatpush1.bf16.msra.mxu0 %v618
        %638 = vmatprep.subr.bf16.mxu0 0
        %639 = vmatpush1.bf16.msra.mxu0 %v619
        %640 = vmatprep.subr.bf16.mxu0 0
        %641 = vmatpush1.bf16.msra.mxu0 %v620
        %642 = vmatprep.subr.bf16.mxu0 0
        %643 = vmatpush1.bf16.msra.mxu0 %v621
        %644 = vmatprep.subr.bf16.mxu0 0
        %645 = vmatpush1.bf16.msra.mxu0 %v622
        %646 = vmatprep.subr.bf16.mxu0 0
        %647 = vmatpush1.bf16.msra.mxu0 %v623
        %648 = vmatprep.subr.bf16.mxu0 0
        %649 = vmatpush1.bf16.msra.mxu0 0
        %650 = vmatprep.subr.bf16.mxu0 0
        %651 = vmatpush1.bf16.msra.mxu0 0
        %652 = vmatprep.subr.bf16.mxu0 0
        %653 = vmatpush1.bf16.msra.mxu0 0
        %654 = vmatprep.subr.bf16.mxu0 0
        %655 = vmatpush1.bf16.msra.mxu0 0
        %656 = vmatprep.subr.bf16.mxu0 0
        %657 = vmatpush1.bf16.msra.mxu0 0
        %658 = vmatprep.subr.bf16.mxu0 0
        %659 = vmatpush1.bf16.msra.mxu0 0
        %660 = vmatprep.subr.bf16.mxu0 0
        %661 = vmatpush1.bf16.msra.mxu0 0
        %662 = vmatprep.subr.bf16.mxu0 0
        %663 = vmatpush1.bf16.msra.mxu0 0
        %664 = vmatprep.mubr.bf16.mxu0 0
        %665 = vmatmul.mubr.bf16.gmra.mrb[0].mxu0 %v568
        %v666 = vpop.f32.mrb[0].mxu0
        %v667 = vadd.f32 0.0, %v666
        %v668 = vpop.f32.mrb[0].mxu0
        %v669 = vpop.f32.mrb[0].mxu0
        %v670 = vadd.f32 0.0, %v669
        %v671 = vpop.f32.mrb[0].mxu0
        %672 = vmatprep.mubr.bf16.mxu0 0
        %673 = vmatmul.mubr.bf16.gmra.mrb[0].mxu0 %v569
        %v674 = vpop.f32.mrb[0].mxu0
        %v675 = vadd.f32 0.0, %v674
        %v676 = vpop.f32.mrb[0].mxu0
        %v677 = vpop.f32.mrb[0].mxu0
        %v678 = vadd.f32 0.0, %v677
        %v679 = vpop.f32.mrb[0].mxu0
        %680 = vmatprep.mubr.bf16.mxu0 0
        %681 = vmatmul.mubr.bf16.gmra.mrb[0].mxu0 %v570
        %v682 = vpop.f32.mrb[0].mxu0
        %v683 = vadd.f32 0.0, %v682
        %v684 = vpop.f32.mrb[0].mxu0
        %v685 = vpop.f32.mrb[0].mxu0
        %v686 = vadd.f32 0.0, %v685
        %v687 = vpop.f32.mrb[0].mxu0
        %688 = vmatprep.mubr.bf16.mxu0 0
        %689 = vmatmul.mubr.bf16.gmra.mrb[0].mxu0 %v571
        %v690 = vpop.f32.mrb[0].mxu0
        %v691 = vadd.f32 0.0, %v690
        %v692 = vpop.f32.mrb[0].mxu0
        %v693 = vpop.f32.mrb[0].mxu0
        %v694 = vadd.f32 0.0, %v693
        %v695 = vpop.f32.mrb[0].mxu0
        %696 = vmatprep.mubr.bf16.mxu0 0
        %697 = vmatmul.mubr.bf16.gmra.mrb[0].mxu0 %v572
        %v698 = vpop.f32.mrb[0].mxu0
        %v699 = vadd.f32 0.0, %v698
        %v700 = vpop.f32.mrb[0].mxu0
        %v701 = vpop.f32.mrb[0].mxu0
        %v702 = vadd.f32 0.0, %v701
        %v703 = vpop.f32.mrb[0].mxu0
        %704 = vmatprep.mubr.bf16.mxu0 0
        %705 = vmatmul.mubr.bf16.gmra.mrb[0].mxu0 %v573
        %v706 = vpop.f32.mrb[0].mxu0
        %v707 = vadd.f32 0.0, %v706
        %v708 = vpop.f32.mrb[0].mxu0
        %v709 = vpop.f32.mrb[0].mxu0
        %v710 = vadd.f32 0.0, %v709
        %v711 = vpop.f32.mrb[0].mxu0
        %712 = vmatprep.mubr.bf16.mxu0 0
        %713 = vmatmul.mubr.bf16.gmra.mrb[0].mxu0 %v574
        %v714 = vpop.f32.mrb[0].mxu0
        %v715 = vadd.f32 0.0, %v714
        %v716 = vpop.f32.mrb[0].mxu0
        %v717 = vpop.f32.mrb[0].mxu0
        %v718 = vadd.f32 0.0, %v717
        %v719 = vpop.f32.mrb[0].mxu0
        %720 = vmatprep.mubr.bf16.mxu0 0
        %721 = vmatmul.mubr.bf16.gmra.mrb[0].mxu0 %v575
        %v722 = vpop.f32.mrb[0].mxu0
        %v723 = vadd.f32 0.0, %v722
        %v724 = vpop.f32.mrb[0].mxu0
        %v725 = vpop.f32.mrb[0].mxu0
        %v726 = vadd.f32 0.0, %v725
        %v727 = vpop.f32.mrb[0].mxu0
        %728 = vdwg.mxu0
        %v729 = vadd.f32 %v488, %v667
        %v730 = vadd.f32 %v489, %v670
        %v731 = vadd.f32 %v490, %v675
        %v732 = vadd.f32 %v491, %v678
        %v733 = vadd.f32 %v492, %v683
        %v734 = vadd.f32 %v493, %v686
        %v735 = vadd.f32 %v494, %v691
        %v736 = vadd.f32 %v495, %v694
        %v737 = vadd.f32 %v496, %v699
        %v738 = vadd.f32 %v497, %v702
        %v739 = vadd.f32 %v498, %v707
        %v740 = vadd.f32 %v499, %v710
        %v741 = vadd.f32 %v500, %v715
        %v742 = vadd.f32 %v501, %v718
        %v743 = vadd.f32 %v502, %v723
        %v744 = vadd.f32 %v503, %v726
        %745 = vst [vmem:[#allocation2] sm:$0xff] %v729
        %746 = vst [vmem:[#allocation2 + $0x8] sm:$0xff] %v730
        %747 = vst [vmem:[#allocation2 + $0x10] sm:$0xff] %v731
        %748 = vst [vmem:[#allocation2 + $0x18] sm:$0xff] %v732
        %749 = vst [vmem:[#allocation2 + $0x20] sm:$0xff] %v733
        %750 = vst [vmem:[#allocation2 + $0x28] sm:$0xff] %v734
        %751 = vst [vmem:[#allocation2 + $0x30] sm:$0xff] %v735
        %752 = vst [vmem:[#allocation2 + $0x38] sm:$0xff] %v736
        %753 = vst [vmem:[#allocation2 + $0x40] sm:$0xff] %v737
        %754 = vst [vmem:[#allocation2 + $0x48] sm:$0xff] %v738
        %755 = vst [vmem:[#allocation2 + $0x50] sm:$0xff] %v739
        %756 = vst [vmem:[#allocation2 + $0x58] sm:$0xff] %v740
        %757 = vst [vmem:[#allocation2 + $0x60] sm:$0xff] %v741
        %758 = vst [vmem:[#allocation2 + $0x68] sm:$0xff] %v742
        %759 = vst [vmem:[#allocation2 + $0x70] sm:$0xff] %v743
        %760 = vst [vmem:[#allocation2 + $0x78] sm:$0xff] %v744
        %p761 = scmp.eq.s32.totalorder %s24, 1
        // Predicated region
        $region119: #{gtn_forward.7} parent=101 // pred_check
          %p762 = pneg %p761
        $region120: #{gtn_forward.7} parent=101 // pred_check_branch
          %764 = sbr.rel (%p762) target = $region122
        $region121: #{gtn_forward.7} parent=101 // pred_region
          %s765 = smul.u32 %s23, 128
          %s766 = smul.u32 %s22, 128
          %s767 = sadd.s32 %s766, 128
          %p768 = scmp.lt.s32.totalorder %s765, %s767
          %s769 = sadd.s32 %s765, 128
          %p770 = scmp.lt.s32.totalorder %s766, %s769
          %p771 = pnand %p768, %p770
          %p772 = pneg %p771
          // Predicated region
          $region123: #{gtn_forward.7} parent=121 // pred_check
            _
          $region124: #{gtn_forward.7} parent=121 // pred_check_branch
            %774 = sbr.rel (%p771) target = $region126
          $region125: #{gtn_forward.7} parent=121 // pred_region
            %v775 = vlaneseq
            %v776 = vshrl.u32 %v775, 7
            %v777 = vadd.s32 %v776, 8
            %v778 = vadd.s32 %v776, 16
            %v779 = vadd.s32 %v776, 24
            %v780 = vadd.s32 %v776, 32
            %v781 = vadd.s32 %v776, 40
            %v782 = vadd.s32 %v776, 48
            %v783 = vadd.s32 %v776, 56
            %v784 = vadd.s32 %v776, 64
            %v785 = vadd.s32 %v776, 72
            %v786 = vadd.s32 %v776, 80
            %v787 = vadd.s32 %v776, 88
            %v788 = vadd.s32 %v776, 96
            %v789 = vadd.s32 %v776, 104
            %v790 = vadd.s32 %v776, 112
            %v791 = vadd.s32 %v776, 120
            %v792 = vstv %s765
            %v793 = vadd.s32 %v792, %v776
            %v794 = vadd.s32 %v792, %v777
            %v795 = vadd.s32 %v792, %v778
            %v796 = vadd.s32 %v792, %v779
            %v797 = vadd.s32 %v792, %v780
            %v798 = vadd.s32 %v792, %v781
            %v799 = vadd.s32 %v792, %v782
            %v800 = vadd.s32 %v792, %v783
            %v801 = vadd.s32 %v792, %v784
            %v802 = vadd.s32 %v792, %v785
            %v803 = vadd.s32 %v792, %v786
            %v804 = vadd.s32 %v792, %v787
            %v805 = vadd.s32 %v792, %v788
            %v806 = vadd.s32 %v792, %v789
            %v807 = vadd.s32 %v792, %v790
            %v808 = vadd.s32 %v792, %v791
            %v809 = vlaneseq
            %v810 = vand.u32 %v809, 127
            %v811 = vstv %s766
            %v812 = vadd.s32 %v811, %v810
            %vm813 = vcmp.eq.s32.totalorder %v793, %v812
            %vm814 = vcmp.eq.s32.totalorder %v794, %v812
            %vm815 = vcmp.eq.s32.totalorder %v795, %v812
            %vm816 = vcmp.eq.s32.totalorder %v796, %v812
            %vm817 = vcmp.eq.s32.totalorder %v797, %v812
            %vm818 = vcmp.eq.s32.totalorder %v798, %v812
            %vm819 = vcmp.eq.s32.totalorder %v799, %v812
            %vm820 = vcmp.eq.s32.totalorder %v800, %v812
            %vm821 = vcmp.eq.s32.totalorder %v801, %v812
            %vm822 = vcmp.eq.s32.totalorder %v802, %v812
            %vm823 = vcmp.eq.s32.totalorder %v803, %v812
            %vm824 = vcmp.eq.s32.totalorder %v804, %v812
            %vm825 = vcmp.eq.s32.totalorder %v805, %v812
            %vm826 = vcmp.eq.s32.totalorder %v806, %v812
            %vm827 = vcmp.eq.s32.totalorder %v807, %v812
            %vm828 = vcmp.eq.s32.totalorder %v808, %v812
            %v829 = vld [vmem:[#allocation2] sm:$0xff]
            %v830 = vld [vmem:[#allocation2 + $0x8] sm:$0xff]
            %v831 = vld [vmem:[#allocation2 + $0x10] sm:$0xff]
            %v832 = vld [vmem:[#allocation2 + $0x18] sm:$0xff]
            %v833 = vld [vmem:[#allocation2 + $0x20] sm:$0xff]
            %v834 = vld [vmem:[#allocation2 + $0x28] sm:$0xff]
            %v835 = vld [vmem:[#allocation2 + $0x30] sm:$0xff]
            %v836 = vld [vmem:[#allocation2 + $0x38] sm:$0xff]
            %v837 = vld [vmem:[#allocation2 + $0x40] sm:$0xff]
            %v838 = vld [vmem:[#allocation2 + $0x48] sm:$0xff]
            %v839 = vld [vmem:[#allocation2 + $0x50] sm:$0xff]
            %v840 = vld [vmem:[#allocation2 + $0x58] sm:$0xff]
            %v841 = vld [vmem:[#allocation2 + $0x60] sm:$0xff]
            %v842 = vld [vmem:[#allocation2 + $0x68] sm:$0xff]
            %v843 = vld [vmem:[#allocation2 + $0x70] sm:$0xff]
            %v844 = vld [vmem:[#allocation2 + $0x78] sm:$0xff]
            %v845 = vsel %vm813, 0.0, %v829
            %v846 = vsel %vm814, 0.0, %v830
            %v847 = vsel %vm815, 0.0, %v831
            %v848 = vsel %vm816, 0.0, %v832
            %v849 = vsel %vm817, 0.0, %v833
            %v850 = vsel %vm818, 0.0, %v834
            %v851 = vsel %vm819, 0.0, %v835
            %v852 = vsel %vm820, 0.0, %v836
            %v853 = vsel %vm821, 0.0, %v837
            %v854 = vsel %vm822, 0.0, %v838
            %v855 = vsel %vm823, 0.0, %v839
            %v856 = vsel %vm824, 0.0, %v840
            %v857 = vsel %vm825, 0.0, %v841
            %v858 = vsel %vm826, 0.0, %v842
            %v859 = vsel %vm827, 0.0, %v843
            %v860 = vsel %vm828, 0.0, %v844
            %861 = vst [vmem:[#allocation2] sm:$0xff] %v845
            %862 = vst [vmem:[#allocation2 + $0x8] sm:$0xff] %v846
            %863 = vst [vmem:[#allocation2 + $0x10] sm:$0xff] %v847
            %864 = vst [vmem:[#allocation2 + $0x18] sm:$0xff] %v848
            %865 = vst [vmem:[#allocation2 + $0x20] sm:$0xff] %v849
            %866 = vst [vmem:[#allocation2 + $0x28] sm:$0xff] %v850
            %867 = vst [vmem:[#allocation2 + $0x30] sm:$0xff] %v851
            %868 = vst [vmem:[#allocation2 + $0x38] sm:$0xff] %v852
            %869 = vst [vmem:[#allocation2 + $0x40] sm:$0xff] %v853
            %870 = vst [vmem:[#allocation2 + $0x48] sm:$0xff] %v854
            %871 = vst [vmem:[#allocation2 + $0x50] sm:$0xff] %v855
            %872 = vst [vmem:[#allocation2 + $0x58] sm:$0xff] %v856
            %873 = vst [vmem:[#allocation2 + $0x60] sm:$0xff] %v857
            %874 = vst [vmem:[#allocation2 + $0x68] sm:$0xff] %v858
            %875 = vst [vmem:[#allocation2 + $0x70] sm:$0xff] %v859
            %876 = vst [vmem:[#allocation2 + $0x78] sm:$0xff] %v860
          $region126: #{gtn_forward.7} parent=121 // pred_fallthru
            _
          %v877 = vld [vmem:[#allocation2] sm:$0xff]
          %v878 = vld [vmem:[#allocation2 + $0x8] sm:$0xff]
          %v879 = vld [vmem:[#allocation2 + $0x10] sm:$0xff]
          %v880 = vld [vmem:[#allocation2 + $0x18] sm:$0xff]
          %v881 = vld [vmem:[#allocation2 + $0x20] sm:$0xff]
          %v882 = vld [vmem:[#allocation2 + $0x28] sm:$0xff]
          %v883 = vld [vmem:[#allocation2 + $0x30] sm:$0xff]
          %v884 = vld [vmem:[#allocation2 + $0x38] sm:$0xff]
          %v885 = vld [vmem:[#allocation2 + $0x40] sm:$0xff]
          %v886 = vld [vmem:[#allocation2 + $0x48] sm:$0xff]
          %v887 = vld [vmem:[#allocation2 + $0x50] sm:$0xff]
          %v888 = vld [vmem:[#allocation2 + $0x58] sm:$0xff]
          %v889 = vld [vmem:[#allocation2 + $0x60] sm:$0xff]
          %v890 = vld [vmem:[#allocation2 + $0x68] sm:$0xff]
          %v891 = vld [vmem:[#allocation2 + $0x70] sm:$0xff]
          %v892 = vld [vmem:[#allocation2 + $0x78] sm:$0xff]
          %v893 = vpack.c.bf16 %v878, %v877
          %v894 = vpack.c.bf16 %v880, %v879
          %v895 = vpack.c.bf16 %v882, %v881
          %v896 = vpack.c.bf16 %v884, %v883
          %v897 = vpack.c.bf16 %v886, %v885
          %v898 = vpack.c.bf16 %v888, %v887
          %v899 = vpack.c.bf16 %v890, %v889
          %v900 = vpack.c.bf16 %v892, %v891
          %v909 = vunpack.c.l.b16 %v893
          %v910 = vunpack.c.h.b16 %v893
          %v911 = vunpack.c.l.b16 %v894
          %v912 = vunpack.c.h.b16 %v894
          %v913 = vunpack.c.l.b16 %v895
          %v914 = vunpack.c.h.b16 %v895
          %v915 = vunpack.c.l.b16 %v896
          %v916 = vunpack.c.h.b16 %v896
          %v917 = vunpack.c.l.b16 %v897
          %v918 = vunpack.c.h.b16 %v897
          %v919 = vunpack.c.l.b16 %v898
          %v920 = vunpack.c.h.b16 %v898
          %v921 = vunpack.c.l.b16 %v899
          %v922 = vunpack.c.h.b16 %v899
          %v923 = vunpack.c.l.b16 %v900
          %v924 = vunpack.c.h.b16 %v900
          %v925 = vpack.c.b16 %v909, %v909
          %v926 = vpack.c.b16 %v910, %v910
          %v927 = vpack.c.b16 %v911, %v911
          %v928 = vpack.c.b16 %v912, %v912
          %v929 = vpack.c.b16 %v913, %v913
          %v930 = vpack.c.b16 %v914, %v914
          %v931 = vpack.c.b16 %v915, %v915
          %v932 = vpack.c.b16 %v916, %v916
          %v933 = vpack.c.b16 %v917, %v917
          %v934 = vpack.c.b16 %v918, %v918
          %v935 = vpack.c.b16 %v919, %v919
          %v936 = vpack.c.b16 %v920, %v920
          %v937 = vpack.c.b16 %v921, %v921
          %v938 = vpack.c.b16 %v922, %v922
          %v939 = vpack.c.b16 %v923, %v923
          %v940 = vpack.c.b16 %v924, %v924
          %957 = vst [vmem:[%s440] sm:$0xf] %v925
          %958 = vst [vmem:[%s440 + $0x4] sm:$0xf] %v926
          %959 = vst [vmem:[%s440 + $0x8] sm:$0xf] %v927
          %960 = vst [vmem:[%s440 + $0xc] sm:$0xf] %v928
          %961 = vst [vmem:[%s440 + $0x10] sm:$0xf] %v929
          %962 = vst [vmem:[%s440 + $0x14] sm:$0xf] %v930
          %963 = vst [vmem:[%s440 + $0x18] sm:$0xf] %v931
          %964 = vst [vmem:[%s440 + $0x1c] sm:$0xf] %v932
          %965 = vst [vmem:[%s440 + $0x20] sm:$0xf] %v933
          %966 = vst [vmem:[%s440 + $0x24] sm:$0xf] %v934
          %967 = vst [vmem:[%s440 + $0x28] sm:$0xf] %v935
          %968 = vst [vmem:[%s440 + $0x2c] sm:$0xf] %v936
          %969 = vst [vmem:[%s440 + $0x30] sm:$0xf] %v937
          %970 = vst [vmem:[%s440 + $0x34] sm:$0xf] %v938
          %971 = vst [vmem:[%s440 + $0x38] sm:$0xf] %v939
          %972 = vst [vmem:[%s440 + $0x3c] sm:$0xf] %v940
          %v973 = vld [vmem:[%s460] sm:$0x1]
          %v974 = vadd.f32 %v877, %v878
          %v975 = vadd.f32 %v974, %v879
          %v976 = vadd.f32 %v975, %v880
          %v977 = vadd.f32 %v976, %v881
          %v978 = vadd.f32 %v977, %v882
          %v979 = vadd.f32 %v978, %v883
          %v980 = vadd.f32 %v979, %v884
          %v981 = vadd.f32 %v980, %v885
          %v982 = vadd.f32 %v981, %v886
          %v983 = vadd.f32 %v982, %v887
          %v984 = vadd.f32 %v983, %v888
          %v985 = vadd.f32 %v984, %v889
          %v986 = vadd.f32 %v985, %v890
          %v987 = vadd.f32 %v986, %v891
          %v988 = vadd.f32 %v987, %v892
          %v989 = vrot.slane %v988, 4
          %v990 = vadd.f32 %v988, %v989
          %v991 = vrot.slane %v990, 2
          %v992 = vadd.f32 %v990, %v991
          %v993 = vrot.slane %v992, 1
          %v994 = vadd.f32 %v992, %v993
          %v995 = vadd.f32 %v973, %v994
          %996 = vst [vmem:[%s460] sm:$0x1] %v995
          %p997 = scmp.eq.s32.totalorder %s23, 1
          // Predicated region
          $region127: #{gtn_forward.7} parent=121 // pred_check
            %p998 = pneg %p997
          $region128: #{gtn_forward.7} parent=121 // pred_check_branch
            %1000 = sbr.rel (%p998) target = $region130
          $region129: #{gtn_forward.7} parent=121 // pred_region
            %v1001 = vld [vmem:[%s460] sm:$0x1]
            %vm1002 = vcmp.eq.f32.partialorder %v1001, 0.0
            %v1003 = vrcp.pop %v1001
            %v1004 = vsel %vm1002, 0.0, %v1003
            %1005 = vst [vmem:[%s460] sm:$0x1] %v1004
          $region130: #{gtn_forward.7} parent=121 // pred_fallthru
            _
        $region122: #{gtn_forward.7} parent=101 // pred_fallthru
          _
        %s1006 = sand.u32 %s115, 1
        %s1007 = sand.u32 %s115, 1
        %s1008 = smul.addr %s1007, 64
        %s1009 = scalar_lea.vmem [#allocation5], %s1008
        %p1010 = scmp.lt.s32.totalorder %s21, 1
        %s1011 = scalar_select %p1010, %s21, 1
        %p1012 = scmp.lt.s32.totalorder %s22, 1
        %s1013 = scalar_select %p1012, %s22, 1
        %s1014 = smul.addr %s1011, 2
        %s1015 = sadd.s32 %s1013, %s1014
        %s1016 = scalar_lea.vmem %s3, %s1015
        // Predicated region
        $region131: #{gtn_forward.7} parent=101 // pred_check
          %p1017 = pneg %p125
        $region132: #{gtn_forward.7} parent=101 // pred_check_branch
          %1019 = sbr.rel (%p1017) target = $region134
        $region133: #{gtn_forward.7} parent=101 // pred_region
          %s1020 = smul.u32 16, %s23
          %s1021 = smul.addr %s1020, 2
          %s1022 = sadd.s32 %s22, %s1021
          %s1023 = smul.addr %s21, 64
          %s1024 = sadd.s32 %s1022, %s1023
          %s1025 = smul.addr %s1024, 4
          %s1026 = scalar_lea.vmem %s2, %s1025
          // Predicated region
          $region135: #{gtn_forward.7} parent=133 // pred_check
            _
          $region136: #{gtn_forward.7} parent=133 // pred_check_branch
            %1028 = sbr.rel (0) target = $region138
          $region137: #{gtn_forward.7} parent=133 // pred_region
            // Predicated region
            $region139: #{gtn_forward.7} parent=137 // pred_check
              _
            $region140: #{gtn_forward.7} parent=137 // pred_check_branch
              %1030 = sbr.rel target = $region142
            $region141: #{gtn_forward.7} parent=137 // pred_region
              // Predicated region
              $region154: #{gtn_forward.7} parent=141 // pred_check
                _
              $region155: #{gtn_forward.7} parent=141 // pred_check_branch
                %1075 = sbr.rel (0) target = $region157
              $region156: #{gtn_forward.7} parent=141 // pred_region
                loop: start=0, step=1, limit=1
                $region158: #{gtn_forward.7} parent=156 // loop_pre_header
                  _
                $region159: #{gtn_forward.7} parent=156 // loop_header
                  %s1077 = sphi 0, %s1081
                  %p1078 = scmp.ge.s32.totalorder %s1077, 1
                  %s1082 = sphi %s1009, %s1009
                  %s1083 = sphi %s1026, %s1026
                $region160: #{gtn_forward.7} parent=156 // loop_header_branch
                  %1080 = sbr.rel (%p1078) target = $region164
                $region161: #{gtn_forward.7} parent=156 // loop_body
                  _
                $region162: #{gtn_forward.7} parent=156 // loop_footer
                  %s1081 = sadd.s32 1, %s1077
                $region163: #{gtn_forward.7} parent=156 // loop_footer_branch
                  %1076 = sbr.rel target = $region159
                $region164: #{gtn_forward.7} parent=156 // loop_exit
                  _
                loop: start=0, step=1, limit=1
                $region165: #{gtn_forward.7} parent=156 // loop_pre_header
                  _
                $region166: #{gtn_forward.7} parent=156 // loop_header
                  %s1086 = sphi 0, %s1090
                  %p1087 = scmp.ge.s32.totalorder %s1086, 1
                  %s1091 = sphi %s1009, %s1009
                  %s1092 = sphi %s1026, %s1026
                $region167: #{gtn_forward.7} parent=156 // loop_header_branch
                  %1089 = sbr.rel (%p1087) target = $region171
                $region168: #{gtn_forward.7} parent=156 // loop_body
                  %v1093 = vld [vmem:[%s1091] sm:$0xf]
                  %1094 = vst [vmem:[%s1092] sm:$0xf] %v1093
                  %v1095 = vld [vmem:[%s1091 + $0x4] sm:$0xf]
                  %1096 = vst [vmem:[%s1092 + $0x8] sm:$0xf] %v1095
                  %v1097 = vld [vmem:[%s1091 + $0x8] sm:$0xf]
                  %1098 = vst [vmem:[%s1092 + $0x10] sm:$0xf] %v1097
                  %v1099 = vld [vmem:[%s1091 + $0xc] sm:$0xf]
                  %1100 = vst [vmem:[%s1092 + $0x18] sm:$0xf] %v1099
                  %v1101 = vld [vmem:[%s1091 + $0x10] sm:$0xf]
                  %1102 = vst [vmem:[%s1092 + $0x20] sm:$0xf] %v1101
                  %v1103 = vld [vmem:[%s1091 + $0x14] sm:$0xf]
                  %1104 = vst [vmem:[%s1092 + $0x28] sm:$0xf] %v1103
                  %v1105 = vld [vmem:[%s1091 + $0x18] sm:$0xf]
                  %1106 = vst [vmem:[%s1092 + $0x30] sm:$0xf] %v1105
                  %v1107 = vld [vmem:[%s1091 + $0x1c] sm:$0xf]
                  %1108 = vst [vmem:[%s1092 + $0x38] sm:$0xf] %v1107
                  %v1109 = vld [vmem:[%s1091 + $0x20] sm:$0xf]
                  %1110 = vst [vmem:[%s1092 + $0x40] sm:$0xf] %v1109
                  %v1111 = vld [vmem:[%s1091 + $0x24] sm:$0xf]
                  %1112 = vst [vmem:[%s1092 + $0x48] sm:$0xf] %v1111
                  %v1113 = vld [vmem:[%s1091 + $0x28] sm:$0xf]
                  %1114 = vst [vmem:[%s1092 + $0x50] sm:$0xf] %v1113
                  %v1115 = vld [vmem:[%s1091 + $0x2c] sm:$0xf]
                  %1116 = vst [vmem:[%s1092 + $0x58] sm:$0xf] %v1115
                  %v1117 = vld [vmem:[%s1091 + $0x30] sm:$0xf]
                  %1118 = vst [vmem:[%s1092 + $0x60] sm:$0xf] %v1117
                  %v1119 = vld [vmem:[%s1091 + $0x34] sm:$0xf]
                  %1120 = vst [vmem:[%s1092 + $0x68] sm:$0xf] %v1119
                  %v1121 = vld [vmem:[%s1091 + $0x38] sm:$0xf]
                  %1122 = vst [vmem:[%s1092 + $0x70] sm:$0xf] %v1121
                  %v1123 = vld [vmem:[%s1091 + $0x3c] sm:$0xf]
                  %1124 = vst [vmem:[%s1092 + $0x78] sm:$0xf] %v1123
                $region169: #{gtn_forward.7} parent=156 // loop_footer
                  %s1090 = sadd.s32 1, %s1086
                $region170: #{gtn_forward.7} parent=156 // loop_footer_branch
                  %1085 = sbr.rel target = $region166
                $region171: #{gtn_forward.7} parent=156 // loop_exit
                  _
              $region157: #{gtn_forward.7} parent=141 // pred_fallthru
                _
            $region142: #{gtn_forward.7} parent=137 // pred_fallthru
              _
            // Predicated region
            $region143: #{gtn_forward.7} parent=137 // pred_check
              _
            $region144: #{gtn_forward.7} parent=137 // pred_check_branch
              %1032 = sbr.rel (0) target = $region146
            $region145: #{gtn_forward.7} parent=137 // pred_region
              loop: start=0, step=1, limit=1
              $region147: #{gtn_forward.7} parent=145 // loop_pre_header
                _
              $region148: #{gtn_forward.7} parent=145 // loop_header
                %s1035 = sphi 0, %s1039
                %p1036 = scmp.ge.s32.totalorder %s1035, 1
                %s1040 = sphi %s1009, %s1009
                %s1041 = sphi %s1026, %s1026
              $region149: #{gtn_forward.7} parent=145 // loop_header_branch
                %1038 = sbr.rel (%p1036) target = $region153
              $region150: #{gtn_forward.7} parent=145 // loop_body
                %v1042 = vld [vmem:[%s1040] sm:$0xf]
                %1043 = vst [vmem:[%s1041] sm:$0xf] %v1042
                %v1044 = vld [vmem:[%s1040 + $0x4] sm:$0xf]
                %1045 = vst [vmem:[%s1041 + $0x8] sm:$0xf] %v1044
                %v1046 = vld [vmem:[%s1040 + $0x8] sm:$0xf]
                %1047 = vst [vmem:[%s1041 + $0x10] sm:$0xf] %v1046
                %v1048 = vld [vmem:[%s1040 + $0xc] sm:$0xf]
                %1049 = vst [vmem:[%s1041 + $0x18] sm:$0xf] %v1048
                %v1050 = vld [vmem:[%s1040 + $0x10] sm:$0xf]
                %1051 = vst [vmem:[%s1041 + $0x20] sm:$0xf] %v1050
                %v1052 = vld [vmem:[%s1040 + $0x14] sm:$0xf]
                %1053 = vst [vmem:[%s1041 + $0x28] sm:$0xf] %v1052
                %v1054 = vld [vmem:[%s1040 + $0x18] sm:$0xf]
                %1055 = vst [vmem:[%s1041 + $0x30] sm:$0xf] %v1054
                %v1056 = vld [vmem:[%s1040 + $0x1c] sm:$0xf]
                %1057 = vst [vmem:[%s1041 + $0x38] sm:$0xf] %v1056
                %v1058 = vld [vmem:[%s1040 + $0x20] sm:$0xf]
                %1059 = vst [vmem:[%s1041 + $0x40] sm:$0xf] %v1058
                %v1060 = vld [vmem:[%s1040 + $0x24] sm:$0xf]
                %1061 = vst [vmem:[%s1041 + $0x48] sm:$0xf] %v1060
                %v1062 = vld [vmem:[%s1040 + $0x28] sm:$0xf]
                %1063 = vst [vmem:[%s1041 + $0x50] sm:$0xf] %v1062
                %v1064 = vld [vmem:[%s1040 + $0x2c] sm:$0xf]
                %1065 = vst [vmem:[%s1041 + $0x58] sm:$0xf] %v1064
                %v1066 = vld [vmem:[%s1040 + $0x30] sm:$0xf]
                %1067 = vst [vmem:[%s1041 + $0x60] sm:$0xf] %v1066
                %v1068 = vld [vmem:[%s1040 + $0x34] sm:$0xf]
                %1069 = vst [vmem:[%s1041 + $0x68] sm:$0xf] %v1068
                %v1070 = vld [vmem:[%s1040 + $0x38] sm:$0xf]
                %1071 = vst [vmem:[%s1041 + $0x70] sm:$0xf] %v1070
                %v1072 = vld [vmem:[%s1040 + $0x3c] sm:$0xf]
                %1073 = vst [vmem:[%s1041 + $0x78] sm:$0xf] %v1072
              $region151: #{gtn_forward.7} parent=145 // loop_footer
                %s1039 = sadd.s32 1, %s1035
              $region152: #{gtn_forward.7} parent=145 // loop_footer_branch
                %1034 = sbr.rel target = $region148
              $region153: #{gtn_forward.7} parent=145 // loop_exit
                _
            $region146: #{gtn_forward.7} parent=137 // pred_fallthru
              _
          $region138: #{gtn_forward.7} parent=133 // pred_fallthru
            _
          %1125 = vnop
        $region134: #{gtn_forward.7} parent=101 // pred_fallthru
          _
        // Predicated region
        $region172: #{gtn_forward.7} parent=101 // pred_check
          %p1126 = pneg %p153
        $region173: #{gtn_forward.7} parent=101 // pred_check_branch
          %1128 = sbr.rel (%p1126) target = $region175
        $region174: #{gtn_forward.7} parent=101 // pred_region
          _
        $region175: #{gtn_forward.7} parent=101 // pred_fallthru
          _
      $region102: #{gtn_forward.7} parent=5 // pred_fallthru
        _
      %p1129 = scmp.le.s32.totalorder 2, %s10
      // Predicated region
      $region176: #{gtn_forward.7} parent=5 // pred_check
        %p1130 = pneg %p1129
      $region177: #{gtn_forward.7} parent=5 // pred_check_branch
        %1132 = sbr.rel (%p1130) target = $region179
      $region178: #{gtn_forward.7} parent=5 // pred_region
        %s1133 = ssub.s32 %s10, 2
        // Predicated region
        $region180: #{gtn_forward.7} parent=178 // pred_check
          %p1134 = pneg %p131
        $region181: #{gtn_forward.7} parent=178 // pred_check_branch
          %1136 = sbr.rel (%p1134) target = $region183
        $region182: #{gtn_forward.7} parent=178 // pred_region
          %s1137 = sand.u32 %s116, 1
          %s1138 = sand.u32 %s116, 1
          %s1139 = smul.addr %s1138, 64
          %s1140 = scalar_lea.vmem [#allocation5], %s1139
        $region183: #{gtn_forward.7} parent=178 // pred_fallthru
          _
        // Predicated region
        $region184: #{gtn_forward.7} parent=178 // pred_check
          %p1141 = pneg %p159
        $region185: #{gtn_forward.7} parent=178 // pred_check_branch
          %1143 = sbr.rel (%p1141) target = $region187
        $region186: #{gtn_forward.7} parent=178 // pred_region
          %p1144 = scmp.lt.s32.totalorder %s25, 1
          %s1145 = scalar_select %p1144, %s25, 1
          %p1146 = scmp.lt.s32.totalorder %s26, 1
          %s1147 = scalar_select %p1146, %s26, 1
          %s1148 = smul.addr %s1145, 2
          %s1149 = sadd.s32 %s1147, %s1148
          %s1150 = scalar_lea.vmem %s3, %s1149
        $region187: #{gtn_forward.7} parent=178 // pred_fallthru
          _
      $region179: #{gtn_forward.7} parent=5 // pred_fallthru
        _
    $region6: #{gtn_forward.7} parent=1 // loop_footer
      %s14 = sadd.s32 1, %s10
    $region7: #{gtn_forward.7} parent=1 // loop_footer_branch
      %9 = sbr.rel target = $region3
    $region8: #{gtn_forward.7} parent=1 // loop_exit
      _

// kernel: gtn_forward.8
$region0: #{gtn_forward.8}
  #allocation0 [shape = 'u32[]', space=smem, size = 0x4, offset = 0x4, fixed_abs, tag = 'smem constant byte address 0x4 - core index']
  #allocation1 [shape = 'u32[144,128]{1,0:T(1,128)}', space=vmem, size = 0x12000, scoped, tag = 'internal scratch']
  %s0 = inlined_call_operand.vmem [shape: f32[2,3], index: 0, kind: input, shape index: {}]
  %s1 = inlined_call_operand.vmem [shape: f32[3,256,256], index: 1, kind: input, shape index: {}]
  %s2 = inlined_call_operand.vmem [shape: bf16[2,256,256], index: 2, kind: output, shape index: {}]
  %s3 = sld [smem:[#allocation0]]
  $region120: #{gtn_forward.8} parent=0
    _
  %s5 = ssub.s32 1, %s3
  %s6 = scalar_select 0, %s5, %s3
  $region1: #{gtn_forward.8} parent=0
    #allocation2 [shape = 'u8[1024]{0}', space=smem, size = 0x400, scoped, tag = 'input window, operand 0, single buffered']
    #allocation3 [shape = 's32[2]{0}', space=sflag, size = 0x8, scoped, tag = 'scoped memory for gtn_forward.8']
    #allocation4 [shape = 'u8[393216]{0}', space=vmem, size = 0x60000, scoped, tag = 'input window, operand 1']
    #allocation5 [shape = 'u8[131072]{0}', space=vmem, size = 0x20000, scoped, tag = 'output window, operand 0']
    %7 = vsyncpa [#allocation3], 0
    loop: start=0, step=1, limit=6
    $region2: #{gtn_forward.8} parent=1 // loop_pre_header
      _
    $region3: #{gtn_forward.8} parent=1 // loop_header
      %s9 = sphi 0, %s13
      %p10 = scmp.ge.s32.totalorder %s9, 6
      %s16 = sphi 0, %s28
      %s17 = sphi 0, %s24
      %s18 = sphi 0, %s16
      %s19 = sphi 0, %s17
      %s20 = sphi 0, %s18
      %s21 = sphi 0, %s19
      %s29 = sphi 0, %s29
      %s31 = sphi 0, %s29
      %s32 = sphi 0, %s31
      %s46 = sphi 0, %s32
      %s54 = sphi 0, %s56
      %s57 = sphi 0, %s54
      %s58 = sphi 0, %s57
      %s74 = sphi 0, %s58
      %s82 = sphi 0, %s84
      %s85 = sphi 0, %s82
      %s86 = sphi 0, %s85
      %s102 = sphi 0, %s86
    $region4: #{gtn_forward.8} parent=1 // loop_header_branch
      %12 = sbr.rel (%p10) target = $region8
    $region5: #{gtn_forward.8} parent=1 // loop_body
      %s14 = ssub.s32 %s9, 1
      %s15 = ssub.s32 %s9, 2
      %s22 = sadd.s32 1, %s17
      %p23 = scmp.ge.s32.totalorder %s22, 2
      %s24 = scalar_select %p23, 0, %s22
      %s25 = sadd.s32 1, %s16
      %s26 = scalar_select %p23, %s25, %s16
      %p27 = scmp.ge.s32.totalorder %s26, 2
      %s28 = scalar_select %p27, 0, %s26
      %s30 = sadd.s32 %s29, 1
      %p33 = scmp.eq.s32.totalorder %s9, 3
      %p34 = scmp.ne.s32.totalorder %s29, %s31
      %p35 = scmp.eq.s32.totalorder %s9, 0
      %p36 = por %p34, %p35
      %p37 = scmp.ne.s32.totalorder %s29, %s31
      %p38 = scmp.eq.s32.totalorder %s14, 3
      %p39 = por %p37, %p38
      %p40 = scmp.ne.s32.totalorder %s31, %s32
      %p41 = scmp.eq.s32.totalorder %s14, 0
      %p42 = por %p40, %p41
      %p43 = scmp.ne.s32.totalorder %s31, %s32
      %p44 = scmp.eq.s32.totalorder %s15, 3
      %p45 = por %p43, %p44
      %p47 = scmp.ne.s32.totalorder %s32, %s46
      %p48 = scmp.eq.s32.totalorder %s15, 0
      %p49 = por %p47, %p48
      %s50 = ssub.s32 %s16, %s28
      %s51 = ssub.s32 %s17, %s24
      %s52 = sor.u32 %s50, %s51
      %p53 = scmp.eq.s32.totalorder %s52, 0
      %s55 = sadd.s32 %s54, 1
      %s56 = scalar_select %p53, %s54, %s55
      %p59 = pneg %p53
      %p60 = scmp.eq.s32.totalorder %s9, 3
      %p61 = por %p59, %p60
      %p62 = scmp.ne.s32.totalorder %s54, %s57
      %p63 = scmp.eq.s32.totalorder %s9, 0
      %p64 = por %p62, %p63
      %p65 = scmp.ne.s32.totalorder %s54, %s57
      %p66 = scmp.eq.s32.totalorder %s14, 3
      %p67 = por %p65, %p66
      %p68 = scmp.ne.s32.totalorder %s57, %s58
      %p69 = scmp.eq.s32.totalorder %s14, 0
      %p70 = por %p68, %p69
      %p71 = scmp.ne.s32.totalorder %s57, %s58
      %p72 = scmp.eq.s32.totalorder %s15, 3
      %p73 = por %p71, %p72
      %p75 = scmp.ne.s32.totalorder %s58, %s74
      %p76 = scmp.eq.s32.totalorder %s15, 0
      %p77 = por %p75, %p76
      %s78 = ssub.s32 %s16, %s28
      %s79 = ssub.s32 %s17, %s24
      %s80 = sor.u32 %s78, %s79
      %p81 = scmp.eq.s32.totalorder %s80, 0
      %s83 = sadd.s32 %s82, 1
      %s84 = scalar_select %p81, %s82, %s83
      %p87 = pneg %p81
      %p88 = scmp.eq.s32.totalorder %s9, 3
      %p89 = por %p87, %p88
      %p90 = scmp.ne.s32.totalorder %s82, %s85
      %p91 = scmp.eq.s32.totalorder %s9, 0
      %p92 = por %p90, %p91
      %p93 = scmp.ne.s32.totalorder %s82, %s85
      %p94 = scmp.eq.s32.totalorder %s14, 3
      %p95 = por %p93, %p94
      %p96 = scmp.ne.s32.totalorder %s85, %s86
      %p97 = scmp.eq.s32.totalorder %s14, 0
      %p98 = por %p96, %p97
      %p99 = scmp.ne.s32.totalorder %s85, %s86
      %p100 = scmp.eq.s32.totalorder %s15, 3
      %p101 = por %p99, %p100
      %p103 = scmp.ne.s32.totalorder %s86, %s102
      %p104 = scmp.eq.s32.totalorder %s15, 0
      %p105 = por %p103, %p104
      %p106 = scmp.le.s32.totalorder 1, %s9
      %p107 = scmp.lt.s32.totalorder %s9, 5
      %p108 = pnand %p106, %p107
      %p109 = pneg %p108
      // Predicated region
      $region9: #{gtn_forward.8} parent=5 // pred_check
        _
      $region10: #{gtn_forward.8} parent=5 // pred_check_branch
        %111 = sbr.rel (%p108) target = $region12
      $region11: #{gtn_forward.8} parent=5 // pred_region
        %s112 = ssub.s32 %s9, 1
        // Predicated region
        $region13: #{gtn_forward.8} parent=11 // pred_check
          %p113 = pneg %p42
        $region14: #{gtn_forward.8} parent=11 // pred_check_branch
          %115 = sbr.rel (%p113) target = $region16
        $region15: #{gtn_forward.8} parent=11 // pred_region
          %s117 = ssub.s32 32, 32
          %118 = vsyncadd [#allocation3], %s117
          %s120 = sshll.u32 %s0, 4
          %s121 = int_to_ptr.vmem [resolvable:$true] %s120
          %123 = dma.vmem_to_smem %s121, 32, [#allocation2], [#allocation3]
        $region16: #{gtn_forward.8} parent=11 // pred_fallthru
          _
      $region12: #{gtn_forward.8} parent=5 // pred_fallthru
        _
      %p124 = scmp.lt.s32.totalorder %s9, 4
      // Predicated region
      $region17: #{gtn_forward.8} parent=5 // pred_check
        %p125 = pneg %p124
      $region18: #{gtn_forward.8} parent=5 // pred_check_branch
        %127 = sbr.rel (%p125) target = $region20
      $region19: #{gtn_forward.8} parent=5 // pred_region
        // Predicated region
        $region21: #{gtn_forward.8} parent=19 // pred_check
          %p128 = pneg %p64
        $region22: #{gtn_forward.8} parent=19 // pred_check_branch
          %130 = sbr.rel (%p128) target = $region24
        $region23: #{gtn_forward.8} parent=19 // pred_region
          %s131 = sand.u32 %s54, 1
          %s132 = sand.u32 %s54, 1
          %s133 = smul.addr %s132, 384
          %s134 = scalar_lea.vmem [#allocation4], %s133
          %s135 = smul.u32 16, %s16
          %s136 = smul.addr %s135, 2
          %s137 = sadd.s32 %s17, %s136
          %s138 = smul.addr %s137, 8
          %s139 = scalar_lea.vmem %s1, %s138
          // Predicated region
          $region25: #{gtn_forward.8} parent=23 // pred_check
            _
          $region26: #{gtn_forward.8} parent=23 // pred_check_branch
            %141 = sbr.rel (0) target = $region28
          $region27: #{gtn_forward.8} parent=23 // pred_region
            // Predicated region
            $region29: #{gtn_forward.8} parent=27 // pred_check
              _
            $region30: #{gtn_forward.8} parent=27 // pred_check_branch
              %143 = sbr.rel (0) target = $region32
            $region31: #{gtn_forward.8} parent=27 // pred_region
              // Predicated region
              $region44: #{gtn_forward.8} parent=31 // pred_check
                _
              $region45: #{gtn_forward.8} parent=31 // pred_check_branch
                %252 = sbr.rel (0) target = $region47
              $region46: #{gtn_forward.8} parent=31 // pred_region
                loop: start=0, step=1, limit=1
                $region48: #{gtn_forward.8} parent=46 // loop_pre_header
                  _
                $region49: #{gtn_forward.8} parent=46 // loop_header
                  %s254 = sphi 0, %s258
                  %p255 = scmp.ge.s32.totalorder %s254, 1
                  %s259 = sphi %s139, %s139
                  %s260 = sphi %s134, %s134
                $region50: #{gtn_forward.8} parent=46 // loop_header_branch
                  %257 = sbr.rel (%p255) target = $region54
                $region51: #{gtn_forward.8} parent=46 // loop_body
                  %v261 = vld [vmem:[%s259] sm:$0xff]
                  %262 = vst [vmem:[%s260] sm:$0xff] %v261
                  %v263 = vld [vmem:[%s259 + $0x10] sm:$0xff]
                  %264 = vst [vmem:[%s260 + $0x8] sm:$0xff] %v263
                  %v265 = vld [vmem:[%s259 + $0x20] sm:$0xff]
                  %266 = vst [vmem:[%s260 + $0x10] sm:$0xff] %v265
                  %v267 = vld [vmem:[%s259 + $0x30] sm:$0xff]
                  %268 = vst [vmem:[%s260 + $0x18] sm:$0xff] %v267
                  %v269 = vld [vmem:[%s259 + $0x40] sm:$0xff]
                  %270 = vst [vmem:[%s260 + $0x20] sm:$0xff] %v269
                  %v271 = vld [vmem:[%s259 + $0x50] sm:$0xff]
                  %272 = vst [vmem:[%s260 + $0x28] sm:$0xff] %v271
                  %v273 = vld [vmem:[%s259 + $0x60] sm:$0xff]
                  %274 = vst [vmem:[%s260 + $0x30] sm:$0xff] %v273
                  %v275 = vld [vmem:[%s259 + $0x70] sm:$0xff]
                  %276 = vst [vmem:[%s260 + $0x38] sm:$0xff] %v275
                  %v277 = vld [vmem:[%s259 + $0x80] sm:$0xff]
                  %278 = vst [vmem:[%s260 + $0x40] sm:$0xff] %v277
                  %v279 = vld [vmem:[%s259 + $0x90] sm:$0xff]
                  %280 = vst [vmem:[%s260 + $0x48] sm:$0xff] %v279
                  %v281 = vld [vmem:[%s259 + $0xa0] sm:$0xff]
                  %282 = vst [vmem:[%s260 + $0x50] sm:$0xff] %v281
                  %v283 = vld [vmem:[%s259 + $0xb0] sm:$0xff]
                  %284 = vst [vmem:[%s260 + $0x58] sm:$0xff] %v283
                  %v285 = vld [vmem:[%s259 + $0xc0] sm:$0xff]
                  %286 = vst [vmem:[%s260 + $0x60] sm:$0xff] %v285
                  %v287 = vld [vmem:[%s259 + $0xd0] sm:$0xff]
                  %288 = vst [vmem:[%s260 + $0x68] sm:$0xff] %v287
                  %v289 = vld [vmem:[%s259 + $0xe0] sm:$0xff]
                  %290 = vst [vmem:[%s260 + $0x70] sm:$0xff] %v289
                  %v291 = vld [vmem:[%s259 + $0xf0] sm:$0xff]
                  %292 = vst [vmem:[%s260 + $0x78] sm:$0xff] %v291
                  %v293 = vld [vmem:[%s259 + $0x200] sm:$0xff]
                  %294 = vst [vmem:[%s260 + $0x80] sm:$0xff] %v293
                  %v295 = vld [vmem:[%s259 + $0x210] sm:$0xff]
                  %296 = vst [vmem:[%s260 + $0x88] sm:$0xff] %v295
                  %v297 = vld [vmem:[%s259 + $0x220] sm:$0xff]
                  %298 = vst [vmem:[%s260 + $0x90] sm:$0xff] %v297
                  %v299 = vld [vmem:[%s259 + $0x230] sm:$0xff]
                  %300 = vst [vmem:[%s260 + $0x98] sm:$0xff] %v299
                  %v301 = vld [vmem:[%s259 + $0x240] sm:$0xff]
                  %302 = vst [vmem:[%s260 + $0xa0] sm:$0xff] %v301
                  %v303 = vld [vmem:[%s259 + $0x250] sm:$0xff]
                  %304 = vst [vmem:[%s260 + $0xa8] sm:$0xff] %v303
                  %v305 = vld [vmem:[%s259 + $0x260] sm:$0xff]
                  %306 = vst [vmem:[%s260 + $0xb0] sm:$0xff] %v305
                  %v307 = vld [vmem:[%s259 + $0x270] sm:$0xff]
                  %308 = vst [vmem:[%s260 + $0xb8] sm:$0xff] %v307
                  %v309 = vld [vmem:[%s259 + $0x280] sm:$0xff]
                  %310 = vst [vmem:[%s260 + $0xc0] sm:$0xff] %v309
                  %v311 = vld [vmem:[%s259 + $0x290] sm:$0xff]
                  %312 = vst [vmem:[%s260 + $0xc8] sm:$0xff] %v311
                  %v313 = vld [vmem:[%s259 + $0x2a0] sm:$0xff]
                  %314 = vst [vmem:[%s260 + $0xd0] sm:$0xff] %v313
                  %v315 = vld [vmem:[%s259 + $0x2b0] sm:$0xff]
                  %316 = vst [vmem:[%s260 + $0xd8] sm:$0xff] %v315
                  %v317 = vld [vmem:[%s259 + $0x2c0] sm:$0xff]
                  %318 = vst [vmem:[%s260 + $0xe0] sm:$0xff] %v317
                  %v319 = vld [vmem:[%s259 + $0x2d0] sm:$0xff]
                  %320 = vst [vmem:[%s260 + $0xe8] sm:$0xff] %v319
                  %v321 = vld [vmem:[%s259 + $0x2e0] sm:$0xff]
                  %322 = vst [vmem:[%s260 + $0xf0] sm:$0xff] %v321
                  %v323 = vld [vmem:[%s259 + $0x2f0] sm:$0xff]
                  %324 = vst [vmem:[%s260 + $0xf8] sm:$0xff] %v323
                  %v325 = vld [vmem:[%s259 + $0x400] sm:$0xff]
                  %326 = vst [vmem:[%s260 + $0x100] sm:$0xff] %v325
                  %v327 = vld [vmem:[%s259 + $0x410] sm:$0xff]
                  %328 = vst [vmem:[%s260 + $0x108] sm:$0xff] %v327
                  %v329 = vld [vmem:[%s259 + $0x420] sm:$0xff]
                  %330 = vst [vmem:[%s260 + $0x110] sm:$0xff] %v329
                  %v331 = vld [vmem:[%s259 + $0x430] sm:$0xff]
                  %332 = vst [vmem:[%s260 + $0x118] sm:$0xff] %v331
                  %v333 = vld [vmem:[%s259 + $0x440] sm:$0xff]
                  %334 = vst [vmem:[%s260 + $0x120] sm:$0xff] %v333
                  %v335 = vld [vmem:[%s259 + $0x450] sm:$0xff]
                  %336 = vst [vmem:[%s260 + $0x128] sm:$0xff] %v335
                  %v337 = vld [vmem:[%s259 + $0x460] sm:$0xff]
                  %338 = vst [vmem:[%s260 + $0x130] sm:$0xff] %v337
                  %v339 = vld [vmem:[%s259 + $0x470] sm:$0xff]
                  %340 = vst [vmem:[%s260 + $0x138] sm:$0xff] %v339
                  %v341 = vld [vmem:[%s259 + $0x480] sm:$0xff]
                  %342 = vst [vmem:[%s260 + $0x140] sm:$0xff] %v341
                  %v343 = vld [vmem:[%s259 + $0x490] sm:$0xff]
                  %344 = vst [vmem:[%s260 + $0x148] sm:$0xff] %v343
                  %v345 = vld [vmem:[%s259 + $0x4a0] sm:$0xff]
                  %346 = vst [vmem:[%s260 + $0x150] sm:$0xff] %v345
                  %v347 = vld [vmem:[%s259 + $0x4b0] sm:$0xff]
                  %348 = vst [vmem:[%s260 + $0x158] sm:$0xff] %v347
                  %v349 = vld [vmem:[%s259 + $0x4c0] sm:$0xff]
                  %350 = vst [vmem:[%s260 + $0x160] sm:$0xff] %v349
                  %v351 = vld [vmem:[%s259 + $0x4d0] sm:$0xff]
                  %352 = vst [vmem:[%s260 + $0x168] sm:$0xff] %v351
                  %v353 = vld [vmem:[%s259 + $0x4e0] sm:$0xff]
                  %354 = vst [vmem:[%s260 + $0x170] sm:$0xff] %v353
                  %v355 = vld [vmem:[%s259 + $0x4f0] sm:$0xff]
                  %356 = vst [vmem:[%s260 + $0x178] sm:$0xff] %v355
                $region52: #{gtn_forward.8} parent=46 // loop_footer
                  %s258 = sadd.s32 1, %s254
                $region53: #{gtn_forward.8} parent=46 // loop_footer_branch
                  %253 = sbr.rel target = $region49
                $region54: #{gtn_forward.8} parent=46 // loop_exit
                  _
              $region47: #{gtn_forward.8} parent=31 // pred_fallthru
                _
              // Predicated region
              $region55: #{gtn_forward.8} parent=31 // pred_check
                _
              $region56: #{gtn_forward.8} parent=31 // pred_check_branch
                %358 = sbr.rel target = $region58
              $region57: #{gtn_forward.8} parent=31 // pred_region
                _
              $region58: #{gtn_forward.8} parent=31 // pred_fallthru
                _
            $region32: #{gtn_forward.8} parent=27 // pred_fallthru
              _
            // Predicated region
            $region33: #{gtn_forward.8} parent=27 // pred_check
              _
            $region34: #{gtn_forward.8} parent=27 // pred_check_branch
              %145 = sbr.rel target = $region36
            $region35: #{gtn_forward.8} parent=27 // pred_region
              loop: start=0, step=1, limit=1
              $region37: #{gtn_forward.8} parent=35 // loop_pre_header
                _
              $region38: #{gtn_forward.8} parent=35 // loop_header
                %s148 = sphi 0, %s152
                %p149 = scmp.ge.s32.totalorder %s148, 1
                %s153 = sphi %s139, %s139
                %s154 = sphi %s134, %s134
              $region39: #{gtn_forward.8} parent=35 // loop_header_branch
                %151 = sbr.rel (%p149) target = $region43
              $region40: #{gtn_forward.8} parent=35 // loop_body
                %v155 = vld [vmem:[%s153] sm:$0xff]
                %156 = vst [vmem:[%s154] sm:$0xff] %v155
                %v157 = vld [vmem:[%s153 + $0x10] sm:$0xff]
                %158 = vst [vmem:[%s154 + $0x8] sm:$0xff] %v157
                %v159 = vld [vmem:[%s153 + $0x20] sm:$0xff]
                %160 = vst [vmem:[%s154 + $0x10] sm:$0xff] %v159
                %v161 = vld [vmem:[%s153 + $0x30] sm:$0xff]
                %162 = vst [vmem:[%s154 + $0x18] sm:$0xff] %v161
                %v163 = vld [vmem:[%s153 + $0x40] sm:$0xff]
                %164 = vst [vmem:[%s154 + $0x20] sm:$0xff] %v163
                %v165 = vld [vmem:[%s153 + $0x50] sm:$0xff]
                %166 = vst [vmem:[%s154 + $0x28] sm:$0xff] %v165
                %v167 = vld [vmem:[%s153 + $0x60] sm:$0xff]
                %168 = vst [vmem:[%s154 + $0x30] sm:$0xff] %v167
                %v169 = vld [vmem:[%s153 + $0x70] sm:$0xff]
                %170 = vst [vmem:[%s154 + $0x38] sm:$0xff] %v169
                %v171 = vld [vmem:[%s153 + $0x80] sm:$0xff]
                %172 = vst [vmem:[%s154 + $0x40] sm:$0xff] %v171
                %v173 = vld [vmem:[%s153 + $0x90] sm:$0xff]
                %174 = vst [vmem:[%s154 + $0x48] sm:$0xff] %v173
                %v175 = vld [vmem:[%s153 + $0xa0] sm:$0xff]
                %176 = vst [vmem:[%s154 + $0x50] sm:$0xff] %v175
                %v177 = vld [vmem:[%s153 + $0xb0] sm:$0xff]
                %178 = vst [vmem:[%s154 + $0x58] sm:$0xff] %v177
                %v179 = vld [vmem:[%s153 + $0xc0] sm:$0xff]
                %180 = vst [vmem:[%s154 + $0x60] sm:$0xff] %v179
                %v181 = vld [vmem:[%s153 + $0xd0] sm:$0xff]
                %182 = vst [vmem:[%s154 + $0x68] sm:$0xff] %v181
                %v183 = vld [vmem:[%s153 + $0xe0] sm:$0xff]
                %184 = vst [vmem:[%s154 + $0x70] sm:$0xff] %v183
                %v185 = vld [vmem:[%s153 + $0xf0] sm:$0xff]
                %186 = vst [vmem:[%s154 + $0x78] sm:$0xff] %v185
                %v187 = vld [vmem:[%s153 + $0x200] sm:$0xff]
                %188 = vst [vmem:[%s154 + $0x80] sm:$0xff] %v187
                %v189 = vld [vmem:[%s153 + $0x210] sm:$0xff]
                %190 = vst [vmem:[%s154 + $0x88] sm:$0xff] %v189
                %v191 = vld [vmem:[%s153 + $0x220] sm:$0xff]
                %192 = vst [vmem:[%s154 + $0x90] sm:$0xff] %v191
                %v193 = vld [vmem:[%s153 + $0x230] sm:$0xff]
                %194 = vst [vmem:[%s154 + $0x98] sm:$0xff] %v193
                %v195 = vld [vmem:[%s153 + $0x240] sm:$0xff]
                %196 = vst [vmem:[%s154 + $0xa0] sm:$0xff] %v195
                %v197 = vld [vmem:[%s153 + $0x250] sm:$0xff]
                %198 = vst [vmem:[%s154 + $0xa8] sm:$0xff] %v197
                %v199 = vld [vmem:[%s153 + $0x260] sm:$0xff]
                %200 = vst [vmem:[%s154 + $0xb0] sm:$0xff] %v199
                %v201 = vld [vmem:[%s153 + $0x270] sm:$0xff]
                %202 = vst [vmem:[%s154 + $0xb8] sm:$0xff] %v201
                %v203 = vld [vmem:[%s153 + $0x280] sm:$0xff]
                %204 = vst [vmem:[%s154 + $0xc0] sm:$0xff] %v203
                %v205 = vld [vmem:[%s153 + $0x290] sm:$0xff]
                %206 = vst [vmem:[%s154 + $0xc8] sm:$0xff] %v205
                %v207 = vld [vmem:[%s153 + $0x2a0] sm:$0xff]
                %208 = vst [vmem:[%s154 + $0xd0] sm:$0xff] %v207
                %v209 = vld [vmem:[%s153 + $0x2b0] sm:$0xff]
                %210 = vst [vmem:[%s154 + $0xd8] sm:$0xff] %v209
                %v211 = vld [vmem:[%s153 + $0x2c0] sm:$0xff]
                %212 = vst [vmem:[%s154 + $0xe0] sm:$0xff] %v211
                %v213 = vld [vmem:[%s153 + $0x2d0] sm:$0xff]
                %214 = vst [vmem:[%s154 + $0xe8] sm:$0xff] %v213
                %v215 = vld [vmem:[%s153 + $0x2e0] sm:$0xff]
                %216 = vst [vmem:[%s154 + $0xf0] sm:$0xff] %v215
                %v217 = vld [vmem:[%s153 + $0x2f0] sm:$0xff]
                %218 = vst [vmem:[%s154 + $0xf8] sm:$0xff] %v217
                %v219 = vld [vmem:[%s153 + $0x400] sm:$0xff]
                %220 = vst [vmem:[%s154 + $0x100] sm:$0xff] %v219
                %v221 = vld [vmem:[%s153 + $0x410] sm:$0xff]
                %222 = vst [vmem:[%s154 + $0x108] sm:$0xff] %v221
                %v223 = vld [vmem:[%s153 + $0x420] sm:$0xff]
                %224 = vst [vmem:[%s154 + $0x110] sm:$0xff] %v223
                %v225 = vld [vmem:[%s153 + $0x430] sm:$0xff]
                %226 = vst [vmem:[%s154 + $0x118] sm:$0xff] %v225
                %v227 = vld [vmem:[%s153 + $0x440] sm:$0xff]
                %228 = vst [vmem:[%s154 + $0x120] sm:$0xff] %v227
                %v229 = vld [vmem:[%s153 + $0x450] sm:$0xff]
                %230 = vst [vmem:[%s154 + $0x128] sm:$0xff] %v229
                %v231 = vld [vmem:[%s153 + $0x460] sm:$0xff]
                %232 = vst [vmem:[%s154 + $0x130] sm:$0xff] %v231
                %v233 = vld [vmem:[%s153 + $0x470] sm:$0xff]
                %234 = vst [vmem:[%s154 + $0x138] sm:$0xff] %v233
                %v235 = vld [vmem:[%s153 + $0x480] sm:$0xff]
                %236 = vst [vmem:[%s154 + $0x140] sm:$0xff] %v235
                %v237 = vld [vmem:[%s153 + $0x490] sm:$0xff]
                %238 = vst [vmem:[%s154 + $0x148] sm:$0xff] %v237
                %v239 = vld [vmem:[%s153 + $0x4a0] sm:$0xff]
                %240 = vst [vmem:[%s154 + $0x150] sm:$0xff] %v239
                %v241 = vld [vmem:[%s153 + $0x4b0] sm:$0xff]
                %242 = vst [vmem:[%s154 + $0x158] sm:$0xff] %v241
                %v243 = vld [vmem:[%s153 + $0x4c0] sm:$0xff]
                %244 = vst [vmem:[%s154 + $0x160] sm:$0xff] %v243
                %v245 = vld [vmem:[%s153 + $0x4d0] sm:$0xff]
                %246 = vst [vmem:[%s154 + $0x168] sm:$0xff] %v245
                %v247 = vld [vmem:[%s153 + $0x4e0] sm:$0xff]
                %248 = vst [vmem:[%s154 + $0x170] sm:$0xff] %v247
                %v249 = vld [vmem:[%s153 + $0x4f0] sm:$0xff]
                %250 = vst [vmem:[%s154 + $0x178] sm:$0xff] %v249
              $region41: #{gtn_forward.8} parent=35 // loop_footer
                %s152 = sadd.s32 1, %s148
              $region42: #{gtn_forward.8} parent=35 // loop_footer_branch
                %147 = sbr.rel target = $region38
              $region43: #{gtn_forward.8} parent=35 // loop_exit
                _
            $region36: #{gtn_forward.8} parent=27 // pred_fallthru
              _
          $region28: #{gtn_forward.8} parent=23 // pred_fallthru
            _
          %359 = vnop
        $region24: #{gtn_forward.8} parent=19 // pred_fallthru
          _
      $region20: #{gtn_forward.8} parent=5 // pred_fallthru
        _
      %p360 = scmp.le.s32.totalorder 1, %s9
      %p361 = scmp.lt.s32.totalorder %s9, 5
      %p362 = pnand %p360, %p361
      %p363 = pneg %p362
      // Predicated region
      $region59: #{gtn_forward.8} parent=5 // pred_check
        _
      $region60: #{gtn_forward.8} parent=5 // pred_check_branch
        %365 = sbr.rel (%p362) target = $region62
      $region61: #{gtn_forward.8} parent=5 // pred_region
        %s366 = ssub.s32 %s9, 1
        // Predicated region
        $region63: #{gtn_forward.8} parent=61 // pred_check
          %p367 = pneg %p42
        $region64: #{gtn_forward.8} parent=61 // pred_check_branch
          %369 = sbr.rel (%p367) target = $region66
        $region65: #{gtn_forward.8} parent=61 // pred_region
          %370 = dma.done [#allocation3], 32
        $region66: #{gtn_forward.8} parent=61 // pred_fallthru
          _
        %s371 = sand.u32 %s57, 1
        %s372 = sand.u32 %s57, 1
        %s373 = smul.addr %s372, 384
        %s374 = scalar_lea.vmem [#allocation4], %s373
        // Predicated region
        $region67: #{gtn_forward.8} parent=61 // pred_check
          %p375 = pneg %p70
        $region68: #{gtn_forward.8} parent=61 // pred_check_branch
          %377 = sbr.rel (%p375) target = $region70
        $region69: #{gtn_forward.8} parent=61 // pred_region
          _
        $region70: #{gtn_forward.8} parent=61 // pred_fallthru
          _
        %378 = sfence
        %p379 = pneg %p42
        %p380 = pneg %p39
        %s381 = sand.u32 %s57, 1
        %s382 = sand.u32 %s57, 1
        %s383 = smul.addr %s382, 384
        %s384 = scalar_lea.vmem [#allocation4], %s383
        %p385 = pneg %p70
        %p386 = pneg %p67
        %p387 = pneg %p98
        %p388 = pneg %p95
        %s389 = sand.u32 %s85, 1
        %s390 = sand.u32 %s85, 1
        %s391 = smul.addr %s390, 128
        %s392 = scalar_lea.vmem [#allocation5], %s391
        %s393 = smul.u32 16, %s18
        %s394 = smul.u32 16, %s18
        %v395 = vld [vmem:[%s374] sm:$0xff]
        %v396 = vld [vmem:[%s374 + $0x8] sm:$0xff]
        %v397 = vld [vmem:[%s374 + $0x10] sm:$0xff]
        %v398 = vld [vmem:[%s374 + $0x18] sm:$0xff]
        %v399 = vld [vmem:[%s374 + $0x20] sm:$0xff]
        %v400 = vld [vmem:[%s374 + $0x28] sm:$0xff]
        %v401 = vld [vmem:[%s374 + $0x30] sm:$0xff]
        %v402 = vld [vmem:[%s374 + $0x38] sm:$0xff]
        %v403 = vld [vmem:[%s374 + $0x40] sm:$0xff]
        %v404 = vld [vmem:[%s374 + $0x48] sm:$0xff]
        %v405 = vld [vmem:[%s374 + $0x50] sm:$0xff]
        %v406 = vld [vmem:[%s374 + $0x58] sm:$0xff]
        %v407 = vld [vmem:[%s374 + $0x60] sm:$0xff]
        %v408 = vld [vmem:[%s374 + $0x68] sm:$0xff]
        %v409 = vld [vmem:[%s374 + $0x70] sm:$0xff]
        %v410 = vld [vmem:[%s374 + $0x78] sm:$0xff]
        %s411 = sld [smem:[#allocation2]]
        %v412 = vstv %s411
        %v413 = vmul.f32 %v395, %v412
        %v414 = vmul.f32 %v396, %v412
        %v415 = vmul.f32 %v397, %v412
        %v416 = vmul.f32 %v398, %v412
        %v417 = vmul.f32 %v399, %v412
        %v418 = vmul.f32 %v400, %v412
        %v419 = vmul.f32 %v401, %v412
        %v420 = vmul.f32 %v402, %v412
        %v421 = vmul.f32 %v403, %v412
        %v422 = vmul.f32 %v404, %v412
        %v423 = vmul.f32 %v405, %v412
        %v424 = vmul.f32 %v406, %v412
        %v425 = vmul.f32 %v407, %v412
        %v426 = vmul.f32 %v408, %v412
        %v427 = vmul.f32 %v409, %v412
        %v428 = vmul.f32 %v410, %v412
        %s429 = scalar_lea.vmem %s374, 128 [#allocation4]
        %v430 = vld [vmem:[%s429] sm:$0xff]
        %v431 = vld [vmem:[%s429 + $0x8] sm:$0xff]
        %v432 = vld [vmem:[%s429 + $0x10] sm:$0xff]
        %v433 = vld [vmem:[%s429 + $0x18] sm:$0xff]
        %v434 = vld [vmem:[%s429 + $0x20] sm:$0xff]
        %v435 = vld [vmem:[%s429 + $0x28] sm:$0xff]
        %v436 = vld [vmem:[%s429 + $0x30] sm:$0xff]
        %v437 = vld [vmem:[%s429 + $0x38] sm:$0xff]
        %v438 = vld [vmem:[%s429 + $0x40] sm:$0xff]
        %v439 = vld [vmem:[%s429 + $0x48] sm:$0xff]
        %v440 = vld [vmem:[%s429 + $0x50] sm:$0xff]
        %v441 = vld [vmem:[%s429 + $0x58] sm:$0xff]
        %v442 = vld [vmem:[%s429 + $0x60] sm:$0xff]
        %v443 = vld [vmem:[%s429 + $0x68] sm:$0xff]
        %v444 = vld [vmem:[%s429 + $0x70] sm:$0xff]
        %v445 = vld [vmem:[%s429 + $0x78] sm:$0xff]
        %s446 = sld [smem:[#allocation2 + $0x1]]
        %v447 = vstv %s446
        %v448 = vmul.f32 %v430, %v447
        %v449 = vmul.f32 %v431, %v447
        %v450 = vmul.f32 %v432, %v447
        %v451 = vmul.f32 %v433, %v447
        %v452 = vmul.f32 %v434, %v447
        %v453 = vmul.f32 %v435, %v447
        %v454 = vmul.f32 %v436, %v447
        %v455 = vmul.f32 %v437, %v447
        %v456 = vmul.f32 %v438, %v447
        %v457 = vmul.f32 %v439, %v447
        %v458 = vmul.f32 %v440, %v447
        %v459 = vmul.f32 %v441, %v447
        %v460 = vmul.f32 %v442, %v447
        %v461 = vmul.f32 %v443, %v447
        %v462 = vmul.f32 %v444, %v447
        %v463 = vmul.f32 %v445, %v447
        %v464 = vadd.f32 %v413, %v448
        %v465 = vadd.f32 %v414, %v449
        %v466 = vadd.f32 %v415, %v450
        %v467 = vadd.f32 %v416, %v451
        %v468 = vadd.f32 %v417, %v452
        %v469 = vadd.f32 %v418, %v453
        %v470 = vadd.f32 %v419, %v454
        %v471 = vadd.f32 %v420, %v455
        %v472 = vadd.f32 %v421, %v456
        %v473 = vadd.f32 %v422, %v457
        %v474 = vadd.f32 %v423, %v458
        %v475 = vadd.f32 %v424, %v459
        %v476 = vadd.f32 %v425, %v460
        %v477 = vadd.f32 %v426, %v461
        %v478 = vadd.f32 %v427, %v462
        %v479 = vadd.f32 %v428, %v463
        %s480 = scalar_lea.vmem %s374, 256 [#allocation4]
        %v481 = vld [vmem:[%s480] sm:$0xff]
        %v482 = vld [vmem:[%s480 + $0x8] sm:$0xff]
        %v483 = vld [vmem:[%s480 + $0x10] sm:$0xff]
        %v484 = vld [vmem:[%s480 + $0x18] sm:$0xff]
        %v485 = vld [vmem:[%s480 + $0x20] sm:$0xff]
        %v486 = vld [vmem:[%s480 + $0x28] sm:$0xff]
        %v487 = vld [vmem:[%s480 + $0x30] sm:$0xff]
        %v488 = vld [vmem:[%s480 + $0x38] sm:$0xff]
        %v489 = vld [vmem:[%s480 + $0x40] sm:$0xff]
        %v490 = vld [vmem:[%s480 + $0x48] sm:$0xff]
        %v491 = vld [vmem:[%s480 + $0x50] sm:$0xff]
        %v492 = vld [vmem:[%s480 + $0x58] sm:$0xff]
        %v493 = vld [vmem:[%s480 + $0x60] sm:$0xff]
        %v494 = vld [vmem:[%s480 + $0x68] sm:$0xff]
        %v495 = vld [vmem:[%s480 + $0x70] sm:$0xff]
        %v496 = vld [vmem:[%s480 + $0x78] sm:$0xff]
        %s497 = sld [smem:[#allocation2 + $0x2]]
        %v498 = vstv %s497
        %v499 = vmul.f32 %v481, %v498
        %v500 = vmul.f32 %v482, %v498
        %v501 = vmul.f32 %v483, %v498
        %v502 = vmul.f32 %v484, %v498
        %v503 = vmul.f32 %v485, %v498
        %v504 = vmul.f32 %v486, %v498
        %v505 = vmul.f32 %v487, %v498
        %v506 = vmul.f32 %v488, %v498
        %v507 = vmul.f32 %v489, %v498
        %v508 = vmul.f32 %v490, %v498
        %v509 = vmul.f32 %v491, %v498
        %v510 = vmul.f32 %v492, %v498
        %v511 = vmul.f32 %v493, %v498
        %v512 = vmul.f32 %v494, %v498
        %v513 = vmul.f32 %v495, %v498
        %v514 = vmul.f32 %v496, %v498
        %v515 = vadd.f32 %v464, %v499
        %v516 = vadd.f32 %v465, %v500
        %v517 = vadd.f32 %v466, %v501
        %v518 = vadd.f32 %v467, %v502
        %v519 = vadd.f32 %v468, %v503
        %v520 = vadd.f32 %v469, %v504
        %v521 = vadd.f32 %v470, %v505
        %v522 = vadd.f32 %v471, %v506
        %v523 = vadd.f32 %v472, %v507
        %v524 = vadd.f32 %v473, %v508
        %v525 = vadd.f32 %v474, %v509
        %v526 = vadd.f32 %v475, %v510
        %v527 = vadd.f32 %v476, %v511
        %v528 = vadd.f32 %v477, %v512
        %v529 = vadd.f32 %v478, %v513
        %v530 = vadd.f32 %v479, %v514
        %v531 = vpack.c.bf16 %v516, %v515
        %v532 = vpack.c.bf16 %v518, %v517
        %v533 = vpack.c.bf16 %v520, %v519
        %v534 = vpack.c.bf16 %v522, %v521
        %v535 = vpack.c.bf16 %v524, %v523
        %v536 = vpack.c.bf16 %v526, %v525
        %v537 = vpack.c.bf16 %v528, %v527
        %v538 = vpack.c.bf16 %v530, %v529
        %v547 = vunpack.c.l.b16 %v531
        %v548 = vunpack.c.h.b16 %v531
        %v549 = vunpack.c.l.b16 %v532
        %v550 = vunpack.c.h.b16 %v532
        %v551 = vunpack.c.l.b16 %v533
        %v552 = vunpack.c.h.b16 %v533
        %v553 = vunpack.c.l.b16 %v534
        %v554 = vunpack.c.h.b16 %v534
        %v555 = vunpack.c.l.b16 %v535
        %v556 = vunpack.c.h.b16 %v535
        %v557 = vunpack.c.l.b16 %v536
        %v558 = vunpack.c.h.b16 %v536
        %v559 = vunpack.c.l.b16 %v537
        %v560 = vunpack.c.h.b16 %v537
        %v561 = vunpack.c.l.b16 %v538
        %v562 = vunpack.c.h.b16 %v538
        %v563 = vpack.c.b16 %v547, %v547
        %v564 = vpack.c.b16 %v548, %v548
        %v565 = vpack.c.b16 %v549, %v549
        %v566 = vpack.c.b16 %v550, %v550
        %v567 = vpack.c.b16 %v551, %v551
        %v568 = vpack.c.b16 %v552, %v552
        %v569 = vpack.c.b16 %v553, %v553
        %v570 = vpack.c.b16 %v554, %v554
        %v571 = vpack.c.b16 %v555, %v555
        %v572 = vpack.c.b16 %v556, %v556
        %v573 = vpack.c.b16 %v557, %v557
        %v574 = vpack.c.b16 %v558, %v558
        %v575 = vpack.c.b16 %v559, %v559
        %v576 = vpack.c.b16 %v560, %v560
        %v577 = vpack.c.b16 %v561, %v561
        %v578 = vpack.c.b16 %v562, %v562
        %595 = vst [vmem:[%s392] sm:$0xf] %v563
        %596 = vst [vmem:[%s392 + $0x4] sm:$0xf] %v564
        %597 = vst [vmem:[%s392 + $0x8] sm:$0xf] %v565
        %598 = vst [vmem:[%s392 + $0xc] sm:$0xf] %v566
        %599 = vst [vmem:[%s392 + $0x10] sm:$0xf] %v567
        %600 = vst [vmem:[%s392 + $0x14] sm:$0xf] %v568
        %601 = vst [vmem:[%s392 + $0x18] sm:$0xf] %v569
        %602 = vst [vmem:[%s392 + $0x1c] sm:$0xf] %v570
        %603 = vst [vmem:[%s392 + $0x20] sm:$0xf] %v571
        %604 = vst [vmem:[%s392 + $0x24] sm:$0xf] %v572
        %605 = vst [vmem:[%s392 + $0x28] sm:$0xf] %v573
        %606 = vst [vmem:[%s392 + $0x2c] sm:$0xf] %v574
        %607 = vst [vmem:[%s392 + $0x30] sm:$0xf] %v575
        %608 = vst [vmem:[%s392 + $0x34] sm:$0xf] %v576
        %609 = vst [vmem:[%s392 + $0x38] sm:$0xf] %v577
        %610 = vst [vmem:[%s392 + $0x3c] sm:$0xf] %v578
        %v611 = vld [vmem:[%s374] sm:$0xff]
        %v612 = vld [vmem:[%s374 + $0x8] sm:$0xff]
        %v613 = vld [vmem:[%s374 + $0x10] sm:$0xff]
        %v614 = vld [vmem:[%s374 + $0x18] sm:$0xff]
        %v615 = vld [vmem:[%s374 + $0x20] sm:$0xff]
        %v616 = vld [vmem:[%s374 + $0x28] sm:$0xff]
        %v617 = vld [vmem:[%s374 + $0x30] sm:$0xff]
        %v618 = vld [vmem:[%s374 + $0x38] sm:$0xff]
        %v619 = vld [vmem:[%s374 + $0x40] sm:$0xff]
        %v620 = vld [vmem:[%s374 + $0x48] sm:$0xff]
        %v621 = vld [vmem:[%s374 + $0x50] sm:$0xff]
        %v622 = vld [vmem:[%s374 + $0x58] sm:$0xff]
        %v623 = vld [vmem:[%s374 + $0x60] sm:$0xff]
        %v624 = vld [vmem:[%s374 + $0x68] sm:$0xff]
        %v625 = vld [vmem:[%s374 + $0x70] sm:$0xff]
        %v626 = vld [vmem:[%s374 + $0x78] sm:$0xff]
        %s627 = sld [smem:[#allocation2 + $0x80]]
        %v628 = vstv %s627
        %v629 = vmul.f32 %v611, %v628
        %v630 = vmul.f32 %v612, %v628
        %v631 = vmul.f32 %v613, %v628
        %v632 = vmul.f32 %v614, %v628
        %v633 = vmul.f32 %v615, %v628
        %v634 = vmul.f32 %v616, %v628
        %v635 = vmul.f32 %v617, %v628
        %v636 = vmul.f32 %v618, %v628
        %v637 = vmul.f32 %v619, %v628
        %v638 = vmul.f32 %v620, %v628
        %v639 = vmul.f32 %v621, %v628
        %v640 = vmul.f32 %v622, %v628
        %v641 = vmul.f32 %v623, %v628
        %v642 = vmul.f32 %v624, %v628
        %v643 = vmul.f32 %v625, %v628
        %v644 = vmul.f32 %v626, %v628
        %v645 = vld [vmem:[%s429] sm:$0xff]
        %v646 = vld [vmem:[%s429 + $0x8] sm:$0xff]
        %v647 = vld [vmem:[%s429 + $0x10] sm:$0xff]
        %v648 = vld [vmem:[%s429 + $0x18] sm:$0xff]
        %v649 = vld [vmem:[%s429 + $0x20] sm:$0xff]
        %v650 = vld [vmem:[%s429 + $0x28] sm:$0xff]
        %v651 = vld [vmem:[%s429 + $0x30] sm:$0xff]
        %v652 = vld [vmem:[%s429 + $0x38] sm:$0xff]
        %v653 = vld [vmem:[%s429 + $0x40] sm:$0xff]
        %v654 = vld [vmem:[%s429 + $0x48] sm:$0xff]
        %v655 = vld [vmem:[%s429 + $0x50] sm:$0xff]
        %v656 = vld [vmem:[%s429 + $0x58] sm:$0xff]
        %v657 = vld [vmem:[%s429 + $0x60] sm:$0xff]
        %v658 = vld [vmem:[%s429 + $0x68] sm:$0xff]
        %v659 = vld [vmem:[%s429 + $0x70] sm:$0xff]
        %v660 = vld [vmem:[%s429 + $0x78] sm:$0xff]
        %s661 = sld [smem:[#allocation2 + $0x81]]
        %v662 = vstv %s661
        %v663 = vmul.f32 %v645, %v662
        %v664 = vmul.f32 %v646, %v662
        %v665 = vmul.f32 %v647, %v662
        %v666 = vmul.f32 %v648, %v662
        %v667 = vmul.f32 %v649, %v662
        %v668 = vmul.f32 %v650, %v662
        %v669 = vmul.f32 %v651, %v662
        %v670 = vmul.f32 %v652, %v662
        %v671 = vmul.f32 %v653, %v662
        %v672 = vmul.f32 %v654, %v662
        %v673 = vmul.f32 %v655, %v662
        %v674 = vmul.f32 %v656, %v662
        %v675 = vmul.f32 %v657, %v662
        %v676 = vmul.f32 %v658, %v662
        %v677 = vmul.f32 %v659, %v662
        %v678 = vmul.f32 %v660, %v662
        %v679 = vadd.f32 %v629, %v663
        %v680 = vadd.f32 %v630, %v664
        %v681 = vadd.f32 %v631, %v665
        %v682 = vadd.f32 %v632, %v666
        %v683 = vadd.f32 %v633, %v667
        %v684 = vadd.f32 %v634, %v668
        %v685 = vadd.f32 %v635, %v669
        %v686 = vadd.f32 %v636, %v670
        %v687 = vadd.f32 %v637, %v671
        %v688 = vadd.f32 %v638, %v672
        %v689 = vadd.f32 %v639, %v673
        %v690 = vadd.f32 %v640, %v674
        %v691 = vadd.f32 %v641, %v675
        %v692 = vadd.f32 %v642, %v676
        %v693 = vadd.f32 %v643, %v677
        %v694 = vadd.f32 %v644, %v678
        %v695 = vld [vmem:[%s480] sm:$0xff]
        %v696 = vld [vmem:[%s480 + $0x8] sm:$0xff]
        %v697 = vld [vmem:[%s480 + $0x10] sm:$0xff]
        %v698 = vld [vmem:[%s480 + $0x18] sm:$0xff]
        %v699 = vld [vmem:[%s480 + $0x20] sm:$0xff]
        %v700 = vld [vmem:[%s480 + $0x28] sm:$0xff]
        %v701 = vld [vmem:[%s480 + $0x30] sm:$0xff]
        %v702 = vld [vmem:[%s480 + $0x38] sm:$0xff]
        %v703 = vld [vmem:[%s480 + $0x40] sm:$0xff]
        %v704 = vld [vmem:[%s480 + $0x48] sm:$0xff]
        %v705 = vld [vmem:[%s480 + $0x50] sm:$0xff]
        %v706 = vld [vmem:[%s480 + $0x58] sm:$0xff]
        %v707 = vld [vmem:[%s480 + $0x60] sm:$0xff]
        %v708 = vld [vmem:[%s480 + $0x68] sm:$0xff]
        %v709 = vld [vmem:[%s480 + $0x70] sm:$0xff]
        %v710 = vld [vmem:[%s480 + $0x78] sm:$0xff]
        %s711 = sld [smem:[#allocation2 + $0x82]]
        %v712 = vstv %s711
        %v713 = vmul.f32 %v695, %v712
        %v714 = vmul.f32 %v696, %v712
        %v715 = vmul.f32 %v697, %v712
        %v716 = vmul.f32 %v698, %v712
        %v717 = vmul.f32 %v699, %v712
        %v718 = vmul.f32 %v700, %v712
        %v719 = vmul.f32 %v701, %v712
        %v720 = vmul.f32 %v702, %v712
        %v721 = vmul.f32 %v703, %v712
        %v722 = vmul.f32 %v704, %v712
        %v723 = vmul.f32 %v705, %v712
        %v724 = vmul.f32 %v706, %v712
        %v725 = vmul.f32 %v707, %v712
        %v726 = vmul.f32 %v708, %v712
        %v727 = vmul.f32 %v709, %v712
        %v728 = vmul.f32 %v710, %v712
        %v729 = vadd.f32 %v679, %v713
        %v730 = vadd.f32 %v680, %v714
        %v731 = vadd.f32 %v681, %v715
        %v732 = vadd.f32 %v682, %v716
        %v733 = vadd.f32 %v683, %v717
        %v734 = vadd.f32 %v684, %v718
        %v735 = vadd.f32 %v685, %v719
        %v736 = vadd.f32 %v686, %v720
        %v737 = vadd.f32 %v687, %v721
        %v738 = vadd.f32 %v688, %v722
        %v739 = vadd.f32 %v689, %v723
        %v740 = vadd.f32 %v690, %v724
        %v741 = vadd.f32 %v691, %v725
        %v742 = vadd.f32 %v692, %v726
        %v743 = vadd.f32 %v693, %v727
        %v744 = vadd.f32 %v694, %v728
        %v745 = vpack.c.bf16 %v730, %v729
        %v746 = vpack.c.bf16 %v732, %v731
        %v747 = vpack.c.bf16 %v734, %v733
        %v748 = vpack.c.bf16 %v736, %v735
        %v749 = vpack.c.bf16 %v738, %v737
        %v750 = vpack.c.bf16 %v740, %v739
        %v751 = vpack.c.bf16 %v742, %v741
        %v752 = vpack.c.bf16 %v744, %v743
        %v761 = vunpack.c.l.b16 %v745
        %v762 = vunpack.c.h.b16 %v745
        %v763 = vunpack.c.l.b16 %v746
        %v764 = vunpack.c.h.b16 %v746
        %v765 = vunpack.c.l.b16 %v747
        %v766 = vunpack.c.h.b16 %v747
        %v767 = vunpack.c.l.b16 %v748
        %v768 = vunpack.c.h.b16 %v748
        %v769 = vunpack.c.l.b16 %v749
        %v770 = vunpack.c.h.b16 %v749
        %v771 = vunpack.c.l.b16 %v750
        %v772 = vunpack.c.h.b16 %v750
        %v773 = vunpack.c.l.b16 %v751
        %v774 = vunpack.c.h.b16 %v751
        %v775 = vunpack.c.l.b16 %v752
        %v776 = vunpack.c.h.b16 %v752
        %v777 = vpack.c.b16 %v761, %v761
        %v778 = vpack.c.b16 %v762, %v762
        %v779 = vpack.c.b16 %v763, %v763
        %v780 = vpack.c.b16 %v764, %v764
        %v781 = vpack.c.b16 %v765, %v765
        %v782 = vpack.c.b16 %v766, %v766
        %v783 = vpack.c.b16 %v767, %v767
        %v784 = vpack.c.b16 %v768, %v768
        %v785 = vpack.c.b16 %v769, %v769
        %v786 = vpack.c.b16 %v770, %v770
        %v787 = vpack.c.b16 %v771, %v771
        %v788 = vpack.c.b16 %v772, %v772
        %v789 = vpack.c.b16 %v773, %v773
        %v790 = vpack.c.b16 %v774, %v774
        %v791 = vpack.c.b16 %v775, %v775
        %v792 = vpack.c.b16 %v776, %v776
        %s809 = scalar_lea.vmem %s392, 64 [#allocation5]
        %810 = vst [vmem:[%s809] sm:$0xf] %v777
        %811 = vst [vmem:[%s809 + $0x4] sm:$0xf] %v778
        %812 = vst [vmem:[%s809 + $0x8] sm:$0xf] %v779
        %813 = vst [vmem:[%s809 + $0xc] sm:$0xf] %v780
        %814 = vst [vmem:[%s809 + $0x10] sm:$0xf] %v781
        %815 = vst [vmem:[%s809 + $0x14] sm:$0xf] %v782
        %816 = vst [vmem:[%s809 + $0x18] sm:$0xf] %v783
        %817 = vst [vmem:[%s809 + $0x1c] sm:$0xf] %v784
        %818 = vst [vmem:[%s809 + $0x20] sm:$0xf] %v785
        %819 = vst [vmem:[%s809 + $0x24] sm:$0xf] %v786
        %820 = vst [vmem:[%s809 + $0x28] sm:$0xf] %v787
        %821 = vst [vmem:[%s809 + $0x2c] sm:$0xf] %v788
        %822 = vst [vmem:[%s809 + $0x30] sm:$0xf] %v789
        %823 = vst [vmem:[%s809 + $0x34] sm:$0xf] %v790
        %824 = vst [vmem:[%s809 + $0x38] sm:$0xf] %v791
        %825 = vst [vmem:[%s809 + $0x3c] sm:$0xf] %v792
        %s826 = sand.u32 %s85, 1
        %s827 = sand.u32 %s85, 1
        %s828 = smul.addr %s827, 128
        %s829 = scalar_lea.vmem [#allocation5], %s828
        // Predicated region
        $region71: #{gtn_forward.8} parent=61 // pred_check
          %p830 = pneg %p95
        $region72: #{gtn_forward.8} parent=61 // pred_check_branch
          %832 = sbr.rel (%p830) target = $region74
        $region73: #{gtn_forward.8} parent=61 // pred_region
          %s833 = smul.u32 16, %s18
          %s834 = smul.addr %s833, 2
          %s835 = sadd.s32 %s19, %s834
          %s836 = smul.addr %s835, 4
          %s837 = scalar_lea.vmem %s2, %s836
          // Predicated region
          $region75: #{gtn_forward.8} parent=73 // pred_check
            _
          $region76: #{gtn_forward.8} parent=73 // pred_check_branch
            %839 = sbr.rel (0) target = $region78
          $region77: #{gtn_forward.8} parent=73 // pred_region
            // Predicated region
            $region79: #{gtn_forward.8} parent=77 // pred_check
              _
            $region80: #{gtn_forward.8} parent=77 // pred_check_branch
              %841 = sbr.rel target = $region82
            $region81: #{gtn_forward.8} parent=77 // pred_region
              // Predicated region
              $region94: #{gtn_forward.8} parent=81 // pred_check
                _
              $region95: #{gtn_forward.8} parent=81 // pred_check_branch
                %918 = sbr.rel (0) target = $region97
              $region96: #{gtn_forward.8} parent=81 // pred_region
                loop: start=0, step=1, limit=1
                $region98: #{gtn_forward.8} parent=96 // loop_pre_header
                  _
                $region99: #{gtn_forward.8} parent=96 // loop_header
                  %s920 = sphi 0, %s924
                  %p921 = scmp.ge.s32.totalorder %s920, 1
                  %s925 = sphi %s829, %s829
                  %s926 = sphi %s837, %s837
                $region100: #{gtn_forward.8} parent=96 // loop_header_branch
                  %923 = sbr.rel (%p921) target = $region104
                $region101: #{gtn_forward.8} parent=96 // loop_body
                  _
                $region102: #{gtn_forward.8} parent=96 // loop_footer
                  %s924 = sadd.s32 1, %s920
                $region103: #{gtn_forward.8} parent=96 // loop_footer_branch
                  %919 = sbr.rel target = $region99
                $region104: #{gtn_forward.8} parent=96 // loop_exit
                  _
                loop: start=0, step=1, limit=1
                $region105: #{gtn_forward.8} parent=96 // loop_pre_header
                  _
                $region106: #{gtn_forward.8} parent=96 // loop_header
                  %s929 = sphi 0, %s933
                  %p930 = scmp.ge.s32.totalorder %s929, 1
                  %s934 = sphi %s829, %s829
                  %s935 = sphi %s837, %s837
                $region107: #{gtn_forward.8} parent=96 // loop_header_branch
                  %932 = sbr.rel (%p930) target = $region111
                $region108: #{gtn_forward.8} parent=96 // loop_body
                  %v936 = vld [vmem:[%s934] sm:$0xf]
                  %937 = vst [vmem:[%s935] sm:$0xf] %v936
                  %v938 = vld [vmem:[%s934 + $0x4] sm:$0xf]
                  %939 = vst [vmem:[%s935 + $0x8] sm:$0xf] %v938
                  %v940 = vld [vmem:[%s934 + $0x8] sm:$0xf]
                  %941 = vst [vmem:[%s935 + $0x10] sm:$0xf] %v940
                  %v942 = vld [vmem:[%s934 + $0xc] sm:$0xf]
                  %943 = vst [vmem:[%s935 + $0x18] sm:$0xf] %v942
                  %v944 = vld [vmem:[%s934 + $0x10] sm:$0xf]
                  %945 = vst [vmem:[%s935 + $0x20] sm:$0xf] %v944
                  %v946 = vld [vmem:[%s934 + $0x14] sm:$0xf]
                  %947 = vst [vmem:[%s935 + $0x28] sm:$0xf] %v946
                  %v948 = vld [vmem:[%s934 + $0x18] sm:$0xf]
                  %949 = vst [vmem:[%s935 + $0x30] sm:$0xf] %v948
                  %v950 = vld [vmem:[%s934 + $0x1c] sm:$0xf]
                  %951 = vst [vmem:[%s935 + $0x38] sm:$0xf] %v950
                  %v952 = vld [vmem:[%s934 + $0x20] sm:$0xf]
                  %953 = vst [vmem:[%s935 + $0x40] sm:$0xf] %v952
                  %v954 = vld [vmem:[%s934 + $0x24] sm:$0xf]
                  %955 = vst [vmem:[%s935 + $0x48] sm:$0xf] %v954
                  %v956 = vld [vmem:[%s934 + $0x28] sm:$0xf]
                  %957 = vst [vmem:[%s935 + $0x50] sm:$0xf] %v956
                  %v958 = vld [vmem:[%s934 + $0x2c] sm:$0xf]
                  %959 = vst [vmem:[%s935 + $0x58] sm:$0xf] %v958
                  %v960 = vld [vmem:[%s934 + $0x30] sm:$0xf]
                  %961 = vst [vmem:[%s935 + $0x60] sm:$0xf] %v960
                  %v962 = vld [vmem:[%s934 + $0x34] sm:$0xf]
                  %963 = vst [vmem:[%s935 + $0x68] sm:$0xf] %v962
                  %v964 = vld [vmem:[%s934 + $0x38] sm:$0xf]
                  %965 = vst [vmem:[%s935 + $0x70] sm:$0xf] %v964
                  %v966 = vld [vmem:[%s934 + $0x3c] sm:$0xf]
                  %967 = vst [vmem:[%s935 + $0x78] sm:$0xf] %v966
                  %v968 = vld [vmem:[%s934 + $0x40] sm:$0xf]
                  %969 = vst [vmem:[%s935 + $0x100] sm:$0xf] %v968
                  %v970 = vld [vmem:[%s934 + $0x44] sm:$0xf]
                  %971 = vst [vmem:[%s935 + $0x108] sm:$0xf] %v970
                  %v972 = vld [vmem:[%s934 + $0x48] sm:$0xf]
                  %973 = vst [vmem:[%s935 + $0x110] sm:$0xf] %v972
                  %v974 = vld [vmem:[%s934 + $0x4c] sm:$0xf]
                  %975 = vst [vmem:[%s935 + $0x118] sm:$0xf] %v974
                  %v976 = vld [vmem:[%s934 + $0x50] sm:$0xf]
                  %977 = vst [vmem:[%s935 + $0x120] sm:$0xf] %v976
                  %v978 = vld [vmem:[%s934 + $0x54] sm:$0xf]
                  %979 = vst [vmem:[%s935 + $0x128] sm:$0xf] %v978
                  %v980 = vld [vmem:[%s934 + $0x58] sm:$0xf]
                  %981 = vst [vmem:[%s935 + $0x130] sm:$0xf] %v980
                  %v982 = vld [vmem:[%s934 + $0x5c] sm:$0xf]
                  %983 = vst [vmem:[%s935 + $0x138] sm:$0xf] %v982
                  %v984 = vld [vmem:[%s934 + $0x60] sm:$0xf]
                  %985 = vst [vmem:[%s935 + $0x140] sm:$0xf] %v984
                  %v986 = vld [vmem:[%s934 + $0x64] sm:$0xf]
                  %987 = vst [vmem:[%s935 + $0x148] sm:$0xf] %v986
                  %v988 = vld [vmem:[%s934 + $0x68] sm:$0xf]
                  %989 = vst [vmem:[%s935 + $0x150] sm:$0xf] %v988
                  %v990 = vld [vmem:[%s934 + $0x6c] sm:$0xf]
                  %991 = vst [vmem:[%s935 + $0x158] sm:$0xf] %v990
                  %v992 = vld [vmem:[%s934 + $0x70] sm:$0xf]
                  %993 = vst [vmem:[%s935 + $0x160] sm:$0xf] %v992
                  %v994 = vld [vmem:[%s934 + $0x74] sm:$0xf]
                  %995 = vst [vmem:[%s935 + $0x168] sm:$0xf] %v994
                  %v996 = vld [vmem:[%s934 + $0x78] sm:$0xf]
                  %997 = vst [vmem:[%s935 + $0x170] sm:$0xf] %v996
                  %v998 = vld [vmem:[%s934 + $0x7c] sm:$0xf]
                  %999 = vst [vmem:[%s935 + $0x178] sm:$0xf] %v998
                $region109: #{gtn_forward.8} parent=96 // loop_footer
                  %s933 = sadd.s32 1, %s929
                $region110: #{gtn_forward.8} parent=96 // loop_footer_branch
                  %928 = sbr.rel target = $region106
                $region111: #{gtn_forward.8} parent=96 // loop_exit
                  _
              $region97: #{gtn_forward.8} parent=81 // pred_fallthru
                _
            $region82: #{gtn_forward.8} parent=77 // pred_fallthru
              _
            // Predicated region
            $region83: #{gtn_forward.8} parent=77 // pred_check
              _
            $region84: #{gtn_forward.8} parent=77 // pred_check_branch
              %843 = sbr.rel (0) target = $region86
            $region85: #{gtn_forward.8} parent=77 // pred_region
              loop: start=0, step=1, limit=1
              $region87: #{gtn_forward.8} parent=85 // loop_pre_header
                _
              $region88: #{gtn_forward.8} parent=85 // loop_header
                %s846 = sphi 0, %s850
                %p847 = scmp.ge.s32.totalorder %s846, 1
                %s851 = sphi %s829, %s829
                %s852 = sphi %s837, %s837
              $region89: #{gtn_forward.8} parent=85 // loop_header_branch
                %849 = sbr.rel (%p847) target = $region93
              $region90: #{gtn_forward.8} parent=85 // loop_body
                %v853 = vld [vmem:[%s851] sm:$0xf]
                %854 = vst [vmem:[%s852] sm:$0xf] %v853
                %v855 = vld [vmem:[%s851 + $0x4] sm:$0xf]
                %856 = vst [vmem:[%s852 + $0x8] sm:$0xf] %v855
                %v857 = vld [vmem:[%s851 + $0x8] sm:$0xf]
                %858 = vst [vmem:[%s852 + $0x10] sm:$0xf] %v857
                %v859 = vld [vmem:[%s851 + $0xc] sm:$0xf]
                %860 = vst [vmem:[%s852 + $0x18] sm:$0xf] %v859
                %v861 = vld [vmem:[%s851 + $0x10] sm:$0xf]
                %862 = vst [vmem:[%s852 + $0x20] sm:$0xf] %v861
                %v863 = vld [vmem:[%s851 + $0x14] sm:$0xf]
                %864 = vst [vmem:[%s852 + $0x28] sm:$0xf] %v863
                %v865 = vld [vmem:[%s851 + $0x18] sm:$0xf]
                %866 = vst [vmem:[%s852 + $0x30] sm:$0xf] %v865
                %v867 = vld [vmem:[%s851 + $0x1c] sm:$0xf]
                %868 = vst [vmem:[%s852 + $0x38] sm:$0xf] %v867
                %v869 = vld [vmem:[%s851 + $0x20] sm:$0xf]
                %870 = vst [vmem:[%s852 + $0x40] sm:$0xf] %v869
                %v871 = vld [vmem:[%s851 + $0x24] sm:$0xf]
                %872 = vst [vmem:[%s852 + $0x48] sm:$0xf] %v871
                %v873 = vld [vmem:[%s851 + $0x28] sm:$0xf]
                %874 = vst [vmem:[%s852 + $0x50] sm:$0xf] %v873
                %v875 = vld [vmem:[%s851 + $0x2c] sm:$0xf]
                %876 = vst [vmem:[%s852 + $0x58] sm:$0xf] %v875
                %v877 = vld [vmem:[%s851 + $0x30] sm:$0xf]
                %878 = vst [vmem:[%s852 + $0x60] sm:$0xf] %v877
                %v879 = vld [vmem:[%s851 + $0x34] sm:$0xf]
                %880 = vst [vmem:[%s852 + $0x68] sm:$0xf] %v879
                %v881 = vld [vmem:[%s851 + $0x38] sm:$0xf]
                %882 = vst [vmem:[%s852 + $0x70] sm:$0xf] %v881
                %v883 = vld [vmem:[%s851 + $0x3c] sm:$0xf]
                %884 = vst [vmem:[%s852 + $0x78] sm:$0xf] %v883
                %v885 = vld [vmem:[%s851 + $0x40] sm:$0xf]
                %886 = vst [vmem:[%s852 + $0x100] sm:$0xf] %v885
                %v887 = vld [vmem:[%s851 + $0x44] sm:$0xf]
                %888 = vst [vmem:[%s852 + $0x108] sm:$0xf] %v887
                %v889 = vld [vmem:[%s851 + $0x48] sm:$0xf]
                %890 = vst [vmem:[%s852 + $0x110] sm:$0xf] %v889
                %v891 = vld [vmem:[%s851 + $0x4c] sm:$0xf]
                %892 = vst [vmem:[%s852 + $0x118] sm:$0xf] %v891
                %v893 = vld [vmem:[%s851 + $0x50] sm:$0xf]
                %894 = vst [vmem:[%s852 + $0x120] sm:$0xf] %v893
                %v895 = vld [vmem:[%s851 + $0x54] sm:$0xf]
                %896 = vst [vmem:[%s852 + $0x128] sm:$0xf] %v895
                %v897 = vld [vmem:[%s851 + $0x58] sm:$0xf]
                %898 = vst [vmem:[%s852 + $0x130] sm:$0xf] %v897
                %v899 = vld [vmem:[%s851 + $0x5c] sm:$0xf]
                %900 = vst [vmem:[%s852 + $0x138] sm:$0xf] %v899
                %v901 = vld [vmem:[%s851 + $0x60] sm:$0xf]
                %902 = vst [vmem:[%s852 + $0x140] sm:$0xf] %v901
                %v903 = vld [vmem:[%s851 + $0x64] sm:$0xf]
                %904 = vst [vmem:[%s852 + $0x148] sm:$0xf] %v903
                %v905 = vld [vmem:[%s851 + $0x68] sm:$0xf]
                %906 = vst [vmem:[%s852 + $0x150] sm:$0xf] %v905
                %v907 = vld [vmem:[%s851 + $0x6c] sm:$0xf]
                %908 = vst [vmem:[%s852 + $0x158] sm:$0xf] %v907
                %v909 = vld [vmem:[%s851 + $0x70] sm:$0xf]
                %910 = vst [vmem:[%s852 + $0x160] sm:$0xf] %v909
                %v911 = vld [vmem:[%s851 + $0x74] sm:$0xf]
                %912 = vst [vmem:[%s852 + $0x168] sm:$0xf] %v911
                %v913 = vld [vmem:[%s851 + $0x78] sm:$0xf]
                %914 = vst [vmem:[%s852 + $0x170] sm:$0xf] %v913
                %v915 = vld [vmem:[%s851 + $0x7c] sm:$0xf]
                %916 = vst [vmem:[%s852 + $0x178] sm:$0xf] %v915
              $region91: #{gtn_forward.8} parent=85 // loop_footer
                %s850 = sadd.s32 1, %s846
              $region92: #{gtn_forward.8} parent=85 // loop_footer_branch
                %845 = sbr.rel target = $region88
              $region93: #{gtn_forward.8} parent=85 // loop_exit
                _
            $region86: #{gtn_forward.8} parent=77 // pred_fallthru
              _
          $region78: #{gtn_forward.8} parent=73 // pred_fallthru
            _
          %1000 = vnop
        $region74: #{gtn_forward.8} parent=61 // pred_fallthru
          _
      $region62: #{gtn_forward.8} parent=5 // pred_fallthru
        _
      %p1001 = scmp.le.s32.totalorder 2, %s9
      // Predicated region
      $region112: #{gtn_forward.8} parent=5 // pred_check
        %p1002 = pneg %p1001
      $region113: #{gtn_forward.8} parent=5 // pred_check_branch
        %1004 = sbr.rel (%p1002) target = $region115
      $region114: #{gtn_forward.8} parent=5 // pred_region
        %s1005 = ssub.s32 %s9, 2
        // Predicated region
        $region116: #{gtn_forward.8} parent=114 // pred_check
          %p1006 = pneg %p101
        $region117: #{gtn_forward.8} parent=114 // pred_check_branch
          %1008 = sbr.rel (%p1006) target = $region119
        $region118: #{gtn_forward.8} parent=114 // pred_region
          %s1009 = sand.u32 %s86, 1
          %s1010 = sand.u32 %s86, 1
          %s1011 = smul.addr %s1010, 128
          %s1012 = scalar_lea.vmem [#allocation5], %s1011
        $region119: #{gtn_forward.8} parent=114 // pred_fallthru
          _
      $region115: #{gtn_forward.8} parent=5 // pred_fallthru
        _
    $region6: #{gtn_forward.8} parent=1 // loop_footer
      %s13 = sadd.s32 1, %s9
    $region7: #{gtn_forward.8} parent=1 // loop_footer_branch
      %8 = sbr.rel target = $region3
    $region8: #{gtn_forward.8} parent=1 // loop_exit
      _
    %1013 = vsyncpa [#allocation3], 1
    %s1014 = scalar_lea.sflag [#allocation3], 1
    %1015 = vsyncpa %s1014, 1

// kernel: gtn_forward.6
$region0: #{gtn_forward.6}
  #allocation0 [shape = 'u32[]', space=smem, size = 0x4, offset = 0x4, fixed_abs, tag = 'smem constant byte address 0x4 - core index']
  #allocation1 [shape = 'u32[144,128]{1,0:T(1,128)}', space=vmem, size = 0x12000, scoped, tag = 'internal scratch']
  #allocation7 [shape = 's32[]', space=sflag, size = 0x4, offset = 0, fixed_abs, tag = 'sflag constant byte address 0x0 - dummy sync flag']
  %s0 = inlined_call_operand.vmem [shape: f32[4,3], index: 0, kind: input, shape index: {}]
  %s1 = inlined_call_operand.hbm [shape: f32[3,256,256], index: 1, kind: input, shape index: {}]
  %s2 = inlined_call_operand.vmem [shape: bf16[4,256,256], index: 2, kind: output, shape index: {}]
  %s3 = sld [smem:[#allocation0]]
  $region86: #{gtn_forward.6} parent=0
    _
  %s5 = ssub.s32 1, %s3
  %s6 = scalar_select 0, %s5, %s3
  $region1: #{gtn_forward.6} parent=0
    #allocation2 [shape = 'u8[2048]{0}', space=smem, size = 0x800, scoped, tag = 'input window, operand 0, single buffered']
    #allocation3 [shape = 's32[2]{0}', space=sflag, size = 0x8, scoped, tag = 'scoped memory for gtn_forward.6']
    #allocation4 [shape = 's32[2]{0}', space=sflag, size = 0x8, scoped, tag = 'scoped memory for gtn_forward.6']
    #allocation5 [shape = 'u8[393216]{0}', space=vmem, size = 0x60000, scoped, tag = 'input window, operand 1']
    #allocation6 [shape = 'u8[262144]{0}', space=vmem, size = 0x40000, scoped, tag = 'output window, operand 0']
    %7 = vsyncpa [#allocation4], 0
    %8 = vsyncpa [#allocation3], 0
    %s9 = scalar_lea.sflag [#allocation3], 1
    %10 = vsyncpa %s9, 0
    loop: start=0, step=1, limit=6
    $region2: #{gtn_forward.6} parent=1 // loop_pre_header
      _
    $region3: #{gtn_forward.6} parent=1 // loop_header
      %s12 = sphi 0, %s16
      %p13 = scmp.ge.s32.totalorder %s12, 6
      %s19 = sphi 0, %s31
      %s20 = sphi 0, %s27
      %s21 = sphi 0, %s19
      %s22 = sphi 0, %s20
      %s23 = sphi 0, %s21
      %s24 = sphi 0, %s22
      %s32 = sphi 0, %s32
      %s34 = sphi 0, %s32
      %s35 = sphi 0, %s34
      %s49 = sphi 0, %s35
      %s57 = sphi 0, %s59
      %s60 = sphi 0, %s57
      %s61 = sphi 0, %s60
      %s77 = sphi 0, %s61
      %s85 = sphi 0, %s87
      %s88 = sphi 0, %s85
      %s89 = sphi 0, %s88
      %s105 = sphi 0, %s89
    $region4: #{gtn_forward.6} parent=1 // loop_header_branch
      %15 = sbr.rel (%p13) target = $region8
    $region5: #{gtn_forward.6} parent=1 // loop_body
      %s17 = ssub.s32 %s12, 1
      %s18 = ssub.s32 %s12, 2
      %s25 = sadd.s32 1, %s20
      %p26 = scmp.ge.s32.totalorder %s25, 2
      %s27 = scalar_select %p26, 0, %s25
      %s28 = sadd.s32 1, %s19
      %s29 = scalar_select %p26, %s28, %s19
      %p30 = scmp.ge.s32.totalorder %s29, 2
      %s31 = scalar_select %p30, 0, %s29
      %s33 = sadd.s32 %s32, 1
      %p36 = scmp.eq.s32.totalorder %s12, 3
      %p37 = scmp.ne.s32.totalorder %s32, %s34
      %p38 = scmp.eq.s32.totalorder %s12, 0
      %p39 = por %p37, %p38
      %p40 = scmp.ne.s32.totalorder %s32, %s34
      %p41 = scmp.eq.s32.totalorder %s17, 3
      %p42 = por %p40, %p41
      %p43 = scmp.ne.s32.totalorder %s34, %s35
      %p44 = scmp.eq.s32.totalorder %s17, 0
      %p45 = por %p43, %p44
      %p46 = scmp.ne.s32.totalorder %s34, %s35
      %p47 = scmp.eq.s32.totalorder %s18, 3
      %p48 = por %p46, %p47
      %p50 = scmp.ne.s32.totalorder %s35, %s49
      %p51 = scmp.eq.s32.totalorder %s18, 0
      %p52 = por %p50, %p51
      %s53 = ssub.s32 %s19, %s31
      %s54 = ssub.s32 %s20, %s27
      %s55 = sor.u32 %s53, %s54
      %p56 = scmp.eq.s32.totalorder %s55, 0
      %s58 = sadd.s32 %s57, 1
      %s59 = scalar_select %p56, %s57, %s58
      %p62 = pneg %p56
      %p63 = scmp.eq.s32.totalorder %s12, 3
      %p64 = por %p62, %p63
      %p65 = scmp.ne.s32.totalorder %s57, %s60
      %p66 = scmp.eq.s32.totalorder %s12, 0
      %p67 = por %p65, %p66
      %p68 = scmp.ne.s32.totalorder %s57, %s60
      %p69 = scmp.eq.s32.totalorder %s17, 3
      %p70 = por %p68, %p69
      %p71 = scmp.ne.s32.totalorder %s60, %s61
      %p72 = scmp.eq.s32.totalorder %s17, 0
      %p73 = por %p71, %p72
      %p74 = scmp.ne.s32.totalorder %s60, %s61
      %p75 = scmp.eq.s32.totalorder %s18, 3
      %p76 = por %p74, %p75
      %p78 = scmp.ne.s32.totalorder %s61, %s77
      %p79 = scmp.eq.s32.totalorder %s18, 0
      %p80 = por %p78, %p79
      %s81 = ssub.s32 %s19, %s31
      %s82 = ssub.s32 %s20, %s27
      %s83 = sor.u32 %s81, %s82
      %p84 = scmp.eq.s32.totalorder %s83, 0
      %s86 = sadd.s32 %s85, 1
      %s87 = scalar_select %p84, %s85, %s86
      %p90 = pneg %p84
      %p91 = scmp.eq.s32.totalorder %s12, 3
      %p92 = por %p90, %p91
      %p93 = scmp.ne.s32.totalorder %s85, %s88
      %p94 = scmp.eq.s32.totalorder %s12, 0
      %p95 = por %p93, %p94
      %p96 = scmp.ne.s32.totalorder %s85, %s88
      %p97 = scmp.eq.s32.totalorder %s17, 3
      %p98 = por %p96, %p97
      %p99 = scmp.ne.s32.totalorder %s88, %s89
      %p100 = scmp.eq.s32.totalorder %s17, 0
      %p101 = por %p99, %p100
      %p102 = scmp.ne.s32.totalorder %s88, %s89
      %p103 = scmp.eq.s32.totalorder %s18, 3
      %p104 = por %p102, %p103
      %p106 = scmp.ne.s32.totalorder %s89, %s105
      %p107 = scmp.eq.s32.totalorder %s18, 0
      %p108 = por %p106, %p107
      %p109 = scmp.le.s32.totalorder 1, %s12
      %p110 = scmp.lt.s32.totalorder %s12, 5
      %p111 = pnand %p109, %p110
      %p112 = pneg %p111
      // Predicated region
      $region9: #{gtn_forward.6} parent=5 // pred_check
        _
      $region10: #{gtn_forward.6} parent=5 // pred_check_branch
        %114 = sbr.rel (%p111) target = $region12
      $region11: #{gtn_forward.6} parent=5 // pred_region
        %s115 = ssub.s32 %s12, 1
        // Predicated region
        $region13: #{gtn_forward.6} parent=11 // pred_check
          %p116 = pneg %p45
        $region14: #{gtn_forward.6} parent=11 // pred_check_branch
          %118 = sbr.rel (%p116) target = $region16
        $region15: #{gtn_forward.6} parent=11 // pred_region
          %s120 = ssub.s32 64, 64
          %121 = vsyncadd [#allocation4], %s120
          %s123 = sshll.u32 %s0, 4
          %s124 = int_to_ptr.vmem [resolvable:$true] %s123
          %126 = dma.vmem_to_smem %s124, 64, [#allocation2], [#allocation4]
        $region16: #{gtn_forward.6} parent=11 // pred_fallthru
          _
      $region12: #{gtn_forward.6} parent=5 // pred_fallthru
        _
      %p127 = scmp.lt.s32.totalorder %s12, 4
      // Predicated region
      $region17: #{gtn_forward.6} parent=5 // pred_check
        %p128 = pneg %p127
      $region18: #{gtn_forward.6} parent=5 // pred_check_branch
        %130 = sbr.rel (%p128) target = $region20
      $region19: #{gtn_forward.6} parent=5 // pred_region
        // Predicated region
        $region21: #{gtn_forward.6} parent=19 // pred_check
          %p131 = pneg %p67
        $region22: #{gtn_forward.6} parent=19 // pred_check_branch
          %133 = sbr.rel (%p131) target = $region24
        $region23: #{gtn_forward.6} parent=19 // pred_region
          #allocation8 [shape = 'u32[6]{0}', space=smem, size = 0x18, scoped, tag = 'DMA stride descriptor']
          %s134 = sand.u32 %s57, 1
          %s135 = scalar_lea.sflag [#allocation3], %s134
          %s136 = sand.u32 %s57, 1
          %s137 = smul.addr %s136, 384
          %s138 = scalar_lea.vmem [#allocation5], %s137
          %s139 = smul.u32 16, %s19
          %s141 = ssub.s32 6144, 6144
          %142 = vsyncadd %s135, %s141
          %s143 = smul.addr %s139, 2
          %s144 = sadd.s32 %s20, %s143
          %s145 = smul.addr %s144, 128
          %s146 = scalar_lea.hbm %s1, %s145
          %s148 = sshll.u32 1, 14
          %s149 = sxor.u32 4294967295, %s148
          %s151 = sld [smem:[#allocation0]]
          %s152 = sadd.s32 2, %s151
          %s154 = sshll.u32 7, 26
          %s155 = sxor.u32 4294967295, %s154
          %s156 = sand.u32 0, %s155
          %s157 = sshll.u32 %s152, 26
          %s158 = sor.u32 %s156, %s157
          %s159 = sshll.u32 %s138, 4
          %s160 = int_to_ptr.vmem [resolvable:$true] %s159
          %166 = sst [smem:[#allocation8]] 8192
          %s167 = scalar_lea.smem [#allocation8], 1
          %168 = sst [smem:[%s167]] 2048
          %s169 = scalar_lea.smem [#allocation8], 2
          %170 = sst [smem:[%s169]] 16
          %s171 = scalar_lea.smem [#allocation8], 3
          %172 = sst [smem:[%s171]] 256
          %s173 = scalar_lea.smem [#allocation8], 4
          %174 = sst [smem:[%s173]] 128
          %s175 = scalar_lea.smem [#allocation8], 5
          %176 = sst [smem:[%s175]] 8
          %178 = dma.general %s146, 6144, %s160, %s135, [#allocation7], [#allocation8], %s158, 0
        $region24: #{gtn_forward.6} parent=19 // pred_fallthru
          _
      $region20: #{gtn_forward.6} parent=5 // pred_fallthru
        _
      %p179 = scmp.le.s32.totalorder 1, %s12
      %p180 = scmp.lt.s32.totalorder %s12, 5
      %p181 = pnand %p179, %p180
      %p182 = pneg %p181
      // Predicated region
      $region25: #{gtn_forward.6} parent=5 // pred_check
        _
      $region26: #{gtn_forward.6} parent=5 // pred_check_branch
        %184 = sbr.rel (%p181) target = $region28
      $region27: #{gtn_forward.6} parent=5 // pred_region
        %s185 = ssub.s32 %s12, 1
        // Predicated region
        $region29: #{gtn_forward.6} parent=27 // pred_check
          %p186 = pneg %p45
        $region30: #{gtn_forward.6} parent=27 // pred_check_branch
          %188 = sbr.rel (%p186) target = $region32
        $region31: #{gtn_forward.6} parent=27 // pred_region
          %189 = dma.done [#allocation4], 64
        $region32: #{gtn_forward.6} parent=27 // pred_fallthru
          _
        %s190 = sand.u32 %s60, 1
        %s191 = scalar_lea.sflag [#allocation3], %s190
        %s192 = sand.u32 %s60, 1
        %s193 = smul.addr %s192, 384
        %s194 = scalar_lea.vmem [#allocation5], %s193
        // Predicated region
        $region33: #{gtn_forward.6} parent=27 // pred_check
          %p195 = pneg %p73
        $region34: #{gtn_forward.6} parent=27 // pred_check_branch
          %197 = sbr.rel (%p195) target = $region36
        $region35: #{gtn_forward.6} parent=27 // pred_region
          %198 = dma.done %s191, 6144
        $region36: #{gtn_forward.6} parent=27 // pred_fallthru
          _
        %199 = sfence
        %p200 = pneg %p45
        %p201 = pneg %p42
        %s202 = sand.u32 %s60, 1
        %s203 = scalar_lea.sflag [#allocation3], %s202
        %s204 = sand.u32 %s60, 1
        %s205 = smul.addr %s204, 384
        %s206 = scalar_lea.vmem [#allocation5], %s205
        %p207 = pneg %p73
        %p208 = pneg %p70
        %p209 = pneg %p101
        %p210 = pneg %p98
        %s211 = sand.u32 %s88, 1
        %s212 = sand.u32 %s88, 1
        %s213 = smul.addr %s212, 256
        %s214 = scalar_lea.vmem [#allocation6], %s213
        %s215 = smul.u32 16, %s21
        %s216 = smul.u32 16, %s21
        %v217 = vld [vmem:[%s194] sm:$0xff]
        %v218 = vld [vmem:[%s194 + $0x8] sm:$0xff]
        %v219 = vld [vmem:[%s194 + $0x10] sm:$0xff]
        %v220 = vld [vmem:[%s194 + $0x18] sm:$0xff]
        %v221 = vld [vmem:[%s194 + $0x20] sm:$0xff]
        %v222 = vld [vmem:[%s194 + $0x28] sm:$0xff]
        %v223 = vld [vmem:[%s194 + $0x30] sm:$0xff]
        %v224 = vld [vmem:[%s194 + $0x38] sm:$0xff]
        %v225 = vld [vmem:[%s194 + $0x40] sm:$0xff]
        %v226 = vld [vmem:[%s194 + $0x48] sm:$0xff]
        %v227 = vld [vmem:[%s194 + $0x50] sm:$0xff]
        %v228 = vld [vmem:[%s194 + $0x58] sm:$0xff]
        %v229 = vld [vmem:[%s194 + $0x60] sm:$0xff]
        %v230 = vld [vmem:[%s194 + $0x68] sm:$0xff]
        %v231 = vld [vmem:[%s194 + $0x70] sm:$0xff]
        %v232 = vld [vmem:[%s194 + $0x78] sm:$0xff]
        %s233 = sld [smem:[#allocation2]]
        %v234 = vstv %s233
        %v235 = vmul.f32 %v217, %v234
        %v236 = vmul.f32 %v218, %v234
        %v237 = vmul.f32 %v219, %v234
        %v238 = vmul.f32 %v220, %v234
        %v239 = vmul.f32 %v221, %v234
        %v240 = vmul.f32 %v222, %v234
        %v241 = vmul.f32 %v223, %v234
        %v242 = vmul.f32 %v224, %v234
        %v243 = vmul.f32 %v225, %v234
        %v244 = vmul.f32 %v226, %v234
        %v245 = vmul.f32 %v227, %v234
        %v246 = vmul.f32 %v228, %v234
        %v247 = vmul.f32 %v229, %v234
        %v248 = vmul.f32 %v230, %v234
        %v249 = vmul.f32 %v231, %v234
        %v250 = vmul.f32 %v232, %v234
        %s251 = scalar_lea.vmem %s194, 128 [#allocation5]
        %v252 = vld [vmem:[%s251] sm:$0xff]
        %v253 = vld [vmem:[%s251 + $0x8] sm:$0xff]
        %v254 = vld [vmem:[%s251 + $0x10] sm:$0xff]
        %v255 = vld [vmem:[%s251 + $0x18] sm:$0xff]
        %v256 = vld [vmem:[%s251 + $0x20] sm:$0xff]
        %v257 = vld [vmem:[%s251 + $0x28] sm:$0xff]
        %v258 = vld [vmem:[%s251 + $0x30] sm:$0xff]
        %v259 = vld [vmem:[%s251 + $0x38] sm:$0xff]
        %v260 = vld [vmem:[%s251 + $0x40] sm:$0xff]
        %v261 = vld [vmem:[%s251 + $0x48] sm:$0xff]
        %v262 = vld [vmem:[%s251 + $0x50] sm:$0xff]
        %v263 = vld [vmem:[%s251 + $0x58] sm:$0xff]
        %v264 = vld [vmem:[%s251 + $0x60] sm:$0xff]
        %v265 = vld [vmem:[%s251 + $0x68] sm:$0xff]
        %v266 = vld [vmem:[%s251 + $0x70] sm:$0xff]
        %v267 = vld [vmem:[%s251 + $0x78] sm:$0xff]
        %s268 = sld [smem:[#allocation2 + $0x1]]
        %v269 = vstv %s268
        %v270 = vmul.f32 %v252, %v269
        %v271 = vmul.f32 %v253, %v269
        %v272 = vmul.f32 %v254, %v269
        %v273 = vmul.f32 %v255, %v269
        %v274 = vmul.f32 %v256, %v269
        %v275 = vmul.f32 %v257, %v269
        %v276 = vmul.f32 %v258, %v269
        %v277 = vmul.f32 %v259, %v269
        %v278 = vmul.f32 %v260, %v269
        %v279 = vmul.f32 %v261, %v269
        %v280 = vmul.f32 %v262, %v269
        %v281 = vmul.f32 %v263, %v269
        %v282 = vmul.f32 %v264, %v269
        %v283 = vmul.f32 %v265, %v269
        %v284 = vmul.f32 %v266, %v269
        %v285 = vmul.f32 %v267, %v269
        %v286 = vadd.f32 %v235, %v270
        %v287 = vadd.f32 %v236, %v271
        %v288 = vadd.f32 %v237, %v272
        %v289 = vadd.f32 %v238, %v273
        %v290 = vadd.f32 %v239, %v274
        %v291 = vadd.f32 %v240, %v275
        %v292 = vadd.f32 %v241, %v276
        %v293 = vadd.f32 %v242, %v277
        %v294 = vadd.f32 %v243, %v278
        %v295 = vadd.f32 %v244, %v279
        %v296 = vadd.f32 %v245, %v280
        %v297 = vadd.f32 %v246, %v281
        %v298 = vadd.f32 %v247, %v282
        %v299 = vadd.f32 %v248, %v283
        %v300 = vadd.f32 %v249, %v284
        %v301 = vadd.f32 %v250, %v285
        %s302 = scalar_lea.vmem %s194, 256 [#allocation5]
        %v303 = vld [vmem:[%s302] sm:$0xff]
        %v304 = vld [vmem:[%s302 + $0x8] sm:$0xff]
        %v305 = vld [vmem:[%s302 + $0x10] sm:$0xff]
        %v306 = vld [vmem:[%s302 + $0x18] sm:$0xff]
        %v307 = vld [vmem:[%s302 + $0x20] sm:$0xff]
        %v308 = vld [vmem:[%s302 + $0x28] sm:$0xff]
        %v309 = vld [vmem:[%s302 + $0x30] sm:$0xff]
        %v310 = vld [vmem:[%s302 + $0x38] sm:$0xff]
        %v311 = vld [vmem:[%s302 + $0x40] sm:$0xff]
        %v312 = vld [vmem:[%s302 + $0x48] sm:$0xff]
        %v313 = vld [vmem:[%s302 + $0x50] sm:$0xff]
        %v314 = vld [vmem:[%s302 + $0x58] sm:$0xff]
        %v315 = vld [vmem:[%s302 + $0x60] sm:$0xff]
        %v316 = vld [vmem:[%s302 + $0x68] sm:$0xff]
        %v317 = vld [vmem:[%s302 + $0x70] sm:$0xff]
        %v318 = vld [vmem:[%s302 + $0x78] sm:$0xff]
        %s319 = sld [smem:[#allocation2 + $0x2]]
        %v320 = vstv %s319
        %v321 = vmul.f32 %v303, %v320
        %v322 = vmul.f32 %v304, %v320
        %v323 = vmul.f32 %v305, %v320
        %v324 = vmul.f32 %v306, %v320
        %v325 = vmul.f32 %v307, %v320
        %v326 = vmul.f32 %v308, %v320
        %v327 = vmul.f32 %v309, %v320
        %v328 = vmul.f32 %v310, %v320
        %v329 = vmul.f32 %v311, %v320
        %v330 = vmul.f32 %v312, %v320
        %v331 = vmul.f32 %v313, %v320
        %v332 = vmul.f32 %v314, %v320
        %v333 = vmul.f32 %v315, %v320
        %v334 = vmul.f32 %v316, %v320
        %v335 = vmul.f32 %v317, %v320
        %v336 = vmul.f32 %v318, %v320
        %v337 = vadd.f32 %v286, %v321
        %v338 = vadd.f32 %v287, %v322
        %v339 = vadd.f32 %v288, %v323
        %v340 = vadd.f32 %v289, %v324
        %v341 = vadd.f32 %v290, %v325
        %v342 = vadd.f32 %v291, %v326
        %v343 = vadd.f32 %v292, %v327
        %v344 = vadd.f32 %v293, %v328
        %v345 = vadd.f32 %v294, %v329
        %v346 = vadd.f32 %v295, %v330
        %v347 = vadd.f32 %v296, %v331
        %v348 = vadd.f32 %v297, %v332
        %v349 = vadd.f32 %v298, %v333
        %v350 = vadd.f32 %v299, %v334
        %v351 = vadd.f32 %v300, %v335
        %v352 = vadd.f32 %v301, %v336
        %v353 = vpack.c.bf16 %v338, %v337
        %v354 = vpack.c.bf16 %v340, %v339
        %v355 = vpack.c.bf16 %v342, %v341
        %v356 = vpack.c.bf16 %v344, %v343
        %v357 = vpack.c.bf16 %v346, %v345
        %v358 = vpack.c.bf16 %v348, %v347
        %v359 = vpack.c.bf16 %v350, %v349
        %v360 = vpack.c.bf16 %v352, %v351
        %v369 = vunpack.c.l.b16 %v353
        %v370 = vunpack.c.h.b16 %v353
        %v371 = vunpack.c.l.b16 %v354
        %v372 = vunpack.c.h.b16 %v354
        %v373 = vunpack.c.l.b16 %v355
        %v374 = vunpack.c.h.b16 %v355
        %v375 = vunpack.c.l.b16 %v356
        %v376 = vunpack.c.h.b16 %v356
        %v377 = vunpack.c.l.b16 %v357
        %v378 = vunpack.c.h.b16 %v357
        %v379 = vunpack.c.l.b16 %v358
        %v380 = vunpack.c.h.b16 %v358
        %v381 = vunpack.c.l.b16 %v359
        %v382 = vunpack.c.h.b16 %v359
        %v383 = vunpack.c.l.b16 %v360
        %v384 = vunpack.c.h.b16 %v360
        %v385 = vpack.c.b16 %v369, %v369
        %v386 = vpack.c.b16 %v370, %v370
        %v387 = vpack.c.b16 %v371, %v371
        %v388 = vpack.c.b16 %v372, %v372
        %v389 = vpack.c.b16 %v373, %v373
        %v390 = vpack.c.b16 %v374, %v374
        %v391 = vpack.c.b16 %v375, %v375
        %v392 = vpack.c.b16 %v376, %v376
        %v393 = vpack.c.b16 %v377, %v377
        %v394 = vpack.c.b16 %v378, %v378
        %v395 = vpack.c.b16 %v379, %v379
        %v396 = vpack.c.b16 %v380, %v380
        %v397 = vpack.c.b16 %v381, %v381
        %v398 = vpack.c.b16 %v382, %v382
        %v399 = vpack.c.b16 %v383, %v383
        %v400 = vpack.c.b16 %v384, %v384
        %417 = vst [vmem:[%s214] sm:$0xf] %v385
        %418 = vst [vmem:[%s214 + $0x4] sm:$0xf] %v386
        %419 = vst [vmem:[%s214 + $0x8] sm:$0xf] %v387
        %420 = vst [vmem:[%s214 + $0xc] sm:$0xf] %v388
        %421 = vst [vmem:[%s214 + $0x10] sm:$0xf] %v389
        %422 = vst [vmem:[%s214 + $0x14] sm:$0xf] %v390
        %423 = vst [vmem:[%s214 + $0x18] sm:$0xf] %v391
        %424 = vst [vmem:[%s214 + $0x1c] sm:$0xf] %v392
        %425 = vst [vmem:[%s214 + $0x20] sm:$0xf] %v393
        %426 = vst [vmem:[%s214 + $0x24] sm:$0xf] %v394
        %427 = vst [vmem:[%s214 + $0x28] sm:$0xf] %v395
        %428 = vst [vmem:[%s214 + $0x2c] sm:$0xf] %v396
        %429 = vst [vmem:[%s214 + $0x30] sm:$0xf] %v397
        %430 = vst [vmem:[%s214 + $0x34] sm:$0xf] %v398
        %431 = vst [vmem:[%s214 + $0x38] sm:$0xf] %v399
        %432 = vst [vmem:[%s214 + $0x3c] sm:$0xf] %v400
        %v433 = vld [vmem:[%s194] sm:$0xff]
        %v434 = vld [vmem:[%s194 + $0x8] sm:$0xff]
        %v435 = vld [vmem:[%s194 + $0x10] sm:$0xff]
        %v436 = vld [vmem:[%s194 + $0x18] sm:$0xff]
        %v437 = vld [vmem:[%s194 + $0x20] sm:$0xff]
        %v438 = vld [vmem:[%s194 + $0x28] sm:$0xff]
        %v439 = vld [vmem:[%s194 + $0x30] sm:$0xff]
        %v440 = vld [vmem:[%s194 + $0x38] sm:$0xff]
        %v441 = vld [vmem:[%s194 + $0x40] sm:$0xff]
        %v442 = vld [vmem:[%s194 + $0x48] sm:$0xff]
        %v443 = vld [vmem:[%s194 + $0x50] sm:$0xff]
        %v444 = vld [vmem:[%s194 + $0x58] sm:$0xff]
        %v445 = vld [vmem:[%s194 + $0x60] sm:$0xff]
        %v446 = vld [vmem:[%s194 + $0x68] sm:$0xff]
        %v447 = vld [vmem:[%s194 + $0x70] sm:$0xff]
        %v448 = vld [vmem:[%s194 + $0x78] sm:$0xff]
        %s449 = sld [smem:[#allocation2 + $0x80]]
        %v450 = vstv %s449
        %v451 = vmul.f32 %v433, %v450
        %v452 = vmul.f32 %v434, %v450
        %v453 = vmul.f32 %v435, %v450
        %v454 = vmul.f32 %v436, %v450
        %v455 = vmul.f32 %v437, %v450
        %v456 = vmul.f32 %v438, %v450
        %v457 = vmul.f32 %v439, %v450
        %v458 = vmul.f32 %v440, %v450
        %v459 = vmul.f32 %v441, %v450
        %v460 = vmul.f32 %v442, %v450
        %v461 = vmul.f32 %v443, %v450
        %v462 = vmul.f32 %v444, %v450
        %v463 = vmul.f32 %v445, %v450
        %v464 = vmul.f32 %v446, %v450
        %v465 = vmul.f32 %v447, %v450
        %v466 = vmul.f32 %v448, %v450
        %v467 = vld [vmem:[%s251] sm:$0xff]
        %v468 = vld [vmem:[%s251 + $0x8] sm:$0xff]
        %v469 = vld [vmem:[%s251 + $0x10] sm:$0xff]
        %v470 = vld [vmem:[%s251 + $0x18] sm:$0xff]
        %v471 = vld [vmem:[%s251 + $0x20] sm:$0xff]
        %v472 = vld [vmem:[%s251 + $0x28] sm:$0xff]
        %v473 = vld [vmem:[%s251 + $0x30] sm:$0xff]
        %v474 = vld [vmem:[%s251 + $0x38] sm:$0xff]
        %v475 = vld [vmem:[%s251 + $0x40] sm:$0xff]
        %v476 = vld [vmem:[%s251 + $0x48] sm:$0xff]
        %v477 = vld [vmem:[%s251 + $0x50] sm:$0xff]
        %v478 = vld [vmem:[%s251 + $0x58] sm:$0xff]
        %v479 = vld [vmem:[%s251 + $0x60] sm:$0xff]
        %v480 = vld [vmem:[%s251 + $0x68] sm:$0xff]
        %v481 = vld [vmem:[%s251 + $0x70] sm:$0xff]
        %v482 = vld [vmem:[%s251 + $0x78] sm:$0xff]
        %s483 = sld [smem:[#allocation2 + $0x81]]
        %v484 = vstv %s483
        %v485 = vmul.f32 %v467, %v484
        %v486 = vmul.f32 %v468, %v484
        %v487 = vmul.f32 %v469, %v484
        %v488 = vmul.f32 %v470, %v484
        %v489 = vmul.f32 %v471, %v484
        %v490 = vmul.f32 %v472, %v484
        %v491 = vmul.f32 %v473, %v484
        %v492 = vmul.f32 %v474, %v484
        %v493 = vmul.f32 %v475, %v484
        %v494 = vmul.f32 %v476, %v484
        %v495 = vmul.f32 %v477, %v484
        %v496 = vmul.f32 %v478, %v484
        %v497 = vmul.f32 %v479, %v484
        %v498 = vmul.f32 %v480, %v484
        %v499 = vmul.f32 %v481, %v484
        %v500 = vmul.f32 %v482, %v484
        %v501 = vadd.f32 %v451, %v485
        %v502 = vadd.f32 %v452, %v486
        %v503 = vadd.f32 %v453, %v487
        %v504 = vadd.f32 %v454, %v488
        %v505 = vadd.f32 %v455, %v489
        %v506 = vadd.f32 %v456, %v490
        %v507 = vadd.f32 %v457, %v491
        %v508 = vadd.f32 %v458, %v492
        %v509 = vadd.f32 %v459, %v493
        %v510 = vadd.f32 %v460, %v494
        %v511 = vadd.f32 %v461, %v495
        %v512 = vadd.f32 %v462, %v496
        %v513 = vadd.f32 %v463, %v497
        %v514 = vadd.f32 %v464, %v498
        %v515 = vadd.f32 %v465, %v499
        %v516 = vadd.f32 %v466, %v500
        %v517 = vld [vmem:[%s302] sm:$0xff]
        %v518 = vld [vmem:[%s302 + $0x8] sm:$0xff]
        %v519 = vld [vmem:[%s302 + $0x10] sm:$0xff]
        %v520 = vld [vmem:[%s302 + $0x18] sm:$0xff]
        %v521 = vld [vmem:[%s302 + $0x20] sm:$0xff]
        %v522 = vld [vmem:[%s302 + $0x28] sm:$0xff]
        %v523 = vld [vmem:[%s302 + $0x30] sm:$0xff]
        %v524 = vld [vmem:[%s302 + $0x38] sm:$0xff]
        %v525 = vld [vmem:[%s302 + $0x40] sm:$0xff]
        %v526 = vld [vmem:[%s302 + $0x48] sm:$0xff]
        %v527 = vld [vmem:[%s302 + $0x50] sm:$0xff]
        %v528 = vld [vmem:[%s302 + $0x58] sm:$0xff]
        %v529 = vld [vmem:[%s302 + $0x60] sm:$0xff]
        %v530 = vld [vmem:[%s302 + $0x68] sm:$0xff]
        %v531 = vld [vmem:[%s302 + $0x70] sm:$0xff]
        %v532 = vld [vmem:[%s302 + $0x78] sm:$0xff]
        %s533 = sld [smem:[#allocation2 + $0x82]]
        %v534 = vstv %s533
        %v535 = vmul.f32 %v517, %v534
        %v536 = vmul.f32 %v518, %v534
        %v537 = vmul.f32 %v519, %v534
        %v538 = vmul.f32 %v520, %v534
        %v539 = vmul.f32 %v521, %v534
        %v540 = vmul.f32 %v522, %v534
        %v541 = vmul.f32 %v523, %v534
        %v542 = vmul.f32 %v524, %v534
        %v543 = vmul.f32 %v525, %v534
        %v544 = vmul.f32 %v526, %v534
        %v545 = vmul.f32 %v527, %v534
        %v546 = vmul.f32 %v528, %v534
        %v547 = vmul.f32 %v529, %v534
        %v548 = vmul.f32 %v530, %v534
        %v549 = vmul.f32 %v531, %v534
        %v550 = vmul.f32 %v532, %v534
        %v551 = vadd.f32 %v501, %v535
        %v552 = vadd.f32 %v502, %v536
        %v553 = vadd.f32 %v503, %v537
        %v554 = vadd.f32 %v504, %v538
        %v555 = vadd.f32 %v505, %v539
        %v556 = vadd.f32 %v506, %v540
        %v557 = vadd.f32 %v507, %v541
        %v558 = vadd.f32 %v508, %v542
        %v559 = vadd.f32 %v509, %v543
        %v560 = vadd.f32 %v510, %v544
        %v561 = vadd.f32 %v511, %v545
        %v562 = vadd.f32 %v512, %v546
        %v563 = vadd.f32 %v513, %v547
        %v564 = vadd.f32 %v514, %v548
        %v565 = vadd.f32 %v515, %v549
        %v566 = vadd.f32 %v516, %v550
        %v567 = vpack.c.bf16 %v552, %v551
        %v568 = vpack.c.bf16 %v554, %v553
        %v569 = vpack.c.bf16 %v556, %v555
        %v570 = vpack.c.bf16 %v558, %v557
        %v571 = vpack.c.bf16 %v560, %v559
        %v572 = vpack.c.bf16 %v562, %v561
        %v573 = vpack.c.bf16 %v564, %v563
        %v574 = vpack.c.bf16 %v566, %v565
        %v583 = vunpack.c.l.b16 %v567
        %v584 = vunpack.c.h.b16 %v567
        %v585 = vunpack.c.l.b16 %v568
        %v586 = vunpack.c.h.b16 %v568
        %v587 = vunpack.c.l.b16 %v569
        %v588 = vunpack.c.h.b16 %v569
        %v589 = vunpack.c.l.b16 %v570
        %v590 = vunpack.c.h.b16 %v570
        %v591 = vunpack.c.l.b16 %v571
        %v592 = vunpack.c.h.b16 %v571
        %v593 = vunpack.c.l.b16 %v572
        %v594 = vunpack.c.h.b16 %v572
        %v595 = vunpack.c.l.b16 %v573
        %v596 = vunpack.c.h.b16 %v573
        %v597 = vunpack.c.l.b16 %v574
        %v598 = vunpack.c.h.b16 %v574
        %v599 = vpack.c.b16 %v583, %v583
        %v600 = vpack.c.b16 %v584, %v584
        %v601 = vpack.c.b16 %v585, %v585
        %v602 = vpack.c.b16 %v586, %v586
        %v603 = vpack.c.b16 %v587, %v587
        %v604 = vpack.c.b16 %v588, %v588
        %v605 = vpack.c.b16 %v589, %v589
        %v606 = vpack.c.b16 %v590, %v590
        %v607 = vpack.c.b16 %v591, %v591
        %v608 = vpack.c.b16 %v592, %v592
        %v609 = vpack.c.b16 %v593, %v593
        %v610 = vpack.c.b16 %v594, %v594
        %v611 = vpack.c.b16 %v595, %v595
        %v612 = vpack.c.b16 %v596, %v596
        %v613 = vpack.c.b16 %v597, %v597
        %v614 = vpack.c.b16 %v598, %v598
        %s631 = scalar_lea.vmem %s214, 64 [#allocation6]
        %632 = vst [vmem:[%s631] sm:$0xf] %v599
        %633 = vst [vmem:[%s631 + $0x4] sm:$0xf] %v600
        %634 = vst [vmem:[%s631 + $0x8] sm:$0xf] %v601
        %635 = vst [vmem:[%s631 + $0xc] sm:$0xf] %v602
        %636 = vst [vmem:[%s631 + $0x10] sm:$0xf] %v603
        %637 = vst [vmem:[%s631 + $0x14] sm:$0xf] %v604
        %638 = vst [vmem:[%s631 + $0x18] sm:$0xf] %v605
        %639 = vst [vmem:[%s631 + $0x1c] sm:$0xf] %v606
        %640 = vst [vmem:[%s631 + $0x20] sm:$0xf] %v607
        %641 = vst [vmem:[%s631 + $0x24] sm:$0xf] %v608
        %642 = vst [vmem:[%s631 + $0x28] sm:$0xf] %v609
        %643 = vst [vmem:[%s631 + $0x2c] sm:$0xf] %v610
        %644 = vst [vmem:[%s631 + $0x30] sm:$0xf] %v611
        %645 = vst [vmem:[%s631 + $0x34] sm:$0xf] %v612
        %646 = vst [vmem:[%s631 + $0x38] sm:$0xf] %v613
        %647 = vst [vmem:[%s631 + $0x3c] sm:$0xf] %v614
        %v648 = vld [vmem:[%s194] sm:$0xff]
        %v649 = vld [vmem:[%s194 + $0x8] sm:$0xff]
        %v650 = vld [vmem:[%s194 + $0x10] sm:$0xff]
        %v651 = vld [vmem:[%s194 + $0x18] sm:$0xff]
        %v652 = vld [vmem:[%s194 + $0x20] sm:$0xff]
        %v653 = vld [vmem:[%s194 + $0x28] sm:$0xff]
        %v654 = vld [vmem:[%s194 + $0x30] sm:$0xff]
        %v655 = vld [vmem:[%s194 + $0x38] sm:$0xff]
        %v656 = vld [vmem:[%s194 + $0x40] sm:$0xff]
        %v657 = vld [vmem:[%s194 + $0x48] sm:$0xff]
        %v658 = vld [vmem:[%s194 + $0x50] sm:$0xff]
        %v659 = vld [vmem:[%s194 + $0x58] sm:$0xff]
        %v660 = vld [vmem:[%s194 + $0x60] sm:$0xff]
        %v661 = vld [vmem:[%s194 + $0x68] sm:$0xff]
        %v662 = vld [vmem:[%s194 + $0x70] sm:$0xff]
        %v663 = vld [vmem:[%s194 + $0x78] sm:$0xff]
        %s664 = sld [smem:[#allocation2 + $0x100]]
        %v665 = vstv %s664
        %v666 = vmul.f32 %v648, %v665
        %v667 = vmul.f32 %v649, %v665
        %v668 = vmul.f32 %v650, %v665
        %v669 = vmul.f32 %v651, %v665
        %v670 = vmul.f32 %v652, %v665
        %v671 = vmul.f32 %v653, %v665
        %v672 = vmul.f32 %v654, %v665
        %v673 = vmul.f32 %v655, %v665
        %v674 = vmul.f32 %v656, %v665
        %v675 = vmul.f32 %v657, %v665
        %v676 = vmul.f32 %v658, %v665
        %v677 = vmul.f32 %v659, %v665
        %v678 = vmul.f32 %v660, %v665
        %v679 = vmul.f32 %v661, %v665
        %v680 = vmul.f32 %v662, %v665
        %v681 = vmul.f32 %v663, %v665
        %v682 = vld [vmem:[%s251] sm:$0xff]
        %v683 = vld [vmem:[%s251 + $0x8] sm:$0xff]
        %v684 = vld [vmem:[%s251 + $0x10] sm:$0xff]
        %v685 = vld [vmem:[%s251 + $0x18] sm:$0xff]
        %v686 = vld [vmem:[%s251 + $0x20] sm:$0xff]
        %v687 = vld [vmem:[%s251 + $0x28] sm:$0xff]
        %v688 = vld [vmem:[%s251 + $0x30] sm:$0xff]
        %v689 = vld [vmem:[%s251 + $0x38] sm:$0xff]
        %v690 = vld [vmem:[%s251 + $0x40] sm:$0xff]
        %v691 = vld [vmem:[%s251 + $0x48] sm:$0xff]
        %v692 = vld [vmem:[%s251 + $0x50] sm:$0xff]
        %v693 = vld [vmem:[%s251 + $0x58] sm:$0xff]
        %v694 = vld [vmem:[%s251 + $0x60] sm:$0xff]
        %v695 = vld [vmem:[%s251 + $0x68] sm:$0xff]
        %v696 = vld [vmem:[%s251 + $0x70] sm:$0xff]
        %v697 = vld [vmem:[%s251 + $0x78] sm:$0xff]
        %s698 = sld [smem:[#allocation2 + $0x101]]
        %v699 = vstv %s698
        %v700 = vmul.f32 %v682, %v699
        %v701 = vmul.f32 %v683, %v699
        %v702 = vmul.f32 %v684, %v699
        %v703 = vmul.f32 %v685, %v699
        %v704 = vmul.f32 %v686, %v699
        %v705 = vmul.f32 %v687, %v699
        %v706 = vmul.f32 %v688, %v699
        %v707 = vmul.f32 %v689, %v699
        %v708 = vmul.f32 %v690, %v699
        %v709 = vmul.f32 %v691, %v699
        %v710 = vmul.f32 %v692, %v699
        %v711 = vmul.f32 %v693, %v699
        %v712 = vmul.f32 %v694, %v699
        %v713 = vmul.f32 %v695, %v699
        %v714 = vmul.f32 %v696, %v699
        %v715 = vmul.f32 %v697, %v699
        %v716 = vadd.f32 %v666, %v700
        %v717 = vadd.f32 %v667, %v701
        %v718 = vadd.f32 %v668, %v702
        %v719 = vadd.f32 %v669, %v703
        %v720 = vadd.f32 %v670, %v704
        %v721 = vadd.f32 %v671, %v705
        %v722 = vadd.f32 %v672, %v706
        %v723 = vadd.f32 %v673, %v707
        %v724 = vadd.f32 %v674, %v708
        %v725 = vadd.f32 %v675, %v709
        %v726 = vadd.f32 %v676, %v710
        %v727 = vadd.f32 %v677, %v711
        %v728 = vadd.f32 %v678, %v712
        %v729 = vadd.f32 %v679, %v713
        %v730 = vadd.f32 %v680, %v714
        %v731 = vadd.f32 %v681, %v715
        %v732 = vld [vmem:[%s302] sm:$0xff]
        %v733 = vld [vmem:[%s302 + $0x8] sm:$0xff]
        %v734 = vld [vmem:[%s302 + $0x10] sm:$0xff]
        %v735 = vld [vmem:[%s302 + $0x18] sm:$0xff]
        %v736 = vld [vmem:[%s302 + $0x20] sm:$0xff]
        %v737 = vld [vmem:[%s302 + $0x28] sm:$0xff]
        %v738 = vld [vmem:[%s302 + $0x30] sm:$0xff]
        %v739 = vld [vmem:[%s302 + $0x38] sm:$0xff]
        %v740 = vld [vmem:[%s302 + $0x40] sm:$0xff]
        %v741 = vld [vmem:[%s302 + $0x48] sm:$0xff]
        %v742 = vld [vmem:[%s302 + $0x50] sm:$0xff]
        %v743 = vld [vmem:[%s302 + $0x58] sm:$0xff]
        %v744 = vld [vmem:[%s302 + $0x60] sm:$0xff]
        %v745 = vld [vmem:[%s302 + $0x68] sm:$0xff]
        %v746 = vld [vmem:[%s302 + $0x70] sm:$0xff]
        %v747 = vld [vmem:[%s302 + $0x78] sm:$0xff]
        %s748 = sld [smem:[#allocation2 + $0x102]]
        %v749 = vstv %s748
        %v750 = vmul.f32 %v732, %v749
        %v751 = vmul.f32 %v733, %v749
        %v752 = vmul.f32 %v734, %v749
        %v753 = vmul.f32 %v735, %v749
        %v754 = vmul.f32 %v736, %v749
        %v755 = vmul.f32 %v737, %v749
        %v756 = vmul.f32 %v738, %v749
        %v757 = vmul.f32 %v739, %v749
        %v758 = vmul.f32 %v740, %v749
        %v759 = vmul.f32 %v741, %v749
        %v760 = vmul.f32 %v742, %v749
        %v761 = vmul.f32 %v743, %v749
        %v762 = vmul.f32 %v744, %v749
        %v763 = vmul.f32 %v745, %v749
        %v764 = vmul.f32 %v746, %v749
        %v765 = vmul.f32 %v747, %v749
        %v766 = vadd.f32 %v716, %v750
        %v767 = vadd.f32 %v717, %v751
        %v768 = vadd.f32 %v718, %v752
        %v769 = vadd.f32 %v719, %v753
        %v770 = vadd.f32 %v720, %v754
        %v771 = vadd.f32 %v721, %v755
        %v772 = vadd.f32 %v722, %v756
        %v773 = vadd.f32 %v723, %v757
        %v774 = vadd.f32 %v724, %v758
        %v775 = vadd.f32 %v725, %v759
        %v776 = vadd.f32 %v726, %v760
        %v777 = vadd.f32 %v727, %v761
        %v778 = vadd.f32 %v728, %v762
        %v779 = vadd.f32 %v729, %v763
        %v780 = vadd.f32 %v730, %v764
        %v781 = vadd.f32 %v731, %v765
        %v782 = vpack.c.bf16 %v767, %v766
        %v783 = vpack.c.bf16 %v769, %v768
        %v784 = vpack.c.bf16 %v771, %v770
        %v785 = vpack.c.bf16 %v773, %v772
        %v786 = vpack.c.bf16 %v775, %v774
        %v787 = vpack.c.bf16 %v777, %v776
        %v788 = vpack.c.bf16 %v779, %v778
        %v789 = vpack.c.bf16 %v781, %v780
        %v798 = vunpack.c.l.b16 %v782
        %v799 = vunpack.c.h.b16 %v782
        %v800 = vunpack.c.l.b16 %v783
        %v801 = vunpack.c.h.b16 %v783
        %v802 = vunpack.c.l.b16 %v784
        %v803 = vunpack.c.h.b16 %v784
        %v804 = vunpack.c.l.b16 %v785
        %v805 = vunpack.c.h.b16 %v785
        %v806 = vunpack.c.l.b16 %v786
        %v807 = vunpack.c.h.b16 %v786
        %v808 = vunpack.c.l.b16 %v787
        %v809 = vunpack.c.h.b16 %v787
        %v810 = vunpack.c.l.b16 %v788
        %v811 = vunpack.c.h.b16 %v788
        %v812 = vunpack.c.l.b16 %v789
        %v813 = vunpack.c.h.b16 %v789
        %v814 = vpack.c.b16 %v798, %v798
        %v815 = vpack.c.b16 %v799, %v799
        %v816 = vpack.c.b16 %v800, %v800
        %v817 = vpack.c.b16 %v801, %v801
        %v818 = vpack.c.b16 %v802, %v802
        %v819 = vpack.c.b16 %v803, %v803
        %v820 = vpack.c.b16 %v804, %v804
        %v821 = vpack.c.b16 %v805, %v805
        %v822 = vpack.c.b16 %v806, %v806
        %v823 = vpack.c.b16 %v807, %v807
        %v824 = vpack.c.b16 %v808, %v808
        %v825 = vpack.c.b16 %v809, %v809
        %v826 = vpack.c.b16 %v810, %v810
        %v827 = vpack.c.b16 %v811, %v811
        %v828 = vpack.c.b16 %v812, %v812
        %v829 = vpack.c.b16 %v813, %v813
        %s846 = scalar_lea.vmem %s214, 128 [#allocation6]
        %847 = vst [vmem:[%s846] sm:$0xf] %v814
        %848 = vst [vmem:[%s846 + $0x4] sm:$0xf] %v815
        %849 = vst [vmem:[%s846 + $0x8] sm:$0xf] %v816
        %850 = vst [vmem:[%s846 + $0xc] sm:$0xf] %v817
        %851 = vst [vmem:[%s846 + $0x10] sm:$0xf] %v818
        %852 = vst [vmem:[%s846 + $0x14] sm:$0xf] %v819
        %853 = vst [vmem:[%s846 + $0x18] sm:$0xf] %v820
        %854 = vst [vmem:[%s846 + $0x1c] sm:$0xf] %v821
        %855 = vst [vmem:[%s846 + $0x20] sm:$0xf] %v822
        %856 = vst [vmem:[%s846 + $0x24] sm:$0xf] %v823
        %857 = vst [vmem:[%s846 + $0x28] sm:$0xf] %v824
        %858 = vst [vmem:[%s846 + $0x2c] sm:$0xf] %v825
        %859 = vst [vmem:[%s846 + $0x30] sm:$0xf] %v826
        %860 = vst [vmem:[%s846 + $0x34] sm:$0xf] %v827
        %861 = vst [vmem:[%s846 + $0x38] sm:$0xf] %v828
        %862 = vst [vmem:[%s846 + $0x3c] sm:$0xf] %v829
        %v863 = vld [vmem:[%s194] sm:$0xff]
        %v864 = vld [vmem:[%s194 + $0x8] sm:$0xff]
        %v865 = vld [vmem:[%s194 + $0x10] sm:$0xff]
        %v866 = vld [vmem:[%s194 + $0x18] sm:$0xff]
        %v867 = vld [vmem:[%s194 + $0x20] sm:$0xff]
        %v868 = vld [vmem:[%s194 + $0x28] sm:$0xff]
        %v869 = vld [vmem:[%s194 + $0x30] sm:$0xff]
        %v870 = vld [vmem:[%s194 + $0x38] sm:$0xff]
        %v871 = vld [vmem:[%s194 + $0x40] sm:$0xff]
        %v872 = vld [vmem:[%s194 + $0x48] sm:$0xff]
        %v873 = vld [vmem:[%s194 + $0x50] sm:$0xff]
        %v874 = vld [vmem:[%s194 + $0x58] sm:$0xff]
        %v875 = vld [vmem:[%s194 + $0x60] sm:$0xff]
        %v876 = vld [vmem:[%s194 + $0x68] sm:$0xff]
        %v877 = vld [vmem:[%s194 + $0x70] sm:$0xff]
        %v878 = vld [vmem:[%s194 + $0x78] sm:$0xff]
        %s879 = sld [smem:[#allocation2 + $0x180]]
        %v880 = vstv %s879
        %v881 = vmul.f32 %v863, %v880
        %v882 = vmul.f32 %v864, %v880
        %v883 = vmul.f32 %v865, %v880
        %v884 = vmul.f32 %v866, %v880
        %v885 = vmul.f32 %v867, %v880
        %v886 = vmul.f32 %v868, %v880
        %v887 = vmul.f32 %v869, %v880
        %v888 = vmul.f32 %v870, %v880
        %v889 = vmul.f32 %v871, %v880
        %v890 = vmul.f32 %v872, %v880
        %v891 = vmul.f32 %v873, %v880
        %v892 = vmul.f32 %v874, %v880
        %v893 = vmul.f32 %v875, %v880
        %v894 = vmul.f32 %v876, %v880
        %v895 = vmul.f32 %v877, %v880
        %v896 = vmul.f32 %v878, %v880
        %v897 = vld [vmem:[%s251] sm:$0xff]
        %v898 = vld [vmem:[%s251 + $0x8] sm:$0xff]
        %v899 = vld [vmem:[%s251 + $0x10] sm:$0xff]
        %v900 = vld [vmem:[%s251 + $0x18] sm:$0xff]
        %v901 = vld [vmem:[%s251 + $0x20] sm:$0xff]
        %v902 = vld [vmem:[%s251 + $0x28] sm:$0xff]
        %v903 = vld [vmem:[%s251 + $0x30] sm:$0xff]
        %v904 = vld [vmem:[%s251 + $0x38] sm:$0xff]
        %v905 = vld [vmem:[%s251 + $0x40] sm:$0xff]
        %v906 = vld [vmem:[%s251 + $0x48] sm:$0xff]
        %v907 = vld [vmem:[%s251 + $0x50] sm:$0xff]
        %v908 = vld [vmem:[%s251 + $0x58] sm:$0xff]
        %v909 = vld [vmem:[%s251 + $0x60] sm:$0xff]
        %v910 = vld [vmem:[%s251 + $0x68] sm:$0xff]
        %v911 = vld [vmem:[%s251 + $0x70] sm:$0xff]
        %v912 = vld [vmem:[%s251 + $0x78] sm:$0xff]
        %s913 = sld [smem:[#allocation2 + $0x181]]
        %v914 = vstv %s913
        %v915 = vmul.f32 %v897, %v914
        %v916 = vmul.f32 %v898, %v914
        %v917 = vmul.f32 %v899, %v914
        %v918 = vmul.f32 %v900, %v914
        %v919 = vmul.f32 %v901, %v914
        %v920 = vmul.f32 %v902, %v914
        %v921 = vmul.f32 %v903, %v914
        %v922 = vmul.f32 %v904, %v914
        %v923 = vmul.f32 %v905, %v914
        %v924 = vmul.f32 %v906, %v914
        %v925 = vmul.f32 %v907, %v914
        %v926 = vmul.f32 %v908, %v914
        %v927 = vmul.f32 %v909, %v914
        %v928 = vmul.f32 %v910, %v914
        %v929 = vmul.f32 %v911, %v914
        %v930 = vmul.f32 %v912, %v914
        %v931 = vadd.f32 %v881, %v915
        %v932 = vadd.f32 %v882, %v916
        %v933 = vadd.f32 %v883, %v917
        %v934 = vadd.f32 %v884, %v918
        %v935 = vadd.f32 %v885, %v919
        %v936 = vadd.f32 %v886, %v920
        %v937 = vadd.f32 %v887, %v921
        %v938 = vadd.f32 %v888, %v922
        %v939 = vadd.f32 %v889, %v923
        %v940 = vadd.f32 %v890, %v924
        %v941 = vadd.f32 %v891, %v925
        %v942 = vadd.f32 %v892, %v926
        %v943 = vadd.f32 %v893, %v927
        %v944 = vadd.f32 %v894, %v928
        %v945 = vadd.f32 %v895, %v929
        %v946 = vadd.f32 %v896, %v930
        %v947 = vld [vmem:[%s302] sm:$0xff]
        %v948 = vld [vmem:[%s302 + $0x8] sm:$0xff]
        %v949 = vld [vmem:[%s302 + $0x10] sm:$0xff]
        %v950 = vld [vmem:[%s302 + $0x18] sm:$0xff]
        %v951 = vld [vmem:[%s302 + $0x20] sm:$0xff]
        %v952 = vld [vmem:[%s302 + $0x28] sm:$0xff]
        %v953 = vld [vmem:[%s302 + $0x30] sm:$0xff]
        %v954 = vld [vmem:[%s302 + $0x38] sm:$0xff]
        %v955 = vld [vmem:[%s302 + $0x40] sm:$0xff]
        %v956 = vld [vmem:[%s302 + $0x48] sm:$0xff]
        %v957 = vld [vmem:[%s302 + $0x50] sm:$0xff]
        %v958 = vld [vmem:[%s302 + $0x58] sm:$0xff]
        %v959 = vld [vmem:[%s302 + $0x60] sm:$0xff]
        %v960 = vld [vmem:[%s302 + $0x68] sm:$0xff]
        %v961 = vld [vmem:[%s302 + $0x70] sm:$0xff]
        %v962 = vld [vmem:[%s302 + $0x78] sm:$0xff]
        %s963 = sld [smem:[#allocation2 + $0x182]]
        %v964 = vstv %s963
        %v965 = vmul.f32 %v947, %v964
        %v966 = vmul.f32 %v948, %v964
        %v967 = vmul.f32 %v949, %v964
        %v968 = vmul.f32 %v950, %v964
        %v969 = vmul.f32 %v951, %v964
        %v970 = vmul.f32 %v952, %v964
        %v971 = vmul.f32 %v953, %v964
        %v972 = vmul.f32 %v954, %v964
        %v973 = vmul.f32 %v955, %v964
        %v974 = vmul.f32 %v956, %v964
        %v975 = vmul.f32 %v957, %v964
        %v976 = vmul.f32 %v958, %v964
        %v977 = vmul.f32 %v959, %v964
        %v978 = vmul.f32 %v960, %v964
        %v979 = vmul.f32 %v961, %v964
        %v980 = vmul.f32 %v962, %v964
        %v981 = vadd.f32 %v931, %v965
        %v982 = vadd.f32 %v932, %v966
        %v983 = vadd.f32 %v933, %v967
        %v984 = vadd.f32 %v934, %v968
        %v985 = vadd.f32 %v935, %v969
        %v986 = vadd.f32 %v936, %v970
        %v987 = vadd.f32 %v937, %v971
        %v988 = vadd.f32 %v938, %v972
        %v989 = vadd.f32 %v939, %v973
        %v990 = vadd.f32 %v940, %v974
        %v991 = vadd.f32 %v941, %v975
        %v992 = vadd.f32 %v942, %v976
        %v993 = vadd.f32 %v943, %v977
        %v994 = vadd.f32 %v944, %v978
        %v995 = vadd.f32 %v945, %v979
        %v996 = vadd.f32 %v946, %v980
        %v997 = vpack.c.bf16 %v982, %v981
        %v998 = vpack.c.bf16 %v984, %v983
        %v999 = vpack.c.bf16 %v986, %v985
        %v1000 = vpack.c.bf16 %v988, %v987
        %v1001 = vpack.c.bf16 %v990, %v989
        %v1002 = vpack.c.bf16 %v992, %v991
        %v1003 = vpack.c.bf16 %v994, %v993
        %v1004 = vpack.c.bf16 %v996, %v995
        %v1013 = vunpack.c.l.b16 %v997
        %v1014 = vunpack.c.h.b16 %v997
        %v1015 = vunpack.c.l.b16 %v998
        %v1016 = vunpack.c.h.b16 %v998
        %v1017 = vunpack.c.l.b16 %v999
        %v1018 = vunpack.c.h.b16 %v999
        %v1019 = vunpack.c.l.b16 %v1000
        %v1020 = vunpack.c.h.b16 %v1000
        %v1021 = vunpack.c.l.b16 %v1001
        %v1022 = vunpack.c.h.b16 %v1001
        %v1023 = vunpack.c.l.b16 %v1002
        %v1024 = vunpack.c.h.b16 %v1002
        %v1025 = vunpack.c.l.b16 %v1003
        %v1026 = vunpack.c.h.b16 %v1003
        %v1027 = vunpack.c.l.b16 %v1004
        %v1028 = vunpack.c.h.b16 %v1004
        %v1029 = vpack.c.b16 %v1013, %v1013
        %v1030 = vpack.c.b16 %v1014, %v1014
        %v1031 = vpack.c.b16 %v1015, %v1015
        %v1032 = vpack.c.b16 %v1016, %v1016
        %v1033 = vpack.c.b16 %v1017, %v1017
        %v1034 = vpack.c.b16 %v1018, %v1018
        %v1035 = vpack.c.b16 %v1019, %v1019
        %v1036 = vpack.c.b16 %v1020, %v1020
        %v1037 = vpack.c.b16 %v1021, %v1021
        %v1038 = vpack.c.b16 %v1022, %v1022
        %v1039 = vpack.c.b16 %v1023, %v1023
        %v1040 = vpack.c.b16 %v1024, %v1024
        %v1041 = vpack.c.b16 %v1025, %v1025
        %v1042 = vpack.c.b16 %v1026, %v1026
        %v1043 = vpack.c.b16 %v1027, %v1027
        %v1044 = vpack.c.b16 %v1028, %v1028
        %s1061 = scalar_lea.vmem %s214, 192 [#allocation6]
        %1062 = vst [vmem:[%s1061] sm:$0xf] %v1029
        %1063 = vst [vmem:[%s1061 + $0x4] sm:$0xf] %v1030
        %1064 = vst [vmem:[%s1061 + $0x8] sm:$0xf] %v1031
        %1065 = vst [vmem:[%s1061 + $0xc] sm:$0xf] %v1032
        %1066 = vst [vmem:[%s1061 + $0x10] sm:$0xf] %v1033
        %1067 = vst [vmem:[%s1061 + $0x14] sm:$0xf] %v1034
        %1068 = vst [vmem:[%s1061 + $0x18] sm:$0xf] %v1035
        %1069 = vst [vmem:[%s1061 + $0x1c] sm:$0xf] %v1036
        %1070 = vst [vmem:[%s1061 + $0x20] sm:$0xf] %v1037
        %1071 = vst [vmem:[%s1061 + $0x24] sm:$0xf] %v1038
        %1072 = vst [vmem:[%s1061 + $0x28] sm:$0xf] %v1039
        %1073 = vst [vmem:[%s1061 + $0x2c] sm:$0xf] %v1040
        %1074 = vst [vmem:[%s1061 + $0x30] sm:$0xf] %v1041
        %1075 = vst [vmem:[%s1061 + $0x34] sm:$0xf] %v1042
        %1076 = vst [vmem:[%s1061 + $0x38] sm:$0xf] %v1043
        %1077 = vst [vmem:[%s1061 + $0x3c] sm:$0xf] %v1044
        %s1078 = sand.u32 %s88, 1
        %s1079 = sand.u32 %s88, 1
        %s1080 = smul.addr %s1079, 256
        %s1081 = scalar_lea.vmem [#allocation6], %s1080
        // Predicated region
        $region37: #{gtn_forward.6} parent=27 // pred_check
          %p1082 = pneg %p98
        $region38: #{gtn_forward.6} parent=27 // pred_check_branch
          %1084 = sbr.rel (%p1082) target = $region40
        $region39: #{gtn_forward.6} parent=27 // pred_region
          %s1085 = smul.u32 16, %s21
          %s1086 = smul.addr %s1085, 2
          %s1087 = sadd.s32 %s22, %s1086
          %s1088 = smul.addr %s1087, 4
          %s1089 = scalar_lea.vmem %s2, %s1088
          // Predicated region
          $region41: #{gtn_forward.6} parent=39 // pred_check
            _
          $region42: #{gtn_forward.6} parent=39 // pred_check_branch
            %1091 = sbr.rel (0) target = $region44
          $region43: #{gtn_forward.6} parent=39 // pred_region
            // Predicated region
            $region45: #{gtn_forward.6} parent=43 // pred_check
              _
            $region46: #{gtn_forward.6} parent=43 // pred_check_branch
              %1093 = sbr.rel target = $region48
            $region47: #{gtn_forward.6} parent=43 // pred_region
              // Predicated region
              $region60: #{gtn_forward.6} parent=47 // pred_check
                _
              $region61: #{gtn_forward.6} parent=47 // pred_check_branch
                %1234 = sbr.rel (0) target = $region63
              $region62: #{gtn_forward.6} parent=47 // pred_region
                loop: start=0, step=1, limit=1
                $region64: #{gtn_forward.6} parent=62 // loop_pre_header
                  _
                $region65: #{gtn_forward.6} parent=62 // loop_header
                  %s1236 = sphi 0, %s1240
                  %p1237 = scmp.ge.s32.totalorder %s1236, 1
                  %s1241 = sphi %s1081, %s1081
                  %s1242 = sphi %s1089, %s1089
                $region66: #{gtn_forward.6} parent=62 // loop_header_branch
                  %1239 = sbr.rel (%p1237) target = $region70
                $region67: #{gtn_forward.6} parent=62 // loop_body
                  _
                $region68: #{gtn_forward.6} parent=62 // loop_footer
                  %s1240 = sadd.s32 1, %s1236
                $region69: #{gtn_forward.6} parent=62 // loop_footer_branch
                  %1235 = sbr.rel target = $region65
                $region70: #{gtn_forward.6} parent=62 // loop_exit
                  _
                loop: start=0, step=1, limit=1
                $region71: #{gtn_forward.6} parent=62 // loop_pre_header
                  _
                $region72: #{gtn_forward.6} parent=62 // loop_header
                  %s1245 = sphi 0, %s1249
                  %p1246 = scmp.ge.s32.totalorder %s1245, 1
                  %s1250 = sphi %s1081, %s1081
                  %s1251 = sphi %s1089, %s1089
                $region73: #{gtn_forward.6} parent=62 // loop_header_branch
                  %1248 = sbr.rel (%p1246) target = $region77
                $region74: #{gtn_forward.6} parent=62 // loop_body
                  %v1252 = vld [vmem:[%s1250] sm:$0xf]
                  %1253 = vst [vmem:[%s1251] sm:$0xf] %v1252
                  %v1254 = vld [vmem:[%s1250 + $0x4] sm:$0xf]
                  %1255 = vst [vmem:[%s1251 + $0x8] sm:$0xf] %v1254
                  %v1256 = vld [vmem:[%s1250 + $0x8] sm:$0xf]
                  %1257 = vst [vmem:[%s1251 + $0x10] sm:$0xf] %v1256
                  %v1258 = vld [vmem:[%s1250 + $0xc] sm:$0xf]
                  %1259 = vst [vmem:[%s1251 + $0x18] sm:$0xf] %v1258
                  %v1260 = vld [vmem:[%s1250 + $0x10] sm:$0xf]
                  %1261 = vst [vmem:[%s1251 + $0x20] sm:$0xf] %v1260
                  %v1262 = vld [vmem:[%s1250 + $0x14] sm:$0xf]
                  %1263 = vst [vmem:[%s1251 + $0x28] sm:$0xf] %v1262
                  %v1264 = vld [vmem:[%s1250 + $0x18] sm:$0xf]
                  %1265 = vst [vmem:[%s1251 + $0x30] sm:$0xf] %v1264
                  %v1266 = vld [vmem:[%s1250 + $0x1c] sm:$0xf]
                  %1267 = vst [vmem:[%s1251 + $0x38] sm:$0xf] %v1266
                  %v1268 = vld [vmem:[%s1250 + $0x20] sm:$0xf]
                  %1269 = vst [vmem:[%s1251 + $0x40] sm:$0xf] %v1268
                  %v1270 = vld [vmem:[%s1250 + $0x24] sm:$0xf]
                  %1271 = vst [vmem:[%s1251 + $0x48] sm:$0xf] %v1270
                  %v1272 = vld [vmem:[%s1250 + $0x28] sm:$0xf]
                  %1273 = vst [vmem:[%s1251 + $0x50] sm:$0xf] %v1272
                  %v1274 = vld [vmem:[%s1250 + $0x2c] sm:$0xf]
                  %1275 = vst [vmem:[%s1251 + $0x58] sm:$0xf] %v1274
                  %v1276 = vld [vmem:[%s1250 + $0x30] sm:$0xf]
                  %1277 = vst [vmem:[%s1251 + $0x60] sm:$0xf] %v1276
                  %v1278 = vld [vmem:[%s1250 + $0x34] sm:$0xf]
                  %1279 = vst [vmem:[%s1251 + $0x68] sm:$0xf] %v1278
                  %v1280 = vld [vmem:[%s1250 + $0x38] sm:$0xf]
                  %1281 = vst [vmem:[%s1251 + $0x70] sm:$0xf] %v1280
                  %v1282 = vld [vmem:[%s1250 + $0x3c] sm:$0xf]
                  %1283 = vst [vmem:[%s1251 + $0x78] sm:$0xf] %v1282
                  %v1284 = vld [vmem:[%s1250 + $0x40] sm:$0xf]
                  %1285 = vst [vmem:[%s1251 + $0x100] sm:$0xf] %v1284
                  %v1286 = vld [vmem:[%s1250 + $0x44] sm:$0xf]
                  %1287 = vst [vmem:[%s1251 + $0x108] sm:$0xf] %v1286
                  %v1288 = vld [vmem:[%s1250 + $0x48] sm:$0xf]
                  %1289 = vst [vmem:[%s1251 + $0x110] sm:$0xf] %v1288
                  %v1290 = vld [vmem:[%s1250 + $0x4c] sm:$0xf]
                  %1291 = vst [vmem:[%s1251 + $0x118] sm:$0xf] %v1290
                  %v1292 = vld [vmem:[%s1250 + $0x50] sm:$0xf]
                  %1293 = vst [vmem:[%s1251 + $0x120] sm:$0xf] %v1292
                  %v1294 = vld [vmem:[%s1250 + $0x54] sm:$0xf]
                  %1295 = vst [vmem:[%s1251 + $0x128] sm:$0xf] %v1294
                  %v1296 = vld [vmem:[%s1250 + $0x58] sm:$0xf]
                  %1297 = vst [vmem:[%s1251 + $0x130] sm:$0xf] %v1296
                  %v1298 = vld [vmem:[%s1250 + $0x5c] sm:$0xf]
                  %1299 = vst [vmem:[%s1251 + $0x138] sm:$0xf] %v1298
                  %v1300 = vld [vmem:[%s1250 + $0x60] sm:$0xf]
                  %1301 = vst [vmem:[%s1251 + $0x140] sm:$0xf] %v1300
                  %v1302 = vld [vmem:[%s1250 + $0x64] sm:$0xf]
                  %1303 = vst [vmem:[%s1251 + $0x148] sm:$0xf] %v1302
                  %v1304 = vld [vmem:[%s1250 + $0x68] sm:$0xf]
                  %1305 = vst [vmem:[%s1251 + $0x150] sm:$0xf] %v1304
                  %v1306 = vld [vmem:[%s1250 + $0x6c] sm:$0xf]
                  %1307 = vst [vmem:[%s1251 + $0x158] sm:$0xf] %v1306
                  %v1308 = vld [vmem:[%s1250 + $0x70] sm:$0xf]
                  %1309 = vst [vmem:[%s1251 + $0x160] sm:$0xf] %v1308
                  %v1310 = vld [vmem:[%s1250 + $0x74] sm:$0xf]
                  %1311 = vst [vmem:[%s1251 + $0x168] sm:$0xf] %v1310
                  %v1312 = vld [vmem:[%s1250 + $0x78] sm:$0xf]
                  %1313 = vst [vmem:[%s1251 + $0x170] sm:$0xf] %v1312
                  %v1314 = vld [vmem:[%s1250 + $0x7c] sm:$0xf]
                  %1315 = vst [vmem:[%s1251 + $0x178] sm:$0xf] %v1314
                  %v1316 = vld [vmem:[%s1250 + $0x80] sm:$0xf]
                  %1317 = vst [vmem:[%s1251 + $0x200] sm:$0xf] %v1316
                  %v1318 = vld [vmem:[%s1250 + $0x84] sm:$0xf]
                  %1319 = vst [vmem:[%s1251 + $0x208] sm:$0xf] %v1318
                  %v1320 = vld [vmem:[%s1250 + $0x88] sm:$0xf]
                  %1321 = vst [vmem:[%s1251 + $0x210] sm:$0xf] %v1320
                  %v1322 = vld [vmem:[%s1250 + $0x8c] sm:$0xf]
                  %1323 = vst [vmem:[%s1251 + $0x218] sm:$0xf] %v1322
                  %v1324 = vld [vmem:[%s1250 + $0x90] sm:$0xf]
                  %1325 = vst [vmem:[%s1251 + $0x220] sm:$0xf] %v1324
                  %v1326 = vld [vmem:[%s1250 + $0x94] sm:$0xf]
                  %1327 = vst [vmem:[%s1251 + $0x228] sm:$0xf] %v1326
                  %v1328 = vld [vmem:[%s1250 + $0x98] sm:$0xf]
                  %1329 = vst [vmem:[%s1251 + $0x230] sm:$0xf] %v1328
                  %v1330 = vld [vmem:[%s1250 + $0x9c] sm:$0xf]
                  %1331 = vst [vmem:[%s1251 + $0x238] sm:$0xf] %v1330
                  %v1332 = vld [vmem:[%s1250 + $0xa0] sm:$0xf]
                  %1333 = vst [vmem:[%s1251 + $0x240] sm:$0xf] %v1332
                  %v1334 = vld [vmem:[%s1250 + $0xa4] sm:$0xf]
                  %1335 = vst [vmem:[%s1251 + $0x248] sm:$0xf] %v1334
                  %v1336 = vld [vmem:[%s1250 + $0xa8] sm:$0xf]
                  %1337 = vst [vmem:[%s1251 + $0x250] sm:$0xf] %v1336
                  %v1338 = vld [vmem:[%s1250 + $0xac] sm:$0xf]
                  %1339 = vst [vmem:[%s1251 + $0x258] sm:$0xf] %v1338
                  %v1340 = vld [vmem:[%s1250 + $0xb0] sm:$0xf]
                  %1341 = vst [vmem:[%s1251 + $0x260] sm:$0xf] %v1340
                  %v1342 = vld [vmem:[%s1250 + $0xb4] sm:$0xf]
                  %1343 = vst [vmem:[%s1251 + $0x268] sm:$0xf] %v1342
                  %v1344 = vld [vmem:[%s1250 + $0xb8] sm:$0xf]
                  %1345 = vst [vmem:[%s1251 + $0x270] sm:$0xf] %v1344
                  %v1346 = vld [vmem:[%s1250 + $0xbc] sm:$0xf]
                  %1347 = vst [vmem:[%s1251 + $0x278] sm:$0xf] %v1346
                  %v1348 = vld [vmem:[%s1250 + $0xc0] sm:$0xf]
                  %1349 = vst [vmem:[%s1251 + $0x300] sm:$0xf] %v1348
                  %v1350 = vld [vmem:[%s1250 + $0xc4] sm:$0xf]
                  %1351 = vst [vmem:[%s1251 + $0x308] sm:$0xf] %v1350
                  %v1352 = vld [vmem:[%s1250 + $0xc8] sm:$0xf]
                  %1353 = vst [vmem:[%s1251 + $0x310] sm:$0xf] %v1352
                  %v1354 = vld [vmem:[%s1250 + $0xcc] sm:$0xf]
                  %1355 = vst [vmem:[%s1251 + $0x318] sm:$0xf] %v1354
                  %v1356 = vld [vmem:[%s1250 + $0xd0] sm:$0xf]
                  %1357 = vst [vmem:[%s1251 + $0x320] sm:$0xf] %v1356
                  %v1358 = vld [vmem:[%s1250 + $0xd4] sm:$0xf]
                  %1359 = vst [vmem:[%s1251 + $0x328] sm:$0xf] %v1358
                  %v1360 = vld [vmem:[%s1250 + $0xd8] sm:$0xf]
                  %1361 = vst [vmem:[%s1251 + $0x330] sm:$0xf] %v1360
                  %v1362 = vld [vmem:[%s1250 + $0xdc] sm:$0xf]
                  %1363 = vst [vmem:[%s1251 + $0x338] sm:$0xf] %v1362
                  %v1364 = vld [vmem:[%s1250 + $0xe0] sm:$0xf]
                  %1365 = vst [vmem:[%s1251 + $0x340] sm:$0xf] %v1364
                  %v1366 = vld [vmem:[%s1250 + $0xe4] sm:$0xf]
                  %1367 = vst [vmem:[%s1251 + $0x348] sm:$0xf] %v1366
                  %v1368 = vld [vmem:[%s1250 + $0xe8] sm:$0xf]
                  %1369 = vst [vmem:[%s1251 + $0x350] sm:$0xf] %v1368
                  %v1370 = vld [vmem:[%s1250 + $0xec] sm:$0xf]
                  %1371 = vst [vmem:[%s1251 + $0x358] sm:$0xf] %v1370
                  %v1372 = vld [vmem:[%s1250 + $0xf0] sm:$0xf]
                  %1373 = vst [vmem:[%s1251 + $0x360] sm:$0xf] %v1372
                  %v1374 = vld [vmem:[%s1250 + $0xf4] sm:$0xf]
                  %1375 = vst [vmem:[%s1251 + $0x368] sm:$0xf] %v1374
                  %v1376 = vld [vmem:[%s1250 + $0xf8] sm:$0xf]
                  %1377 = vst [vmem:[%s1251 + $0x370] sm:$0xf] %v1376
                  %v1378 = vld [vmem:[%s1250 + $0xfc] sm:$0xf]
                  %1379 = vst [vmem:[%s1251 + $0x378] sm:$0xf] %v1378
                $region75: #{gtn_forward.6} parent=62 // loop_footer
                  %s1249 = sadd.s32 1, %s1245
                $region76: #{gtn_forward.6} parent=62 // loop_footer_branch
                  %1244 = sbr.rel target = $region72
                $region77: #{gtn_forward.6} parent=62 // loop_exit
                  _
              $region63: #{gtn_forward.6} parent=47 // pred_fallthru
                _
            $region48: #{gtn_forward.6} parent=43 // pred_fallthru
              _
            // Predicated region
            $region49: #{gtn_forward.6} parent=43 // pred_check
              _
            $region50: #{gtn_forward.6} parent=43 // pred_check_branch
              %1095 = sbr.rel (0) target = $region52
            $region51: #{gtn_forward.6} parent=43 // pred_region
              loop: start=0, step=1, limit=1
              $region53: #{gtn_forward.6} parent=51 // loop_pre_header
                _
              $region54: #{gtn_forward.6} parent=51 // loop_header
                %s1098 = sphi 0, %s1102
                %p1099 = scmp.ge.s32.totalorder %s1098, 1
                %s1103 = sphi %s1081, %s1081
                %s1104 = sphi %s1089, %s1089
              $region55: #{gtn_forward.6} parent=51 // loop_header_branch
                %1101 = sbr.rel (%p1099) target = $region59
              $region56: #{gtn_forward.6} parent=51 // loop_body
                %v1105 = vld [vmem:[%s1103] sm:$0xf]
                %1106 = vst [vmem:[%s1104] sm:$0xf] %v1105
                %v1107 = vld [vmem:[%s1103 + $0x4] sm:$0xf]
                %1108 = vst [vmem:[%s1104 + $0x8] sm:$0xf] %v1107
                %v1109 = vld [vmem:[%s1103 + $0x8] sm:$0xf]
                %1110 = vst [vmem:[%s1104 + $0x10] sm:$0xf] %v1109
                %v1111 = vld [vmem:[%s1103 + $0xc] sm:$0xf]
                %1112 = vst [vmem:[%s1104 + $0x18] sm:$0xf] %v1111
                %v1113 = vld [vmem:[%s1103 + $0x10] sm:$0xf]
                %1114 = vst [vmem:[%s1104 + $0x20] sm:$0xf] %v1113
                %v1115 = vld [vmem:[%s1103 + $0x14] sm:$0xf]
                %1116 = vst [vmem:[%s1104 + $0x28] sm:$0xf] %v1115
                %v1117 = vld [vmem:[%s1103 + $0x18] sm:$0xf]
                %1118 = vst [vmem:[%s1104 + $0x30] sm:$0xf] %v1117
                %v1119 = vld [vmem:[%s1103 + $0x1c] sm:$0xf]
                %1120 = vst [vmem:[%s1104 + $0x38] sm:$0xf] %v1119
                %v1121 = vld [vmem:[%s1103 + $0x20] sm:$0xf]
                %1122 = vst [vmem:[%s1104 + $0x40] sm:$0xf] %v1121
                %v1123 = vld [vmem:[%s1103 + $0x24] sm:$0xf]
                %1124 = vst [vmem:[%s1104 + $0x48] sm:$0xf] %v1123
                %v1125 = vld [vmem:[%s1103 + $0x28] sm:$0xf]
                %1126 = vst [vmem:[%s1104 + $0x50] sm:$0xf] %v1125
                %v1127 = vld [vmem:[%s1103 + $0x2c] sm:$0xf]
                %1128 = vst [vmem:[%s1104 + $0x58] sm:$0xf] %v1127
                %v1129 = vld [vmem:[%s1103 + $0x30] sm:$0xf]
                %1130 = vst [vmem:[%s1104 + $0x60] sm:$0xf] %v1129
                %v1131 = vld [vmem:[%s1103 + $0x34] sm:$0xf]
                %1132 = vst [vmem:[%s1104 + $0x68] sm:$0xf] %v1131
                %v1133 = vld [vmem:[%s1103 + $0x38] sm:$0xf]
                %1134 = vst [vmem:[%s1104 + $0x70] sm:$0xf] %v1133
                %v1135 = vld [vmem:[%s1103 + $0x3c] sm:$0xf]
                %1136 = vst [vmem:[%s1104 + $0x78] sm:$0xf] %v1135
                %v1137 = vld [vmem:[%s1103 + $0x40] sm:$0xf]
                %1138 = vst [vmem:[%s1104 + $0x100] sm:$0xf] %v1137
                %v1139 = vld [vmem:[%s1103 + $0x44] sm:$0xf]
                %1140 = vst [vmem:[%s1104 + $0x108] sm:$0xf] %v1139
                %v1141 = vld [vmem:[%s1103 + $0x48] sm:$0xf]
                %1142 = vst [vmem:[%s1104 + $0x110] sm:$0xf] %v1141
                %v1143 = vld [vmem:[%s1103 + $0x4c] sm:$0xf]
                %1144 = vst [vmem:[%s1104 + $0x118] sm:$0xf] %v1143
                %v1145 = vld [vmem:[%s1103 + $0x50] sm:$0xf]
                %1146 = vst [vmem:[%s1104 + $0x120] sm:$0xf] %v1145
                %v1147 = vld [vmem:[%s1103 + $0x54] sm:$0xf]
                %1148 = vst [vmem:[%s1104 + $0x128] sm:$0xf] %v1147
                %v1149 = vld [vmem:[%s1103 + $0x58] sm:$0xf]
                %1150 = vst [vmem:[%s1104 + $0x130] sm:$0xf] %v1149
                %v1151 = vld [vmem:[%s1103 + $0x5c] sm:$0xf]
                %1152 = vst [vmem:[%s1104 + $0x138] sm:$0xf] %v1151
                %v1153 = vld [vmem:[%s1103 + $0x60] sm:$0xf]
                %1154 = vst [vmem:[%s1104 + $0x140] sm:$0xf] %v1153
                %v1155 = vld [vmem:[%s1103 + $0x64] sm:$0xf]
                %1156 = vst [vmem:[%s1104 + $0x148] sm:$0xf] %v1155
                %v1157 = vld [vmem:[%s1103 + $0x68] sm:$0xf]
                %1158 = vst [vmem:[%s1104 + $0x150] sm:$0xf] %v1157
                %v1159 = vld [vmem:[%s1103 + $0x6c] sm:$0xf]
                %1160 = vst [vmem:[%s1104 + $0x158] sm:$0xf] %v1159
                %v1161 = vld [vmem:[%s1103 + $0x70] sm:$0xf]
                %1162 = vst [vmem:[%s1104 + $0x160] sm:$0xf] %v1161
                %v1163 = vld [vmem:[%s1103 + $0x74] sm:$0xf]
                %1164 = vst [vmem:[%s1104 + $0x168] sm:$0xf] %v1163
                %v1165 = vld [vmem:[%s1103 + $0x78] sm:$0xf]
                %1166 = vst [vmem:[%s1104 + $0x170] sm:$0xf] %v1165
                %v1167 = vld [vmem:[%s1103 + $0x7c] sm:$0xf]
                %1168 = vst [vmem:[%s1104 + $0x178] sm:$0xf] %v1167
                %v1169 = vld [vmem:[%s1103 + $0x80] sm:$0xf]
                %1170 = vst [vmem:[%s1104 + $0x200] sm:$0xf] %v1169
                %v1171 = vld [vmem:[%s1103 + $0x84] sm:$0xf]
                %1172 = vst [vmem:[%s1104 + $0x208] sm:$0xf] %v1171
                %v1173 = vld [vmem:[%s1103 + $0x88] sm:$0xf]
                %1174 = vst [vmem:[%s1104 + $0x210] sm:$0xf] %v1173
                %v1175 = vld [vmem:[%s1103 + $0x8c] sm:$0xf]
                %1176 = vst [vmem:[%s1104 + $0x218] sm:$0xf] %v1175
                %v1177 = vld [vmem:[%s1103 + $0x90] sm:$0xf]
                %1178 = vst [vmem:[%s1104 + $0x220] sm:$0xf] %v1177
                %v1179 = vld [vmem:[%s1103 + $0x94] sm:$0xf]
                %1180 = vst [vmem:[%s1104 + $0x228] sm:$0xf] %v1179
                %v1181 = vld [vmem:[%s1103 + $0x98] sm:$0xf]
                %1182 = vst [vmem:[%s1104 + $0x230] sm:$0xf] %v1181
                %v1183 = vld [vmem:[%s1103 + $0x9c] sm:$0xf]
                %1184 = vst [vmem:[%s1104 + $0x238] sm:$0xf] %v1183
                %v1185 = vld [vmem:[%s1103 + $0xa0] sm:$0xf]
                %1186 = vst [vmem:[%s1104 + $0x240] sm:$0xf] %v1185
                %v1187 = vld [vmem:[%s1103 + $0xa4] sm:$0xf]
                %1188 = vst [vmem:[%s1104 + $0x248] sm:$0xf] %v1187
                %v1189 = vld [vmem:[%s1103 + $0xa8] sm:$0xf]
                %1190 = vst [vmem:[%s1104 + $0x250] sm:$0xf] %v1189
                %v1191 = vld [vmem:[%s1103 + $0xac] sm:$0xf]
                %1192 = vst [vmem:[%s1104 + $0x258] sm:$0xf] %v1191
                %v1193 = vld [vmem:[%s1103 + $0xb0] sm:$0xf]
                %1194 = vst [vmem:[%s1104 + $0x260] sm:$0xf] %v1193
                %v1195 = vld [vmem:[%s1103 + $0xb4] sm:$0xf]
                %1196 = vst [vmem:[%s1104 + $0x268] sm:$0xf] %v1195
                %v1197 = vld [vmem:[%s1103 + $0xb8] sm:$0xf]
                %1198 = vst [vmem:[%s1104 + $0x270] sm:$0xf] %v1197
                %v1199 = vld [vmem:[%s1103 + $0xbc] sm:$0xf]
                %1200 = vst [vmem:[%s1104 + $0x278] sm:$0xf] %v1199
                %v1201 = vld [vmem:[%s1103 + $0xc0] sm:$0xf]
                %1202 = vst [vmem:[%s1104 + $0x300] sm:$0xf] %v1201
                %v1203 = vld [vmem:[%s1103 + $0xc4] sm:$0xf]
                %1204 = vst [vmem:[%s1104 + $0x308] sm:$0xf] %v1203
                %v1205 = vld [vmem:[%s1103 + $0xc8] sm:$0xf]
                %1206 = vst [vmem:[%s1104 + $0x310] sm:$0xf] %v1205
                %v1207 = vld [vmem:[%s1103 + $0xcc] sm:$0xf]
                %1208 = vst [vmem:[%s1104 + $0x318] sm:$0xf] %v1207
                %v1209 = vld [vmem:[%s1103 + $0xd0] sm:$0xf]
                %1210 = vst [vmem:[%s1104 + $0x320] sm:$0xf] %v1209
                %v1211 = vld [vmem:[%s1103 + $0xd4] sm:$0xf]
                %1212 = vst [vmem:[%s1104 + $0x328] sm:$0xf] %v1211
                %v1213 = vld [vmem:[%s1103 + $0xd8] sm:$0xf]
                %1214 = vst [vmem:[%s1104 + $0x330] sm:$0xf] %v1213
                %v1215 = vld [vmem:[%s1103 + $0xdc] sm:$0xf]
                %1216 = vst [vmem:[%s1104 + $0x338] sm:$0xf] %v1215
                %v1217 = vld [vmem:[%s1103 + $0xe0] sm:$0xf]
                %1218 = vst [vmem:[%s1104 + $0x340] sm:$0xf] %v1217
                %v1219 = vld [vmem:[%s1103 + $0xe4] sm:$0xf]
                %1220 = vst [vmem:[%s1104 + $0x348] sm:$0xf] %v1219
                %v1221 = vld [vmem:[%s1103 + $0xe8] sm:$0xf]
                %1222 = vst [vmem:[%s1104 + $0x350] sm:$0xf] %v1221
                %v1223 = vld [vmem:[%s1103 + $0xec] sm:$0xf]
                %1224 = vst [vmem:[%s1104 + $0x358] sm:$0xf] %v1223
                %v1225 = vld [vmem:[%s1103 + $0xf0] sm:$0xf]
                %1226 = vst [vmem:[%s1104 + $0x360] sm:$0xf] %v1225
                %v1227 = vld [vmem:[%s1103 + $0xf4] sm:$0xf]
                %1228 = vst [vmem:[%s1104 + $0x368] sm:$0xf] %v1227
                %v1229 = vld [vmem:[%s1103 + $0xf8] sm:$0xf]
                %1230 = vst [vmem:[%s1104 + $0x370] sm:$0xf] %v1229
                %v1231 = vld [vmem:[%s1103 + $0xfc] sm:$0xf]
                %1232 = vst [vmem:[%s1104 + $0x378] sm:$0xf] %v1231
              $region57: #{gtn_forward.6} parent=51 // loop_footer
                %s1102 = sadd.s32 1, %s1098
              $region58: #{gtn_forward.6} parent=51 // loop_footer_branch
                %1097 = sbr.rel target = $region54
              $region59: #{gtn_forward.6} parent=51 // loop_exit
                _
            $region52: #{gtn_forward.6} parent=43 // pred_fallthru
              _
          $region44: #{gtn_forward.6} parent=39 // pred_fallthru
            _
          %1380 = vnop
        $region40: #{gtn_forward.6} parent=27 // pred_fallthru
          _
      $region28: #{gtn_forward.6} parent=5 // pred_fallthru
        _
      %p1381 = scmp.le.s32.totalorder 2, %s12
      // Predicated region
      $region78: #{gtn_forward.6} parent=5 // pred_check
        %p1382 = pneg %p1381
      $region79: #{gtn_forward.6} parent=5 // pred_check_branch
        %1384 = sbr.rel (%p1382) target = $region81
      $region80: #{gtn_forward.6} parent=5 // pred_region
        %s1385 = ssub.s32 %s12, 2
        // Predicated region
        $region82: #{gtn_forward.6} parent=80 // pred_check
          %p1386 = pneg %p104
        $region83: #{gtn_forward.6} parent=80 // pred_check_branch
          %1388 = sbr.rel (%p1386) target = $region85
        $region84: #{gtn_forward.6} parent=80 // pred_region
          %s1389 = sand.u32 %s89, 1
          %s1390 = sand.u32 %s89, 1
          %s1391 = smul.addr %s1390, 256
          %s1392 = scalar_lea.vmem [#allocation6], %s1391
        $region85: #{gtn_forward.6} parent=80 // pred_fallthru
          _
      $region81: #{gtn_forward.6} parent=5 // pred_fallthru
        _
    $region6: #{gtn_forward.6} parent=1 // loop_footer
      %s16 = sadd.s32 1, %s12
    $region7: #{gtn_forward.6} parent=1 // loop_footer_branch
      %11 = sbr.rel target = $region3
    $region8: #{gtn_forward.6} parent=1 // loop_exit
      _
    %1393 = vsyncpa [#allocation3], 1
    %s1394 = scalar_lea.sflag [#allocation3], 1
    %1395 = vsyncpa %s1394, 1
    %1396 = vsyncpa [#allocation4], 1
    %s1397 = scalar_lea.sflag [#allocation4], 1
    %1398 = vsyncpa %s1397, 1

// kernel: gtn_forward.11
$region0: #{gtn_forward.11}
  #allocation0 [shape = 'u32[]', space=smem, size = 0x4, offset = 0x4, fixed_abs, tag = 'smem constant byte address 0x4 - core index']
  #allocation1 [shape = 'u32[144,128]{1,0:T(1,128)}', space=vmem, size = 0x12000, scoped, tag = 'internal scratch']
  #allocation2 [shape = 'f32[16,128]{1,0:T(8,128)}', space=vmem, size = 0x2000, scoped, tag = 'scratch operand']
  #allocation3 [shape = 'f32[16,128]{1,0:T(8,128)}', space=vmem, size = 0x2000, scoped, tag = 'scratch operand']
  %s0 = inlined_call_operand.vmem [shape: bf16[16,256], index: 0, kind: input, shape index: {}]
  %s1 = inlined_call_operand.vmem [shape: bf16[2,256,256], index: 1, kind: input, shape index: {}]
  %s2 = inlined_call_operand.vmem [shape: f32[2,1,256], index: 2, kind: input, shape index: {}]
  %s3 = inlined_call_operand.vmem [shape: f32[16,1], index: 3, kind: input, shape index: {}]
  %s4 = inlined_call_operand.vmem [shape: f32[2,16,16], index: 4, kind: input, shape index: {}]
  %s5 = inlined_call_operand.vmem [shape: f32[16,1], index: 5, kind: input, shape index: {}]
  %s6 = inlined_call_operand.vmem [shape: f32[16,256], index: 6, kind: output, shape index: {}]
  %s7 = sld [smem:[#allocation0]]
  $region189: #{gtn_forward.11} parent=0
    _
  %s9 = ssub.s32 1, %s7
  %s10 = scalar_select 0, %s9, %s7
  $region1: #{gtn_forward.11} parent=0
    #allocation4 [shape = 'u8[8192]{0}', space=vmem, size = 0x2000, scoped, tag = 'input window, operand 0']
    #allocation5 [shape = 'u8[65536]{0}', space=vmem, size = 0x10000, scoped, tag = 'input window, operand 1']
    #allocation6 [shape = 'u8[16384]{0}', space=vmem, size = 0x4000, scoped, tag = 'output window, operand 0']
    loop: start=0, step=1, limit=10
    $region2: #{gtn_forward.11} parent=1 // loop_pre_header
      _
    $region3: #{gtn_forward.11} parent=1 // loop_header
      %s12 = sphi 0, %s16
      %p13 = scmp.ge.s32.totalorder %s12, 10
      %s19 = sphi 0, %s38
      %s20 = sphi 0, %s34
      %s21 = sphi 0, %s30
      %s22 = sphi 0, %s19
      %s23 = sphi 0, %s20
      %s24 = sphi 0, %s21
      %s25 = sphi 0, %s22
      %s26 = sphi 0, %s23
      %s27 = sphi 0, %s24
      %s41 = sphi 0, %s43
      %s44 = sphi 0, %s41
      %s45 = sphi 0, %s44
      %s61 = sphi 0, %s45
      %s71 = sphi 0, %s73
      %s74 = sphi 0, %s71
      %s75 = sphi 0, %s74
      %s91 = sphi 0, %s75
      %s99 = sphi 0, %s101
      %s102 = sphi 0, %s99
      %s103 = sphi 0, %s102
      %s119 = sphi 0, %s103
      %s123 = sphi 0, %s123
      %s125 = sphi 0, %s123
      %s126 = sphi 0, %s125
      %s140 = sphi 0, %s126
      %s146 = sphi 0, %s148
      %s149 = sphi 0, %s146
      %s150 = sphi 0, %s149
      %s166 = sphi 0, %s150
      %s170 = sphi 0, %s170
      %s172 = sphi 0, %s170
      %s173 = sphi 0, %s172
      %s187 = sphi 0, %s173
      %s193 = sphi 0, %s195
      %s196 = sphi 0, %s193
      %s197 = sphi 0, %s196
      %s213 = sphi 0, %s197
    $region4: #{gtn_forward.11} parent=1 // loop_header_branch
      %15 = sbr.rel (%p13) target = $region8
    $region5: #{gtn_forward.11} parent=1 // loop_body
      %s17 = ssub.s32 %s12, 1
      %s18 = ssub.s32 %s12, 2
      %s28 = sadd.s32 1, %s21
      %p29 = scmp.ge.s32.totalorder %s28, 2
      %s30 = scalar_select %p29, 0, %s28
      %s31 = sadd.s32 1, %s20
      %s32 = scalar_select %p29, %s31, %s20
      %p33 = scmp.ge.s32.totalorder %s32, 2
      %s34 = scalar_select %p33, 0, %s32
      %s35 = sadd.s32 1, %s19
      %s36 = scalar_select %p33, %s35, %s19
      %p37 = scmp.ge.s32.totalorder %s36, 2
      %s38 = scalar_select %p37, 0, %s36
      %s39 = ssub.s32 %s21, %s30
      %p40 = scmp.eq.s32.totalorder %s39, 0
      %s42 = sadd.s32 %s41, 1
      %s43 = scalar_select %p40, %s41, %s42
      %p46 = pneg %p40
      %p47 = scmp.eq.s32.totalorder %s12, 7
      %p48 = por %p46, %p47
      %p49 = scmp.ne.s32.totalorder %s41, %s44
      %p50 = scmp.eq.s32.totalorder %s12, 0
      %p51 = por %p49, %p50
      %p52 = scmp.ne.s32.totalorder %s41, %s44
      %p53 = scmp.eq.s32.totalorder %s17, 7
      %p54 = por %p52, %p53
      %p55 = scmp.ne.s32.totalorder %s44, %s45
      %p56 = scmp.eq.s32.totalorder %s17, 0
      %p57 = por %p55, %p56
      %p58 = scmp.ne.s32.totalorder %s44, %s45
      %p59 = scmp.eq.s32.totalorder %s18, 7
      %p60 = por %p58, %p59
      %p62 = scmp.ne.s32.totalorder %s45, %s61
      %p63 = scmp.eq.s32.totalorder %s18, 0
      %p64 = por %p62, %p63
      %s65 = ssub.s32 %s20, %s34
      %s66 = ssub.s32 %s21, %s30
      %s67 = sor.u32 %s65, %s66
      %s68 = ssub.s32 %s19, %s38
      %s69 = sor.u32 %s67, %s68
      %p70 = scmp.eq.s32.totalorder %s69, 0
      %s72 = sadd.s32 %s71, 1
      %s73 = scalar_select %p70, %s71, %s72
      %p76 = pneg %p70
      %p77 = scmp.eq.s32.totalorder %s12, 7
      %p78 = por %p76, %p77
      %p79 = scmp.ne.s32.totalorder %s71, %s74
      %p80 = scmp.eq.s32.totalorder %s12, 0
      %p81 = por %p79, %p80
      %p82 = scmp.ne.s32.totalorder %s71, %s74
      %p83 = scmp.eq.s32.totalorder %s17, 7
      %p84 = por %p82, %p83
      %p85 = scmp.ne.s32.totalorder %s74, %s75
      %p86 = scmp.eq.s32.totalorder %s17, 0
      %p87 = por %p85, %p86
      %p88 = scmp.ne.s32.totalorder %s74, %s75
      %p89 = scmp.eq.s32.totalorder %s18, 7
      %p90 = por %p88, %p89
      %p92 = scmp.ne.s32.totalorder %s75, %s91
      %p93 = scmp.eq.s32.totalorder %s18, 0
      %p94 = por %p92, %p93
      %s95 = ssub.s32 %s20, %s34
      %s96 = ssub.s32 %s19, %s38
      %s97 = sor.u32 %s95, %s96
      %p98 = scmp.eq.s32.totalorder %s97, 0
      %s100 = sadd.s32 %s99, 1
      %s101 = scalar_select %p98, %s99, %s100
      %p104 = pneg %p98
      %p105 = scmp.eq.s32.totalorder %s12, 7
      %p106 = por %p104, %p105
      %p107 = scmp.ne.s32.totalorder %s99, %s102
      %p108 = scmp.eq.s32.totalorder %s12, 0
      %p109 = por %p107, %p108
      %p110 = scmp.ne.s32.totalorder %s99, %s102
      %p111 = scmp.eq.s32.totalorder %s17, 7
      %p112 = por %p110, %p111
      %p113 = scmp.ne.s32.totalorder %s102, %s103
      %p114 = scmp.eq.s32.totalorder %s17, 0
      %p115 = por %p113, %p114
      %p116 = scmp.ne.s32.totalorder %s102, %s103
      %p117 = scmp.eq.s32.totalorder %s18, 7
      %p118 = por %p116, %p117
      %p120 = scmp.ne.s32.totalorder %s103, %s119
      %p121 = scmp.eq.s32.totalorder %s18, 0
      %p122 = por %p120, %p121
      %s124 = sadd.s32 %s123, 1
      %p127 = scmp.eq.s32.totalorder %s12, 7
      %p128 = scmp.ne.s32.totalorder %s123, %s125
      %p129 = scmp.eq.s32.totalorder %s12, 0
      %p130 = por %p128, %p129
      %p131 = scmp.ne.s32.totalorder %s123, %s125
      %p132 = scmp.eq.s32.totalorder %s17, 7
      %p133 = por %p131, %p132
      %p134 = scmp.ne.s32.totalorder %s125, %s126
      %p135 = scmp.eq.s32.totalorder %s17, 0
      %p136 = por %p134, %p135
      %p137 = scmp.ne.s32.totalorder %s125, %s126
      %p138 = scmp.eq.s32.totalorder %s18, 7
      %p139 = por %p137, %p138
      %p141 = scmp.ne.s32.totalorder %s126, %s140
      %p142 = scmp.eq.s32.totalorder %s18, 0
      %p143 = por %p141, %p142
      %s144 = ssub.s32 %s20, %s34
      %p145 = scmp.eq.s32.totalorder %s144, 0
      %s147 = sadd.s32 %s146, 1
      %s148 = scalar_select %p145, %s146, %s147
      %p151 = pneg %p145
      %p152 = scmp.eq.s32.totalorder %s12, 7
      %p153 = por %p151, %p152
      %p154 = scmp.ne.s32.totalorder %s146, %s149
      %p155 = scmp.eq.s32.totalorder %s12, 0
      %p156 = por %p154, %p155
      %p157 = scmp.ne.s32.totalorder %s146, %s149
      %p158 = scmp.eq.s32.totalorder %s17, 7
      %p159 = por %p157, %p158
      %p160 = scmp.ne.s32.totalorder %s149, %s150
      %p161 = scmp.eq.s32.totalorder %s17, 0
      %p162 = por %p160, %p161
      %p163 = scmp.ne.s32.totalorder %s149, %s150
      %p164 = scmp.eq.s32.totalorder %s18, 7
      %p165 = por %p163, %p164
      %p167 = scmp.ne.s32.totalorder %s150, %s166
      %p168 = scmp.eq.s32.totalorder %s18, 0
      %p169 = por %p167, %p168
      %s171 = sadd.s32 %s170, 1
      %p174 = scmp.eq.s32.totalorder %s12, 7
      %p175 = scmp.ne.s32.totalorder %s170, %s172
      %p176 = scmp.eq.s32.totalorder %s12, 0
      %p177 = por %p175, %p176
      %p178 = scmp.ne.s32.totalorder %s170, %s172
      %p179 = scmp.eq.s32.totalorder %s17, 7
      %p180 = por %p178, %p179
      %p181 = scmp.ne.s32.totalorder %s172, %s173
      %p182 = scmp.eq.s32.totalorder %s17, 0
      %p183 = por %p181, %p182
      %p184 = scmp.ne.s32.totalorder %s172, %s173
      %p185 = scmp.eq.s32.totalorder %s18, 7
      %p186 = por %p184, %p185
      %p188 = scmp.ne.s32.totalorder %s173, %s187
      %p189 = scmp.eq.s32.totalorder %s18, 0
      %p190 = por %p188, %p189
      %s191 = ssub.s32 %s19, %s38
      %p192 = scmp.eq.s32.totalorder %s191, 0
      %s194 = sadd.s32 %s193, 1
      %s195 = scalar_select %p192, %s193, %s194
      %p198 = pneg %p192
      %p199 = scmp.eq.s32.totalorder %s12, 7
      %p200 = por %p198, %p199
      %p201 = scmp.ne.s32.totalorder %s193, %s196
      %p202 = scmp.eq.s32.totalorder %s12, 0
      %p203 = por %p201, %p202
      %p204 = scmp.ne.s32.totalorder %s193, %s196
      %p205 = scmp.eq.s32.totalorder %s17, 7
      %p206 = por %p204, %p205
      %p207 = scmp.ne.s32.totalorder %s196, %s197
      %p208 = scmp.eq.s32.totalorder %s17, 0
      %p209 = por %p207, %p208
      %p210 = scmp.ne.s32.totalorder %s196, %s197
      %p211 = scmp.eq.s32.totalorder %s18, 7
      %p212 = por %p210, %p211
      %p214 = scmp.ne.s32.totalorder %s197, %s213
      %p215 = scmp.eq.s32.totalorder %s18, 0
      %p216 = por %p214, %p215
      %p217 = scmp.le.s32.totalorder 1, %s12
      %p218 = scmp.lt.s32.totalorder %s12, 9
      %p219 = pnand %p217, %p218
      %p220 = pneg %p219
      // Predicated region
      $region9: #{gtn_forward.11} parent=5 // pred_check
        _
      $region10: #{gtn_forward.11} parent=5 // pred_check_branch
        %222 = sbr.rel (%p219) target = $region12
      $region11: #{gtn_forward.11} parent=5 // pred_region
        %s223 = ssub.s32 %s12, 1
        // Predicated region
        $region13: #{gtn_forward.11} parent=11 // pred_check
          %p224 = pneg %p136
        $region14: #{gtn_forward.11} parent=11 // pred_check_branch
          %226 = sbr.rel (%p224) target = $region16
        $region15: #{gtn_forward.11} parent=11 // pred_region
          _
        $region16: #{gtn_forward.11} parent=11 // pred_fallthru
          _
        // Predicated region
        $region17: #{gtn_forward.11} parent=11 // pred_check
          %p227 = pneg %p183
        $region18: #{gtn_forward.11} parent=11 // pred_check_branch
          %229 = sbr.rel (%p227) target = $region20
        $region19: #{gtn_forward.11} parent=11 // pred_region
          _
        $region20: #{gtn_forward.11} parent=11 // pred_fallthru
          _
      $region12: #{gtn_forward.11} parent=5 // pred_fallthru
        _
      %p230 = scmp.lt.s32.totalorder %s12, 8
      // Predicated region
      $region21: #{gtn_forward.11} parent=5 // pred_check
        %p231 = pneg %p230
      $region22: #{gtn_forward.11} parent=5 // pred_check_branch
        %233 = sbr.rel (%p231) target = $region24
      $region23: #{gtn_forward.11} parent=5 // pred_region
        // Predicated region
        $region25: #{gtn_forward.11} parent=23 // pred_check
          %p234 = pneg %p51
        $region26: #{gtn_forward.11} parent=23 // pred_check_branch
          %236 = sbr.rel (%p234) target = $region28
        $region27: #{gtn_forward.11} parent=23 // pred_region
          %s237 = sand.u32 %s41, 1
          %s238 = sand.u32 %s41, 1
          %s239 = smul.addr %s238, 8
          %s240 = scalar_lea.vmem [#allocation4], %s239
          %s241 = smul.addr %s21, 4
          %s242 = scalar_lea.vmem %s0, %s241
          // Predicated region
          $region29: #{gtn_forward.11} parent=27 // pred_check
            _
          $region30: #{gtn_forward.11} parent=27 // pred_check_branch
            %244 = sbr.rel (0) target = $region32
          $region31: #{gtn_forward.11} parent=27 // pred_region
            // Predicated region
            $region33: #{gtn_forward.11} parent=31 // pred_check
              _
            $region34: #{gtn_forward.11} parent=31 // pred_check_branch
              %246 = sbr.rel target = $region36
            $region35: #{gtn_forward.11} parent=31 // pred_region
              // Predicated region
              $region48: #{gtn_forward.11} parent=35 // pred_check
                _
              $region49: #{gtn_forward.11} parent=35 // pred_check_branch
                %263 = sbr.rel (0) target = $region51
              $region50: #{gtn_forward.11} parent=35 // pred_region
                loop: start=0, step=1, limit=1
                $region52: #{gtn_forward.11} parent=50 // loop_pre_header
                  _
                $region53: #{gtn_forward.11} parent=50 // loop_header
                  %s265 = sphi 0, %s269
                  %p266 = scmp.ge.s32.totalorder %s265, 1
                  %s270 = sphi %s242, %s242
                  %s271 = sphi %s240, %s240
                $region54: #{gtn_forward.11} parent=50 // loop_header_branch
                  %268 = sbr.rel (%p266) target = $region58
                $region55: #{gtn_forward.11} parent=50 // loop_body
                  _
                $region56: #{gtn_forward.11} parent=50 // loop_footer
                  %s269 = sadd.s32 1, %s265
                $region57: #{gtn_forward.11} parent=50 // loop_footer_branch
                  %264 = sbr.rel target = $region53
                $region58: #{gtn_forward.11} parent=50 // loop_exit
                  _
                loop: start=0, step=1, limit=1
                $region59: #{gtn_forward.11} parent=50 // loop_pre_header
                  _
                $region60: #{gtn_forward.11} parent=50 // loop_header
                  %s274 = sphi 0, %s278
                  %p275 = scmp.ge.s32.totalorder %s274, 1
                  %s279 = sphi %s242, %s242
                  %s280 = sphi %s240, %s240
                $region61: #{gtn_forward.11} parent=50 // loop_header_branch
                  %277 = sbr.rel (%p275) target = $region65
                $region62: #{gtn_forward.11} parent=50 // loop_body
                  %v281 = vld [vmem:[%s279] sm:$0xf]
                  %282 = vst [vmem:[%s280] sm:$0xf] %v281
                  %v283 = vld [vmem:[%s279 + $0x8] sm:$0xf]
                  %284 = vst [vmem:[%s280 + $0x4] sm:$0xf] %v283
                $region63: #{gtn_forward.11} parent=50 // loop_footer
                  %s278 = sadd.s32 1, %s274
                $region64: #{gtn_forward.11} parent=50 // loop_footer_branch
                  %273 = sbr.rel target = $region60
                $region65: #{gtn_forward.11} parent=50 // loop_exit
                  _
              $region51: #{gtn_forward.11} parent=35 // pred_fallthru
                _
            $region36: #{gtn_forward.11} parent=31 // pred_fallthru
              _
            // Predicated region
            $region37: #{gtn_forward.11} parent=31 // pred_check
              _
            $region38: #{gtn_forward.11} parent=31 // pred_check_branch
              %248 = sbr.rel (0) target = $region40
            $region39: #{gtn_forward.11} parent=31 // pred_region
              loop: start=0, step=1, limit=1
              $region41: #{gtn_forward.11} parent=39 // loop_pre_header
                _
              $region42: #{gtn_forward.11} parent=39 // loop_header
                %s251 = sphi 0, %s255
                %p252 = scmp.ge.s32.totalorder %s251, 1
                %s256 = sphi %s242, %s242
                %s257 = sphi %s240, %s240
              $region43: #{gtn_forward.11} parent=39 // loop_header_branch
                %254 = sbr.rel (%p252) target = $region47
              $region44: #{gtn_forward.11} parent=39 // loop_body
                %v258 = vld [vmem:[%s256] sm:$0xf]
                %259 = vst [vmem:[%s257] sm:$0xf] %v258
                %v260 = vld [vmem:[%s256 + $0x8] sm:$0xf]
                %261 = vst [vmem:[%s257 + $0x4] sm:$0xf] %v260
              $region45: #{gtn_forward.11} parent=39 // loop_footer
                %s255 = sadd.s32 1, %s251
              $region46: #{gtn_forward.11} parent=39 // loop_footer_branch
                %250 = sbr.rel target = $region42
              $region47: #{gtn_forward.11} parent=39 // loop_exit
                _
            $region40: #{gtn_forward.11} parent=31 // pred_fallthru
              _
          $region32: #{gtn_forward.11} parent=27 // pred_fallthru
            _
          %285 = vnop
        $region28: #{gtn_forward.11} parent=23 // pred_fallthru
          _
        // Predicated region
        $region66: #{gtn_forward.11} parent=23 // pred_check
          %p286 = pneg %p81
        $region67: #{gtn_forward.11} parent=23 // pred_check_branch
          %288 = sbr.rel (%p286) target = $region69
        $region68: #{gtn_forward.11} parent=23 // pred_region
          %s289 = sand.u32 %s71, 1
          %s290 = sand.u32 %s71, 1
          %s291 = smul.addr %s290, 64
          %s292 = scalar_lea.vmem [#allocation5], %s291
          %s293 = smul.u32 16, %s21
          %s294 = smul.addr %s293, 2
          %s295 = sadd.s32 %s19, %s294
          %s296 = smul.addr %s20, 64
          %s297 = sadd.s32 %s295, %s296
          %s298 = smul.addr %s297, 4
          %s299 = scalar_lea.vmem %s1, %s298
          // Predicated region
          $region70: #{gtn_forward.11} parent=68 // pred_check
            _
          $region71: #{gtn_forward.11} parent=68 // pred_check_branch
            %301 = sbr.rel (0) target = $region73
          $region72: #{gtn_forward.11} parent=68 // pred_region
            // Predicated region
            $region74: #{gtn_forward.11} parent=72 // pred_check
              _
            $region75: #{gtn_forward.11} parent=72 // pred_check_branch
              %303 = sbr.rel target = $region77
            $region76: #{gtn_forward.11} parent=72 // pred_region
              // Predicated region
              $region89: #{gtn_forward.11} parent=76 // pred_check
                _
              $region90: #{gtn_forward.11} parent=76 // pred_check_branch
                %348 = sbr.rel (0) target = $region92
              $region91: #{gtn_forward.11} parent=76 // pred_region
                loop: start=0, step=1, limit=1
                $region93: #{gtn_forward.11} parent=91 // loop_pre_header
                  _
                $region94: #{gtn_forward.11} parent=91 // loop_header
                  %s350 = sphi 0, %s354
                  %p351 = scmp.ge.s32.totalorder %s350, 1
                  %s355 = sphi %s299, %s299
                  %s356 = sphi %s292, %s292
                $region95: #{gtn_forward.11} parent=91 // loop_header_branch
                  %353 = sbr.rel (%p351) target = $region99
                $region96: #{gtn_forward.11} parent=91 // loop_body
                  _
                $region97: #{gtn_forward.11} parent=91 // loop_footer
                  %s354 = sadd.s32 1, %s350
                $region98: #{gtn_forward.11} parent=91 // loop_footer_branch
                  %349 = sbr.rel target = $region94
                $region99: #{gtn_forward.11} parent=91 // loop_exit
                  _
                loop: start=0, step=1, limit=1
                $region100: #{gtn_forward.11} parent=91 // loop_pre_header
                  _
                $region101: #{gtn_forward.11} parent=91 // loop_header
                  %s359 = sphi 0, %s363
                  %p360 = scmp.ge.s32.totalorder %s359, 1
                  %s364 = sphi %s299, %s299
                  %s365 = sphi %s292, %s292
                $region102: #{gtn_forward.11} parent=91 // loop_header_branch
                  %362 = sbr.rel (%p360) target = $region106
                $region103: #{gtn_forward.11} parent=91 // loop_body
                  %v366 = vld [vmem:[%s364] sm:$0xf]
                  %367 = vst [vmem:[%s365] sm:$0xf] %v366
                  %v368 = vld [vmem:[%s364 + $0x8] sm:$0xf]
                  %369 = vst [vmem:[%s365 + $0x4] sm:$0xf] %v368
                  %v370 = vld [vmem:[%s364 + $0x10] sm:$0xf]
                  %371 = vst [vmem:[%s365 + $0x8] sm:$0xf] %v370
                  %v372 = vld [vmem:[%s364 + $0x18] sm:$0xf]
                  %373 = vst [vmem:[%s365 + $0xc] sm:$0xf] %v372
                  %v374 = vld [vmem:[%s364 + $0x20] sm:$0xf]
                  %375 = vst [vmem:[%s365 + $0x10] sm:$0xf] %v374
                  %v376 = vld [vmem:[%s364 + $0x28] sm:$0xf]
                  %377 = vst [vmem:[%s365 + $0x14] sm:$0xf] %v376
                  %v378 = vld [vmem:[%s364 + $0x30] sm:$0xf]
                  %379 = vst [vmem:[%s365 + $0x18] sm:$0xf] %v378
                  %v380 = vld [vmem:[%s364 + $0x38] sm:$0xf]
                  %381 = vst [vmem:[%s365 + $0x1c] sm:$0xf] %v380
                  %v382 = vld [vmem:[%s364 + $0x40] sm:$0xf]
                  %383 = vst [vmem:[%s365 + $0x20] sm:$0xf] %v382
                  %v384 = vld [vmem:[%s364 + $0x48] sm:$0xf]
                  %385 = vst [vmem:[%s365 + $0x24] sm:$0xf] %v384
                  %v386 = vld [vmem:[%s364 + $0x50] sm:$0xf]
                  %387 = vst [vmem:[%s365 + $0x28] sm:$0xf] %v386
                  %v388 = vld [vmem:[%s364 + $0x58] sm:$0xf]
                  %389 = vst [vmem:[%s365 + $0x2c] sm:$0xf] %v388
                  %v390 = vld [vmem:[%s364 + $0x60] sm:$0xf]
                  %391 = vst [vmem:[%s365 + $0x30] sm:$0xf] %v390
                  %v392 = vld [vmem:[%s364 + $0x68] sm:$0xf]
                  %393 = vst [vmem:[%s365 + $0x34] sm:$0xf] %v392
                  %v394 = vld [vmem:[%s364 + $0x70] sm:$0xf]
                  %395 = vst [vmem:[%s365 + $0x38] sm:$0xf] %v394
                  %v396 = vld [vmem:[%s364 + $0x78] sm:$0xf]
                  %397 = vst [vmem:[%s365 + $0x3c] sm:$0xf] %v396
                $region104: #{gtn_forward.11} parent=91 // loop_footer
                  %s363 = sadd.s32 1, %s359
                $region105: #{gtn_forward.11} parent=91 // loop_footer_branch
                  %358 = sbr.rel target = $region101
                $region106: #{gtn_forward.11} parent=91 // loop_exit
                  _
              $region92: #{gtn_forward.11} parent=76 // pred_fallthru
                _
            $region77: #{gtn_forward.11} parent=72 // pred_fallthru
              _
            // Predicated region
            $region78: #{gtn_forward.11} parent=72 // pred_check
              _
            $region79: #{gtn_forward.11} parent=72 // pred_check_branch
              %305 = sbr.rel (0) target = $region81
            $region80: #{gtn_forward.11} parent=72 // pred_region
              loop: start=0, step=1, limit=1
              $region82: #{gtn_forward.11} parent=80 // loop_pre_header
                _
              $region83: #{gtn_forward.11} parent=80 // loop_header
                %s308 = sphi 0, %s312
                %p309 = scmp.ge.s32.totalorder %s308, 1
                %s313 = sphi %s299, %s299
                %s314 = sphi %s292, %s292
              $region84: #{gtn_forward.11} parent=80 // loop_header_branch
                %311 = sbr.rel (%p309) target = $region88
              $region85: #{gtn_forward.11} parent=80 // loop_body
                %v315 = vld [vmem:[%s313] sm:$0xf]
                %316 = vst [vmem:[%s314] sm:$0xf] %v315
                %v317 = vld [vmem:[%s313 + $0x8] sm:$0xf]
                %318 = vst [vmem:[%s314 + $0x4] sm:$0xf] %v317
                %v319 = vld [vmem:[%s313 + $0x10] sm:$0xf]
                %320 = vst [vmem:[%s314 + $0x8] sm:$0xf] %v319
                %v321 = vld [vmem:[%s313 + $0x18] sm:$0xf]
                %322 = vst [vmem:[%s314 + $0xc] sm:$0xf] %v321
                %v323 = vld [vmem:[%s313 + $0x20] sm:$0xf]
                %324 = vst [vmem:[%s314 + $0x10] sm:$0xf] %v323
                %v325 = vld [vmem:[%s313 + $0x28] sm:$0xf]
                %326 = vst [vmem:[%s314 + $0x14] sm:$0xf] %v325
                %v327 = vld [vmem:[%s313 + $0x30] sm:$0xf]
                %328 = vst [vmem:[%s314 + $0x18] sm:$0xf] %v327
                %v329 = vld [vmem:[%s313 + $0x38] sm:$0xf]
                %330 = vst [vmem:[%s314 + $0x1c] sm:$0xf] %v329
                %v331 = vld [vmem:[%s313 + $0x40] sm:$0xf]
                %332 = vst [vmem:[%s314 + $0x20] sm:$0xf] %v331
                %v333 = vld [vmem:[%s313 + $0x48] sm:$0xf]
                %334 = vst [vmem:[%s314 + $0x24] sm:$0xf] %v333
                %v335 = vld [vmem:[%s313 + $0x50] sm:$0xf]
                %336 = vst [vmem:[%s314 + $0x28] sm:$0xf] %v335
                %v337 = vld [vmem:[%s313 + $0x58] sm:$0xf]
                %338 = vst [vmem:[%s314 + $0x2c] sm:$0xf] %v337
                %v339 = vld [vmem:[%s313 + $0x60] sm:$0xf]
                %340 = vst [vmem:[%s314 + $0x30] sm:$0xf] %v339
                %v341 = vld [vmem:[%s313 + $0x68] sm:$0xf]
                %342 = vst [vmem:[%s314 + $0x34] sm:$0xf] %v341
                %v343 = vld [vmem:[%s313 + $0x70] sm:$0xf]
                %344 = vst [vmem:[%s314 + $0x38] sm:$0xf] %v343
                %v345 = vld [vmem:[%s313 + $0x78] sm:$0xf]
                %346 = vst [vmem:[%s314 + $0x3c] sm:$0xf] %v345
              $region86: #{gtn_forward.11} parent=80 // loop_footer
                %s312 = sadd.s32 1, %s308
              $region87: #{gtn_forward.11} parent=80 // loop_footer_branch
                %307 = sbr.rel target = $region83
              $region88: #{gtn_forward.11} parent=80 // loop_exit
                _
            $region81: #{gtn_forward.11} parent=72 // pred_fallthru
              _
          $region73: #{gtn_forward.11} parent=68 // pred_fallthru
            _
          %398 = vnop
        $region69: #{gtn_forward.11} parent=23 // pred_fallthru
          _
        // Predicated region
        $region107: #{gtn_forward.11} parent=23 // pred_check
          %p399 = pneg %p109
        $region108: #{gtn_forward.11} parent=23 // pred_check_branch
          %401 = sbr.rel (%p399) target = $region110
        $region109: #{gtn_forward.11} parent=23 // pred_region
          %p402 = scmp.lt.s32.totalorder %s20, 1
          %s403 = scalar_select %p402, %s20, 1
          %p404 = scmp.lt.s32.totalorder %s19, 1
          %s405 = scalar_select %p404, %s19, 1
          %s406 = smul.addr %s403, 2
          %s407 = sadd.s32 %s405, %s406
          %s408 = scalar_lea.vmem %s2, %s407
        $region110: #{gtn_forward.11} parent=23 // pred_fallthru
          _
        // Predicated region
        $region111: #{gtn_forward.11} parent=23 // pred_check
          %p409 = pneg %p156
        $region112: #{gtn_forward.11} parent=23 // pred_check_branch
          %411 = sbr.rel (%p409) target = $region114
        $region113: #{gtn_forward.11} parent=23 // pred_region
          %p412 = scmp.lt.s32.totalorder %s20, 1
          %s413 = scalar_select %p412, %s20, 1
          %s414 = smul.addr %s413, 2
          %s415 = smul.addr %s414, 8
          %s416 = scalar_lea.vmem %s4, %s415
        $region114: #{gtn_forward.11} parent=23 // pred_fallthru
          _
      $region24: #{gtn_forward.11} parent=5 // pred_fallthru
        _
      %p417 = scmp.le.s32.totalorder 1, %s12
      %p418 = scmp.lt.s32.totalorder %s12, 9
      %p419 = pnand %p417, %p418
      %p420 = pneg %p419
      // Predicated region
      $region115: #{gtn_forward.11} parent=5 // pred_check
        _
      $region116: #{gtn_forward.11} parent=5 // pred_check_branch
        %422 = sbr.rel (%p419) target = $region118
      $region117: #{gtn_forward.11} parent=5 // pred_region
        %s423 = ssub.s32 %s12, 1
        %s424 = sand.u32 %s44, 1
        %s425 = sand.u32 %s44, 1
        %s426 = smul.addr %s425, 8
        %s427 = scalar_lea.vmem [#allocation4], %s426
        // Predicated region
        $region119: #{gtn_forward.11} parent=117 // pred_check
          %p428 = pneg %p57
        $region120: #{gtn_forward.11} parent=117 // pred_check_branch
          %430 = sbr.rel (%p428) target = $region122
        $region121: #{gtn_forward.11} parent=117 // pred_region
          _
        $region122: #{gtn_forward.11} parent=117 // pred_fallthru
          _
        %s431 = sand.u32 %s74, 1
        %s432 = sand.u32 %s74, 1
        %s433 = smul.addr %s432, 64
        %s434 = scalar_lea.vmem [#allocation5], %s433
        // Predicated region
        $region123: #{gtn_forward.11} parent=117 // pred_check
          %p435 = pneg %p87
        $region124: #{gtn_forward.11} parent=117 // pred_check_branch
          %437 = sbr.rel (%p435) target = $region126
        $region125: #{gtn_forward.11} parent=117 // pred_region
          _
        $region126: #{gtn_forward.11} parent=117 // pred_fallthru
          _
        %s438 = sand.u32 %s44, 1
        %s439 = sand.u32 %s44, 1
        %s440 = smul.addr %s439, 8
        %s441 = scalar_lea.vmem [#allocation4], %s440
        %p442 = pneg %p57
        %p443 = pneg %p54
        %s444 = sand.u32 %s74, 1
        %s445 = sand.u32 %s74, 1
        %s446 = smul.addr %s445, 64
        %s447 = scalar_lea.vmem [#allocation5], %s446
        %p448 = pneg %p87
        %p449 = pneg %p84
        %p450 = scmp.lt.s32.totalorder %s23, 1
        %s451 = scalar_select %p450, %s23, 1
        %p452 = scmp.lt.s32.totalorder %s22, 1
        %s453 = scalar_select %p452, %s22, 1
        %s454 = smul.addr %s451, 2
        %s455 = sadd.s32 %s453, %s454
        %s456 = scalar_lea.vmem %s2, %s455
        %p457 = pneg %p115
        %p458 = pneg %p112
        %p459 = pneg %p136
        %p460 = pneg %p133
        %p461 = scmp.lt.s32.totalorder %s23, 1
        %s462 = scalar_select %p461, %s23, 1
        %s463 = smul.addr %s462, 2
        %s464 = smul.addr %s463, 8
        %s465 = scalar_lea.vmem %s4, %s464
        %p466 = pneg %p162
        %p467 = pneg %p159
        %p468 = pneg %p183
        %p469 = pneg %p180
        %p470 = pneg %p209
        %p471 = pneg %p206
        %s472 = sand.u32 %s196, 1
        %s473 = sand.u32 %s196, 1
        %s474 = smul.addr %s473, 16
        %s475 = scalar_lea.vmem [#allocation6], %s474
        %s476 = smul.u32 16, %s24
        %p477 = scmp.lt.s32.totalorder %s23, 1
        %s478 = scalar_select %p477, %s23, 1
        %p479 = scmp.lt.s32.totalorder %s22, 1
        %s480 = scalar_select %p479, %s22, 1
        %s481 = smul.addr %s478, 2
        %s482 = sadd.s32 %s480, %s481
        %s483 = scalar_lea.vmem %s2, %s482
        %p484 = scmp.lt.s32.totalorder %s23, 1
        %s485 = scalar_select %p484, %s23, 1
        %s486 = smul.addr %s485, 2
        %s487 = smul.addr %s486, 8
        %s488 = scalar_lea.vmem %s4, %s487
        %p490 = scmp.eq.s32.totalorder %s23, 0
        %p491 = scmp.eq.s32.totalorder %s24, 0
        %p492 = pnand %p490, %p491
        %p493 = pneg %p492
        // Predicated region
        $region127: #{gtn_forward.11} parent=117 // pred_check
          _
        $region128: #{gtn_forward.11} parent=117 // pred_check_branch
          %495 = sbr.rel (%p492) target = $region130
        $region129: #{gtn_forward.11} parent=117 // pred_region
          %496 = vst [vmem:[#allocation3] sm:$0xff] 0.0
          %497 = vst [vmem:[#allocation3 + $0x8] sm:$0xff] 0.0
        $region130: #{gtn_forward.11} parent=117 // pred_fallthru
          _
        // Predicated region
        $region131: #{gtn_forward.11} parent=117 // pred_check
          %p498 = pneg %p491
        $region132: #{gtn_forward.11} parent=117 // pred_check_branch
          %500 = sbr.rel (%p498) target = $region134
        $region133: #{gtn_forward.11} parent=117 // pred_region
          %501 = vst [vmem:[#allocation2] sm:$0xff] 0.0
          %502 = vst [vmem:[#allocation2 + $0x8] sm:$0xff] 0.0
        $region134: #{gtn_forward.11} parent=117 // pred_fallthru
          _
        %v503 = vld [vmem:[#allocation2] sm:$0xff]
        %v504 = vld [vmem:[#allocation2 + $0x8] sm:$0xff]
        %v505 = vld [vmem:[%s427] sm:$0xf]
        %v506 = vld [vmem:[%s427 + $0x4] sm:$0xf]
        %v507 = vld [vmem:[%s434] sm:$0xf]
        %v508 = vld [vmem:[%s434 + $0x4] sm:$0xf]
        %v509 = vld [vmem:[%s434 + $0x8] sm:$0xf]
        %v510 = vld [vmem:[%s434 + $0xc] sm:$0xf]
        %v511 = vld [vmem:[%s434 + $0x10] sm:$0xf]
        %v512 = vld [vmem:[%s434 + $0x14] sm:$0xf]
        %v513 = vld [vmem:[%s434 + $0x18] sm:$0xf]
        %v514 = vld [vmem:[%s434 + $0x1c] sm:$0xf]
        %v515 = vld [vmem:[%s434 + $0x20] sm:$0xf]
        %v516 = vld [vmem:[%s434 + $0x24] sm:$0xf]
        %v517 = vld [vmem:[%s434 + $0x28] sm:$0xf]
        %v518 = vld [vmem:[%s434 + $0x2c] sm:$0xf]
        %v519 = vld [vmem:[%s434 + $0x30] sm:$0xf]
        %v520 = vld [vmem:[%s434 + $0x34] sm:$0xf]
        %v521 = vld [vmem:[%s434 + $0x38] sm:$0xf]
        %v522 = vld [vmem:[%s434 + $0x3c] sm:$0xf]
        %v525 = vunpack.c.l.b16 %v505
        %v526 = vunpack.c.l.b16 %v506
        %v527 = vpack.c.b16 %v526, %v525
        %v545 = vunpack.c.l.b16 %v507
        %v546 = vunpack.c.l.b16 %v508
        %v547 = vunpack.c.l.b16 %v509
        %v548 = vunpack.c.l.b16 %v510
        %v549 = vunpack.c.l.b16 %v511
        %v550 = vunpack.c.l.b16 %v512
        %v551 = vunpack.c.l.b16 %v513
        %v552 = vunpack.c.l.b16 %v514
        %v553 = vunpack.c.l.b16 %v515
        %v554 = vunpack.c.l.b16 %v516
        %v555 = vunpack.c.l.b16 %v517
        %v556 = vunpack.c.l.b16 %v518
        %v557 = vunpack.c.l.b16 %v519
        %v558 = vunpack.c.l.b16 %v520
        %v559 = vunpack.c.l.b16 %v521
        %v560 = vunpack.c.l.b16 %v522
        %v561 = vpack.c.b16 %v546, %v545
        %v562 = vpack.c.b16 %v548, %v547
        %v563 = vpack.c.b16 %v550, %v549
        %v564 = vpack.c.b16 %v552, %v551
        %v565 = vpack.c.b16 %v554, %v553
        %v566 = vpack.c.b16 %v556, %v555
        %v567 = vpack.c.b16 %v558, %v557
        %v568 = vpack.c.b16 %v560, %v559
        %577 = vmatprep.subr.bf16.mxu0 0
        %578 = vmatpush1.bf16.msra.mxu0 %v561
        %579 = vmatprep.subr.bf16.mxu0 0
        %580 = vmatpush1.bf16.msra.mxu0 %v562
        %581 = vmatprep.subr.bf16.mxu0 0
        %582 = vmatpush1.bf16.msra.mxu0 %v563
        %583 = vmatprep.subr.bf16.mxu0 0
        %584 = vmatpush1.bf16.msra.mxu0 %v564
        %585 = vmatprep.subr.bf16.mxu0 0
        %586 = vmatpush1.bf16.msra.mxu0 %v565
        %587 = vmatprep.subr.bf16.mxu0 0
        %588 = vmatpush1.bf16.msra.mxu0 %v566
        %589 = vmatprep.subr.bf16.mxu0 0
        %590 = vmatpush1.bf16.msra.mxu0 %v567
        %591 = vmatprep.subr.bf16.mxu0 0
        %592 = vmatpush1.bf16.msra.mxu0 %v568
        %593 = vmatprep.subr.bf16.mxu0 0
        %594 = vmatpush1.bf16.msra.mxu0 0
        %595 = vmatprep.subr.bf16.mxu0 0
        %596 = vmatpush1.bf16.msra.mxu0 0
        %597 = vmatprep.subr.bf16.mxu0 0
        %598 = vmatpush1.bf16.msra.mxu0 0
        %599 = vmatprep.subr.bf16.mxu0 0
        %600 = vmatpush1.bf16.msra.mxu0 0
        %601 = vmatprep.subr.bf16.mxu0 0
        %602 = vmatpush1.bf16.msra.mxu0 0
        %603 = vmatprep.subr.bf16.mxu0 0
        %604 = vmatpush1.bf16.msra.mxu0 0
        %605 = vmatprep.subr.bf16.mxu0 0
        %606 = vmatpush1.bf16.msra.mxu0 0
        %607 = vmatprep.subr.bf16.mxu0 0
        %608 = vmatpush1.bf16.msra.mxu0 0
        %609 = vmatprep.mubr.bf16.mxu0 0
        %610 = vmatmul.mubr.bf16.gmra.mrb[0].mxu0 %v527
        %v611 = vpop.f32.mrb[0].mxu0
        %v612 = vadd.f32 0.0, %v611
        %v613 = vpop.f32.mrb[0].mxu0
        %v614 = vpop.f32.mrb[0].mxu0
        %v615 = vadd.f32 0.0, %v614
        %v616 = vpop.f32.mrb[0].mxu0
        %617 = vdwg.mxu0
        %v618 = vadd.f32 %v503, %v612
        %v619 = vadd.f32 %v504, %v615
        %620 = vst [vmem:[#allocation2] sm:$0xff] %v618
        %621 = vst [vmem:[#allocation2 + $0x8] sm:$0xff] %v619
        %p622 = scmp.eq.s32.totalorder %s24, 1
        // Predicated region
        $region135: #{gtn_forward.11} parent=117 // pred_check
          %p623 = pneg %p622
        $region136: #{gtn_forward.11} parent=117 // pred_check_branch
          %625 = sbr.rel (%p623) target = $region138
        $region137: #{gtn_forward.11} parent=117 // pred_region
          %v626 = vld [vmem:[#allocation2] sm:$0xff]
          %v627 = vld [vmem:[#allocation2 + $0x8] sm:$0xff]
          %v628 = vld [vmem:[%s483] sm:$0x1]
          %v630 = vlaneseq
          %v631 = vshrl.u32 %v630, 7
          %v632 = vsub.s32 0, %v631
          %v633 = vrot.slane %v628, %v632
          %v635 = vmul.f32 %v626, %v633
          %v636 = vmul.f32 %v627, %v633
          %v637 = vld [vmem:[%s3] sm:$0xff]
          %v638 = vld [vmem:[%s3 + $0x8] sm:$0xff]
          %640 = vset.pattern.permute.xlu0 0
          %641 = vperm.xlu0 %640, %v637
          %v642 = vpop.permute.xlu0 %641
          %645 = vset.pattern.permute.xlu0 0
          %646 = vperm.xlu0 %645, %v638
          %v647 = vpop.permute.xlu0 %646
          %v649 = vadd.f32 %v635, %v642
          %v650 = vadd.f32 %v636, %v647
          %v651 = vmax.f32 %v649, 0.0
          %v652 = vmax.f32 %v650, 0.0
          %v653 = vld [vmem:[#allocation3] sm:$0xff]
          %v654 = vld [vmem:[#allocation3 + $0x8] sm:$0xff]
          %v655 = vld [vmem:[%s488] sm:$0xff]
          %v656 = vld [vmem:[%s488 + $0x8] sm:$0xff]
          %vm657 = vcmask 130048
          %v659 = vsel %vm657, %v655, 0
          %v662 = vsel %vm657, %v656, 0
          %664 = vmatprep.subr.mxu0 0.0
          %665 = vmatpush1.msra.mxu0 %v651
          %666 = vmatprep.subr.mxu0 0.0
          %667 = vmatpush1.msra.mxu0 %v652
          %668 = vmatprep.subr.mxu0 0.0
          %669 = vmatpush1.msra.mxu0 0.0
          %670 = vmatprep.subr.mxu0 0.0
          %671 = vmatpush1.msra.mxu0 0.0
          %672 = vmatprep.subr.mxu0 0.0
          %673 = vmatpush1.msra.mxu0 0.0
          %674 = vmatprep.subr.mxu0 0.0
          %675 = vmatpush1.msra.mxu0 0.0
          %676 = vmatprep.subr.mxu0 0.0
          %677 = vmatpush1.msra.mxu0 0.0
          %678 = vmatprep.subr.mxu0 0.0
          %679 = vmatpush1.msra.mxu0 0.0
          %680 = vmatprep.subr.mxu0 0.0
          %681 = vmatpush1.msra.mxu0 0.0
          %682 = vmatprep.subr.mxu0 0.0
          %683 = vmatpush1.msra.mxu0 0.0
          %684 = vmatprep.subr.mxu0 0.0
          %685 = vmatpush1.msra.mxu0 0.0
          %686 = vmatprep.subr.mxu0 0.0
          %687 = vmatpush1.msra.mxu0 0.0
          %688 = vmatprep.subr.mxu0 0.0
          %689 = vmatpush1.msra.mxu0 0.0
          %690 = vmatprep.subr.mxu0 0.0
          %691 = vmatpush1.msra.mxu0 0.0
          %692 = vmatprep.subr.mxu0 0.0
          %693 = vmatpush1.msra.mxu0 0.0
          %694 = vmatprep.subr.mxu0 0.0
          %695 = vmatpush1.msra.mxu0 0.0
          %696 = vmatprep.subr.mxu0 0.0
          %697 = vmatpush1.msra.mxu0 0.0
          %698 = vmatprep.subr.mxu0 0.0
          %699 = vmatpush1.msra.mxu0 0.0
          %700 = vmatprep.subr.mxu0 0.0
          %701 = vmatpush1.msra.mxu0 0.0
          %702 = vmatprep.subr.mxu0 0.0
          %703 = vmatpush1.msra.mxu0 0.0
          %704 = vmatprep.subr.mxu0 0.0
          %705 = vmatpush1.msra.mxu0 0.0
          %706 = vmatprep.subr.mxu0 0.0
          %707 = vmatpush1.msra.mxu0 0.0
          %708 = vmatprep.subr.mxu0 0.0
          %709 = vmatpush1.msra.mxu0 0.0
          %710 = vmatprep.subr.mxu0 0.0
          %711 = vmatpush1.msra.mxu0 0.0
          %712 = vmatprep.subr.mxu0 0.0
          %713 = vmatpush1.msra.mxu0 0.0
          %714 = vmatprep.subr.mxu0 0.0
          %715 = vmatpush1.msra.mxu0 0.0
          %716 = vmatprep.subr.mxu0 0.0
          %717 = vmatpush1.msra.mxu0 0.0
          %718 = vmatprep.subr.mxu0 0.0
          %719 = vmatpush1.msra.mxu0 0.0
          %720 = vmatprep.subr.mxu0 0.0
          %721 = vmatpush1.msra.mxu0 0.0
          %722 = vmatprep.subr.mxu0 0.0
          %723 = vmatpush1.msra.mxu0 0.0
          %724 = vmatprep.subr.mxu0 0.0
          %725 = vmatpush1.msra.mxu0 0.0
          %726 = vmatprep.subr.mxu0 0.0
          %727 = vmatpush1.msra.mxu0 0.0
          %728 = vmatprep.mubr.f32.mxu0 0.0
          %729 = vmatmul.mubr.f32.gmra.mrb[0].mxu0 %v659
          %v730 = vpop.f32.mrb[0].mxu0
          %v731 = vadd.f32 0.0, %v730
          %v732 = vpop.f32.mrb[0].mxu0
          %733 = vmatprep.mubr.f32.mxu0 0.0
          %734 = vmatmul.mubr.f32.gmra.mrb[0].mxu0 %v662
          %v735 = vpop.f32.mrb[0].mxu0
          %v736 = vadd.f32 0.0, %v735
          %v737 = vpop.f32.mrb[0].mxu0
          %738 = vdwg.mxu0
          %v739 = vadd.f32 %v653, %v731
          %v740 = vadd.f32 %v654, %v736
          %741 = vst [vmem:[#allocation3] sm:$0xff] %v739
          %742 = vst [vmem:[#allocation3 + $0x8] sm:$0xff] %v740
          %p743 = scmp.eq.s32.totalorder %s23, 1
          // Predicated region
          $region139: #{gtn_forward.11} parent=137 // pred_check
            %p744 = pneg %p743
          $region140: #{gtn_forward.11} parent=137 // pred_check_branch
            %746 = sbr.rel (%p744) target = $region142
          $region141: #{gtn_forward.11} parent=137 // pred_region
            %v747 = vld [vmem:[#allocation3] sm:$0xff]
            %v748 = vld [vmem:[#allocation3 + $0x8] sm:$0xff]
            %v749 = vld [vmem:[%s5] sm:$0xff]
            %v750 = vld [vmem:[%s5 + $0x8] sm:$0xff]
            %752 = vset.pattern.permute.xlu0 0
            %753 = vperm.xlu0 %752, %v749
            %v754 = vpop.permute.xlu0 %753
            %757 = vset.pattern.permute.xlu0 0
            %758 = vperm.xlu0 %757, %v750
            %v759 = vpop.permute.xlu0 %758
            %v761 = vadd.f32 %v747, %v754
            %v762 = vadd.f32 %v748, %v759
            %v763 = vmax.f32 %v761, 0.0
            %v764 = vmax.f32 %v762, 0.0
            %765 = vst [vmem:[%s475] sm:$0xff] %v763
            %766 = vst [vmem:[%s475 + $0x8] sm:$0xff] %v764
          $region142: #{gtn_forward.11} parent=137 // pred_fallthru
            _
        $region138: #{gtn_forward.11} parent=117 // pred_fallthru
          _
        %s767 = sand.u32 %s196, 1
        %s768 = sand.u32 %s196, 1
        %s769 = smul.addr %s768, 16
        %s770 = scalar_lea.vmem [#allocation6], %s769
        // Predicated region
        $region143: #{gtn_forward.11} parent=117 // pred_check
          %p771 = pneg %p206
        $region144: #{gtn_forward.11} parent=117 // pred_check_branch
          %773 = sbr.rel (%p771) target = $region146
        $region145: #{gtn_forward.11} parent=117 // pred_region
          %s774 = smul.addr %s22, 8
          %s775 = scalar_lea.vmem %s6, %s774
          // Predicated region
          $region147: #{gtn_forward.11} parent=145 // pred_check
            _
          $region148: #{gtn_forward.11} parent=145 // pred_check_branch
            %777 = sbr.rel (0) target = $region150
          $region149: #{gtn_forward.11} parent=145 // pred_region
            // Predicated region
            $region151: #{gtn_forward.11} parent=149 // pred_check
              _
            $region152: #{gtn_forward.11} parent=149 // pred_check_branch
              %779 = sbr.rel (0) target = $region154
            $region153: #{gtn_forward.11} parent=149 // pred_region
              // Predicated region
              $region166: #{gtn_forward.11} parent=153 // pred_check
                _
              $region167: #{gtn_forward.11} parent=153 // pred_check_branch
                %796 = sbr.rel (0) target = $region169
              $region168: #{gtn_forward.11} parent=153 // pred_region
                loop: start=0, step=1, limit=1
                $region170: #{gtn_forward.11} parent=168 // loop_pre_header
                  _
                $region171: #{gtn_forward.11} parent=168 // loop_header
                  %s798 = sphi 0, %s802
                  %p799 = scmp.ge.s32.totalorder %s798, 1
                  %s803 = sphi %s770, %s770
                  %s804 = sphi %s775, %s775
                $region172: #{gtn_forward.11} parent=168 // loop_header_branch
                  %801 = sbr.rel (%p799) target = $region176
                $region173: #{gtn_forward.11} parent=168 // loop_body
                  %v805 = vld [vmem:[%s803] sm:$0xff]
                  %806 = vst [vmem:[%s804] sm:$0xff] %v805
                  %v807 = vld [vmem:[%s803 + $0x8] sm:$0xff]
                  %808 = vst [vmem:[%s804 + $0x10] sm:$0xff] %v807
                $region174: #{gtn_forward.11} parent=168 // loop_footer
                  %s802 = sadd.s32 1, %s798
                $region175: #{gtn_forward.11} parent=168 // loop_footer_branch
                  %797 = sbr.rel target = $region171
                $region176: #{gtn_forward.11} parent=168 // loop_exit
                  _
              $region169: #{gtn_forward.11} parent=153 // pred_fallthru
                _
              // Predicated region
              $region177: #{gtn_forward.11} parent=153 // pred_check
                _
              $region178: #{gtn_forward.11} parent=153 // pred_check_branch
                %810 = sbr.rel target = $region180
              $region179: #{gtn_forward.11} parent=153 // pred_region
                _
              $region180: #{gtn_forward.11} parent=153 // pred_fallthru
                _
            $region154: #{gtn_forward.11} parent=149 // pred_fallthru
              _
            // Predicated region
            $region155: #{gtn_forward.11} parent=149 // pred_check
              _
            $region156: #{gtn_forward.11} parent=149 // pred_check_branch
              %781 = sbr.rel target = $region158
            $region157: #{gtn_forward.11} parent=149 // pred_region
              loop: start=0, step=1, limit=1
              $region159: #{gtn_forward.11} parent=157 // loop_pre_header
                _
              $region160: #{gtn_forward.11} parent=157 // loop_header
                %s784 = sphi 0, %s788
                %p785 = scmp.ge.s32.totalorder %s784, 1
                %s789 = sphi %s770, %s770
                %s790 = sphi %s775, %s775
              $region161: #{gtn_forward.11} parent=157 // loop_header_branch
                %787 = sbr.rel (%p785) target = $region165
              $region162: #{gtn_forward.11} parent=157 // loop_body
                %v791 = vld [vmem:[%s789] sm:$0xff]
                %792 = vst [vmem:[%s790] sm:$0xff] %v791
                %v793 = vld [vmem:[%s789 + $0x8] sm:$0xff]
                %794 = vst [vmem:[%s790 + $0x10] sm:$0xff] %v793
              $region163: #{gtn_forward.11} parent=157 // loop_footer
                %s788 = sadd.s32 1, %s784
              $region164: #{gtn_forward.11} parent=157 // loop_footer_branch
                %783 = sbr.rel target = $region160
              $region165: #{gtn_forward.11} parent=157 // loop_exit
                _
            $region158: #{gtn_forward.11} parent=149 // pred_fallthru
              _
          $region150: #{gtn_forward.11} parent=145 // pred_fallthru
            _
          %811 = vnop
        $region146: #{gtn_forward.11} parent=117 // pred_fallthru
          _
      $region118: #{gtn_forward.11} parent=5 // pred_fallthru
        _
      %p812 = scmp.le.s32.totalorder 2, %s12
      // Predicated region
      $region181: #{gtn_forward.11} parent=5 // pred_check
        %p813 = pneg %p812
      $region182: #{gtn_forward.11} parent=5 // pred_check_branch
        %815 = sbr.rel (%p813) target = $region184
      $region183: #{gtn_forward.11} parent=5 // pred_region
        %s816 = ssub.s32 %s12, 2
        // Predicated region
        $region185: #{gtn_forward.11} parent=183 // pred_check
          %p817 = pneg %p212
        $region186: #{gtn_forward.11} parent=183 // pred_check_branch
          %819 = sbr.rel (%p817) target = $region188
        $region187: #{gtn_forward.11} parent=183 // pred_region
          %s820 = sand.u32 %s197, 1
          %s821 = sand.u32 %s197, 1
          %s822 = smul.addr %s821, 16
          %s823 = scalar_lea.vmem [#allocation6], %s822
        $region188: #{gtn_forward.11} parent=183 // pred_fallthru
          _
      $region184: #{gtn_forward.11} parent=5 // pred_fallthru
        _
    $region6: #{gtn_forward.11} parent=1 // loop_footer
      %s16 = sadd.s32 1, %s12
    $region7: #{gtn_forward.11} parent=1 // loop_footer_branch
      %11 = sbr.rel target = $region3
    $region8: #{gtn_forward.11} parent=1 // loop_exit
      _

// kernel: gtn_forward.10
$region0: #{gtn_forward.10}
  #allocation0 [shape = 'u32[]', space=smem, size = 0x4, offset = 0x4, fixed_abs, tag = 'smem constant byte address 0x4 - core index']
  #allocation1 [shape = 'u32[144,128]{1,0:T(1,128)}', space=vmem, size = 0x12000, scoped, tag = 'internal scratch']
  %s0 = inlined_call_operand.vmem [shape: f32[256,64], index: 0, kind: input, shape index: {}]
  %s1 = inlined_call_operand.vmem [shape: f32[64,16], index: 1, kind: input, shape index: {}]
  %s2 = inlined_call_operand.vmem [shape: bf16[256,16], index: 2, kind: output, shape index: {}]
  %s3 = sld [smem:[#allocation0]]
  $region18: #{gtn_forward.10} parent=0
    _
  %s5 = ssub.s32 1, %s3
  %s6 = scalar_select 0, %s5, %s3
  // Predicated region
  $region2: #{gtn_forward.10} parent=0 // pred_check
    _
  $region3: #{gtn_forward.10} parent=0 // pred_check_branch
    %8 = sbr.rel (0) target = $region5
  $region4: #{gtn_forward.10} parent=0 // pred_region
    _
  $region5: #{gtn_forward.10} parent=0 // pred_fallthru
    _
  // Predicated region
  $region6: #{gtn_forward.10} parent=0 // pred_check
    _
  $region7: #{gtn_forward.10} parent=0 // pred_check_branch
    %10 = sbr.rel (0) target = $region9
  $region8: #{gtn_forward.10} parent=0 // pred_region
    _
  $region9: #{gtn_forward.10} parent=0 // pred_fallthru
    _
  %v11 = vld [vmem:[%s0] sm:$0xff]
  %v12 = vld [vmem:[%s0 + $0x8] sm:$0xff]
  %v13 = vld [vmem:[%s0 + $0x10] sm:$0xff]
  %v14 = vld [vmem:[%s0 + $0x18] sm:$0xff]
  %v15 = vld [vmem:[%s0 + $0x20] sm:$0xff]
  %v16 = vld [vmem:[%s0 + $0x28] sm:$0xff]
  %v17 = vld [vmem:[%s0 + $0x30] sm:$0xff]
  %v18 = vld [vmem:[%s0 + $0x38] sm:$0xff]
  %v19 = vld [vmem:[%s0 + $0x40] sm:$0xff]
  %v20 = vld [vmem:[%s0 + $0x48] sm:$0xff]
  %v21 = vld [vmem:[%s0 + $0x50] sm:$0xff]
  %v22 = vld [vmem:[%s0 + $0x58] sm:$0xff]
  %v23 = vld [vmem:[%s0 + $0x60] sm:$0xff]
  %v24 = vld [vmem:[%s0 + $0x68] sm:$0xff]
  %v25 = vld [vmem:[%s0 + $0x70] sm:$0xff]
  %v26 = vld [vmem:[%s0 + $0x78] sm:$0xff]
  %v27 = vld [vmem:[%s0 + $0x80] sm:$0xff]
  %v28 = vld [vmem:[%s0 + $0x88] sm:$0xff]
  %v29 = vld [vmem:[%s0 + $0x90] sm:$0xff]
  %v30 = vld [vmem:[%s0 + $0x98] sm:$0xff]
  %v31 = vld [vmem:[%s0 + $0xa0] sm:$0xff]
  %v32 = vld [vmem:[%s0 + $0xa8] sm:$0xff]
  %v33 = vld [vmem:[%s0 + $0xb0] sm:$0xff]
  %v34 = vld [vmem:[%s0 + $0xb8] sm:$0xff]
  %v35 = vld [vmem:[%s0 + $0xc0] sm:$0xff]
  %v36 = vld [vmem:[%s0 + $0xc8] sm:$0xff]
  %v37 = vld [vmem:[%s0 + $0xd0] sm:$0xff]
  %v38 = vld [vmem:[%s0 + $0xd8] sm:$0xff]
  %v39 = vld [vmem:[%s0 + $0xe0] sm:$0xff]
  %v40 = vld [vmem:[%s0 + $0xe8] sm:$0xff]
  %v41 = vld [vmem:[%s0 + $0xf0] sm:$0xff]
  %v42 = vld [vmem:[%s0 + $0xf8] sm:$0xff]
  %v43 = vld [vmem:[%s1] sm:$0xff]
  %v44 = vld [vmem:[%s1 + $0x8] sm:$0xff]
  %v45 = vld [vmem:[%s1 + $0x10] sm:$0xff]
  %v46 = vld [vmem:[%s1 + $0x18] sm:$0xff]
  %v47 = vld [vmem:[%s1 + $0x20] sm:$0xff]
  %v48 = vld [vmem:[%s1 + $0x28] sm:$0xff]
  %v49 = vld [vmem:[%s1 + $0x30] sm:$0xff]
  %v50 = vld [vmem:[%s1 + $0x38] sm:$0xff]
  %vm51 = vcmask 523264
  %v53 = vsel %vm51, %v11, 0
  %v56 = vsel %vm51, %v12, 0
  %v59 = vsel %vm51, %v13, 0
  %v62 = vsel %vm51, %v14, 0
  %v65 = vsel %vm51, %v15, 0
  %v68 = vsel %vm51, %v16, 0
  %v71 = vsel %vm51, %v17, 0
  %v74 = vsel %vm51, %v18, 0
  %v77 = vsel %vm51, %v19, 0
  %v80 = vsel %vm51, %v20, 0
  %v83 = vsel %vm51, %v21, 0
  %v86 = vsel %vm51, %v22, 0
  %v89 = vsel %vm51, %v23, 0
  %v92 = vsel %vm51, %v24, 0
  %v95 = vsel %vm51, %v25, 0
  %v98 = vsel %vm51, %v26, 0
  %v101 = vsel %vm51, %v27, 0
  %v104 = vsel %vm51, %v28, 0
  %v107 = vsel %vm51, %v29, 0
  %v110 = vsel %vm51, %v30, 0
  %v113 = vsel %vm51, %v31, 0
  %v116 = vsel %vm51, %v32, 0
  %v119 = vsel %vm51, %v33, 0
  %v122 = vsel %vm51, %v34, 0
  %v125 = vsel %vm51, %v35, 0
  %v128 = vsel %vm51, %v36, 0
  %v131 = vsel %vm51, %v37, 0
  %v134 = vsel %vm51, %v38, 0
  %v137 = vsel %vm51, %v39, 0
  %v140 = vsel %vm51, %v40, 0
  %v143 = vsel %vm51, %v41, 0
  %v146 = vsel %vm51, %v42, 0
  %148 = vmatprep.subr.mxu0 0.0
  %149 = vmatpush1.msra.mxu0 %v43
  %150 = vmatprep.subr.mxu0 0.0
  %151 = vmatpush1.msra.mxu0 %v44
  %152 = vmatprep.subr.mxu0 0.0
  %153 = vmatpush1.msra.mxu0 %v45
  %154 = vmatprep.subr.mxu0 0.0
  %155 = vmatpush1.msra.mxu0 %v46
  %156 = vmatprep.subr.mxu0 0.0
  %157 = vmatpush1.msra.mxu0 %v47
  %158 = vmatprep.subr.mxu0 0.0
  %159 = vmatpush1.msra.mxu0 %v48
  %160 = vmatprep.subr.mxu0 0.0
  %161 = vmatpush1.msra.mxu0 %v49
  %162 = vmatprep.subr.mxu0 0.0
  %163 = vmatpush1.msra.mxu0 %v50
  %164 = vmatprep.subr.mxu0 0.0
  %165 = vmatpush1.msra.mxu0 0.0
  %166 = vmatprep.subr.mxu0 0.0
  %167 = vmatpush1.msra.mxu0 0.0
  %168 = vmatprep.subr.mxu0 0.0
  %169 = vmatpush1.msra.mxu0 0.0
  %170 = vmatprep.subr.mxu0 0.0
  %171 = vmatpush1.msra.mxu0 0.0
  %172 = vmatprep.subr.mxu0 0.0
  %173 = vmatpush1.msra.mxu0 0.0
  %174 = vmatprep.subr.mxu0 0.0
  %175 = vmatpush1.msra.mxu0 0.0
  %176 = vmatprep.subr.mxu0 0.0
  %177 = vmatpush1.msra.mxu0 0.0
  %178 = vmatprep.subr.mxu0 0.0
  %179 = vmatpush1.msra.mxu0 0.0
  %180 = vmatprep.subr.mxu0 0.0
  %181 = vmatpush1.msra.mxu0 0.0
  %182 = vmatprep.subr.mxu0 0.0
  %183 = vmatpush1.msra.mxu0 0.0
  %184 = vmatprep.subr.mxu0 0.0
  %185 = vmatpush1.msra.mxu0 0.0
  %186 = vmatprep.subr.mxu0 0.0
  %187 = vmatpush1.msra.mxu0 0.0
  %188 = vmatprep.subr.mxu0 0.0
  %189 = vmatpush1.msra.mxu0 0.0
  %190 = vmatprep.subr.mxu0 0.0
  %191 = vmatpush1.msra.mxu0 0.0
  %192 = vmatprep.subr.mxu0 0.0
  %193 = vmatpush1.msra.mxu0 0.0
  %194 = vmatprep.subr.mxu0 0.0
  %195 = vmatpush1.msra.mxu0 0.0
  %196 = vmatprep.subr.mxu0 0.0
  %197 = vmatpush1.msra.mxu0 0.0
  %198 = vmatprep.subr.mxu0 0.0
  %199 = vmatpush1.msra.mxu0 0.0
  %200 = vmatprep.subr.mxu0 0.0
  %201 = vmatpush1.msra.mxu0 0.0
  %202 = vmatprep.subr.mxu0 0.0
  %203 = vmatpush1.msra.mxu0 0.0
  %204 = vmatprep.subr.mxu0 0.0
  %205 = vmatpush1.msra.mxu0 0.0
  %206 = vmatprep.subr.mxu0 0.0
  %207 = vmatpush1.msra.mxu0 0.0
  %208 = vmatprep.subr.mxu0 0.0
  %209 = vmatpush1.msra.mxu0 0.0
  %210 = vmatprep.subr.mxu0 0.0
  %211 = vmatpush1.msra.mxu0 0.0
  %212 = vmatprep.mubr.f32.mxu0 0.0
  %213 = vmatmul.mubr.f32.gmra.mrb[0].mxu0 %v53
  %v214 = vpop.f32.mrb[0].mxu0
  %v215 = vadd.f32 0.0, %v214
  %v216 = vpop.f32.mrb[0].mxu0
  %217 = vmatprep.mubr.f32.mxu0 0.0
  %218 = vmatmul.mubr.f32.gmra.mrb[0].mxu0 %v56
  %v219 = vpop.f32.mrb[0].mxu0
  %v220 = vadd.f32 0.0, %v219
  %v221 = vpop.f32.mrb[0].mxu0
  %222 = vmatprep.mubr.f32.mxu0 0.0
  %223 = vmatmul.mubr.f32.gmra.mrb[0].mxu0 %v59
  %v224 = vpop.f32.mrb[0].mxu0
  %v225 = vadd.f32 0.0, %v224
  %v226 = vpop.f32.mrb[0].mxu0
  %227 = vmatprep.mubr.f32.mxu0 0.0
  %228 = vmatmul.mubr.f32.gmra.mrb[0].mxu0 %v62
  %v229 = vpop.f32.mrb[0].mxu0
  %v230 = vadd.f32 0.0, %v229
  %v231 = vpop.f32.mrb[0].mxu0
  %232 = vmatprep.mubr.f32.mxu0 0.0
  %233 = vmatmul.mubr.f32.gmra.mrb[0].mxu0 %v65
  %v234 = vpop.f32.mrb[0].mxu0
  %v235 = vadd.f32 0.0, %v234
  %v236 = vpop.f32.mrb[0].mxu0
  %237 = vmatprep.mubr.f32.mxu0 0.0
  %238 = vmatmul.mubr.f32.gmra.mrb[0].mxu0 %v68
  %v239 = vpop.f32.mrb[0].mxu0
  %v240 = vadd.f32 0.0, %v239
  %v241 = vpop.f32.mrb[0].mxu0
  %242 = vmatprep.mubr.f32.mxu0 0.0
  %243 = vmatmul.mubr.f32.gmra.mrb[0].mxu0 %v71
  %v244 = vpop.f32.mrb[0].mxu0
  %v245 = vadd.f32 0.0, %v244
  %v246 = vpop.f32.mrb[0].mxu0
  %247 = vmatprep.mubr.f32.mxu0 0.0
  %248 = vmatmul.mubr.f32.gmra.mrb[0].mxu0 %v74
  %v249 = vpop.f32.mrb[0].mxu0
  %v250 = vadd.f32 0.0, %v249
  %v251 = vpop.f32.mrb[0].mxu0
  %252 = vmatprep.mubr.f32.mxu0 0.0
  %253 = vmatmul.mubr.f32.gmra.mrb[0].mxu0 %v77
  %v254 = vpop.f32.mrb[0].mxu0
  %v255 = vadd.f32 0.0, %v254
  %v256 = vpop.f32.mrb[0].mxu0
  %257 = vmatprep.mubr.f32.mxu0 0.0
  %258 = vmatmul.mubr.f32.gmra.mrb[0].mxu0 %v80
  %v259 = vpop.f32.mrb[0].mxu0
  %v260 = vadd.f32 0.0, %v259
  %v261 = vpop.f32.mrb[0].mxu0
  %262 = vmatprep.mubr.f32.mxu0 0.0
  %263 = vmatmul.mubr.f32.gmra.mrb[0].mxu0 %v83
  %v264 = vpop.f32.mrb[0].mxu0
  %v265 = vadd.f32 0.0, %v264
  %v266 = vpop.f32.mrb[0].mxu0
  %267 = vmatprep.mubr.f32.mxu0 0.0
  %268 = vmatmul.mubr.f32.gmra.mrb[0].mxu0 %v86
  %v269 = vpop.f32.mrb[0].mxu0
  %v270 = vadd.f32 0.0, %v269
  %v271 = vpop.f32.mrb[0].mxu0
  %272 = vmatprep.mubr.f32.mxu0 0.0
  %273 = vmatmul.mubr.f32.gmra.mrb[0].mxu0 %v89
  %v274 = vpop.f32.mrb[0].mxu0
  %v275 = vadd.f32 0.0, %v274
  %v276 = vpop.f32.mrb[0].mxu0
  %277 = vmatprep.mubr.f32.mxu0 0.0
  %278 = vmatmul.mubr.f32.gmra.mrb[0].mxu0 %v92
  %v279 = vpop.f32.mrb[0].mxu0
  %v280 = vadd.f32 0.0, %v279
  %v281 = vpop.f32.mrb[0].mxu0
  %282 = vmatprep.mubr.f32.mxu0 0.0
  %283 = vmatmul.mubr.f32.gmra.mrb[0].mxu0 %v95
  %v284 = vpop.f32.mrb[0].mxu0
  %v285 = vadd.f32 0.0, %v284
  %v286 = vpop.f32.mrb[0].mxu0
  %287 = vmatprep.mubr.f32.mxu0 0.0
  %288 = vmatmul.mubr.f32.gmra.mrb[0].mxu0 %v98
  %v289 = vpop.f32.mrb[0].mxu0
  %v290 = vadd.f32 0.0, %v289
  %v291 = vpop.f32.mrb[0].mxu0
  %292 = vmatprep.mubr.f32.mxu0 0.0
  %293 = vmatmul.mubr.f32.gmra.mrb[0].mxu0 %v101
  %v294 = vpop.f32.mrb[0].mxu0
  %v295 = vadd.f32 0.0, %v294
  %v296 = vpop.f32.mrb[0].mxu0
  %297 = vmatprep.mubr.f32.mxu0 0.0
  %298 = vmatmul.mubr.f32.gmra.mrb[0].mxu0 %v104
  %v299 = vpop.f32.mrb[0].mxu0
  %v300 = vadd.f32 0.0, %v299
  %v301 = vpop.f32.mrb[0].mxu0
  %302 = vmatprep.mubr.f32.mxu0 0.0
  %303 = vmatmul.mubr.f32.gmra.mrb[0].mxu0 %v107
  %v304 = vpop.f32.mrb[0].mxu0
  %v305 = vadd.f32 0.0, %v304
  %v306 = vpop.f32.mrb[0].mxu0
  %307 = vmatprep.mubr.f32.mxu0 0.0
  %308 = vmatmul.mubr.f32.gmra.mrb[0].mxu0 %v110
  %v309 = vpop.f32.mrb[0].mxu0
  %v310 = vadd.f32 0.0, %v309
  %v311 = vpop.f32.mrb[0].mxu0
  %312 = vmatprep.mubr.f32.mxu0 0.0
  %313 = vmatmul.mubr.f32.gmra.mrb[0].mxu0 %v113
  %v314 = vpop.f32.mrb[0].mxu0
  %v315 = vadd.f32 0.0, %v314
  %v316 = vpop.f32.mrb[0].mxu0
  %317 = vmatprep.mubr.f32.mxu0 0.0
  %318 = vmatmul.mubr.f32.gmra.mrb[0].mxu0 %v116
  %v319 = vpop.f32.mrb[0].mxu0
  %v320 = vadd.f32 0.0, %v319
  %v321 = vpop.f32.mrb[0].mxu0
  %322 = vmatprep.mubr.f32.mxu0 0.0
  %323 = vmatmul.mubr.f32.gmra.mrb[0].mxu0 %v119
  %v324 = vpop.f32.mrb[0].mxu0
  %v325 = vadd.f32 0.0, %v324
  %v326 = vpop.f32.mrb[0].mxu0
  %327 = vmatprep.mubr.f32.mxu0 0.0
  %328 = vmatmul.mubr.f32.gmra.mrb[0].mxu0 %v122
  %v329 = vpop.f32.mrb[0].mxu0
  %v330 = vadd.f32 0.0, %v329
  %v331 = vpop.f32.mrb[0].mxu0
  %332 = vmatprep.mubr.f32.mxu0 0.0
  %333 = vmatmul.mubr.f32.gmra.mrb[0].mxu0 %v125
  %v334 = vpop.f32.mrb[0].mxu0
  %v335 = vadd.f32 0.0, %v334
  %v336 = vpop.f32.mrb[0].mxu0
  %337 = vmatprep.mubr.f32.mxu0 0.0
  %338 = vmatmul.mubr.f32.gmra.mrb[0].mxu0 %v128
  %v339 = vpop.f32.mrb[0].mxu0
  %v340 = vadd.f32 0.0, %v339
  %v341 = vpop.f32.mrb[0].mxu0
  %342 = vmatprep.mubr.f32.mxu0 0.0
  %343 = vmatmul.mubr.f32.gmra.mrb[0].mxu0 %v131
  %v344 = vpop.f32.mrb[0].mxu0
  %v345 = vadd.f32 0.0, %v344
  %v346 = vpop.f32.mrb[0].mxu0
  %347 = vmatprep.mubr.f32.mxu0 0.0
  %348 = vmatmul.mubr.f32.gmra.mrb[0].mxu0 %v134
  %v349 = vpop.f32.mrb[0].mxu0
  %v350 = vadd.f32 0.0, %v349
  %v351 = vpop.f32.mrb[0].mxu0
  %352 = vmatprep.mubr.f32.mxu0 0.0
  %353 = vmatmul.mubr.f32.gmra.mrb[0].mxu0 %v137
  %v354 = vpop.f32.mrb[0].mxu0
  %v355 = vadd.f32 0.0, %v354
  %v356 = vpop.f32.mrb[0].mxu0
  %357 = vmatprep.mubr.f32.mxu0 0.0
  %358 = vmatmul.mubr.f32.gmra.mrb[0].mxu0 %v140
  %v359 = vpop.f32.mrb[0].mxu0
  %v360 = vadd.f32 0.0, %v359
  %v361 = vpop.f32.mrb[0].mxu0
  %362 = vmatprep.mubr.f32.mxu0 0.0
  %363 = vmatmul.mubr.f32.gmra.mrb[0].mxu0 %v143
  %v364 = vpop.f32.mrb[0].mxu0
  %v365 = vadd.f32 0.0, %v364
  %v366 = vpop.f32.mrb[0].mxu0
  %367 = vmatprep.mubr.f32.mxu0 0.0
  %368 = vmatmul.mubr.f32.gmra.mrb[0].mxu0 %v146
  %v369 = vpop.f32.mrb[0].mxu0
  %v370 = vadd.f32 0.0, %v369
  %v371 = vpop.f32.mrb[0].mxu0
  %372 = vdwg.mxu0
  %v373 = vpack.c.bf16 %v220, %v215
  %v374 = vpack.c.bf16 %v230, %v225
  %v375 = vpack.c.bf16 %v240, %v235
  %v376 = vpack.c.bf16 %v250, %v245
  %v377 = vpack.c.bf16 %v260, %v255
  %v378 = vpack.c.bf16 %v270, %v265
  %v379 = vpack.c.bf16 %v280, %v275
  %v380 = vpack.c.bf16 %v290, %v285
  %v381 = vpack.c.bf16 %v300, %v295
  %v382 = vpack.c.bf16 %v310, %v305
  %v383 = vpack.c.bf16 %v320, %v315
  %v384 = vpack.c.bf16 %v330, %v325
  %v385 = vpack.c.bf16 %v340, %v335
  %v386 = vpack.c.bf16 %v350, %v345
  %v387 = vpack.c.bf16 %v360, %v355
  %v388 = vpack.c.bf16 %v370, %v365
  %v405 = vunpack.c.l.b16 %v373
  %v406 = vunpack.c.h.b16 %v373
  %v407 = vunpack.c.l.b16 %v374
  %v408 = vunpack.c.h.b16 %v374
  %v409 = vunpack.c.l.b16 %v375
  %v410 = vunpack.c.h.b16 %v375
  %v411 = vunpack.c.l.b16 %v376
  %v412 = vunpack.c.h.b16 %v376
  %v413 = vunpack.c.l.b16 %v377
  %v414 = vunpack.c.h.b16 %v377
  %v415 = vunpack.c.l.b16 %v378
  %v416 = vunpack.c.h.b16 %v378
  %v417 = vunpack.c.l.b16 %v379
  %v418 = vunpack.c.h.b16 %v379
  %v419 = vunpack.c.l.b16 %v380
  %v420 = vunpack.c.h.b16 %v380
  %v421 = vunpack.c.l.b16 %v381
  %v422 = vunpack.c.h.b16 %v381
  %v423 = vunpack.c.l.b16 %v382
  %v424 = vunpack.c.h.b16 %v382
  %v425 = vunpack.c.l.b16 %v383
  %v426 = vunpack.c.h.b16 %v383
  %v427 = vunpack.c.l.b16 %v384
  %v428 = vunpack.c.h.b16 %v384
  %v429 = vunpack.c.l.b16 %v385
  %v430 = vunpack.c.h.b16 %v385
  %v431 = vunpack.c.l.b16 %v386
  %v432 = vunpack.c.h.b16 %v386
  %v433 = vunpack.c.l.b16 %v387
  %v434 = vunpack.c.h.b16 %v387
  %v435 = vunpack.c.l.b16 %v388
  %v436 = vunpack.c.h.b16 %v388
  %v437 = vpack.c.b16 %v405, %v405
  %v438 = vpack.c.b16 %v406, %v406
  %v439 = vpack.c.b16 %v407, %v407
  %v440 = vpack.c.b16 %v408, %v408
  %v441 = vpack.c.b16 %v409, %v409
  %v442 = vpack.c.b16 %v410, %v410
  %v443 = vpack.c.b16 %v411, %v411
  %v444 = vpack.c.b16 %v412, %v412
  %v445 = vpack.c.b16 %v413, %v413
  %v446 = vpack.c.b16 %v414, %v414
  %v447 = vpack.c.b16 %v415, %v415
  %v448 = vpack.c.b16 %v416, %v416
  %v449 = vpack.c.b16 %v417, %v417
  %v450 = vpack.c.b16 %v418, %v418
  %v451 = vpack.c.b16 %v419, %v419
  %v452 = vpack.c.b16 %v420, %v420
  %v453 = vpack.c.b16 %v421, %v421
  %v454 = vpack.c.b16 %v422, %v422
  %v455 = vpack.c.b16 %v423, %v423
  %v456 = vpack.c.b16 %v424, %v424
  %v457 = vpack.c.b16 %v425, %v425
  %v458 = vpack.c.b16 %v426, %v426
  %v459 = vpack.c.b16 %v427, %v427
  %v460 = vpack.c.b16 %v428, %v428
  %v461 = vpack.c.b16 %v429, %v429
  %v462 = vpack.c.b16 %v430, %v430
  %v463 = vpack.c.b16 %v431, %v431
  %v464 = vpack.c.b16 %v432, %v432
  %v465 = vpack.c.b16 %v433, %v433
  %v466 = vpack.c.b16 %v434, %v434
  %v467 = vpack.c.b16 %v435, %v435
  %v468 = vpack.c.b16 %v436, %v436
  %vm501 = vcmask 125952
  %502 = vst.msk [vmem:[%s2] sm:$0xf] %vm501, %v437
  %503 = vst.msk [vmem:[%s2 + $0x4] sm:$0xf] %vm501, %v438
  %504 = vst.msk [vmem:[%s2 + $0x8] sm:$0xf] %vm501, %v439
  %505 = vst.msk [vmem:[%s2 + $0xc] sm:$0xf] %vm501, %v440
  %506 = vst.msk [vmem:[%s2 + $0x10] sm:$0xf] %vm501, %v441
  %507 = vst.msk [vmem:[%s2 + $0x14] sm:$0xf] %vm501, %v442
  %508 = vst.msk [vmem:[%s2 + $0x18] sm:$0xf] %vm501, %v443
  %509 = vst.msk [vmem:[%s2 + $0x1c] sm:$0xf] %vm501, %v444
  %510 = vst.msk [vmem:[%s2 + $0x20] sm:$0xf] %vm501, %v445
  %511 = vst.msk [vmem:[%s2 + $0x24] sm:$0xf] %vm501, %v446
  %512 = vst.msk [vmem:[%s2 + $0x28] sm:$0xf] %vm501, %v447
  %513 = vst.msk [vmem:[%s2 + $0x2c] sm:$0xf] %vm501, %v448
  %514 = vst.msk [vmem:[%s2 + $0x30] sm:$0xf] %vm501, %v449
  %515 = vst.msk [vmem:[%s2 + $0x34] sm:$0xf] %vm501, %v450
  %516 = vst.msk [vmem:[%s2 + $0x38] sm:$0xf] %vm501, %v451
  %517 = vst.msk [vmem:[%s2 + $0x3c] sm:$0xf] %vm501, %v452
  %518 = vst.msk [vmem:[%s2 + $0x40] sm:$0xf] %vm501, %v453
  %519 = vst.msk [vmem:[%s2 + $0x44] sm:$0xf] %vm501, %v454
  %520 = vst.msk [vmem:[%s2 + $0x48] sm:$0xf] %vm501, %v455
  %521 = vst.msk [vmem:[%s2 + $0x4c] sm:$0xf] %vm501, %v456
  %522 = vst.msk [vmem:[%s2 + $0x50] sm:$0xf] %vm501, %v457
  %523 = vst.msk [vmem:[%s2 + $0x54] sm:$0xf] %vm501, %v458
  %524 = vst.msk [vmem:[%s2 + $0x58] sm:$0xf] %vm501, %v459
  %525 = vst.msk [vmem:[%s2 + $0x5c] sm:$0xf] %vm501, %v460
  %526 = vst.msk [vmem:[%s2 + $0x60] sm:$0xf] %vm501, %v461
  %527 = vst.msk [vmem:[%s2 + $0x64] sm:$0xf] %vm501, %v462
  %528 = vst.msk [vmem:[%s2 + $0x68] sm:$0xf] %vm501, %v463
  %529 = vst.msk [vmem:[%s2 + $0x6c] sm:$0xf] %vm501, %v464
  %530 = vst.msk [vmem:[%s2 + $0x70] sm:$0xf] %vm501, %v465
  %531 = vst.msk [vmem:[%s2 + $0x74] sm:$0xf] %vm501, %v466
  %532 = vst.msk [vmem:[%s2 + $0x78] sm:$0xf] %vm501, %v467
  %533 = vst.msk [vmem:[%s2 + $0x7c] sm:$0xf] %vm501, %v468
  // Predicated region
  $region10: #{gtn_forward.10} parent=0 // pred_check
    _
  $region11: #{gtn_forward.10} parent=0 // pred_check_branch
    %535 = sbr.rel (0) target = $region13
  $region12: #{gtn_forward.10} parent=0 // pred_region
    _
  $region13: #{gtn_forward.10} parent=0 // pred_fallthru
    _
  // Predicated region
  $region14: #{gtn_forward.10} parent=0 // pred_check
    _
  $region15: #{gtn_forward.10} parent=0 // pred_check_branch
    %537 = sbr.rel (0) target = $region17
  $region16: #{gtn_forward.10} parent=0 // pred_region
    _
  $region17: #{gtn_forward.10} parent=0 // pred_fallthru
    _

</llo_original>
